<compile_context>
chip_gen: v7x
topology: tpu7x:2x2x1
jax: 0.10.0
libtpu: 0.0.40
codegen_flags: <defaults>
</compile_context>

<pallas_src>
import functools
import math

import jax
import jax.numpy as jnp
from jax import lax
from jax.experimental import pallas as pl
from jax.experimental.pallas import tpu as pltpu


# Matmul-input dtype. bf16 is the native MXU path on v6e/v7x (fine on v5e too)
# and halves weight DMA bytes; accumulation is always f32 and softmax /
# LayerNorm math is done in f32. Flip to jnp.float32 for bit-tighter parity
# with the PyTorch reference.
_MM_DTYPE = jnp.bfloat16

_HAS_RECIP = hasattr(pl, "reciprocal")


def _approx_recip(x):
    if _HAS_RECIP:
        return pl.reciprocal(x, approx=True)   # EUP slot, effectively free
    return 1.0 / x


def _compiler_params(**kwargs):
    cls = getattr(pltpu, "CompilerParams", None) or getattr(pltpu, "TPUCompilerParams", None)
    return cls(**kwargs) if cls is not None else None


# ----------------------------------------------------------------------------
# The single fused kernel
# ----------------------------------------------------------------------------

def _fused_transformer_kernel(
        src_ref, tgt_ref, smask_ref, tmask_ref,
        e_wqkv, e_wo, e_w1, e_b1, e_w2, e_b2, e_lng, e_lnb,
        d_swqkv, d_swo, d_cwq, d_cwkv, d_cwo,
        d_w1, d_b1, d_w2, d_b2, d_lng, d_lnb,
        ow_ref, ob_ref,
        o_ref,
        *, n_heads, n_layers):
    """Encoder stack + decoder stack + vocab projection for one batch element.

    src_ref  : [1, Ss, D]   embedded source (+PE)
    tgt_ref  : [1, St, D]   embedded target (+PE)
    smask_ref: [1, 1, Ss]   additive src key-padding mask (0 / -1e9)
    tmask_ref: [1, St, St]  additive causal+padding target mask (0 / -1e9)
    e_* / d_*: per-layer weights stacked on a leading n_layers axis
    ow/ob    : [D, Vp] / [1, Vp] vocab projection (Vp padded to mult. of 128)
    o_ref    : [1, St, Vp]  logits (lane-dense store)
    """
    x = src_ref[0]                       # [Ss, D] encoder residual stream
    y = tgt_ref[0]                       # [St, D] decoder residual stream
    src_add = smask_ref[0]               # [1, Ss]
    tgt_add = tmask_ref[0]               # [St, St]
    D = x.shape[1]
    Dh = D // n_heads
    scale = 1.0 / math.sqrt(Dh)

    def mm(a, b):
        # MXU matmul: bf16 (or f32) inputs, f32 accumulation.
        return jnp.dot(a.astype(_MM_DTYPE), b.astype(_MM_DTYPE),
                       preferred_element_type=jnp.float32)

    def mm_nt(a, b):
        # a[M,K] x b[N,K] -> [M,N]: contraction on the last dim of BOTH, so no
        # explicit transpose (XLU relayout) is ever materialized.
        return lax.dot_general(a.astype(_MM_DTYPE), b.astype(_MM_DTYPE),
                               dimension_numbers=(((1,), (1,)), ((), ())),
                               preferred_element_type=jnp.float32)

    def layer_norm(z, g, b):
        # One-pass statistics: var = E[z^2] - mu^2 (saves a reduction + sub).
        mu = jnp.mean(z, axis=-1, keepdims=True)
        var = jnp.mean(z * z, axis=-1, keepdims=True) - mu * mu
        return (z - mu) * lax.rsqrt(var + 1e-5) * g + b

    def softmax_rows(s):
        s = s - jnp.max(s, axis=-1, keepdims=True)
        e = jnp.exp(s)
        return e * _approx_recip(jnp.sum(e, axis=-1, keepdims=True))

    def attn_core(q, k, v, wo, mask_add):
        # Per-head scores via transpose-free dot_general; each head's result is
        # folded straight into a lane-dense [S1, D] accumulator through the MXU
        # (W_o applied per head) -> no [S1, H*Dh] lane concat, no separate W_o.
        out = jnp.zeros((q.shape[0], D), jnp.float32)
        for h in range(n_heads):                      # static unroll, tiny H
            sl = slice(h * Dh, (h + 1) * Dh)
            s = mm_nt(q[:, sl], k[:, sl]) + mask_add  # [S1, S2], additive mask
            p = softmax_rows(s)
            oh = mm(p, v[:, sl])                      # [S1, Dh]
            out = out + mm(oh, wo[sl, :])             # fold output projection
        return out

    def mha_self(z, wqkv, wo, mask_add):
        qkv = mm(z, wqkv)                 # fused Q|K|V projection, one matmul
        q = qkv[:, :D] * scale            # 1/sqrt(head_dim) folded into q
        k = qkv[:, D:2 * D]
        v = qkv[:, 2 * D:]
        return attn_core(q, k, v, wo, mask_add)

    def mha_cross(zq, zkv, wq, wkv, wo, mask_add):
        q = mm(zq, wq) * scale
        kv = mm(zkv, wkv)                 # fused K|V projection
        return attn_core(q, kv[:, :D], kv[:, D:], wo, mask_add)

    def ffn(z, w1, b1, w2, b2):
        h = jnp.maximum(mm(z, w1) + b1, 0.0)
        return mm(h, w2) + b2

    # ------------------------------ encoder ---------------------------------
    for l in range(n_layers):             # static unroll over stacked weights
        g = e_lng[l]                      # [2, D]
        b = e_lnb[l]
        a = mha_self(x, e_wqkv[l], e_wo[l], src_add)
        x = layer_norm(x + a, g[0:1], b[0:1])
        f = ffn(x, e_w1[l], e_b1[l], e_w2[l], e_b2[l])
        x = layer_norm(x + f, g[1:2], b[1:2])
    memory = x                            # stays resident in VMEM / vregs

    # ------------------------------ decoder ---------------------------------
    for l in range(n_layers):
        g = d_lng[l]                      # [3, D]
        b = d_lnb[l]
        a = mha_self(y, d_swqkv[l], d_swo[l], tgt_add)
        y = layer_norm(y + a, g[0:1], b[0:1])
        c = mha_cross(y, memory, d_cwq[l], d_cwkv[l], d_cwo[l], src_add)
        y = layer_norm(y + c, g[1:2], b[1:2])
        f = ffn(y, d_w1[l], d_b1[l], d_w2[l], d_b2[l])
        y = layer_norm(y + f, g[2:3], b[2:3])

    # --------------------- vocab projection (lane-dense) --------------------
    # Vp is a multiple of 128 so the kernel's only HBM store is an unmasked,
    # fully lane-dense slab.
    # TODO(synk): for production vocab sizes, split this into a separate
    # (M-tile, V-tile) gridded kernel with 128-aligned V tiles and an explicit
    # vmem_limit_bytes so it fits v7x's 64 MiB VMEM / v5e's 16 MiB scoped default.
    o_ref[0] = mm(y, ow_ref[...]) + ob_ref[...]


# ----------------------------------------------------------------------------
# Parameters (deterministic, synthetic; weights pre-transposed [in, out] and
# stacked over a leading n_layers axis)
# ----------------------------------------------------------------------------

def make_positional_encoding(d_model, max_len):
    pos = jnp.arange(max_len, dtype=jnp.float32)[:, None]
    div = jnp.exp(jnp.arange(0, d_model, 2, dtype=jnp.float32)
                  * (-math.log(10000.0) / d_model))
    pe = jnp.zeros((max_len, d_model), jnp.float32)
    pe = pe.at[:, 0::2].set(jnp.sin(pos * div))
    pe = pe.at[:, 1::2].set(jnp.cos(pos * div))
    return pe


def init_params(key, n_tokens_src, n_tokens_tgt, n_heads, d_model, d_ff,
                n_layers, src_pad_idx, tgt_pad_idx, max_len=64):
    keys = iter(jax.random.split(key, 64))
    L, D, F = n_layers, d_model, d_ff

    def nrm(shape, scale=0.05, dtype=_MM_DTYPE):
        return (scale * jax.random.normal(next(keys), shape, dtype=jnp.float32)).astype(dtype)

    enc = {
        "wqkv": nrm((L, D, 3 * D)),          # fused W_q | W_k | W_v
        "wo":   nrm((L, D, D)),
        "w1":   nrm((L, D, F)),
        "b1":   jnp.zeros((L, 1, F), jnp.float32),
        "w2":   nrm((L, F, D)),
        "b2":   jnp.zeros((L, 1, D), jnp.float32),
        "ln_g": jnp.ones((L, 2, D), jnp.float32),
        "ln_b": jnp.zeros((L, 2, D), jnp.float32),
    }
    dec = {
        "swqkv": nrm((L, D, 3 * D)),         # self-attn fused QKV
        "swo":   nrm((L, D, D)),
        "cwq":   nrm((L, D, D)),             # cross-attn Q
        "cwkv":  nrm((L, D, 2 * D)),         # cross-attn fused K|V
        "cwo":   nrm((L, D, D)),
        "w1":    nrm((L, D, F)),
        "b1":    jnp.zeros((L, 1, F), jnp.float32),
        "w2":    nrm((L, F, D)),
        "b2":    jnp.zeros((L, 1, D), jnp.float32),
        "ln_g":  jnp.ones((L, 3, D), jnp.float32),
        "ln_b":  jnp.zeros((L, 3, D), jnp.float32),
    }

    # Vocab projection padded to a multiple of 128 lanes (lane-dense store).
    Vp = ((n_tokens_tgt + 127) // 128) * 128
    out_w = jnp.zeros((D, Vp), _MM_DTYPE).at[:, :n_tokens_tgt].set(
        nrm((D, n_tokens_tgt)))
    out_b = jnp.zeros((1, Vp), jnp.float32)

    src_emb = nrm((n_tokens_src, D), 1.0, jnp.float32).at[src_pad_idx].set(0.0)
    tgt_emb = nrm((n_tokens_tgt, D), 1.0, jnp.float32).at[tgt_pad_idx].set(0.0)

    return {"src_emb": src_emb, "tgt_emb": tgt_emb,
            "pe": make_positional_encoding(d_model, max_len),
            "enc": enc, "dec": dec, "out_w": out_w, "out_b": out_b}


# ----------------------------------------------------------------------------
# Forward pass (mirrors TranslationTransformer.forward, eval mode)
# ----------------------------------------------------------------------------

def translation_transformer_forward(params, source, target, *, n_heads,
                                    src_pad_idx, tgt_pad_idx, n_tokens_tgt):
    B, Ss = source.shape
    _, St = target.shape
    D = params["src_emb"].shape[1]
    enc, dec = params["enc"], params["dec"]
    n_layers = enc["wqkv"].shape[0]
    Vp = params["out_w"].shape[1]

    # Glue outside the kernel: embedding gather + positional encoding
    # (no sqrt(d_model) scaling, matching the reference module).
    src_x = params["src_emb"][source] + params["pe"][:Ss][None]
    tgt_x = params["tgt_emb"][target] + params["pe"][:St][None]

    # Tiny additive masks (0 / -1e9); causal triangle and key-padding are
    # combined once here so the kernel only does a vadd per attention.
    neg = jnp.float32(-1e9)
    src_add = jnp.where(source == src_pad_idx, neg, 0.0)[:, None, :]       # [B,1,Ss]
    causal = jnp.triu(jnp.ones((St, St), dtype=jnp.bool_), k=1)
    tgt_bad = jnp.logical_or(causal[None], (target == tgt_pad_idx)[:, None, :])
    tgt_add = jnp.where(tgt_bad, neg, 0.0)                                 # [B,St,St]

    def per_batch(shape):
        nd = len(shape)
        return pl.BlockSpec((1,) + shape, lambda bb, _n=nd: (bb,) + (0,) * _n)

    def shared(arr):
        # Same (whole-array) block for every grid step -> fetched once.
        # TODO(synk): at production weight sizes add pipeline_mode=pl.Buffered(1)
        # to drop the redundant second buffer; irrelevant at this toy size.
        nd = arr.ndim
        return pl.BlockSpec(arr.shape, lambda bb, _n=nd: (0,) * _n)

    weight_args = (enc["wqkv"], enc["wo"], enc["w1"], enc["b1"], enc["w2"],
                   enc["b2"], enc["ln_g"], enc["ln_b"],
                   dec["swqkv"], dec["swo"], dec["cwq"], dec["cwkv"], dec["cwo"],
                   dec["w1"], dec["b1"], dec["w2"], dec["b2"],
                   dec["ln_g"], dec["ln_b"],
                   params["out_w"], params["out_b"])

    kernel = functools.partial(_fused_transformer_kernel,
                               n_heads=n_heads, n_layers=n_layers)

    # Single fused pallas_call: grid=(B,) marked "parallel" gives v7x's two
    # TensorCores one batch element each; on v5e/v6e it is a 2-step loop.
    logits_padded = pl.pallas_call(
        kernel,
        grid=(B,),
        in_specs=[per_batch((Ss, D)), per_batch((St, D)),
                  per_batch((1, Ss)), per_batch((St, St))]
                 + [shared(w) for w in weight_args],
        out_specs=pl.BlockSpec((1, St, Vp), lambda bb: (bb, 0, 0)),
        out_shape=jax.ShapeDtypeStruct((B, St, Vp), jnp.float32),
        compiler_params=_compiler_params(dimension_semantics=("parallel",)),
    )(src_x, tgt_x, src_add, tgt_add, *weight_args)

    return logits_padded[:, :, :n_tokens_tgt]


# ----------------------------------------------------------------------------
# Main
# ----------------------------------------------------------------------------

if __name__ == "__main__":
    # Small config consistent with the module.
    B, Ss, St = 2, 8, 8
    n_tokens_src, n_tokens_tgt = 50, 60
    n_heads, d_model, d_ff, n_layers = 4, 32, 64, 2
    src_pad_idx, tgt_pad_idx = 0, 0

    key = jax.random.PRNGKey(0)
    pkey, skey, tkey = jax.random.split(key, 3)

    params = init_params(pkey, n_tokens_src, n_tokens_tgt, n_heads, d_model,
                         d_ff, n_layers, src_pad_idx, tgt_pad_idx)

    source = jax.random.randint(skey, (B, Ss), 1, n_tokens_src, dtype=jnp.int32)
    target = jax.random.randint(tkey, (B, St), 1, n_tokens_tgt, dtype=jnp.int32)
    # Introduce some padding tokens so the key-padding masks are exercised.
    source = source.at[:, -2:].set(src_pad_idx)
    target = target.at[:, -1].set(tgt_pad_idx)

    fwd = jax.jit(functools.partial(translation_transformer_forward,
                                    n_heads=n_heads,
                                    src_pad_idx=src_pad_idx,
                                    tgt_pad_idx=tgt_pad_idx,
                                    n_tokens_tgt=n_tokens_tgt))
    out = jax.block_until_ready(fwd(params, source, target))

    assert out.shape == (B, St, n_tokens_tgt), out.shape
    assert out.dtype == jnp.float32
    assert bool(jnp.all(jnp.isfinite(out)))
    print("KERNEL_OK")
</pallas_src>

<mosaic_0001>
module attributes {stable_mosaic.version = 11 : i64} {
  func.func @_fused_transformer_kernel(%arg0: i32, %arg1: memref<1x8x32xf32, #tpu.memory_space<vmem>>, %arg2: memref<1x8x32xf32, #tpu.memory_space<vmem>>, %arg3: memref<1x1x8xf32, #tpu.memory_space<vmem>>, %arg4: memref<1x8x8xf32, #tpu.memory_space<vmem>>, %arg5: memref<2x32x96xbf16, #tpu.memory_space<vmem>>, %arg6: memref<2x32x32xbf16, #tpu.memory_space<vmem>>, %arg7: memref<2x32x64xbf16, #tpu.memory_space<vmem>>, %arg8: memref<2x1x64xf32, #tpu.memory_space<vmem>>, %arg9: memref<2x64x32xbf16, #tpu.memory_space<vmem>>, %arg10: memref<2x1x32xf32, #tpu.memory_space<vmem>>, %arg11: memref<2x2x32xf32, #tpu.memory_space<vmem>>, %arg12: memref<2x2x32xf32, #tpu.memory_space<vmem>>, %arg13: memref<2x32x96xbf16, #tpu.memory_space<vmem>>, %arg14: memref<2x32x32xbf16, #tpu.memory_space<vmem>>, %arg15: memref<2x32x32xbf16, #tpu.memory_space<vmem>>, %arg16: memref<2x32x64xbf16, #tpu.memory_space<vmem>>, %arg17: memref<2x32x32xbf16, #tpu.memory_space<vmem>>, %arg18: memref<2x32x64xbf16, #tpu.memory_space<vmem>>, %arg19: memref<2x1x64xf32, #tpu.memory_space<vmem>>, %arg20: memref<2x64x32xbf16, #tpu.memory_space<vmem>>, %arg21: memref<2x1x32xf32, #tpu.memory_space<vmem>>, %arg22: memref<2x3x32xf32, #tpu.memory_space<vmem>>, %arg23: memref<2x3x32xf32, #tpu.memory_space<vmem>>, %arg24: memref<32x128xbf16, #tpu.memory_space<vmem>>, %arg25: memref<1x128xf32, #tpu.memory_space<vmem>>, %arg26: memref<1x8x128xf32, #tpu.memory_space<vmem>>) attributes {dimension_semantics = [#tpu.dimension_semantics<parallel>], iteration_bounds = array<i64: 2>, scalar_prefetch = 0 : i64, scratch_operands = 0 : i64, tpu.core_type = #tpu.core_type<tc>, window_params = [{transform_indices = @transform_0, window_bounds = array<i64: 1, 8, 32>}, {transform_indices = @transform_1, window_bounds = array<i64: 1, 8, 32>}, {transform_indices = @transform_2, window_bounds = array<i64: 1, 1, 8>}, {transform_indices = @transform_3, window_bounds = array<i64: 1, 8, 8>}, {pipeline_mode = #tpu.pipeline_mode<synchronous>, transform_indices = @transform_4, window_bounds = array<i64: 2, 32, 96>}, {pipeline_mode = #tpu.pipeline_mode<synchronous>, transform_indices = @transform_5, window_bounds = array<i64: 2, 32, 32>}, {pipeline_mode = #tpu.pipeline_mode<synchronous>, transform_indices = @transform_6, window_bounds = array<i64: 2, 32, 64>}, {pipeline_mode = #tpu.pipeline_mode<synchronous>, transform_indices = @transform_7, window_bounds = array<i64: 2, 1, 64>}, {pipeline_mode = #tpu.pipeline_mode<synchronous>, transform_indices = @transform_8, window_bounds = array<i64: 2, 64, 32>}, {pipeline_mode = #tpu.pipeline_mode<synchronous>, transform_indices = @transform_9, window_bounds = array<i64: 2, 1, 32>}, {pipeline_mode = #tpu.pipeline_mode<synchronous>, transform_indices = @transform_10, window_bounds = array<i64: 2, 2, 32>}, {pipeline_mode = #tpu.pipeline_mode<synchronous>, transform_indices = @transform_11, window_bounds = array<i64: 2, 2, 32>}, {pipeline_mode = #tpu.pipeline_mode<synchronous>, transform_indices = @transform_12, window_bounds = array<i64: 2, 32, 96>}, {pipeline_mode = #tpu.pipeline_mode<synchronous>, transform_indices = @transform_13, window_bounds = array<i64: 2, 32, 32>}, {pipeline_mode = #tpu.pipeline_mode<synchronous>, transform_indices = @transform_14, window_bounds = array<i64: 2, 32, 32>}, {pipeline_mode = #tpu.pipeline_mode<synchronous>, transform_indices = @transform_15, window_bounds = array<i64: 2, 32, 64>}, {pipeline_mode = #tpu.pipeline_mode<synchronous>, transform_indices = @transform_16, window_bounds = array<i64: 2, 32, 32>}, {pipeline_mode = #tpu.pipeline_mode<synchronous>, transform_indices = @transform_17, window_bounds = array<i64: 2, 32, 64>}, {pipeline_mode = #tpu.pipeline_mode<synchronous>, transform_indices = @transform_18, window_bounds = array<i64: 2, 1, 64>}, {pipeline_mode = #tpu.pipeline_mode<synchronous>, transform_indices = @transform_19, window_bounds = array<i64: 2, 64, 32>}, {pipeline_mode = #tpu.pipeline_mode<synchronous>, transform_indices = @transform_20, window_bounds = array<i64: 2, 1, 32>}, {pipeline_mode = #tpu.pipeline_mode<synchronous>, transform_indices = @transform_21, window_bounds = array<i64: 2, 3, 32>}, {pipeline_mode = #tpu.pipeline_mode<synchronous>, transform_indices = @transform_22, window_bounds = array<i64: 2, 3, 32>}, {pipeline_mode = #tpu.pipeline_mode<synchronous>, transform_indices = @transform_23, window_bounds = array<i64: 32, 128>}, {pipeline_mode = #tpu.pipeline_mode<synchronous>, transform_indices = @transform_24, window_bounds = array<i64: 1, 128>}, {transform_indices = @transform_25, window_bounds = array<i64: 1, 8, 128>}]} {
    %c0 = arith.constant 0 : index
    %c0_0 = arith.constant 0 : index
    %c0_1 = arith.constant 0 : index
    %0 = vector.load %arg1[%c0, %c0_0, %c0_1] : memref<1x8x32xf32, #tpu.memory_space<vmem>>, vector<1x8x32xf32>
    %1 = vector.shape_cast %0 : vector<1x8x32xf32> to vector<8x32xf32>
    %c0_2 = arith.constant 0 : index
    %c0_3 = arith.constant 0 : index
    %c0_4 = arith.constant 0 : index
    %2 = vector.load %arg2[%c0_2, %c0_3, %c0_4] : memref<1x8x32xf32, #tpu.memory_space<vmem>>, vector<1x8x32xf32>
    %3 = vector.shape_cast %2 : vector<1x8x32xf32> to vector<8x32xf32>
    %c0_5 = arith.constant 0 : index
    %c0_6 = arith.constant 0 : index
    %c0_7 = arith.constant 0 : index
    %4 = vector.load %arg3[%c0_5, %c0_6, %c0_7] : memref<1x1x8xf32, #tpu.memory_space<vmem>>, vector<1x1x8xf32>
    %5 = vector.shape_cast %4 : vector<1x1x8xf32> to vector<1x8xf32>
    %c0_8 = arith.constant 0 : index
    %c0_9 = arith.constant 0 : index
    %c0_10 = arith.constant 0 : index
    %6 = vector.load %arg4[%c0_8, %c0_9, %c0_10] : memref<1x8x8xf32, #tpu.memory_space<vmem>>, vector<1x8x8xf32>
    %7 = vector.shape_cast %6 : vector<1x8x8xf32> to vector<8x8xf32>
    %c0_11 = arith.constant 0 : index
    %c0_12 = arith.constant 0 : index
    %c0_13 = arith.constant 0 : index
    %8 = vector.load %arg11[%c0_11, %c0_12, %c0_13] : memref<2x2x32xf32, #tpu.memory_space<vmem>>, vector<1x2x32xf32>
    %9 = vector.shape_cast %8 : vector<1x2x32xf32> to vector<2x32xf32>
    %c0_14 = arith.constant 0 : index
    %c0_15 = arith.constant 0 : index
    %c0_16 = arith.constant 0 : index
    %10 = vector.load %arg12[%c0_14, %c0_15, %c0_16] : memref<2x2x32xf32, #tpu.memory_space<vmem>>, vector<1x2x32xf32>
    %11 = vector.shape_cast %10 : vector<1x2x32xf32> to vector<2x32xf32>
    %c0_17 = arith.constant 0 : index
    %c0_18 = arith.constant 0 : index
    %c0_19 = arith.constant 0 : index
    %12 = vector.load %arg5[%c0_17, %c0_18, %c0_19] : memref<2x32x96xbf16, #tpu.memory_space<vmem>>, vector<1x32x96xbf16>
    %13 = vector.shape_cast %12 : vector<1x32x96xbf16> to vector<32x96xbf16>
    %c0_20 = arith.constant 0 : index
    %c0_21 = arith.constant 0 : index
    %c0_22 = arith.constant 0 : index
    %14 = vector.load %arg6[%c0_20, %c0_21, %c0_22] : memref<2x32x32xbf16, #tpu.memory_space<vmem>>, vector<1x32x32xbf16>
    %15 = vector.shape_cast %14 : vector<1x32x32xbf16> to vector<32x32xbf16>
    %16 = arith.truncf %1 : vector<8x32xf32> to vector<8x32xbf16>
    %cst = arith.constant dense<0.000000e+00> : vector<8x96xf32>
    %17 = tpu.matmul %16, %13, %cst {dimension_numbers = #tpu.dot_dimension_numbers<[1], [0], [0], [1], [0, 0, 1, 1], [], []>} : vector<8x32xbf16>, vector<32x96xbf16>, vector<8x96xf32> -> vector<8x96xf32>
    %18 = vector.extract_strided_slice %17 {offsets = [0, 0], sizes = [8, 32], strides = [1, 1]} : vector<8x96xf32> to vector<8x32xf32>
    %cst_23 = arith.constant 0.353553385 : f32
    %19 = vector.broadcast %cst_23 : f32 to vector<8x32xf32>
    %20 = arith.mulf %18, %19 : vector<8x32xf32>
    %21 = vector.extract_strided_slice %17 {offsets = [0, 32], sizes = [8, 32], strides = [1, 1]} : vector<8x96xf32> to vector<8x32xf32>
    %22 = vector.extract_strided_slice %17 {offsets = [0, 64], sizes = [8, 32], strides = [1, 1]} : vector<8x96xf32> to vector<8x32xf32>
    %cst_24 = arith.constant 0.000000e+00 : f32
    %23 = vector.broadcast %cst_24 : f32 to vector<8x32xf32>
    %24 = vector.extract_strided_slice %20 {offsets = [0, 0], sizes = [8, 8], strides = [1, 1]} : vector<8x32xf32> to vector<8x8xf32>
    %25 = vector.extract_strided_slice %21 {offsets = [0, 0], sizes = [8, 8], strides = [1, 1]} : vector<8x32xf32> to vector<8x8xf32>
    %26 = arith.truncf %24 : vector<8x8xf32> to vector<8x8xbf16>
    %27 = arith.truncf %25 : vector<8x8xf32> to vector<8x8xbf16>
    %cst_25 = arith.constant dense<0.000000e+00> : vector<8x8xf32>
    %28 = tpu.matmul %26, %27, %cst_25 {dimension_numbers = #tpu.dot_dimension_numbers<[1], [1], [0], [0], [0, 0, 1, 0], [], []>} : vector<8x8xbf16>, vector<8x8xbf16>, vector<8x8xf32> -> vector<8x8xf32>
    %29 = vector.broadcast %5 : vector<1x8xf32> to vector<8x8xf32>
    %30 = arith.addf %28, %29 : vector<8x8xf32>
    %cst_26 = arith.constant dense<0xFF800000> : vector<8xf32>
    %31 = vector.multi_reduction <maximumf>, %30, %cst_26 [1] : vector<8x8xf32> to vector<8xf32>
    %32 = vector.shape_cast %31 : vector<8xf32> to vector<8x1xf32>
    %33 = vector.broadcast %32 : vector<8x1xf32> to vector<8x8xf32>
    %34 = arith.subf %30, %33 : vector<8x8xf32>
    %35 = math.exp %34 : vector<8x8xf32>
    %cst_27 = arith.constant dense<0.000000e+00> : vector<8xf32>
    %36 = vector.multi_reduction <add>, %35, %cst_27 [1] : vector<8x8xf32> to vector<8xf32>
    %37 = vector.shape_cast %36 : vector<8xf32> to vector<8x1xf32>
    %38 = tpu.reciprocal %37 {approx = true} : vector<8x1xf32> -> vector<8x1xf32>
    %39 = vector.broadcast %38 : vector<8x1xf32> to vector<8x8xf32>
    %40 = arith.mulf %35, %39 : vector<8x8xf32>
    %41 = vector.extract_strided_slice %22 {offsets = [0, 0], sizes = [8, 8], strides = [1, 1]} : vector<8x32xf32> to vector<8x8xf32>
    %42 = arith.truncf %40 : vector<8x8xf32> to vector<8x8xbf16>
    %43 = arith.truncf %41 : vector<8x8xf32> to vector<8x8xbf16>
    %cst_28 = arith.constant dense<0.000000e+00> : vector<8x8xf32>
    %44 = tpu.matmul %42, %43, %cst_28 {dimension_numbers = #tpu.dot_dimension_numbers<[1], [0], [0], [1], [0, 0, 1, 1], [], []>} : vector<8x8xbf16>, vector<8x8xbf16>, vector<8x8xf32> -> vector<8x8xf32>
    %45 = vector.extract_strided_slice %15 {offsets = [0, 0], sizes = [8, 32], strides = [1, 1]} : vector<32x32xbf16> to vector<8x32xbf16>
    %46 = arith.truncf %44 : vector<8x8xf32> to vector<8x8xbf16>
    %cst_29 = arith.constant dense<0.000000e+00> : vector<8x32xf32>
    %47 = tpu.matmul %46, %45, %cst_29 {dimension_numbers = #tpu.dot_dimension_numbers<[1], [0], [0], [1], [0, 0, 1, 1], [], []>} : vector<8x8xbf16>, vector<8x32xbf16>, vector<8x32xf32> -> vector<8x32xf32>
    %48 = arith.addf %23, %47 : vector<8x32xf32>
    %49 = vector.extract_strided_slice %20 {offsets = [0, 8], sizes = [8, 8], strides = [1, 1]} : vector<8x32xf32> to vector<8x8xf32>
    %50 = vector.extract_strided_slice %21 {offsets = [0, 8], sizes = [8, 8], strides = [1, 1]} : vector<8x32xf32> to vector<8x8xf32>
    %51 = arith.truncf %49 : vector<8x8xf32> to vector<8x8xbf16>
    %52 = arith.truncf %50 : vector<8x8xf32> to vector<8x8xbf16>
    %cst_30 = arith.constant dense<0.000000e+00> : vector<8x8xf32>
    %53 = tpu.matmul %51, %52, %cst_30 {dimension_numbers = #tpu.dot_dimension_numbers<[1], [1], [0], [0], [0, 0, 1, 0], [], []>} : vector<8x8xbf16>, vector<8x8xbf16>, vector<8x8xf32> -> vector<8x8xf32>
    %54 = vector.broadcast %5 : vector<1x8xf32> to vector<8x8xf32>
    %55 = arith.addf %53, %54 : vector<8x8xf32>
    %cst_31 = arith.constant dense<0xFF800000> : vector<8xf32>
    %56 = vector.multi_reduction <maximumf>, %55, %cst_31 [1] : vector<8x8xf32> to vector<8xf32>
    %57 = vector.shape_cast %56 : vector<8xf32> to vector<8x1xf32>
    %58 = vector.broadcast %57 : vector<8x1xf32> to vector<8x8xf32>
    %59 = arith.subf %55, %58 : vector<8x8xf32>
    %60 = math.exp %59 : vector<8x8xf32>
    %cst_32 = arith.constant dense<0.000000e+00> : vector<8xf32>
    %61 = vector.multi_reduction <add>, %60, %cst_32 [1] : vector<8x8xf32> to vector<8xf32>
    %62 = vector.shape_cast %61 : vector<8xf32> to vector<8x1xf32>
    %63 = tpu.reciprocal %62 {approx = true} : vector<8x1xf32> -> vector<8x1xf32>
    %64 = vector.broadcast %63 : vector<8x1xf32> to vector<8x8xf32>
    %65 = arith.mulf %60, %64 : vector<8x8xf32>
    %66 = vector.extract_strided_slice %22 {offsets = [0, 8], sizes = [8, 8], strides = [1, 1]} : vector<8x32xf32> to vector<8x8xf32>
    %67 = arith.truncf %65 : vector<8x8xf32> to vector<8x8xbf16>
    %68 = arith.truncf %66 : vector<8x8xf32> to vector<8x8xbf16>
    %cst_33 = arith.constant dense<0.000000e+00> : vector<8x8xf32>
    %69 = tpu.matmul %67, %68, %cst_33 {dimension_numbers = #tpu.dot_dimension_numbers<[1], [0], [0], [1], [0, 0, 1, 1], [], []>} : vector<8x8xbf16>, vector<8x8xbf16>, vector<8x8xf32> -> vector<8x8xf32>
    %70 = vector.extract_strided_slice %15 {offsets = [8, 0], sizes = [8, 32], strides = [1, 1]} : vector<32x32xbf16> to vector<8x32xbf16>
    %71 = arith.truncf %69 : vector<8x8xf32> to vector<8x8xbf16>
    %cst_34 = arith.constant dense<0.000000e+00> : vector<8x32xf32>
    %72 = tpu.matmul %71, %70, %cst_34 {dimension_numbers = #tpu.dot_dimension_numbers<[1], [0], [0], [1], [0, 0, 1, 1], [], []>} : vector<8x8xbf16>, vector<8x32xbf16>, vector<8x32xf32> -> vector<8x32xf32>
    %73 = arith.addf %48, %72 : vector<8x32xf32>
    %74 = vector.extract_strided_slice %20 {offsets = [0, 16], sizes = [8, 8], strides = [1, 1]} : vector<8x32xf32> to vector<8x8xf32>
    %75 = vector.extract_strided_slice %21 {offsets = [0, 16], sizes = [8, 8], strides = [1, 1]} : vector<8x32xf32> to vector<8x8xf32>
    %76 = arith.truncf %74 : vector<8x8xf32> to vector<8x8xbf16>
    %77 = arith.truncf %75 : vector<8x8xf32> to vector<8x8xbf16>
    %cst_35 = arith.constant dense<0.000000e+00> : vector<8x8xf32>
    %78 = tpu.matmul %76, %77, %cst_35 {dimension_numbers = #tpu.dot_dimension_numbers<[1], [1], [0], [0], [0, 0, 1, 0], [], []>} : vector<8x8xbf16>, vector<8x8xbf16>, vector<8x8xf32> -> vector<8x8xf32>
    %79 = vector.broadcast %5 : vector<1x8xf32> to vector<8x8xf32>
    %80 = arith.addf %78, %79 : vector<8x8xf32>
    %cst_36 = arith.constant dense<0xFF800000> : vector<8xf32>
    %81 = vector.multi_reduction <maximumf>, %80, %cst_36 [1] : vector<8x8xf32> to vector<8xf32>
    %82 = vector.shape_cast %81 : vector<8xf32> to vector<8x1xf32>
    %83 = vector.broadcast %82 : vector<8x1xf32> to vector<8x8xf32>
    %84 = arith.subf %80, %83 : vector<8x8xf32>
    %85 = math.exp %84 : vector<8x8xf32>
    %cst_37 = arith.constant dense<0.000000e+00> : vector<8xf32>
    %86 = vector.multi_reduction <add>, %85, %cst_37 [1] : vector<8x8xf32> to vector<8xf32>
    %87 = vector.shape_cast %86 : vector<8xf32> to vector<8x1xf32>
    %88 = tpu.reciprocal %87 {approx = true} : vector<8x1xf32> -> vector<8x1xf32>
    %89 = vector.broadcast %88 : vector<8x1xf32> to vector<8x8xf32>
    %90 = arith.mulf %85, %89 : vector<8x8xf32>
    %91 = vector.extract_strided_slice %22 {offsets = [0, 16], sizes = [8, 8], strides = [1, 1]} : vector<8x32xf32> to vector<8x8xf32>
    %92 = arith.truncf %90 : vector<8x8xf32> to vector<8x8xbf16>
    %93 = arith.truncf %91 : vector<8x8xf32> to vector<8x8xbf16>
    %cst_38 = arith.constant dense<0.000000e+00> : vector<8x8xf32>
    %94 = tpu.matmul %92, %93, %cst_38 {dimension_numbers = #tpu.dot_dimension_numbers<[1], [0], [0], [1], [0, 0, 1, 1], [], []>} : vector<8x8xbf16>, vector<8x8xbf16>, vector<8x8xf32> -> vector<8x8xf32>
    %95 = vector.extract_strided_slice %15 {offsets = [16, 0], sizes = [8, 32], strides = [1, 1]} : vector<32x32xbf16> to vector<8x32xbf16>
    %96 = arith.truncf %94 : vector<8x8xf32> to vector<8x8xbf16>
    %cst_39 = arith.constant dense<0.000000e+00> : vector<8x32xf32>
    %97 = tpu.matmul %96, %95, %cst_39 {dimension_numbers = #tpu.dot_dimension_numbers<[1], [0], [0], [1], [0, 0, 1, 1], [], []>} : vector<8x8xbf16>, vector<8x32xbf16>, vector<8x32xf32> -> vector<8x32xf32>
    %98 = arith.addf %73, %97 : vector<8x32xf32>
    %99 = vector.extract_strided_slice %20 {offsets = [0, 24], sizes = [8, 8], strides = [1, 1]} : vector<8x32xf32> to vector<8x8xf32>
    %100 = vector.extract_strided_slice %21 {offsets = [0, 24], sizes = [8, 8], strides = [1, 1]} : vector<8x32xf32> to vector<8x8xf32>
    %101 = arith.truncf %99 : vector<8x8xf32> to vector<8x8xbf16>
    %102 = arith.truncf %100 : vector<8x8xf32> to vector<8x8xbf16>
    %cst_40 = arith.constant dense<0.000000e+00> : vector<8x8xf32>
    %103 = tpu.matmul %101, %102, %cst_40 {dimension_numbers = #tpu.dot_dimension_numbers<[1], [1], [0], [0], [0, 0, 1, 0], [], []>} : vector<8x8xbf16>, vector<8x8xbf16>, vector<8x8xf32> -> vector<8x8xf32>
    %104 = vector.broadcast %5 : vector<1x8xf32> to vector<8x8xf32>
    %105 = arith.addf %103, %104 : vector<8x8xf32>
    %cst_41 = arith.constant dense<0xFF800000> : vector<8xf32>
    %106 = vector.multi_reduction <maximumf>, %105, %cst_41 [1] : vector<8x8xf32> to vector<8xf32>
    %107 = vector.shape_cast %106 : vector<8xf32> to vector<8x1xf32>
    %108 = vector.broadcast %107 : vector<8x1xf32> to vector<8x8xf32>
    %109 = arith.subf %105, %108 : vector<8x8xf32>
    %110 = math.exp %109 : vector<8x8xf32>
    %cst_42 = arith.constant dense<0.000000e+00> : vector<8xf32>
    %111 = vector.multi_reduction <add>, %110, %cst_42 [1] : vector<8x8xf32> to vector<8xf32>
    %112 = vector.shape_cast %111 : vector<8xf32> to vector<8x1xf32>
    %113 = tpu.reciprocal %112 {approx = true} : vector<8x1xf32> -> vector<8x1xf32>
    %114 = vector.broadcast %113 : vector<8x1xf32> to vector<8x8xf32>
    %115 = arith.mulf %110, %114 : vector<8x8xf32>
    %116 = vector.extract_strided_slice %22 {offsets = [0, 24], sizes = [8, 8], strides = [1, 1]} : vector<8x32xf32> to vector<8x8xf32>
    %117 = arith.truncf %115 : vector<8x8xf32> to vector<8x8xbf16>
    %118 = arith.truncf %116 : vector<8x8xf32> to vector<8x8xbf16>
    %cst_43 = arith.constant dense<0.000000e+00> : vector<8x8xf32>
    %119 = tpu.matmul %117, %118, %cst_43 {dimension_numbers = #tpu.dot_dimension_numbers<[1], [0], [0], [1], [0, 0, 1, 1], [], []>} : vector<8x8xbf16>, vector<8x8xbf16>, vector<8x8xf32> -> vector<8x8xf32>
    %120 = vector.extract_strided_slice %15 {offsets = [24, 0], sizes = [8, 32], strides = [1, 1]} : vector<32x32xbf16> to vector<8x32xbf16>
    %121 = arith.truncf %119 : vector<8x8xf32> to vector<8x8xbf16>
    %cst_44 = arith.constant dense<0.000000e+00> : vector<8x32xf32>
    %122 = tpu.matmul %121, %120, %cst_44 {dimension_numbers = #tpu.dot_dimension_numbers<[1], [0], [0], [1], [0, 0, 1, 1], [], []>} : vector<8x8xbf16>, vector<8x32xbf16>, vector<8x32xf32> -> vector<8x32xf32>
    %123 = arith.addf %98, %122 : vector<8x32xf32>
    %124 = arith.addf %1, %123 : vector<8x32xf32>
    %125 = vector.extract_strided_slice %9 {offsets = [0, 0], sizes = [1, 32], strides = [1, 1]} : vector<2x32xf32> to vector<1x32xf32>
    %126 = vector.extract_strided_slice %11 {offsets = [0, 0], sizes = [1, 32], strides = [1, 1]} : vector<2x32xf32> to vector<1x32xf32>
    %cst_45 = arith.constant dense<0.000000e+00> : vector<8xf32>
    %127 = vector.multi_reduction <add>, %124, %cst_45 [1] : vector<8x32xf32> to vector<8xf32>
    %128 = vector.shape_cast %127 : vector<8xf32> to vector<8x1xf32>
    %cst_46 = arith.constant 3.200000e+01 : f32
    %129 = vector.broadcast %cst_46 : f32 to vector<8x1xf32>
    %130 = arith.divf %128, %129 : vector<8x1xf32>
    %131 = arith.mulf %124, %124 : vector<8x32xf32>
    %cst_47 = arith.constant dense<0.000000e+00> : vector<8xf32>
    %132 = vector.multi_reduction <add>, %131, %cst_47 [1] : vector<8x32xf32> to vector<8xf32>
    %133 = vector.shape_cast %132 : vector<8xf32> to vector<8x1xf32>
    %cst_48 = arith.constant 3.200000e+01 : f32
    %134 = vector.broadcast %cst_48 : f32 to vector<8x1xf32>
    %135 = arith.divf %133, %134 : vector<8x1xf32>
    %136 = arith.mulf %130, %130 : vector<8x1xf32>
    %137 = arith.subf %135, %136 : vector<8x1xf32>
    %138 = vector.broadcast %130 : vector<8x1xf32> to vector<8x32xf32>
    %139 = arith.subf %124, %138 : vector<8x32xf32>
    %cst_49 = arith.constant 9.99999974E-6 : f32
    %140 = vector.broadcast %cst_49 : f32 to vector<8x1xf32>
    %141 = arith.addf %137, %140 : vector<8x1xf32>
    %142 = math.rsqrt %141 : vector<8x1xf32>
    %143 = vector.broadcast %142 : vector<8x1xf32> to vector<8x32xf32>
    %144 = arith.mulf %139, %143 : vector<8x32xf32>
    %145 = vector.broadcast %125 : vector<1x32xf32> to vector<8x32xf32>
    %146 = arith.mulf %144, %145 : vector<8x32xf32>
    %147 = vector.broadcast %126 : vector<1x32xf32> to vector<8x32xf32>
    %148 = arith.addf %146, %147 : vector<8x32xf32>
    %c0_50 = arith.constant 0 : index
    %c0_51 = arith.constant 0 : index
    %c0_52 = arith.constant 0 : index
    %149 = vector.load %arg7[%c0_50, %c0_51, %c0_52] : memref<2x32x64xbf16, #tpu.memory_space<vmem>>, vector<1x32x64xbf16>
    %150 = vector.shape_cast %149 : vector<1x32x64xbf16> to vector<32x64xbf16>
    %c0_53 = arith.constant 0 : index
    %c0_54 = arith.constant 0 : index
    %c0_55 = arith.constant 0 : index
    %151 = vector.load %arg8[%c0_53, %c0_54, %c0_55] : memref<2x1x64xf32, #tpu.memory_space<vmem>>, vector<1x1x64xf32>
    %152 = vector.shape_cast %151 : vector<1x1x64xf32> to vector<1x64xf32>
    %c0_56 = arith.constant 0 : index
    %c0_57 = arith.constant 0 : index
    %c0_58 = arith.constant 0 : index
    %153 = vector.load %arg9[%c0_56, %c0_57, %c0_58] : memref<2x64x32xbf16, #tpu.memory_space<vmem>>, vector<1x64x32xbf16>
    %154 = vector.shape_cast %153 : vector<1x64x32xbf16> to vector<64x32xbf16>
    %c0_59 = arith.constant 0 : index
    %c0_60 = arith.constant 0 : index
    %c0_61 = arith.constant 0 : index
    %155 = vector.load %arg10[%c0_59, %c0_60, %c0_61] : memref<2x1x32xf32, #tpu.memory_space<vmem>>, vector<1x1x32xf32>
    %156 = vector.shape_cast %155 : vector<1x1x32xf32> to vector<1x32xf32>
    %157 = arith.truncf %148 : vector<8x32xf32> to vector<8x32xbf16>
    %cst_62 = arith.constant dense<0.000000e+00> : vector<8x64xf32>
    %158 = tpu.matmul %157, %150, %cst_62 {dimension_numbers = #tpu.dot_dimension_numbers<[1], [0], [0], [1], [0, 0, 1, 1], [], []>} : vector<8x32xbf16>, vector<32x64xbf16>, vector<8x64xf32> -> vector<8x64xf32>
    %159 = vector.broadcast %152 : vector<1x64xf32> to vector<8x64xf32>
    %160 = arith.addf %158, %159 : vector<8x64xf32>
    %cst_63 = arith.constant 0.000000e+00 : f32
    %161 = vector.broadcast %cst_63 : f32 to vector<8x64xf32>
    %162 = arith.maximumf %160, %161 : vector<8x64xf32>
    %163 = arith.truncf %162 : vector<8x64xf32> to vector<8x64xbf16>
    %cst_64 = arith.constant dense<0.000000e+00> : vector<8x32xf32>
    %164 = tpu.matmul %163, %154, %cst_64 {dimension_numbers = #tpu.dot_dimension_numbers<[1], [0], [0], [1], [0, 0, 1, 1], [], []>} : vector<8x64xbf16>, vector<64x32xbf16>, vector<8x32xf32> -> vector<8x32xf32>
    %165 = vector.broadcast %156 : vector<1x32xf32> to vector<8x32xf32>
    %166 = arith.addf %164, %165 : vector<8x32xf32>
    %167 = arith.addf %148, %166 : vector<8x32xf32>
    %168 = vector.extract_strided_slice %9 {offsets = [1, 0], sizes = [1, 32], strides = [1, 1]} : vector<2x32xf32> to vector<1x32xf32>
    %169 = vector.extract_strided_slice %11 {offsets = [1, 0], sizes = [1, 32], strides = [1, 1]} : vector<2x32xf32> to vector<1x32xf32>
    %cst_65 = arith.constant dense<0.000000e+00> : vector<8xf32>
    %170 = vector.multi_reduction <add>, %167, %cst_65 [1] : vector<8x32xf32> to vector<8xf32>
    %171 = vector.shape_cast %170 : vector<8xf32> to vector<8x1xf32>
    %cst_66 = arith.constant 3.200000e+01 : f32
    %172 = vector.broadcast %cst_66 : f32 to vector<8x1xf32>
    %173 = arith.divf %171, %172 : vector<8x1xf32>
    %174 = arith.mulf %167, %167 : vector<8x32xf32>
    %cst_67 = arith.constant dense<0.000000e+00> : vector<8xf32>
    %175 = vector.multi_reduction <add>, %174, %cst_67 [1] : vector<8x32xf32> to vector<8xf32>
    %176 = vector.shape_cast %175 : vector<8xf32> to vector<8x1xf32>
    %cst_68 = arith.constant 3.200000e+01 : f32
    %177 = vector.broadcast %cst_68 : f32 to vector<8x1xf32>
    %178 = arith.divf %176, %177 : vector<8x1xf32>
    %179 = arith.mulf %173, %173 : vector<8x1xf32>
    %180 = arith.subf %178, %179 : vector<8x1xf32>
    %181 = vector.broadcast %173 : vector<8x1xf32> to vector<8x32xf32>
    %182 = arith.subf %167, %181 : vector<8x32xf32>
    %cst_69 = arith.constant 9.99999974E-6 : f32
    %183 = vector.broadcast %cst_69 : f32 to vector<8x1xf32>
    %184 = arith.addf %180, %183 : vector<8x1xf32>
    %185 = math.rsqrt %184 : vector<8x1xf32>
    %186 = vector.broadcast %185 : vector<8x1xf32> to vector<8x32xf32>
    %187 = arith.mulf %182, %186 : vector<8x32xf32>
    %188 = vector.broadcast %168 : vector<1x32xf32> to vector<8x32xf32>
    %189 = arith.mulf %187, %188 : vector<8x32xf32>
    %190 = vector.broadcast %169 : vector<1x32xf32> to vector<8x32xf32>
    %191 = arith.addf %189, %190 : vector<8x32xf32>
    %c1 = arith.constant 1 : index
    %c0_70 = arith.constant 0 : index
    %c0_71 = arith.constant 0 : index
    %192 = vector.load %arg11[%c1, %c0_70, %c0_71] : memref<2x2x32xf32, #tpu.memory_space<vmem>>, vector<1x2x32xf32>
    %193 = vector.shape_cast %192 : vector<1x2x32xf32> to vector<2x32xf32>
    %c1_72 = arith.constant 1 : index
    %c0_73 = arith.constant 0 : index
    %c0_74 = arith.constant 0 : index
    %194 = vector.load %arg12[%c1_72, %c0_73, %c0_74] : memref<2x2x32xf32, #tpu.memory_space<vmem>>, vector<1x2x32xf32>
    %195 = vector.shape_cast %194 : vector<1x2x32xf32> to vector<2x32xf32>
    %c1_75 = arith.constant 1 : index
    %c0_76 = arith.constant 0 : index
    %c0_77 = arith.constant 0 : index
    %196 = vector.load %arg5[%c1_75, %c0_76, %c0_77] : memref<2x32x96xbf16, #tpu.memory_space<vmem>>, vector<1x32x96xbf16>
    %197 = vector.shape_cast %196 : vector<1x32x96xbf16> to vector<32x96xbf16>
    %c1_78 = arith.constant 1 : index
    %c0_79 = arith.constant 0 : index
    %c0_80 = arith.constant 0 : index
    %198 = vector.load %arg6[%c1_78, %c0_79, %c0_80] : memref<2x32x32xbf16, #tpu.memory_space<vmem>>, vector<1x32x32xbf16>
    %199 = vector.shape_cast %198 : vector<1x32x32xbf16> to vector<32x32xbf16>
    %200 = arith.truncf %191 : vector<8x32xf32> to vector<8x32xbf16>
    %cst_81 = arith.constant dense<0.000000e+00> : vector<8x96xf32>
    %201 = tpu.matmul %200, %197, %cst_81 {dimension_numbers = #tpu.dot_dimension_numbers<[1], [0], [0], [1], [0, 0, 1, 1], [], []>} : vector<8x32xbf16>, vector<32x96xbf16>, vector<8x96xf32> -> vector<8x96xf32>
    %202 = vector.extract_strided_slice %201 {offsets = [0, 0], sizes = [8, 32], strides = [1, 1]} : vector<8x96xf32> to vector<8x32xf32>
    %cst_82 = arith.constant 0.353553385 : f32
    %203 = vector.broadcast %cst_82 : f32 to vector<8x32xf32>
    %204 = arith.mulf %202, %203 : vector<8x32xf32>
    %205 = vector.extract_strided_slice %201 {offsets = [0, 32], sizes = [8, 32], strides = [1, 1]} : vector<8x96xf32> to vector<8x32xf32>
    %206 = vector.extract_strided_slice %201 {offsets = [0, 64], sizes = [8, 32], strides = [1, 1]} : vector<8x96xf32> to vector<8x32xf32>
    %cst_83 = arith.constant 0.000000e+00 : f32
    %207 = vector.broadcast %cst_83 : f32 to vector<8x32xf32>
    %208 = vector.extract_strided_slice %204 {offsets = [0, 0], sizes = [8, 8], strides = [1, 1]} : vector<8x32xf32> to vector<8x8xf32>
    %209 = vector.extract_strided_slice %205 {offsets = [0, 0], sizes = [8, 8], strides = [1, 1]} : vector<8x32xf32> to vector<8x8xf32>
    %210 = arith.truncf %208 : vector<8x8xf32> to vector<8x8xbf16>
    %211 = arith.truncf %209 : vector<8x8xf32> to vector<8x8xbf16>
    %cst_84 = arith.constant dense<0.000000e+00> : vector<8x8xf32>
    %212 = tpu.matmul %210, %211, %cst_84 {dimension_numbers = #tpu.dot_dimension_numbers<[1], [1], [0], [0], [0, 0, 1, 0], [], []>} : vector<8x8xbf16>, vector<8x8xbf16>, vector<8x8xf32> -> vector<8x8xf32>
    %213 = vector.broadcast %5 : vector<1x8xf32> to vector<8x8xf32>
    %214 = arith.addf %212, %213 : vector<8x8xf32>
    %cst_85 = arith.constant dense<0xFF800000> : vector<8xf32>
    %215 = vector.multi_reduction <maximumf>, %214, %cst_85 [1] : vector<8x8xf32> to vector<8xf32>
    %216 = vector.shape_cast %215 : vector<8xf32> to vector<8x1xf32>
    %217 = vector.broadcast %216 : vector<8x1xf32> to vector<8x8xf32>
    %218 = arith.subf %214, %217 : vector<8x8xf32>
    %219 = math.exp %218 : vector<8x8xf32>
    %cst_86 = arith.constant dense<0.000000e+00> : vector<8xf32>
    %220 = vector.multi_reduction <add>, %219, %cst_86 [1] : vector<8x8xf32> to vector<8xf32>
    %221 = vector.shape_cast %220 : vector<8xf32> to vector<8x1xf32>
    %222 = tpu.reciprocal %221 {approx = true} : vector<8x1xf32> -> vector<8x1xf32>
    %223 = vector.broadcast %222 : vector<8x1xf32> to vector<8x8xf32>
    %224 = arith.mulf %219, %223 : vector<8x8xf32>
    %225 = vector.extract_strided_slice %206 {offsets = [0, 0], sizes = [8, 8], strides = [1, 1]} : vector<8x32xf32> to vector<8x8xf32>
    %226 = arith.truncf %224 : vector<8x8xf32> to vector<8x8xbf16>
    %227 = arith.truncf %225 : vector<8x8xf32> to vector<8x8xbf16>
    %cst_87 = arith.constant dense<0.000000e+00> : vector<8x8xf32>
    %228 = tpu.matmul %226, %227, %cst_87 {dimension_numbers = #tpu.dot_dimension_numbers<[1], [0], [0], [1], [0, 0, 1, 1], [], []>} : vector<8x8xbf16>, vector<8x8xbf16>, vector<8x8xf32> -> vector<8x8xf32>
    %229 = vector.extract_strided_slice %199 {offsets = [0, 0], sizes = [8, 32], strides = [1, 1]} : vector<32x32xbf16> to vector<8x32xbf16>
    %230 = arith.truncf %228 : vector<8x8xf32> to vector<8x8xbf16>
    %cst_88 = arith.constant dense<0.000000e+00> : vector<8x32xf32>
    %231 = tpu.matmul %230, %229, %cst_88 {dimension_numbers = #tpu.dot_dimension_numbers<[1], [0], [0], [1], [0, 0, 1, 1], [], []>} : vector<8x8xbf16>, vector<8x32xbf16>, vector<8x32xf32> -> vector<8x32xf32>
    %232 = arith.addf %207, %231 : vector<8x32xf32>
    %233 = vector.extract_strided_slice %204 {offsets = [0, 8], sizes = [8, 8], strides = [1, 1]} : vector<8x32xf32> to vector<8x8xf32>
    %234 = vector.extract_strided_slice %205 {offsets = [0, 8], sizes = [8, 8], strides = [1, 1]} : vector<8x32xf32> to vector<8x8xf32>
    %235 = arith.truncf %233 : vector<8x8xf32> to vector<8x8xbf16>
    %236 = arith.truncf %234 : vector<8x8xf32> to vector<8x8xbf16>
    %cst_89 = arith.constant dense<0.000000e+00> : vector<8x8xf32>
    %237 = tpu.matmul %235, %236, %cst_89 {dimension_numbers = #tpu.dot_dimension_numbers<[1], [1], [0], [0], [0, 0, 1, 0], [], []>} : vector<8x8xbf16>, vector<8x8xbf16>, vector<8x8xf32> -> vector<8x8xf32>
    %238 = vector.broadcast %5 : vector<1x8xf32> to vector<8x8xf32>
    %239 = arith.addf %237, %238 : vector<8x8xf32>
    %cst_90 = arith.constant dense<0xFF800000> : vector<8xf32>
    %240 = vector.multi_reduction <maximumf>, %239, %cst_90 [1] : vector<8x8xf32> to vector<8xf32>
    %241 = vector.shape_cast %240 : vector<8xf32> to vector<8x1xf32>
    %242 = vector.broadcast %241 : vector<8x1xf32> to vector<8x8xf32>
    %243 = arith.subf %239, %242 : vector<8x8xf32>
    %244 = math.exp %243 : vector<8x8xf32>
    %cst_91 = arith.constant dense<0.000000e+00> : vector<8xf32>
    %245 = vector.multi_reduction <add>, %244, %cst_91 [1] : vector<8x8xf32> to vector<8xf32>
    %246 = vector.shape_cast %245 : vector<8xf32> to vector<8x1xf32>
    %247 = tpu.reciprocal %246 {approx = true} : vector<8x1xf32> -> vector<8x1xf32>
    %248 = vector.broadcast %247 : vector<8x1xf32> to vector<8x8xf32>
    %249 = arith.mulf %244, %248 : vector<8x8xf32>
    %250 = vector.extract_strided_slice %206 {offsets = [0, 8], sizes = [8, 8], strides = [1, 1]} : vector<8x32xf32> to vector<8x8xf32>
    %251 = arith.truncf %249 : vector<8x8xf32> to vector<8x8xbf16>
    %252 = arith.truncf %250 : vector<8x8xf32> to vector<8x8xbf16>
    %cst_92 = arith.constant dense<0.000000e+00> : vector<8x8xf32>
    %253 = tpu.matmul %251, %252, %cst_92 {dimension_numbers = #tpu.dot_dimension_numbers<[1], [0], [0], [1], [0, 0, 1, 1], [], []>} : vector<8x8xbf16>, vector<8x8xbf16>, vector<8x8xf32> -> vector<8x8xf32>
    %254 = vector.extract_strided_slice %199 {offsets = [8, 0], sizes = [8, 32], strides = [1, 1]} : vector<32x32xbf16> to vector<8x32xbf16>
    %255 = arith.truncf %253 : vector<8x8xf32> to vector<8x8xbf16>
    %cst_93 = arith.constant dense<0.000000e+00> : vector<8x32xf32>
    %256 = tpu.matmul %255, %254, %cst_93 {dimension_numbers = #tpu.dot_dimension_numbers<[1], [0], [0], [1], [0, 0, 1, 1], [], []>} : vector<8x8xbf16>, vector<8x32xbf16>, vector<8x32xf32> -> vector<8x32xf32>
    %257 = arith.addf %232, %256 : vector<8x32xf32>
    %258 = vector.extract_strided_slice %204 {offsets = [0, 16], sizes = [8, 8], strides = [1, 1]} : vector<8x32xf32> to vector<8x8xf32>
    %259 = vector.extract_strided_slice %205 {offsets = [0, 16], sizes = [8, 8], strides = [1, 1]} : vector<8x32xf32> to vector<8x8xf32>
    %260 = arith.truncf %258 : vector<8x8xf32> to vector<8x8xbf16>
    %261 = arith.truncf %259 : vector<8x8xf32> to vector<8x8xbf16>
    %cst_94 = arith.constant dense<0.000000e+00> : vector<8x8xf32>
    %262 = tpu.matmul %260, %261, %cst_94 {dimension_numbers = #tpu.dot_dimension_numbers<[1], [1], [0], [0], [0, 0, 1, 0], [], []>} : vector<8x8xbf16>, vector<8x8xbf16>, vector<8x8xf32> -> vector<8x8xf32>
    %263 = vector.broadcast %5 : vector<1x8xf32> to vector<8x8xf32>
    %264 = arith.addf %262, %263 : vector<8x8xf32>
    %cst_95 = arith.constant dense<0xFF800000> : vector<8xf32>
    %265 = vector.multi_reduction <maximumf>, %264, %cst_95 [1] : vector<8x8xf32> to vector<8xf32>
    %266 = vector.shape_cast %265 : vector<8xf32> to vector<8x1xf32>
    %267 = vector.broadcast %266 : vector<8x1xf32> to vector<8x8xf32>
    %268 = arith.subf %264, %267 : vector<8x8xf32>
    %269 = math.exp %268 : vector<8x8xf32>
    %cst_96 = arith.constant dense<0.000000e+00> : vector<8xf32>
    %270 = vector.multi_reduction <add>, %269, %cst_96 [1] : vector<8x8xf32> to vector<8xf32>
    %271 = vector.shape_cast %270 : vector<8xf32> to vector<8x1xf32>
    %272 = tpu.reciprocal %271 {approx = true} : vector<8x1xf32> -> vector<8x1xf32>
    %273 = vector.broadcast %272 : vector<8x1xf32> to vector<8x8xf32>
    %274 = arith.mulf %269, %273 : vector<8x8xf32>
    %275 = vector.extract_strided_slice %206 {offsets = [0, 16], sizes = [8, 8], strides = [1, 1]} : vector<8x32xf32> to vector<8x8xf32>
    %276 = arith.truncf %274 : vector<8x8xf32> to vector<8x8xbf16>
    %277 = arith.truncf %275 : vector<8x8xf32> to vector<8x8xbf16>
    %cst_97 = arith.constant dense<0.000000e+00> : vector<8x8xf32>
    %278 = tpu.matmul %276, %277, %cst_97 {dimension_numbers = #tpu.dot_dimension_numbers<[1], [0], [0], [1], [0, 0, 1, 1], [], []>} : vector<8x8xbf16>, vector<8x8xbf16>, vector<8x8xf32> -> vector<8x8xf32>
    %279 = vector.extract_strided_slice %199 {offsets = [16, 0], sizes = [8, 32], strides = [1, 1]} : vector<32x32xbf16> to vector<8x32xbf16>
    %280 = arith.truncf %278 : vector<8x8xf32> to vector<8x8xbf16>
    %cst_98 = arith.constant dense<0.000000e+00> : vector<8x32xf32>
    %281 = tpu.matmul %280, %279, %cst_98 {dimension_numbers = #tpu.dot_dimension_numbers<[1], [0], [0], [1], [0, 0, 1, 1], [], []>} : vector<8x8xbf16>, vector<8x32xbf16>, vector<8x32xf32> -> vector<8x32xf32>
    %282 = arith.addf %257, %281 : vector<8x32xf32>
    %283 = vector.extract_strided_slice %204 {offsets = [0, 24], sizes = [8, 8], strides = [1, 1]} : vector<8x32xf32> to vector<8x8xf32>
    %284 = vector.extract_strided_slice %205 {offsets = [0, 24], sizes = [8, 8], strides = [1, 1]} : vector<8x32xf32> to vector<8x8xf32>
    %285 = arith.truncf %283 : vector<8x8xf32> to vector<8x8xbf16>
    %286 = arith.truncf %284 : vector<8x8xf32> to vector<8x8xbf16>
    %cst_99 = arith.constant dense<0.000000e+00> : vector<8x8xf32>
    %287 = tpu.matmul %285, %286, %cst_99 {dimension_numbers = #tpu.dot_dimension_numbers<[1], [1], [0], [0], [0, 0, 1, 0], [], []>} : vector<8x8xbf16>, vector<8x8xbf16>, vector<8x8xf32> -> vector<8x8xf32>
    %288 = vector.broadcast %5 : vector<1x8xf32> to vector<8x8xf32>
    %289 = arith.addf %287, %288 : vector<8x8xf32>
    %cst_100 = arith.constant dense<0xFF800000> : vector<8xf32>
    %290 = vector.multi_reduction <maximumf>, %289, %cst_100 [1] : vector<8x8xf32> to vector<8xf32>
    %291 = vector.shape_cast %290 : vector<8xf32> to vector<8x1xf32>
    %292 = vector.broadcast %291 : vector<8x1xf32> to vector<8x8xf32>
    %293 = arith.subf %289, %292 : vector<8x8xf32>
    %294 = math.exp %293 : vector<8x8xf32>
    %cst_101 = arith.constant dense<0.000000e+00> : vector<8xf32>
    %295 = vector.multi_reduction <add>, %294, %cst_101 [1] : vector<8x8xf32> to vector<8xf32>
    %296 = vector.shape_cast %295 : vector<8xf32> to vector<8x1xf32>
    %297 = tpu.reciprocal %296 {approx = true} : vector<8x1xf32> -> vector<8x1xf32>
    %298 = vector.broadcast %297 : vector<8x1xf32> to vector<8x8xf32>
    %299 = arith.mulf %294, %298 : vector<8x8xf32>
    %300 = vector.extract_strided_slice %206 {offsets = [0, 24], sizes = [8, 8], strides = [1, 1]} : vector<8x32xf32> to vector<8x8xf32>
    %301 = arith.truncf %299 : vector<8x8xf32> to vector<8x8xbf16>
    %302 = arith.truncf %300 : vector<8x8xf32> to vector<8x8xbf16>
    %cst_102 = arith.constant dense<0.000000e+00> : vector<8x8xf32>
    %303 = tpu.matmul %301, %302, %cst_102 {dimension_numbers = #tpu.dot_dimension_numbers<[1], [0], [0], [1], [0, 0, 1, 1], [], []>} : vector<8x8xbf16>, vector<8x8xbf16>, vector<8x8xf32> -> vector<8x8xf32>
    %304 = vector.extract_strided_slice %199 {offsets = [24, 0], sizes = [8, 32], strides = [1, 1]} : vector<32x32xbf16> to vector<8x32xbf16>
    %305 = arith.truncf %303 : vector<8x8xf32> to vector<8x8xbf16>
    %cst_103 = arith.constant dense<0.000000e+00> : vector<8x32xf32>
    %306 = tpu.matmul %305, %304, %cst_103 {dimension_numbers = #tpu.dot_dimension_numbers<[1], [0], [0], [1], [0, 0, 1, 1], [], []>} : vector<8x8xbf16>, vector<8x32xbf16>, vector<8x32xf32> -> vector<8x32xf32>
    %307 = arith.addf %282, %306 : vector<8x32xf32>
    %308 = arith.addf %191, %307 : vector<8x32xf32>
    %309 = vector.extract_strided_slice %193 {offsets = [0, 0], sizes = [1, 32], strides = [1, 1]} : vector<2x32xf32> to vector<1x32xf32>
    %310 = vector.extract_strided_slice %195 {offsets = [0, 0], sizes = [1, 32], strides = [1, 1]} : vector<2x32xf32> to vector<1x32xf32>
    %cst_104 = arith.constant dense<0.000000e+00> : vector<8xf32>
    %311 = vector.multi_reduction <add>, %308, %cst_104 [1] : vector<8x32xf32> to vector<8xf32>
    %312 = vector.shape_cast %311 : vector<8xf32> to vector<8x1xf32>
    %cst_105 = arith.constant 3.200000e+01 : f32
    %313 = vector.broadcast %cst_105 : f32 to vector<8x1xf32>
    %314 = arith.divf %312, %313 : vector<8x1xf32>
    %315 = arith.mulf %308, %308 : vector<8x32xf32>
    %cst_106 = arith.constant dense<0.000000e+00> : vector<8xf32>
    %316 = vector.multi_reduction <add>, %315, %cst_106 [1] : vector<8x32xf32> to vector<8xf32>
    %317 = vector.shape_cast %316 : vector<8xf32> to vector<8x1xf32>
    %cst_107 = arith.constant 3.200000e+01 : f32
    %318 = vector.broadcast %cst_107 : f32 to vector<8x1xf32>
    %319 = arith.divf %317, %318 : vector<8x1xf32>
    %320 = arith.mulf %314, %314 : vector<8x1xf32>
    %321 = arith.subf %319, %320 : vector<8x1xf32>
    %322 = vector.broadcast %314 : vector<8x1xf32> to vector<8x32xf32>
    %323 = arith.subf %308, %322 : vector<8x32xf32>
    %cst_108 = arith.constant 9.99999974E-6 : f32
    %324 = vector.broadcast %cst_108 : f32 to vector<8x1xf32>
    %325 = arith.addf %321, %324 : vector<8x1xf32>
    %326 = math.rsqrt %325 : vector<8x1xf32>
    %327 = vector.broadcast %326 : vector<8x1xf32> to vector<8x32xf32>
    %328 = arith.mulf %323, %327 : vector<8x32xf32>
    %329 = vector.broadcast %309 : vector<1x32xf32> to vector<8x32xf32>
    %330 = arith.mulf %328, %329 : vector<8x32xf32>
    %331 = vector.broadcast %310 : vector<1x32xf32> to vector<8x32xf32>
    %332 = arith.addf %330, %331 : vector<8x32xf32>
    %c1_109 = arith.constant 1 : index
    %c0_110 = arith.constant 0 : index
    %c0_111 = arith.constant 0 : index
    %333 = vector.load %arg7[%c1_109, %c0_110, %c0_111] : memref<2x32x64xbf16, #tpu.memory_space<vmem>>, vector<1x32x64xbf16>
    %334 = vector.shape_cast %333 : vector<1x32x64xbf16> to vector<32x64xbf16>
    %c1_112 = arith.constant 1 : index
    %c0_113 = arith.constant 0 : index
    %c0_114 = arith.constant 0 : index
    %335 = vector.load %arg8[%c1_112, %c0_113, %c0_114] : memref<2x1x64xf32, #tpu.memory_space<vmem>>, vector<1x1x64xf32>
    %336 = vector.shape_cast %335 : vector<1x1x64xf32> to vector<1x64xf32>
    %c1_115 = arith.constant 1 : index
    %c0_116 = arith.constant 0 : index
    %c0_117 = arith.constant 0 : index
    %337 = vector.load %arg9[%c1_115, %c0_116, %c0_117] : memref<2x64x32xbf16, #tpu.memory_space<vmem>>, vector<1x64x32xbf16>
    %338 = vector.shape_cast %337 : vector<1x64x32xbf16> to vector<64x32xbf16>
    %c1_118 = arith.constant 1 : index
    %c0_119 = arith.constant 0 : index
    %c0_120 = arith.constant 0 : index
    %339 = vector.load %arg10[%c1_118, %c0_119, %c0_120] : memref<2x1x32xf32, #tpu.memory_space<vmem>>, vector<1x1x32xf32>
    %340 = vector.shape_cast %339 : vector<1x1x32xf32> to vector<1x32xf32>
    %341 = arith.truncf %332 : vector<8x32xf32> to vector<8x32xbf16>
    %cst_121 = arith.constant dense<0.000000e+00> : vector<8x64xf32>
    %342 = tpu.matmul %341, %334, %cst_121 {dimension_numbers = #tpu.dot_dimension_numbers<[1], [0], [0], [1], [0, 0, 1, 1], [], []>} : vector<8x32xbf16>, vector<32x64xbf16>, vector<8x64xf32> -> vector<8x64xf32>
    %343 = vector.broadcast %336 : vector<1x64xf32> to vector<8x64xf32>
    %344 = arith.addf %342, %343 : vector<8x64xf32>
    %cst_122 = arith.constant 0.000000e+00 : f32
    %345 = vector.broadcast %cst_122 : f32 to vector<8x64xf32>
    %346 = arith.maximumf %344, %345 : vector<8x64xf32>
    %347 = arith.truncf %346 : vector<8x64xf32> to vector<8x64xbf16>
    %cst_123 = arith.constant dense<0.000000e+00> : vector<8x32xf32>
    %348 = tpu.matmul %347, %338, %cst_123 {dimension_numbers = #tpu.dot_dimension_numbers<[1], [0], [0], [1], [0, 0, 1, 1], [], []>} : vector<8x64xbf16>, vector<64x32xbf16>, vector<8x32xf32> -> vector<8x32xf32>
    %349 = vector.broadcast %340 : vector<1x32xf32> to vector<8x32xf32>
    %350 = arith.addf %348, %349 : vector<8x32xf32>
    %351 = arith.addf %332, %350 : vector<8x32xf32>
    %352 = vector.extract_strided_slice %193 {offsets = [1, 0], sizes = [1, 32], strides = [1, 1]} : vector<2x32xf32> to vector<1x32xf32>
    %353 = vector.extract_strided_slice %195 {offsets = [1, 0], sizes = [1, 32], strides = [1, 1]} : vector<2x32xf32> to vector<1x32xf32>
    %cst_124 = arith.constant dense<0.000000e+00> : vector<8xf32>
    %354 = vector.multi_reduction <add>, %351, %cst_124 [1] : vector<8x32xf32> to vector<8xf32>
    %355 = vector.shape_cast %354 : vector<8xf32> to vector<8x1xf32>
    %cst_125 = arith.constant 3.200000e+01 : f32
    %356 = vector.broadcast %cst_125 : f32 to vector<8x1xf32>
    %357 = arith.divf %355, %356 : vector<8x1xf32>
    %358 = arith.mulf %351, %351 : vector<8x32xf32>
    %cst_126 = arith.constant dense<0.000000e+00> : vector<8xf32>
    %359 = vector.multi_reduction <add>, %358, %cst_126 [1] : vector<8x32xf32> to vector<8xf32>
    %360 = vector.shape_cast %359 : vector<8xf32> to vector<8x1xf32>
    %cst_127 = arith.constant 3.200000e+01 : f32
    %361 = vector.broadcast %cst_127 : f32 to vector<8x1xf32>
    %362 = arith.divf %360, %361 : vector<8x1xf32>
    %363 = arith.mulf %357, %357 : vector<8x1xf32>
    %364 = arith.subf %362, %363 : vector<8x1xf32>
    %365 = vector.broadcast %357 : vector<8x1xf32> to vector<8x32xf32>
    %366 = arith.subf %351, %365 : vector<8x32xf32>
    %cst_128 = arith.constant 9.99999974E-6 : f32
    %367 = vector.broadcast %cst_128 : f32 to vector<8x1xf32>
    %368 = arith.addf %364, %367 : vector<8x1xf32>
    %369 = math.rsqrt %368 : vector<8x1xf32>
    %370 = vector.broadcast %369 : vector<8x1xf32> to vector<8x32xf32>
    %371 = arith.mulf %366, %370 : vector<8x32xf32>
    %372 = vector.broadcast %352 : vector<1x32xf32> to vector<8x32xf32>
    %373 = arith.mulf %371, %372 : vector<8x32xf32>
    %374 = vector.broadcast %353 : vector<1x32xf32> to vector<8x32xf32>
    %375 = arith.addf %373, %374 : vector<8x32xf32>
    %c0_129 = arith.constant 0 : index
    %c0_130 = arith.constant 0 : index
    %c0_131 = arith.constant 0 : index
    %376 = vector.load %arg22[%c0_129, %c0_130, %c0_131] : memref<2x3x32xf32, #tpu.memory_space<vmem>>, vector<1x3x32xf32>
    %377 = vector.shape_cast %376 : vector<1x3x32xf32> to vector<3x32xf32>
    %c0_132 = arith.constant 0 : index
    %c0_133 = arith.constant 0 : index
    %c0_134 = arith.constant 0 : index
    %378 = vector.load %arg23[%c0_132, %c0_133, %c0_134] : memref<2x3x32xf32, #tpu.memory_space<vmem>>, vector<1x3x32xf32>
    %379 = vector.shape_cast %378 : vector<1x3x32xf32> to vector<3x32xf32>
    %c0_135 = arith.constant 0 : index
    %c0_136 = arith.constant 0 : index
    %c0_137 = arith.constant 0 : index
    %380 = vector.load %arg13[%c0_135, %c0_136, %c0_137] : memref<2x32x96xbf16, #tpu.memory_space<vmem>>, vector<1x32x96xbf16>
    %381 = vector.shape_cast %380 : vector<1x32x96xbf16> to vector<32x96xbf16>
    %c0_138 = arith.constant 0 : index
    %c0_139 = arith.constant 0 : index
    %c0_140 = arith.constant 0 : index
    %382 = vector.load %arg14[%c0_138, %c0_139, %c0_140] : memref<2x32x32xbf16, #tpu.memory_space<vmem>>, vector<1x32x32xbf16>
    %383 = vector.shape_cast %382 : vector<1x32x32xbf16> to vector<32x32xbf16>
    %384 = arith.truncf %3 : vector<8x32xf32> to vector<8x32xbf16>
    %cst_141 = arith.constant dense<0.000000e+00> : vector<8x96xf32>
    %385 = tpu.matmul %384, %381, %cst_141 {dimension_numbers = #tpu.dot_dimension_numbers<[1], [0], [0], [1], [0, 0, 1, 1], [], []>} : vector<8x32xbf16>, vector<32x96xbf16>, vector<8x96xf32> -> vector<8x96xf32>
    %386 = vector.extract_strided_slice %385 {offsets = [0, 0], sizes = [8, 32], strides = [1, 1]} : vector<8x96xf32> to vector<8x32xf32>
    %cst_142 = arith.constant 0.353553385 : f32
    %387 = vector.broadcast %cst_142 : f32 to vector<8x32xf32>
    %388 = arith.mulf %386, %387 : vector<8x32xf32>
    %389 = vector.extract_strided_slice %385 {offsets = [0, 32], sizes = [8, 32], strides = [1, 1]} : vector<8x96xf32> to vector<8x32xf32>
    %390 = vector.extract_strided_slice %385 {offsets = [0, 64], sizes = [8, 32], strides = [1, 1]} : vector<8x96xf32> to vector<8x32xf32>
    %cst_143 = arith.constant 0.000000e+00 : f32
    %391 = vector.broadcast %cst_143 : f32 to vector<8x32xf32>
    %392 = vector.extract_strided_slice %388 {offsets = [0, 0], sizes = [8, 8], strides = [1, 1]} : vector<8x32xf32> to vector<8x8xf32>
    %393 = vector.extract_strided_slice %389 {offsets = [0, 0], sizes = [8, 8], strides = [1, 1]} : vector<8x32xf32> to vector<8x8xf32>
    %394 = arith.truncf %392 : vector<8x8xf32> to vector<8x8xbf16>
    %395 = arith.truncf %393 : vector<8x8xf32> to vector<8x8xbf16>
    %cst_144 = arith.constant dense<0.000000e+00> : vector<8x8xf32>
    %396 = tpu.matmul %394, %395, %cst_144 {dimension_numbers = #tpu.dot_dimension_numbers<[1], [1], [0], [0], [0, 0, 1, 0], [], []>} : vector<8x8xbf16>, vector<8x8xbf16>, vector<8x8xf32> -> vector<8x8xf32>
    %397 = arith.addf %396, %7 : vector<8x8xf32>
    %cst_145 = arith.constant dense<0xFF800000> : vector<8xf32>
    %398 = vector.multi_reduction <maximumf>, %397, %cst_145 [1] : vector<8x8xf32> to vector<8xf32>
    %399 = vector.shape_cast %398 : vector<8xf32> to vector<8x1xf32>
    %400 = vector.broadcast %399 : vector<8x1xf32> to vector<8x8xf32>
    %401 = arith.subf %397, %400 : vector<8x8xf32>
    %402 = math.exp %401 : vector<8x8xf32>
    %cst_146 = arith.constant dense<0.000000e+00> : vector<8xf32>
    %403 = vector.multi_reduction <add>, %402, %cst_146 [1] : vector<8x8xf32> to vector<8xf32>
    %404 = vector.shape_cast %403 : vector<8xf32> to vector<8x1xf32>
    %405 = tpu.reciprocal %404 {approx = true} : vector<8x1xf32> -> vector<8x1xf32>
    %406 = vector.broadcast %405 : vector<8x1xf32> to vector<8x8xf32>
    %407 = arith.mulf %402, %406 : vector<8x8xf32>
    %408 = vector.extract_strided_slice %390 {offsets = [0, 0], sizes = [8, 8], strides = [1, 1]} : vector<8x32xf32> to vector<8x8xf32>
    %409 = arith.truncf %407 : vector<8x8xf32> to vector<8x8xbf16>
    %410 = arith.truncf %408 : vector<8x8xf32> to vector<8x8xbf16>
    %cst_147 = arith.constant dense<0.000000e+00> : vector<8x8xf32>
    %411 = tpu.matmul %409, %410, %cst_147 {dimension_numbers = #tpu.dot_dimension_numbers<[1], [0], [0], [1], [0, 0, 1, 1], [], []>} : vector<8x8xbf16>, vector<8x8xbf16>, vector<8x8xf32> -> vector<8x8xf32>
    %412 = vector.extract_strided_slice %383 {offsets = [0, 0], sizes = [8, 32], strides = [1, 1]} : vector<32x32xbf16> to vector<8x32xbf16>
    %413 = arith.truncf %411 : vector<8x8xf32> to vector<8x8xbf16>
    %cst_148 = arith.constant dense<0.000000e+00> : vector<8x32xf32>
    %414 = tpu.matmul %413, %412, %cst_148 {dimension_numbers = #tpu.dot_dimension_numbers<[1], [0], [0], [1], [0, 0, 1, 1], [], []>} : vector<8x8xbf16>, vector<8x32xbf16>, vector<8x32xf32> -> vector<8x32xf32>
    %415 = arith.addf %391, %414 : vector<8x32xf32>
    %416 = vector.extract_strided_slice %388 {offsets = [0, 8], sizes = [8, 8], strides = [1, 1]} : vector<8x32xf32> to vector<8x8xf32>
    %417 = vector.extract_strided_slice %389 {offsets = [0, 8], sizes = [8, 8], strides = [1, 1]} : vector<8x32xf32> to vector<8x8xf32>
    %418 = arith.truncf %416 : vector<8x8xf32> to vector<8x8xbf16>
    %419 = arith.truncf %417 : vector<8x8xf32> to vector<8x8xbf16>
    %cst_149 = arith.constant dense<0.000000e+00> : vector<8x8xf32>
    %420 = tpu.matmul %418, %419, %cst_149 {dimension_numbers = #tpu.dot_dimension_numbers<[1], [1], [0], [0], [0, 0, 1, 0], [], []>} : vector<8x8xbf16>, vector<8x8xbf16>, vector<8x8xf32> -> vector<8x8xf32>
    %421 = arith.addf %420, %7 : vector<8x8xf32>
    %cst_150 = arith.constant dense<0xFF800000> : vector<8xf32>
    %422 = vector.multi_reduction <maximumf>, %421, %cst_150 [1] : vector<8x8xf32> to vector<8xf32>
    %423 = vector.shape_cast %422 : vector<8xf32> to vector<8x1xf32>
    %424 = vector.broadcast %423 : vector<8x1xf32> to vector<8x8xf32>
    %425 = arith.subf %421, %424 : vector<8x8xf32>
    %426 = math.exp %425 : vector<8x8xf32>
    %cst_151 = arith.constant dense<0.000000e+00> : vector<8xf32>
    %427 = vector.multi_reduction <add>, %426, %cst_151 [1] : vector<8x8xf32> to vector<8xf32>
    %428 = vector.shape_cast %427 : vector<8xf32> to vector<8x1xf32>
    %429 = tpu.reciprocal %428 {approx = true} : vector<8x1xf32> -> vector<8x1xf32>
    %430 = vector.broadcast %429 : vector<8x1xf32> to vector<8x8xf32>
    %431 = arith.mulf %426, %430 : vector<8x8xf32>
    %432 = vector.extract_strided_slice %390 {offsets = [0, 8], sizes = [8, 8], strides = [1, 1]} : vector<8x32xf32> to vector<8x8xf32>
    %433 = arith.truncf %431 : vector<8x8xf32> to vector<8x8xbf16>
    %434 = arith.truncf %432 : vector<8x8xf32> to vector<8x8xbf16>
    %cst_152 = arith.constant dense<0.000000e+00> : vector<8x8xf32>
    %435 = tpu.matmul %433, %434, %cst_152 {dimension_numbers = #tpu.dot_dimension_numbers<[1], [0], [0], [1], [0, 0, 1, 1], [], []>} : vector<8x8xbf16>, vector<8x8xbf16>, vector<8x8xf32> -> vector<8x8xf32>
    %436 = vector.extract_strided_slice %383 {offsets = [8, 0], sizes = [8, 32], strides = [1, 1]} : vector<32x32xbf16> to vector<8x32xbf16>
    %437 = arith.truncf %435 : vector<8x8xf32> to vector<8x8xbf16>
    %cst_153 = arith.constant dense<0.000000e+00> : vector<8x32xf32>
    %438 = tpu.matmul %437, %436, %cst_153 {dimension_numbers = #tpu.dot_dimension_numbers<[1], [0], [0], [1], [0, 0, 1, 1], [], []>} : vector<8x8xbf16>, vector<8x32xbf16>, vector<8x32xf32> -> vector<8x32xf32>
    %439 = arith.addf %415, %438 : vector<8x32xf32>
    %440 = vector.extract_strided_slice %388 {offsets = [0, 16], sizes = [8, 8], strides = [1, 1]} : vector<8x32xf32> to vector<8x8xf32>
    %441 = vector.extract_strided_slice %389 {offsets = [0, 16], sizes = [8, 8], strides = [1, 1]} : vector<8x32xf32> to vector<8x8xf32>
    %442 = arith.truncf %440 : vector<8x8xf32> to vector<8x8xbf16>
    %443 = arith.truncf %441 : vector<8x8xf32> to vector<8x8xbf16>
    %cst_154 = arith.constant dense<0.000000e+00> : vector<8x8xf32>
    %444 = tpu.matmul %442, %443, %cst_154 {dimension_numbers = #tpu.dot_dimension_numbers<[1], [1], [0], [0], [0, 0, 1, 0], [], []>} : vector<8x8xbf16>, vector<8x8xbf16>, vector<8x8xf32> -> vector<8x8xf32>
    %445 = arith.addf %444, %7 : vector<8x8xf32>
    %cst_155 = arith.constant dense<0xFF800000> : vector<8xf32>
    %446 = vector.multi_reduction <maximumf>, %445, %cst_155 [1] : vector<8x8xf32> to vector<8xf32>
    %447 = vector.shape_cast %446 : vector<8xf32> to vector<8x1xf32>
    %448 = vector.broadcast %447 : vector<8x1xf32> to vector<8x8xf32>
    %449 = arith.subf %445, %448 : vector<8x8xf32>
    %450 = math.exp %449 : vector<8x8xf32>
    %cst_156 = arith.constant dense<0.000000e+00> : vector<8xf32>
    %451 = vector.multi_reduction <add>, %450, %cst_156 [1] : vector<8x8xf32> to vector<8xf32>
    %452 = vector.shape_cast %451 : vector<8xf32> to vector<8x1xf32>
    %453 = tpu.reciprocal %452 {approx = true} : vector<8x1xf32> -> vector<8x1xf32>
    %454 = vector.broadcast %453 : vector<8x1xf32> to vector<8x8xf32>
    %455 = arith.mulf %450, %454 : vector<8x8xf32>
    %456 = vector.extract_strided_slice %390 {offsets = [0, 16], sizes = [8, 8], strides = [1, 1]} : vector<8x32xf32> to vector<8x8xf32>
    %457 = arith.truncf %455 : vector<8x8xf32> to vector<8x8xbf16>
    %458 = arith.truncf %456 : vector<8x8xf32> to vector<8x8xbf16>
    %cst_157 = arith.constant dense<0.000000e+00> : vector<8x8xf32>
    %459 = tpu.matmul %457, %458, %cst_157 {dimension_numbers = #tpu.dot_dimension_numbers<[1], [0], [0], [1], [0, 0, 1, 1], [], []>} : vector<8x8xbf16>, vector<8x8xbf16>, vector<8x8xf32> -> vector<8x8xf32>
    %460 = vector.extract_strided_slice %383 {offsets = [16, 0], sizes = [8, 32], strides = [1, 1]} : vector<32x32xbf16> to vector<8x32xbf16>
    %461 = arith.truncf %459 : vector<8x8xf32> to vector<8x8xbf16>
    %cst_158 = arith.constant dense<0.000000e+00> : vector<8x32xf32>
    %462 = tpu.matmul %461, %460, %cst_158 {dimension_numbers = #tpu.dot_dimension_numbers<[1], [0], [0], [1], [0, 0, 1, 1], [], []>} : vector<8x8xbf16>, vector<8x32xbf16>, vector<8x32xf32> -> vector<8x32xf32>
    %463 = arith.addf %439, %462 : vector<8x32xf32>
    %464 = vector.extract_strided_slice %388 {offsets = [0, 24], sizes = [8, 8], strides = [1, 1]} : vector<8x32xf32> to vector<8x8xf32>
    %465 = vector.extract_strided_slice %389 {offsets = [0, 24], sizes = [8, 8], strides = [1, 1]} : vector<8x32xf32> to vector<8x8xf32>
    %466 = arith.truncf %464 : vector<8x8xf32> to vector<8x8xbf16>
    %467 = arith.truncf %465 : vector<8x8xf32> to vector<8x8xbf16>
    %cst_159 = arith.constant dense<0.000000e+00> : vector<8x8xf32>
    %468 = tpu.matmul %466, %467, %cst_159 {dimension_numbers = #tpu.dot_dimension_numbers<[1], [1], [0], [0], [0, 0, 1, 0], [], []>} : vector<8x8xbf16>, vector<8x8xbf16>, vector<8x8xf32> -> vector<8x8xf32>
    %469 = arith.addf %468, %7 : vector<8x8xf32>
    %cst_160 = arith.constant dense<0xFF800000> : vector<8xf32>
    %470 = vector.multi_reduction <maximumf>, %469, %cst_160 [1] : vector<8x8xf32> to vector<8xf32>
    %471 = vector.shape_cast %470 : vector<8xf32> to vector<8x1xf32>
    %472 = vector.broadcast %471 : vector<8x1xf32> to vector<8x8xf32>
    %473 = arith.subf %469, %472 : vector<8x8xf32>
    %474 = math.exp %473 : vector<8x8xf32>
    %cst_161 = arith.constant dense<0.000000e+00> : vector<8xf32>
    %475 = vector.multi_reduction <add>, %474, %cst_161 [1] : vector<8x8xf32> to vector<8xf32>
    %476 = vector.shape_cast %475 : vector<8xf32> to vector<8x1xf32>
    %477 = tpu.reciprocal %476 {approx = true} : vector<8x1xf32> -> vector<8x1xf32>
    %478 = vector.broadcast %477 : vector<8x1xf32> to vector<8x8xf32>
    %479 = arith.mulf %474, %478 : vector<8x8xf32>
    %480 = vector.extract_strided_slice %390 {offsets = [0, 24], sizes = [8, 8], strides = [1, 1]} : vector<8x32xf32> to vector<8x8xf32>
    %481 = arith.truncf %479 : vector<8x8xf32> to vector<8x8xbf16>
    %482 = arith.truncf %480 : vector<8x8xf32> to vector<8x8xbf16>
    %cst_162 = arith.constant dense<0.000000e+00> : vector<8x8xf32>
    %483 = tpu.matmul %481, %482, %cst_162 {dimension_numbers = #tpu.dot_dimension_numbers<[1], [0], [0], [1], [0, 0, 1, 1], [], []>} : vector<8x8xbf16>, vector<8x8xbf16>, vector<8x8xf32> -> vector<8x8xf32>
    %484 = vector.extract_strided_slice %383 {offsets = [24, 0], sizes = [8, 32], strides = [1, 1]} : vector<32x32xbf16> to vector<8x32xbf16>
    %485 = arith.truncf %483 : vector<8x8xf32> to vector<8x8xbf16>
    %cst_163 = arith.constant dense<0.000000e+00> : vector<8x32xf32>
    %486 = tpu.matmul %485, %484, %cst_163 {dimension_numbers = #tpu.dot_dimension_numbers<[1], [0], [0], [1], [0, 0, 1, 1], [], []>} : vector<8x8xbf16>, vector<8x32xbf16>, vector<8x32xf32> -> vector<8x32xf32>
    %487 = arith.addf %463, %486 : vector<8x32xf32>
    %488 = arith.addf %3, %487 : vector<8x32xf32>
    %489 = vector.extract_strided_slice %377 {offsets = [0, 0], sizes = [1, 32], strides = [1, 1]} : vector<3x32xf32> to vector<1x32xf32>
    %490 = vector.extract_strided_slice %379 {offsets = [0, 0], sizes = [1, 32], strides = [1, 1]} : vector<3x32xf32> to vector<1x32xf32>
    %cst_164 = arith.constant dense<0.000000e+00> : vector<8xf32>
    %491 = vector.multi_reduction <add>, %488, %cst_164 [1] : vector<8x32xf32> to vector<8xf32>
    %492 = vector.shape_cast %491 : vector<8xf32> to vector<8x1xf32>
    %cst_165 = arith.constant 3.200000e+01 : f32
    %493 = vector.broadcast %cst_165 : f32 to vector<8x1xf32>
    %494 = arith.divf %492, %493 : vector<8x1xf32>
    %495 = arith.mulf %488, %488 : vector<8x32xf32>
    %cst_166 = arith.constant dense<0.000000e+00> : vector<8xf32>
    %496 = vector.multi_reduction <add>, %495, %cst_166 [1] : vector<8x32xf32> to vector<8xf32>
    %497 = vector.shape_cast %496 : vector<8xf32> to vector<8x1xf32>
    %cst_167 = arith.constant 3.200000e+01 : f32
    %498 = vector.broadcast %cst_167 : f32 to vector<8x1xf32>
    %499 = arith.divf %497, %498 : vector<8x1xf32>
    %500 = arith.mulf %494, %494 : vector<8x1xf32>
    %501 = arith.subf %499, %500 : vector<8x1xf32>
    %502 = vector.broadcast %494 : vector<8x1xf32> to vector<8x32xf32>
    %503 = arith.subf %488, %502 : vector<8x32xf32>
    %cst_168 = arith.constant 9.99999974E-6 : f32
    %504 = vector.broadcast %cst_168 : f32 to vector<8x1xf32>
    %505 = arith.addf %501, %504 : vector<8x1xf32>
    %506 = math.rsqrt %505 : vector<8x1xf32>
    %507 = vector.broadcast %506 : vector<8x1xf32> to vector<8x32xf32>
    %508 = arith.mulf %503, %507 : vector<8x32xf32>
    %509 = vector.broadcast %489 : vector<1x32xf32> to vector<8x32xf32>
    %510 = arith.mulf %508, %509 : vector<8x32xf32>
    %511 = vector.broadcast %490 : vector<1x32xf32> to vector<8x32xf32>
    %512 = arith.addf %510, %511 : vector<8x32xf32>
    %c0_169 = arith.constant 0 : index
    %c0_170 = arith.constant 0 : index
    %c0_171 = arith.constant 0 : index
    %513 = vector.load %arg15[%c0_169, %c0_170, %c0_171] : memref<2x32x32xbf16, #tpu.memory_space<vmem>>, vector<1x32x32xbf16>
    %514 = vector.shape_cast %513 : vector<1x32x32xbf16> to vector<32x32xbf16>
    %c0_172 = arith.constant 0 : index
    %c0_173 = arith.constant 0 : index
    %c0_174 = arith.constant 0 : index
    %515 = vector.load %arg16[%c0_172, %c0_173, %c0_174] : memref<2x32x64xbf16, #tpu.memory_space<vmem>>, vector<1x32x64xbf16>
    %516 = vector.shape_cast %515 : vector<1x32x64xbf16> to vector<32x64xbf16>
    %c0_175 = arith.constant 0 : index
    %c0_176 = arith.constant 0 : index
    %c0_177 = arith.constant 0 : index
    %517 = vector.load %arg17[%c0_175, %c0_176, %c0_177] : memref<2x32x32xbf16, #tpu.memory_space<vmem>>, vector<1x32x32xbf16>
    %518 = vector.shape_cast %517 : vector<1x32x32xbf16> to vector<32x32xbf16>
    %519 = arith.truncf %512 : vector<8x32xf32> to vector<8x32xbf16>
    %cst_178 = arith.constant dense<0.000000e+00> : vector<8x32xf32>
    %520 = tpu.matmul %519, %514, %cst_178 {dimension_numbers = #tpu.dot_dimension_numbers<[1], [0], [0], [1], [0, 0, 1, 1], [], []>} : vector<8x32xbf16>, vector<32x32xbf16>, vector<8x32xf32> -> vector<8x32xf32>
    %cst_179 = arith.constant 0.353553385 : f32
    %521 = vector.broadcast %cst_179 : f32 to vector<8x32xf32>
    %522 = arith.mulf %520, %521 : vector<8x32xf32>
    %523 = arith.truncf %375 : vector<8x32xf32> to vector<8x32xbf16>
    %cst_180 = arith.constant dense<0.000000e+00> : vector<8x64xf32>
    %524 = tpu.matmul %523, %516, %cst_180 {dimension_numbers = #tpu.dot_dimension_numbers<[1], [0], [0], [1], [0, 0, 1, 1], [], []>} : vector<8x32xbf16>, vector<32x64xbf16>, vector<8x64xf32> -> vector<8x64xf32>
    %525 = vector.extract_strided_slice %524 {offsets = [0, 0], sizes = [8, 32], strides = [1, 1]} : vector<8x64xf32> to vector<8x32xf32>
    %526 = vector.extract_strided_slice %524 {offsets = [0, 32], sizes = [8, 32], strides = [1, 1]} : vector<8x64xf32> to vector<8x32xf32>
    %cst_181 = arith.constant 0.000000e+00 : f32
    %527 = vector.broadcast %cst_181 : f32 to vector<8x32xf32>
    %528 = vector.extract_strided_slice %522 {offsets = [0, 0], sizes = [8, 8], strides = [1, 1]} : vector<8x32xf32> to vector<8x8xf32>
    %529 = vector.extract_strided_slice %525 {offsets = [0, 0], sizes = [8, 8], strides = [1, 1]} : vector<8x32xf32> to vector<8x8xf32>
    %530 = arith.truncf %528 : vector<8x8xf32> to vector<8x8xbf16>
    %531 = arith.truncf %529 : vector<8x8xf32> to vector<8x8xbf16>
    %cst_182 = arith.constant dense<0.000000e+00> : vector<8x8xf32>
    %532 = tpu.matmul %530, %531, %cst_182 {dimension_numbers = #tpu.dot_dimension_numbers<[1], [1], [0], [0], [0, 0, 1, 0], [], []>} : vector<8x8xbf16>, vector<8x8xbf16>, vector<8x8xf32> -> vector<8x8xf32>
    %533 = vector.broadcast %5 : vector<1x8xf32> to vector<8x8xf32>
    %534 = arith.addf %532, %533 : vector<8x8xf32>
    %cst_183 = arith.constant dense<0xFF800000> : vector<8xf32>
    %535 = vector.multi_reduction <maximumf>, %534, %cst_183 [1] : vector<8x8xf32> to vector<8xf32>
    %536 = vector.shape_cast %535 : vector<8xf32> to vector<8x1xf32>
    %537 = vector.broadcast %536 : vector<8x1xf32> to vector<8x8xf32>
    %538 = arith.subf %534, %537 : vector<8x8xf32>
    %539 = math.exp %538 : vector<8x8xf32>
    %cst_184 = arith.constant dense<0.000000e+00> : vector<8xf32>
    %540 = vector.multi_reduction <add>, %539, %cst_184 [1] : vector<8x8xf32> to vector<8xf32>
    %541 = vector.shape_cast %540 : vector<8xf32> to vector<8x1xf32>
    %542 = tpu.reciprocal %541 {approx = true} : vector<8x1xf32> -> vector<8x1xf32>
    %543 = vector.broadcast %542 : vector<8x1xf32> to vector<8x8xf32>
    %544 = arith.mulf %539, %543 : vector<8x8xf32>
    %545 = vector.extract_strided_slice %526 {offsets = [0, 0], sizes = [8, 8], strides = [1, 1]} : vector<8x32xf32> to vector<8x8xf32>
    %546 = arith.truncf %544 : vector<8x8xf32> to vector<8x8xbf16>
    %547 = arith.truncf %545 : vector<8x8xf32> to vector<8x8xbf16>
    %cst_185 = arith.constant dense<0.000000e+00> : vector<8x8xf32>
    %548 = tpu.matmul %546, %547, %cst_185 {dimension_numbers = #tpu.dot_dimension_numbers<[1], [0], [0], [1], [0, 0, 1, 1], [], []>} : vector<8x8xbf16>, vector<8x8xbf16>, vector<8x8xf32> -> vector<8x8xf32>
    %549 = vector.extract_strided_slice %518 {offsets = [0, 0], sizes = [8, 32], strides = [1, 1]} : vector<32x32xbf16> to vector<8x32xbf16>
    %550 = arith.truncf %548 : vector<8x8xf32> to vector<8x8xbf16>
    %cst_186 = arith.constant dense<0.000000e+00> : vector<8x32xf32>
    %551 = tpu.matmul %550, %549, %cst_186 {dimension_numbers = #tpu.dot_dimension_numbers<[1], [0], [0], [1], [0, 0, 1, 1], [], []>} : vector<8x8xbf16>, vector<8x32xbf16>, vector<8x32xf32> -> vector<8x32xf32>
    %552 = arith.addf %527, %551 : vector<8x32xf32>
    %553 = vector.extract_strided_slice %522 {offsets = [0, 8], sizes = [8, 8], strides = [1, 1]} : vector<8x32xf32> to vector<8x8xf32>
    %554 = vector.extract_strided_slice %525 {offsets = [0, 8], sizes = [8, 8], strides = [1, 1]} : vector<8x32xf32> to vector<8x8xf32>
    %555 = arith.truncf %553 : vector<8x8xf32> to vector<8x8xbf16>
    %556 = arith.truncf %554 : vector<8x8xf32> to vector<8x8xbf16>
    %cst_187 = arith.constant dense<0.000000e+00> : vector<8x8xf32>
    %557 = tpu.matmul %555, %556, %cst_187 {dimension_numbers = #tpu.dot_dimension_numbers<[1], [1], [0], [0], [0, 0, 1, 0], [], []>} : vector<8x8xbf16>, vector<8x8xbf16>, vector<8x8xf32> -> vector<8x8xf32>
    %558 = vector.broadcast %5 : vector<1x8xf32> to vector<8x8xf32>
    %559 = arith.addf %557, %558 : vector<8x8xf32>
    %cst_188 = arith.constant dense<0xFF800000> : vector<8xf32>
    %560 = vector.multi_reduction <maximumf>, %559, %cst_188 [1] : vector<8x8xf32> to vector<8xf32>
    %561 = vector.shape_cast %560 : vector<8xf32> to vector<8x1xf32>
    %562 = vector.broadcast %561 : vector<8x1xf32> to vector<8x8xf32>
    %563 = arith.subf %559, %562 : vector<8x8xf32>
    %564 = math.exp %563 : vector<8x8xf32>
    %cst_189 = arith.constant dense<0.000000e+00> : vector<8xf32>
    %565 = vector.multi_reduction <add>, %564, %cst_189 [1] : vector<8x8xf32> to vector<8xf32>
    %566 = vector.shape_cast %565 : vector<8xf32> to vector<8x1xf32>
    %567 = tpu.reciprocal %566 {approx = true} : vector<8x1xf32> -> vector<8x1xf32>
    %568 = vector.broadcast %567 : vector<8x1xf32> to vector<8x8xf32>
    %569 = arith.mulf %564, %568 : vector<8x8xf32>
    %570 = vector.extract_strided_slice %526 {offsets = [0, 8], sizes = [8, 8], strides = [1, 1]} : vector<8x32xf32> to vector<8x8xf32>
    %571 = arith.truncf %569 : vector<8x8xf32> to vector<8x8xbf16>
    %572 = arith.truncf %570 : vector<8x8xf32> to vector<8x8xbf16>
    %cst_190 = arith.constant dense<0.000000e+00> : vector<8x8xf32>
    %573 = tpu.matmul %571, %572, %cst_190 {dimension_numbers = #tpu.dot_dimension_numbers<[1], [0], [0], [1], [0, 0, 1, 1], [], []>} : vector<8x8xbf16>, vector<8x8xbf16>, vector<8x8xf32> -> vector<8x8xf32>
    %574 = vector.extract_strided_slice %518 {offsets = [8, 0], sizes = [8, 32], strides = [1, 1]} : vector<32x32xbf16> to vector<8x32xbf16>
    %575 = arith.truncf %573 : vector<8x8xf32> to vector<8x8xbf16>
    %cst_191 = arith.constant dense<0.000000e+00> : vector<8x32xf32>
    %576 = tpu.matmul %575, %574, %cst_191 {dimension_numbers = #tpu.dot_dimension_numbers<[1], [0], [0], [1], [0, 0, 1, 1], [], []>} : vector<8x8xbf16>, vector<8x32xbf16>, vector<8x32xf32> -> vector<8x32xf32>
    %577 = arith.addf %552, %576 : vector<8x32xf32>
    %578 = vector.extract_strided_slice %522 {offsets = [0, 16], sizes = [8, 8], strides = [1, 1]} : vector<8x32xf32> to vector<8x8xf32>
    %579 = vector.extract_strided_slice %525 {offsets = [0, 16], sizes = [8, 8], strides = [1, 1]} : vector<8x32xf32> to vector<8x8xf32>
    %580 = arith.truncf %578 : vector<8x8xf32> to vector<8x8xbf16>
    %581 = arith.truncf %579 : vector<8x8xf32> to vector<8x8xbf16>
    %cst_192 = arith.constant dense<0.000000e+00> : vector<8x8xf32>
    %582 = tpu.matmul %580, %581, %cst_192 {dimension_numbers = #tpu.dot_dimension_numbers<[1], [1], [0], [0], [0, 0, 1, 0], [], []>} : vector<8x8xbf16>, vector<8x8xbf16>, vector<8x8xf32> -> vector<8x8xf32>
    %583 = vector.broadcast %5 : vector<1x8xf32> to vector<8x8xf32>
    %584 = arith.addf %582, %583 : vector<8x8xf32>
    %cst_193 = arith.constant dense<0xFF800000> : vector<8xf32>
    %585 = vector.multi_reduction <maximumf>, %584, %cst_193 [1] : vector<8x8xf32> to vector<8xf32>
    %586 = vector.shape_cast %585 : vector<8xf32> to vector<8x1xf32>
    %587 = vector.broadcast %586 : vector<8x1xf32> to vector<8x8xf32>
    %588 = arith.subf %584, %587 : vector<8x8xf32>
    %589 = math.exp %588 : vector<8x8xf32>
    %cst_194 = arith.constant dense<0.000000e+00> : vector<8xf32>
    %590 = vector.multi_reduction <add>, %589, %cst_194 [1] : vector<8x8xf32> to vector<8xf32>
    %591 = vector.shape_cast %590 : vector<8xf32> to vector<8x1xf32>
    %592 = tpu.reciprocal %591 {approx = true} : vector<8x1xf32> -> vector<8x1xf32>
    %593 = vector.broadcast %592 : vector<8x1xf32> to vector<8x8xf32>
    %594 = arith.mulf %589, %593 : vector<8x8xf32>
    %595 = vector.extract_strided_slice %526 {offsets = [0, 16], sizes = [8, 8], strides = [1, 1]} : vector<8x32xf32> to vector<8x8xf32>
    %596 = arith.truncf %594 : vector<8x8xf32> to vector<8x8xbf16>
    %597 = arith.truncf %595 : vector<8x8xf32> to vector<8x8xbf16>
    %cst_195 = arith.constant dense<0.000000e+00> : vector<8x8xf32>
    %598 = tpu.matmul %596, %597, %cst_195 {dimension_numbers = #tpu.dot_dimension_numbers<[1], [0], [0], [1], [0, 0, 1, 1], [], []>} : vector<8x8xbf16>, vector<8x8xbf16>, vector<8x8xf32> -> vector<8x8xf32>
    %599 = vector.extract_strided_slice %518 {offsets = [16, 0], sizes = [8, 32], strides = [1, 1]} : vector<32x32xbf16> to vector<8x32xbf16>
    %600 = arith.truncf %598 : vector<8x8xf32> to vector<8x8xbf16>
    %cst_196 = arith.constant dense<0.000000e+00> : vector<8x32xf32>
    %601 = tpu.matmul %600, %599, %cst_196 {dimension_numbers = #tpu.dot_dimension_numbers<[1], [0], [0], [1], [0, 0, 1, 1], [], []>} : vector<8x8xbf16>, vector<8x32xbf16>, vector<8x32xf32> -> vector<8x32xf32>
    %602 = arith.addf %577, %601 : vector<8x32xf32>
    %603 = vector.extract_strided_slice %522 {offsets = [0, 24], sizes = [8, 8], strides = [1, 1]} : vector<8x32xf32> to vector<8x8xf32>
    %604 = vector.extract_strided_slice %525 {offsets = [0, 24], sizes = [8, 8], strides = [1, 1]} : vector<8x32xf32> to vector<8x8xf32>
    %605 = arith.truncf %603 : vector<8x8xf32> to vector<8x8xbf16>
    %606 = arith.truncf %604 : vector<8x8xf32> to vector<8x8xbf16>
    %cst_197 = arith.constant dense<0.000000e+00> : vector<8x8xf32>
    %607 = tpu.matmul %605, %606, %cst_197 {dimension_numbers = #tpu.dot_dimension_numbers<[1], [1], [0], [0], [0, 0, 1, 0], [], []>} : vector<8x8xbf16>, vector<8x8xbf16>, vector<8x8xf32> -> vector<8x8xf32>
    %608 = vector.broadcast %5 : vector<1x8xf32> to vector<8x8xf32>
    %609 = arith.addf %607, %608 : vector<8x8xf32>
    %cst_198 = arith.constant dense<0xFF800000> : vector<8xf32>
    %610 = vector.multi_reduction <maximumf>, %609, %cst_198 [1] : vector<8x8xf32> to vector<8xf32>
    %611 = vector.shape_cast %610 : vector<8xf32> to vector<8x1xf32>
    %612 = vector.broadcast %611 : vector<8x1xf32> to vector<8x8xf32>
    %613 = arith.subf %609, %612 : vector<8x8xf32>
    %614 = math.exp %613 : vector<8x8xf32>
    %cst_199 = arith.constant dense<0.000000e+00> : vector<8xf32>
    %615 = vector.multi_reduction <add>, %614, %cst_199 [1] : vector<8x8xf32> to vector<8xf32>
    %616 = vector.shape_cast %615 : vector<8xf32> to vector<8x1xf32>
    %617 = tpu.reciprocal %616 {approx = true} : vector<8x1xf32> -> vector<8x1xf32>
    %618 = vector.broadcast %617 : vector<8x1xf32> to vector<8x8xf32>
    %619 = arith.mulf %614, %618 : vector<8x8xf32>
    %620 = vector.extract_strided_slice %526 {offsets = [0, 24], sizes = [8, 8], strides = [1, 1]} : vector<8x32xf32> to vector<8x8xf32>
    %621 = arith.truncf %619 : vector<8x8xf32> to vector<8x8xbf16>
    %622 = arith.truncf %620 : vector<8x8xf32> to vector<8x8xbf16>
    %cst_200 = arith.constant dense<0.000000e+00> : vector<8x8xf32>
    %623 = tpu.matmul %621, %622, %cst_200 {dimension_numbers = #tpu.dot_dimension_numbers<[1], [0], [0], [1], [0, 0, 1, 1], [], []>} : vector<8x8xbf16>, vector<8x8xbf16>, vector<8x8xf32> -> vector<8x8xf32>
    %624 = vector.extract_strided_slice %518 {offsets = [24, 0], sizes = [8, 32], strides = [1, 1]} : vector<32x32xbf16> to vector<8x32xbf16>
    %625 = arith.truncf %623 : vector<8x8xf32> to vector<8x8xbf16>
    %cst_201 = arith.constant dense<0.000000e+00> : vector<8x32xf32>
    %626 = tpu.matmul %625, %624, %cst_201 {dimension_numbers = #tpu.dot_dimension_numbers<[1], [0], [0], [1], [0, 0, 1, 1], [], []>} : vector<8x8xbf16>, vector<8x32xbf16>, vector<8x32xf32> -> vector<8x32xf32>
    %627 = arith.addf %602, %626 : vector<8x32xf32>
    %628 = arith.addf %512, %627 : vector<8x32xf32>
    %629 = vector.extract_strided_slice %377 {offsets = [1, 0], sizes = [1, 32], strides = [1, 1]} : vector<3x32xf32> to vector<1x32xf32>
    %630 = vector.extract_strided_slice %379 {offsets = [1, 0], sizes = [1, 32], strides = [1, 1]} : vector<3x32xf32> to vector<1x32xf32>
    %cst_202 = arith.constant dense<0.000000e+00> : vector<8xf32>
    %631 = vector.multi_reduction <add>, %628, %cst_202 [1] : vector<8x32xf32> to vector<8xf32>
    %632 = vector.shape_cast %631 : vector<8xf32> to vector<8x1xf32>
    %cst_203 = arith.constant 3.200000e+01 : f32
    %633 = vector.broadcast %cst_203 : f32 to vector<8x1xf32>
    %634 = arith.divf %632, %633 : vector<8x1xf32>
    %635 = arith.mulf %628, %628 : vector<8x32xf32>
    %cst_204 = arith.constant dense<0.000000e+00> : vector<8xf32>
    %636 = vector.multi_reduction <add>, %635, %cst_204 [1] : vector<8x32xf32> to vector<8xf32>
    %637 = vector.shape_cast %636 : vector<8xf32> to vector<8x1xf32>
    %cst_205 = arith.constant 3.200000e+01 : f32
    %638 = vector.broadcast %cst_205 : f32 to vector<8x1xf32>
    %639 = arith.divf %637, %638 : vector<8x1xf32>
    %640 = arith.mulf %634, %634 : vector<8x1xf32>
    %641 = arith.subf %639, %640 : vector<8x1xf32>
    %642 = vector.broadcast %634 : vector<8x1xf32> to vector<8x32xf32>
    %643 = arith.subf %628, %642 : vector<8x32xf32>
    %cst_206 = arith.constant 9.99999974E-6 : f32
    %644 = vector.broadcast %cst_206 : f32 to vector<8x1xf32>
    %645 = arith.addf %641, %644 : vector<8x1xf32>
    %646 = math.rsqrt %645 : vector<8x1xf32>
    %647 = vector.broadcast %646 : vector<8x1xf32> to vector<8x32xf32>
    %648 = arith.mulf %643, %647 : vector<8x32xf32>
    %649 = vector.broadcast %629 : vector<1x32xf32> to vector<8x32xf32>
    %650 = arith.mulf %648, %649 : vector<8x32xf32>
    %651 = vector.broadcast %630 : vector<1x32xf32> to vector<8x32xf32>
    %652 = arith.addf %650, %651 : vector<8x32xf32>
    %c0_207 = arith.constant 0 : index
    %c0_208 = arith.constant 0 : index
    %c0_209 = arith.constant 0 : index
    %653 = vector.load %arg18[%c0_207, %c0_208, %c0_209] : memref<2x32x64xbf16, #tpu.memory_space<vmem>>, vector<1x32x64xbf16>
    %654 = vector.shape_cast %653 : vector<1x32x64xbf16> to vector<32x64xbf16>
    %c0_210 = arith.constant 0 : index
    %c0_211 = arith.constant 0 : index
    %c0_212 = arith.constant 0 : index
    %655 = vector.load %arg19[%c0_210, %c0_211, %c0_212] : memref<2x1x64xf32, #tpu.memory_space<vmem>>, vector<1x1x64xf32>
    %656 = vector.shape_cast %655 : vector<1x1x64xf32> to vector<1x64xf32>
    %c0_213 = arith.constant 0 : index
    %c0_214 = arith.constant 0 : index
    %c0_215 = arith.constant 0 : index
    %657 = vector.load %arg20[%c0_213, %c0_214, %c0_215] : memref<2x64x32xbf16, #tpu.memory_space<vmem>>, vector<1x64x32xbf16>
    %658 = vector.shape_cast %657 : vector<1x64x32xbf16> to vector<64x32xbf16>
    %c0_216 = arith.constant 0 : index
    %c0_217 = arith.constant 0 : index
    %c0_218 = arith.constant 0 : index
    %659 = vector.load %arg21[%c0_216, %c0_217, %c0_218] : memref<2x1x32xf32, #tpu.memory_space<vmem>>, vector<1x1x32xf32>
    %660 = vector.shape_cast %659 : vector<1x1x32xf32> to vector<1x32xf32>
    %661 = arith.truncf %652 : vector<8x32xf32> to vector<8x32xbf16>
    %cst_219 = arith.constant dense<0.000000e+00> : vector<8x64xf32>
    %662 = tpu.matmul %661, %654, %cst_219 {dimension_numbers = #tpu.dot_dimension_numbers<[1], [0], [0], [1], [0, 0, 1, 1], [], []>} : vector<8x32xbf16>, vector<32x64xbf16>, vector<8x64xf32> -> vector<8x64xf32>
    %663 = vector.broadcast %656 : vector<1x64xf32> to vector<8x64xf32>
    %664 = arith.addf %662, %663 : vector<8x64xf32>
    %cst_220 = arith.constant 0.000000e+00 : f32
    %665 = vector.broadcast %cst_220 : f32 to vector<8x64xf32>
    %666 = arith.maximumf %664, %665 : vector<8x64xf32>
    %667 = arith.truncf %666 : vector<8x64xf32> to vector<8x64xbf16>
    %cst_221 = arith.constant dense<0.000000e+00> : vector<8x32xf32>
    %668 = tpu.matmul %667, %658, %cst_221 {dimension_numbers = #tpu.dot_dimension_numbers<[1], [0], [0], [1], [0, 0, 1, 1], [], []>} : vector<8x64xbf16>, vector<64x32xbf16>, vector<8x32xf32> -> vector<8x32xf32>
    %669 = vector.broadcast %660 : vector<1x32xf32> to vector<8x32xf32>
    %670 = arith.addf %668, %669 : vector<8x32xf32>
    %671 = arith.addf %652, %670 : vector<8x32xf32>
    %672 = vector.extract_strided_slice %377 {offsets = [2, 0], sizes = [1, 32], strides = [1, 1]} : vector<3x32xf32> to vector<1x32xf32>
    %673 = vector.extract_strided_slice %379 {offsets = [2, 0], sizes = [1, 32], strides = [1, 1]} : vector<3x32xf32> to vector<1x32xf32>
    %cst_222 = arith.constant dense<0.000000e+00> : vector<8xf32>
    %674 = vector.multi_reduction <add>, %671, %cst_222 [1] : vector<8x32xf32> to vector<8xf32>
    %675 = vector.shape_cast %674 : vector<8xf32> to vector<8x1xf32>
    %cst_223 = arith.constant 3.200000e+01 : f32
    %676 = vector.broadcast %cst_223 : f32 to vector<8x1xf32>
    %677 = arith.divf %675, %676 : vector<8x1xf32>
    %678 = arith.mulf %671, %671 : vector<8x32xf32>
    %cst_224 = arith.constant dense<0.000000e+00> : vector<8xf32>
    %679 = vector.multi_reduction <add>, %678, %cst_224 [1] : vector<8x32xf32> to vector<8xf32>
    %680 = vector.shape_cast %679 : vector<8xf32> to vector<8x1xf32>
    %cst_225 = arith.constant 3.200000e+01 : f32
    %681 = vector.broadcast %cst_225 : f32 to vector<8x1xf32>
    %682 = arith.divf %680, %681 : vector<8x1xf32>
    %683 = arith.mulf %677, %677 : vector<8x1xf32>
    %684 = arith.subf %682, %683 : vector<8x1xf32>
    %685 = vector.broadcast %677 : vector<8x1xf32> to vector<8x32xf32>
    %686 = arith.subf %671, %685 : vector<8x32xf32>
    %cst_226 = arith.constant 9.99999974E-6 : f32
    %687 = vector.broadcast %cst_226 : f32 to vector<8x1xf32>
    %688 = arith.addf %684, %687 : vector<8x1xf32>
    %689 = math.rsqrt %688 : vector<8x1xf32>
    %690 = vector.broadcast %689 : vector<8x1xf32> to vector<8x32xf32>
    %691 = arith.mulf %686, %690 : vector<8x32xf32>
    %692 = vector.broadcast %672 : vector<1x32xf32> to vector<8x32xf32>
    %693 = arith.mulf %691, %692 : vector<8x32xf32>
    %694 = vector.broadcast %673 : vector<1x32xf32> to vector<8x32xf32>
    %695 = arith.addf %693, %694 : vector<8x32xf32>
    %c1_227 = arith.constant 1 : index
    %c0_228 = arith.constant 0 : index
    %c0_229 = arith.constant 0 : index
    %696 = vector.load %arg22[%c1_227, %c0_228, %c0_229] : memref<2x3x32xf32, #tpu.memory_space<vmem>>, vector<1x3x32xf32>
    %697 = vector.shape_cast %696 : vector<1x3x32xf32> to vector<3x32xf32>
    %c1_230 = arith.constant 1 : index
    %c0_231 = arith.constant 0 : index
    %c0_232 = arith.constant 0 : index
    %698 = vector.load %arg23[%c1_230, %c0_231, %c0_232] : memref<2x3x32xf32, #tpu.memory_space<vmem>>, vector<1x3x32xf32>
    %699 = vector.shape_cast %698 : vector<1x3x32xf32> to vector<3x32xf32>
    %c1_233 = arith.constant 1 : index
    %c0_234 = arith.constant 0 : index
    %c0_235 = arith.constant 0 : index
    %700 = vector.load %arg13[%c1_233, %c0_234, %c0_235] : memref<2x32x96xbf16, #tpu.memory_space<vmem>>, vector<1x32x96xbf16>
    %701 = vector.shape_cast %700 : vector<1x32x96xbf16> to vector<32x96xbf16>
    %c1_236 = arith.constant 1 : index
    %c0_237 = arith.constant 0 : index
    %c0_238 = arith.constant 0 : index
    %702 = vector.load %arg14[%c1_236, %c0_237, %c0_238] : memref<2x32x32xbf16, #tpu.memory_space<vmem>>, vector<1x32x32xbf16>
    %703 = vector.shape_cast %702 : vector<1x32x32xbf16> to vector<32x32xbf16>
    %704 = arith.truncf %695 : vector<8x32xf32> to vector<8x32xbf16>
    %cst_239 = arith.constant dense<0.000000e+00> : vector<8x96xf32>
    %705 = tpu.matmul %704, %701, %cst_239 {dimension_numbers = #tpu.dot_dimension_numbers<[1], [0], [0], [1], [0, 0, 1, 1], [], []>} : vector<8x32xbf16>, vector<32x96xbf16>, vector<8x96xf32> -> vector<8x96xf32>
    %706 = vector.extract_strided_slice %705 {offsets = [0, 0], sizes = [8, 32], strides = [1, 1]} : vector<8x96xf32> to vector<8x32xf32>
    %cst_240 = arith.constant 0.353553385 : f32
    %707 = vector.broadcast %cst_240 : f32 to vector<8x32xf32>
    %708 = arith.mulf %706, %707 : vector<8x32xf32>
    %709 = vector.extract_strided_slice %705 {offsets = [0, 32], sizes = [8, 32], strides = [1, 1]} : vector<8x96xf32> to vector<8x32xf32>
    %710 = vector.extract_strided_slice %705 {offsets = [0, 64], sizes = [8, 32], strides = [1, 1]} : vector<8x96xf32> to vector<8x32xf32>
    %cst_241 = arith.constant 0.000000e+00 : f32
    %711 = vector.broadcast %cst_241 : f32 to vector<8x32xf32>
    %712 = vector.extract_strided_slice %708 {offsets = [0, 0], sizes = [8, 8], strides = [1, 1]} : vector<8x32xf32> to vector<8x8xf32>
    %713 = vector.extract_strided_slice %709 {offsets = [0, 0], sizes = [8, 8], strides = [1, 1]} : vector<8x32xf32> to vector<8x8xf32>
    %714 = arith.truncf %712 : vector<8x8xf32> to vector<8x8xbf16>
    %715 = arith.truncf %713 : vector<8x8xf32> to vector<8x8xbf16>
    %cst_242 = arith.constant dense<0.000000e+00> : vector<8x8xf32>
    %716 = tpu.matmul %714, %715, %cst_242 {dimension_numbers = #tpu.dot_dimension_numbers<[1], [1], [0], [0], [0, 0, 1, 0], [], []>} : vector<8x8xbf16>, vector<8x8xbf16>, vector<8x8xf32> -> vector<8x8xf32>
    %717 = arith.addf %716, %7 : vector<8x8xf32>
    %cst_243 = arith.constant dense<0xFF800000> : vector<8xf32>
    %718 = vector.multi_reduction <maximumf>, %717, %cst_243 [1] : vector<8x8xf32> to vector<8xf32>
    %719 = vector.shape_cast %718 : vector<8xf32> to vector<8x1xf32>
    %720 = vector.broadcast %719 : vector<8x1xf32> to vector<8x8xf32>
    %721 = arith.subf %717, %720 : vector<8x8xf32>
    %722 = math.exp %721 : vector<8x8xf32>
    %cst_244 = arith.constant dense<0.000000e+00> : vector<8xf32>
    %723 = vector.multi_reduction <add>, %722, %cst_244 [1] : vector<8x8xf32> to vector<8xf32>
    %724 = vector.shape_cast %723 : vector<8xf32> to vector<8x1xf32>
    %725 = tpu.reciprocal %724 {approx = true} : vector<8x1xf32> -> vector<8x1xf32>
    %726 = vector.broadcast %725 : vector<8x1xf32> to vector<8x8xf32>
    %727 = arith.mulf %722, %726 : vector<8x8xf32>
    %728 = vector.extract_strided_slice %710 {offsets = [0, 0], sizes = [8, 8], strides = [1, 1]} : vector<8x32xf32> to vector<8x8xf32>
    %729 = arith.truncf %727 : vector<8x8xf32> to vector<8x8xbf16>
    %730 = arith.truncf %728 : vector<8x8xf32> to vector<8x8xbf16>
    %cst_245 = arith.constant dense<0.000000e+00> : vector<8x8xf32>
    %731 = tpu.matmul %729, %730, %cst_245 {dimension_numbers = #tpu.dot_dimension_numbers<[1], [0], [0], [1], [0, 0, 1, 1], [], []>} : vector<8x8xbf16>, vector<8x8xbf16>, vector<8x8xf32> -> vector<8x8xf32>
    %732 = vector.extract_strided_slice %703 {offsets = [0, 0], sizes = [8, 32], strides = [1, 1]} : vector<32x32xbf16> to vector<8x32xbf16>
    %733 = arith.truncf %731 : vector<8x8xf32> to vector<8x8xbf16>
    %cst_246 = arith.constant dense<0.000000e+00> : vector<8x32xf32>
    %734 = tpu.matmul %733, %732, %cst_246 {dimension_numbers = #tpu.dot_dimension_numbers<[1], [0], [0], [1], [0, 0, 1, 1], [], []>} : vector<8x8xbf16>, vector<8x32xbf16>, vector<8x32xf32> -> vector<8x32xf32>
    %735 = arith.addf %711, %734 : vector<8x32xf32>
    %736 = vector.extract_strided_slice %708 {offsets = [0, 8], sizes = [8, 8], strides = [1, 1]} : vector<8x32xf32> to vector<8x8xf32>
    %737 = vector.extract_strided_slice %709 {offsets = [0, 8], sizes = [8, 8], strides = [1, 1]} : vector<8x32xf32> to vector<8x8xf32>
    %738 = arith.truncf %736 : vector<8x8xf32> to vector<8x8xbf16>
    %739 = arith.truncf %737 : vector<8x8xf32> to vector<8x8xbf16>
    %cst_247 = arith.constant dense<0.000000e+00> : vector<8x8xf32>
    %740 = tpu.matmul %738, %739, %cst_247 {dimension_numbers = #tpu.dot_dimension_numbers<[1], [1], [0], [0], [0, 0, 1, 0], [], []>} : vector<8x8xbf16>, vector<8x8xbf16>, vector<8x8xf32> -> vector<8x8xf32>
    %741 = arith.addf %740, %7 : vector<8x8xf32>
    %cst_248 = arith.constant dense<0xFF800000> : vector<8xf32>
    %742 = vector.multi_reduction <maximumf>, %741, %cst_248 [1] : vector<8x8xf32> to vector<8xf32>
    %743 = vector.shape_cast %742 : vector<8xf32> to vector<8x1xf32>
    %744 = vector.broadcast %743 : vector<8x1xf32> to vector<8x8xf32>
    %745 = arith.subf %741, %744 : vector<8x8xf32>
    %746 = math.exp %745 : vector<8x8xf32>
    %cst_249 = arith.constant dense<0.000000e+00> : vector<8xf32>
    %747 = vector.multi_reduction <add>, %746, %cst_249 [1] : vector<8x8xf32> to vector<8xf32>
    %748 = vector.shape_cast %747 : vector<8xf32> to vector<8x1xf32>
    %749 = tpu.reciprocal %748 {approx = true} : vector<8x1xf32> -> vector<8x1xf32>
    %750 = vector.broadcast %749 : vector<8x1xf32> to vector<8x8xf32>
    %751 = arith.mulf %746, %750 : vector<8x8xf32>
    %752 = vector.extract_strided_slice %710 {offsets = [0, 8], sizes = [8, 8], strides = [1, 1]} : vector<8x32xf32> to vector<8x8xf32>
    %753 = arith.truncf %751 : vector<8x8xf32> to vector<8x8xbf16>
    %754 = arith.truncf %752 : vector<8x8xf32> to vector<8x8xbf16>
    %cst_250 = arith.constant dense<0.000000e+00> : vector<8x8xf32>
    %755 = tpu.matmul %753, %754, %cst_250 {dimension_numbers = #tpu.dot_dimension_numbers<[1], [0], [0], [1], [0, 0, 1, 1], [], []>} : vector<8x8xbf16>, vector<8x8xbf16>, vector<8x8xf32> -> vector<8x8xf32>
    %756 = vector.extract_strided_slice %703 {offsets = [8, 0], sizes = [8, 32], strides = [1, 1]} : vector<32x32xbf16> to vector<8x32xbf16>
    %757 = arith.truncf %755 : vector<8x8xf32> to vector<8x8xbf16>
    %cst_251 = arith.constant dense<0.000000e+00> : vector<8x32xf32>
    %758 = tpu.matmul %757, %756, %cst_251 {dimension_numbers = #tpu.dot_dimension_numbers<[1], [0], [0], [1], [0, 0, 1, 1], [], []>} : vector<8x8xbf16>, vector<8x32xbf16>, vector<8x32xf32> -> vector<8x32xf32>
    %759 = arith.addf %735, %758 : vector<8x32xf32>
    %760 = vector.extract_strided_slice %708 {offsets = [0, 16], sizes = [8, 8], strides = [1, 1]} : vector<8x32xf32> to vector<8x8xf32>
    %761 = vector.extract_strided_slice %709 {offsets = [0, 16], sizes = [8, 8], strides = [1, 1]} : vector<8x32xf32> to vector<8x8xf32>
    %762 = arith.truncf %760 : vector<8x8xf32> to vector<8x8xbf16>
    %763 = arith.truncf %761 : vector<8x8xf32> to vector<8x8xbf16>
    %cst_252 = arith.constant dense<0.000000e+00> : vector<8x8xf32>
    %764 = tpu.matmul %762, %763, %cst_252 {dimension_numbers = #tpu.dot_dimension_numbers<[1], [1], [0], [0], [0, 0, 1, 0], [], []>} : vector<8x8xbf16>, vector<8x8xbf16>, vector<8x8xf32> -> vector<8x8xf32>
    %765 = arith.addf %764, %7 : vector<8x8xf32>
    %cst_253 = arith.constant dense<0xFF800000> : vector<8xf32>
    %766 = vector.multi_reduction <maximumf>, %765, %cst_253 [1] : vector<8x8xf32> to vector<8xf32>
    %767 = vector.shape_cast %766 : vector<8xf32> to vector<8x1xf32>
    %768 = vector.broadcast %767 : vector<8x1xf32> to vector<8x8xf32>
    %769 = arith.subf %765, %768 : vector<8x8xf32>
    %770 = math.exp %769 : vector<8x8xf32>
    %cst_254 = arith.constant dense<0.000000e+00> : vector<8xf32>
    %771 = vector.multi_reduction <add>, %770, %cst_254 [1] : vector<8x8xf32> to vector<8xf32>
    %772 = vector.shape_cast %771 : vector<8xf32> to vector<8x1xf32>
    %773 = tpu.reciprocal %772 {approx = true} : vector<8x1xf32> -> vector<8x1xf32>
    %774 = vector.broadcast %773 : vector<8x1xf32> to vector<8x8xf32>
    %775 = arith.mulf %770, %774 : vector<8x8xf32>
    %776 = vector.extract_strided_slice %710 {offsets = [0, 16], sizes = [8, 8], strides = [1, 1]} : vector<8x32xf32> to vector<8x8xf32>
    %777 = arith.truncf %775 : vector<8x8xf32> to vector<8x8xbf16>
    %778 = arith.truncf %776 : vector<8x8xf32> to vector<8x8xbf16>
    %cst_255 = arith.constant dense<0.000000e+00> : vector<8x8xf32>
    %779 = tpu.matmul %777, %778, %cst_255 {dimension_numbers = #tpu.dot_dimension_numbers<[1], [0], [0], [1], [0, 0, 1, 1], [], []>} : vector<8x8xbf16>, vector<8x8xbf16>, vector<8x8xf32> -> vector<8x8xf32>
    %780 = vector.extract_strided_slice %703 {offsets = [16, 0], sizes = [8, 32], strides = [1, 1]} : vector<32x32xbf16> to vector<8x32xbf16>
    %781 = arith.truncf %779 : vector<8x8xf32> to vector<8x8xbf16>
    %cst_256 = arith.constant dense<0.000000e+00> : vector<8x32xf32>
    %782 = tpu.matmul %781, %780, %cst_256 {dimension_numbers = #tpu.dot_dimension_numbers<[1], [0], [0], [1], [0, 0, 1, 1], [], []>} : vector<8x8xbf16>, vector<8x32xbf16>, vector<8x32xf32> -> vector<8x32xf32>
    %783 = arith.addf %759, %782 : vector<8x32xf32>
    %784 = vector.extract_strided_slice %708 {offsets = [0, 24], sizes = [8, 8], strides = [1, 1]} : vector<8x32xf32> to vector<8x8xf32>
    %785 = vector.extract_strided_slice %709 {offsets = [0, 24], sizes = [8, 8], strides = [1, 1]} : vector<8x32xf32> to vector<8x8xf32>
    %786 = arith.truncf %784 : vector<8x8xf32> to vector<8x8xbf16>
    %787 = arith.truncf %785 : vector<8x8xf32> to vector<8x8xbf16>
    %cst_257 = arith.constant dense<0.000000e+00> : vector<8x8xf32>
    %788 = tpu.matmul %786, %787, %cst_257 {dimension_numbers = #tpu.dot_dimension_numbers<[1], [1], [0], [0], [0, 0, 1, 0], [], []>} : vector<8x8xbf16>, vector<8x8xbf16>, vector<8x8xf32> -> vector<8x8xf32>
    %789 = arith.addf %788, %7 : vector<8x8xf32>
    %cst_258 = arith.constant dense<0xFF800000> : vector<8xf32>
    %790 = vector.multi_reduction <maximumf>, %789, %cst_258 [1] : vector<8x8xf32> to vector<8xf32>
    %791 = vector.shape_cast %790 : vector<8xf32> to vector<8x1xf32>
    %792 = vector.broadcast %791 : vector<8x1xf32> to vector<8x8xf32>
    %793 = arith.subf %789, %792 : vector<8x8xf32>
    %794 = math.exp %793 : vector<8x8xf32>
    %cst_259 = arith.constant dense<0.000000e+00> : vector<8xf32>
    %795 = vector.multi_reduction <add>, %794, %cst_259 [1] : vector<8x8xf32> to vector<8xf32>
    %796 = vector.shape_cast %795 : vector<8xf32> to vector<8x1xf32>
    %797 = tpu.reciprocal %796 {approx = true} : vector<8x1xf32> -> vector<8x1xf32>
    %798 = vector.broadcast %797 : vector<8x1xf32> to vector<8x8xf32>
    %799 = arith.mulf %794, %798 : vector<8x8xf32>
    %800 = vector.extract_strided_slice %710 {offsets = [0, 24], sizes = [8, 8], strides = [1, 1]} : vector<8x32xf32> to vector<8x8xf32>
    %801 = arith.truncf %799 : vector<8x8xf32> to vector<8x8xbf16>
    %802 = arith.truncf %800 : vector<8x8xf32> to vector<8x8xbf16>
    %cst_260 = arith.constant dense<0.000000e+00> : vector<8x8xf32>
    %803 = tpu.matmul %801, %802, %cst_260 {dimension_numbers = #tpu.dot_dimension_numbers<[1], [0], [0], [1], [0, 0, 1, 1], [], []>} : vector<8x8xbf16>, vector<8x8xbf16>, vector<8x8xf32> -> vector<8x8xf32>
    %804 = vector.extract_strided_slice %703 {offsets = [24, 0], sizes = [8, 32], strides = [1, 1]} : vector<32x32xbf16> to vector<8x32xbf16>
    %805 = arith.truncf %803 : vector<8x8xf32> to vector<8x8xbf16>
    %cst_261 = arith.constant dense<0.000000e+00> : vector<8x32xf32>
    %806 = tpu.matmul %805, %804, %cst_261 {dimension_numbers = #tpu.dot_dimension_numbers<[1], [0], [0], [1], [0, 0, 1, 1], [], []>} : vector<8x8xbf16>, vector<8x32xbf16>, vector<8x32xf32> -> vector<8x32xf32>
    %807 = arith.addf %783, %806 : vector<8x32xf32>
    %808 = arith.addf %695, %807 : vector<8x32xf32>
    %809 = vector.extract_strided_slice %697 {offsets = [0, 0], sizes = [1, 32], strides = [1, 1]} : vector<3x32xf32> to vector<1x32xf32>
    %810 = vector.extract_strided_slice %699 {offsets = [0, 0], sizes = [1, 32], strides = [1, 1]} : vector<3x32xf32> to vector<1x32xf32>
    %cst_262 = arith.constant dense<0.000000e+00> : vector<8xf32>
    %811 = vector.multi_reduction <add>, %808, %cst_262 [1] : vector<8x32xf32> to vector<8xf32>
    %812 = vector.shape_cast %811 : vector<8xf32> to vector<8x1xf32>
    %cst_263 = arith.constant 3.200000e+01 : f32
    %813 = vector.broadcast %cst_263 : f32 to vector<8x1xf32>
    %814 = arith.divf %812, %813 : vector<8x1xf32>
    %815 = arith.mulf %808, %808 : vector<8x32xf32>
    %cst_264 = arith.constant dense<0.000000e+00> : vector<8xf32>
    %816 = vector.multi_reduction <add>, %815, %cst_264 [1] : vector<8x32xf32> to vector<8xf32>
    %817 = vector.shape_cast %816 : vector<8xf32> to vector<8x1xf32>
    %cst_265 = arith.constant 3.200000e+01 : f32
    %818 = vector.broadcast %cst_265 : f32 to vector<8x1xf32>
    %819 = arith.divf %817, %818 : vector<8x1xf32>
    %820 = arith.mulf %814, %814 : vector<8x1xf32>
    %821 = arith.subf %819, %820 : vector<8x1xf32>
    %822 = vector.broadcast %814 : vector<8x1xf32> to vector<8x32xf32>
    %823 = arith.subf %808, %822 : vector<8x32xf32>
    %cst_266 = arith.constant 9.99999974E-6 : f32
    %824 = vector.broadcast %cst_266 : f32 to vector<8x1xf32>
    %825 = arith.addf %821, %824 : vector<8x1xf32>
    %826 = math.rsqrt %825 : vector<8x1xf32>
    %827 = vector.broadcast %826 : vector<8x1xf32> to vector<8x32xf32>
    %828 = arith.mulf %823, %827 : vector<8x32xf32>
    %829 = vector.broadcast %809 : vector<1x32xf32> to vector<8x32xf32>
    %830 = arith.mulf %828, %829 : vector<8x32xf32>
    %831 = vector.broadcast %810 : vector<1x32xf32> to vector<8x32xf32>
    %832 = arith.addf %830, %831 : vector<8x32xf32>
    %c1_267 = arith.constant 1 : index
    %c0_268 = arith.constant 0 : index
    %c0_269 = arith.constant 0 : index
    %833 = vector.load %arg15[%c1_267, %c0_268, %c0_269] : memref<2x32x32xbf16, #tpu.memory_space<vmem>>, vector<1x32x32xbf16>
    %834 = vector.shape_cast %833 : vector<1x32x32xbf16> to vector<32x32xbf16>
    %c1_270 = arith.constant 1 : index
    %c0_271 = arith.constant 0 : index
    %c0_272 = arith.constant 0 : index
    %835 = vector.load %arg16[%c1_270, %c0_271, %c0_272] : memref<2x32x64xbf16, #tpu.memory_space<vmem>>, vector<1x32x64xbf16>
    %836 = vector.shape_cast %835 : vector<1x32x64xbf16> to vector<32x64xbf16>
    %c1_273 = arith.constant 1 : index
    %c0_274 = arith.constant 0 : index
    %c0_275 = arith.constant 0 : index
    %837 = vector.load %arg17[%c1_273, %c0_274, %c0_275] : memref<2x32x32xbf16, #tpu.memory_space<vmem>>, vector<1x32x32xbf16>
    %838 = vector.shape_cast %837 : vector<1x32x32xbf16> to vector<32x32xbf16>
    %839 = arith.truncf %832 : vector<8x32xf32> to vector<8x32xbf16>
    %cst_276 = arith.constant dense<0.000000e+00> : vector<8x32xf32>
    %840 = tpu.matmul %839, %834, %cst_276 {dimension_numbers = #tpu.dot_dimension_numbers<[1], [0], [0], [1], [0, 0, 1, 1], [], []>} : vector<8x32xbf16>, vector<32x32xbf16>, vector<8x32xf32> -> vector<8x32xf32>
    %cst_277 = arith.constant 0.353553385 : f32
    %841 = vector.broadcast %cst_277 : f32 to vector<8x32xf32>
    %842 = arith.mulf %840, %841 : vector<8x32xf32>
    %843 = arith.truncf %375 : vector<8x32xf32> to vector<8x32xbf16>
    %cst_278 = arith.constant dense<0.000000e+00> : vector<8x64xf32>
    %844 = tpu.matmul %843, %836, %cst_278 {dimension_numbers = #tpu.dot_dimension_numbers<[1], [0], [0], [1], [0, 0, 1, 1], [], []>} : vector<8x32xbf16>, vector<32x64xbf16>, vector<8x64xf32> -> vector<8x64xf32>
    %845 = vector.extract_strided_slice %844 {offsets = [0, 0], sizes = [8, 32], strides = [1, 1]} : vector<8x64xf32> to vector<8x32xf32>
    %846 = vector.extract_strided_slice %844 {offsets = [0, 32], sizes = [8, 32], strides = [1, 1]} : vector<8x64xf32> to vector<8x32xf32>
    %cst_279 = arith.constant 0.000000e+00 : f32
    %847 = vector.broadcast %cst_279 : f32 to vector<8x32xf32>
    %848 = vector.extract_strided_slice %842 {offsets = [0, 0], sizes = [8, 8], strides = [1, 1]} : vector<8x32xf32> to vector<8x8xf32>
    %849 = vector.extract_strided_slice %845 {offsets = [0, 0], sizes = [8, 8], strides = [1, 1]} : vector<8x32xf32> to vector<8x8xf32>
    %850 = arith.truncf %848 : vector<8x8xf32> to vector<8x8xbf16>
    %851 = arith.truncf %849 : vector<8x8xf32> to vector<8x8xbf16>
    %cst_280 = arith.constant dense<0.000000e+00> : vector<8x8xf32>
    %852 = tpu.matmul %850, %851, %cst_280 {dimension_numbers = #tpu.dot_dimension_numbers<[1], [1], [0], [0], [0, 0, 1, 0], [], []>} : vector<8x8xbf16>, vector<8x8xbf16>, vector<8x8xf32> -> vector<8x8xf32>
    %853 = vector.broadcast %5 : vector<1x8xf32> to vector<8x8xf32>
    %854 = arith.addf %852, %853 : vector<8x8xf32>
    %cst_281 = arith.constant dense<0xFF800000> : vector<8xf32>
    %855 = vector.multi_reduction <maximumf>, %854, %cst_281 [1] : vector<8x8xf32> to vector<8xf32>
    %856 = vector.shape_cast %855 : vector<8xf32> to vector<8x1xf32>
    %857 = vector.broadcast %856 : vector<8x1xf32> to vector<8x8xf32>
    %858 = arith.subf %854, %857 : vector<8x8xf32>
    %859 = math.exp %858 : vector<8x8xf32>
    %cst_282 = arith.constant dense<0.000000e+00> : vector<8xf32>
    %860 = vector.multi_reduction <add>, %859, %cst_282 [1] : vector<8x8xf32> to vector<8xf32>
    %861 = vector.shape_cast %860 : vector<8xf32> to vector<8x1xf32>
    %862 = tpu.reciprocal %861 {approx = true} : vector<8x1xf32> -> vector<8x1xf32>
    %863 = vector.broadcast %862 : vector<8x1xf32> to vector<8x8xf32>
    %864 = arith.mulf %859, %863 : vector<8x8xf32>
    %865 = vector.extract_strided_slice %846 {offsets = [0, 0], sizes = [8, 8], strides = [1, 1]} : vector<8x32xf32> to vector<8x8xf32>
    %866 = arith.truncf %864 : vector<8x8xf32> to vector<8x8xbf16>
    %867 = arith.truncf %865 : vector<8x8xf32> to vector<8x8xbf16>
    %cst_283 = arith.constant dense<0.000000e+00> : vector<8x8xf32>
    %868 = tpu.matmul %866, %867, %cst_283 {dimension_numbers = #tpu.dot_dimension_numbers<[1], [0], [0], [1], [0, 0, 1, 1], [], []>} : vector<8x8xbf16>, vector<8x8xbf16>, vector<8x8xf32> -> vector<8x8xf32>
    %869 = vector.extract_strided_slice %838 {offsets = [0, 0], sizes = [8, 32], strides = [1, 1]} : vector<32x32xbf16> to vector<8x32xbf16>
    %870 = arith.truncf %868 : vector<8x8xf32> to vector<8x8xbf16>
    %cst_284 = arith.constant dense<0.000000e+00> : vector<8x32xf32>
    %871 = tpu.matmul %870, %869, %cst_284 {dimension_numbers = #tpu.dot_dimension_numbers<[1], [0], [0], [1], [0, 0, 1, 1], [], []>} : vector<8x8xbf16>, vector<8x32xbf16>, vector<8x32xf32> -> vector<8x32xf32>
    %872 = arith.addf %847, %871 : vector<8x32xf32>
    %873 = vector.extract_strided_slice %842 {offsets = [0, 8], sizes = [8, 8], strides = [1, 1]} : vector<8x32xf32> to vector<8x8xf32>
    %874 = vector.extract_strided_slice %845 {offsets = [0, 8], sizes = [8, 8], strides = [1, 1]} : vector<8x32xf32> to vector<8x8xf32>
    %875 = arith.truncf %873 : vector<8x8xf32> to vector<8x8xbf16>
    %876 = arith.truncf %874 : vector<8x8xf32> to vector<8x8xbf16>
    %cst_285 = arith.constant dense<0.000000e+00> : vector<8x8xf32>
    %877 = tpu.matmul %875, %876, %cst_285 {dimension_numbers = #tpu.dot_dimension_numbers<[1], [1], [0], [0], [0, 0, 1, 0], [], []>} : vector<8x8xbf16>, vector<8x8xbf16>, vector<8x8xf32> -> vector<8x8xf32>
    %878 = vector.broadcast %5 : vector<1x8xf32> to vector<8x8xf32>
    %879 = arith.addf %877, %878 : vector<8x8xf32>
    %cst_286 = arith.constant dense<0xFF800000> : vector<8xf32>
    %880 = vector.multi_reduction <maximumf>, %879, %cst_286 [1] : vector<8x8xf32> to vector<8xf32>
    %881 = vector.shape_cast %880 : vector<8xf32> to vector<8x1xf32>
    %882 = vector.broadcast %881 : vector<8x1xf32> to vector<8x8xf32>
    %883 = arith.subf %879, %882 : vector<8x8xf32>
    %884 = math.exp %883 : vector<8x8xf32>
    %cst_287 = arith.constant dense<0.000000e+00> : vector<8xf32>
    %885 = vector.multi_reduction <add>, %884, %cst_287 [1] : vector<8x8xf32> to vector<8xf32>
    %886 = vector.shape_cast %885 : vector<8xf32> to vector<8x1xf32>
    %887 = tpu.reciprocal %886 {approx = true} : vector<8x1xf32> -> vector<8x1xf32>
    %888 = vector.broadcast %887 : vector<8x1xf32> to vector<8x8xf32>
    %889 = arith.mulf %884, %888 : vector<8x8xf32>
    %890 = vector.extract_strided_slice %846 {offsets = [0, 8], sizes = [8, 8], strides = [1, 1]} : vector<8x32xf32> to vector<8x8xf32>
    %891 = arith.truncf %889 : vector<8x8xf32> to vector<8x8xbf16>
    %892 = arith.truncf %890 : vector<8x8xf32> to vector<8x8xbf16>
    %cst_288 = arith.constant dense<0.000000e+00> : vector<8x8xf32>
    %893 = tpu.matmul %891, %892, %cst_288 {dimension_numbers = #tpu.dot_dimension_numbers<[1], [0], [0], [1], [0, 0, 1, 1], [], []>} : vector<8x8xbf16>, vector<8x8xbf16>, vector<8x8xf32> -> vector<8x8xf32>
    %894 = vector.extract_strided_slice %838 {offsets = [8, 0], sizes = [8, 32], strides = [1, 1]} : vector<32x32xbf16> to vector<8x32xbf16>
    %895 = arith.truncf %893 : vector<8x8xf32> to vector<8x8xbf16>
    %cst_289 = arith.constant dense<0.000000e+00> : vector<8x32xf32>
    %896 = tpu.matmul %895, %894, %cst_289 {dimension_numbers = #tpu.dot_dimension_numbers<[1], [0], [0], [1], [0, 0, 1, 1], [], []>} : vector<8x8xbf16>, vector<8x32xbf16>, vector<8x32xf32> -> vector<8x32xf32>
    %897 = arith.addf %872, %896 : vector<8x32xf32>
    %898 = vector.extract_strided_slice %842 {offsets = [0, 16], sizes = [8, 8], strides = [1, 1]} : vector<8x32xf32> to vector<8x8xf32>
    %899 = vector.extract_strided_slice %845 {offsets = [0, 16], sizes = [8, 8], strides = [1, 1]} : vector<8x32xf32> to vector<8x8xf32>
    %900 = arith.truncf %898 : vector<8x8xf32> to vector<8x8xbf16>
    %901 = arith.truncf %899 : vector<8x8xf32> to vector<8x8xbf16>
    %cst_290 = arith.constant dense<0.000000e+00> : vector<8x8xf32>
    %902 = tpu.matmul %900, %901, %cst_290 {dimension_numbers = #tpu.dot_dimension_numbers<[1], [1], [0], [0], [0, 0, 1, 0], [], []>} : vector<8x8xbf16>, vector<8x8xbf16>, vector<8x8xf32> -> vector<8x8xf32>
    %903 = vector.broadcast %5 : vector<1x8xf32> to vector<8x8xf32>
    %904 = arith.addf %902, %903 : vector<8x8xf32>
    %cst_291 = arith.constant dense<0xFF800000> : vector<8xf32>
    %905 = vector.multi_reduction <maximumf>, %904, %cst_291 [1] : vector<8x8xf32> to vector<8xf32>
    %906 = vector.shape_cast %905 : vector<8xf32> to vector<8x1xf32>
    %907 = vector.broadcast %906 : vector<8x1xf32> to vector<8x8xf32>
    %908 = arith.subf %904, %907 : vector<8x8xf32>
    %909 = math.exp %908 : vector<8x8xf32>
    %cst_292 = arith.constant dense<0.000000e+00> : vector<8xf32>
    %910 = vector.multi_reduction <add>, %909, %cst_292 [1] : vector<8x8xf32> to vector<8xf32>
    %911 = vector.shape_cast %910 : vector<8xf32> to vector<8x1xf32>
    %912 = tpu.reciprocal %911 {approx = true} : vector<8x1xf32> -> vector<8x1xf32>
    %913 = vector.broadcast %912 : vector<8x1xf32> to vector<8x8xf32>
    %914 = arith.mulf %909, %913 : vector<8x8xf32>
    %915 = vector.extract_strided_slice %846 {offsets = [0, 16], sizes = [8, 8], strides = [1, 1]} : vector<8x32xf32> to vector<8x8xf32>
    %916 = arith.truncf %914 : vector<8x8xf32> to vector<8x8xbf16>
    %917 = arith.truncf %915 : vector<8x8xf32> to vector<8x8xbf16>
    %cst_293 = arith.constant dense<0.000000e+00> : vector<8x8xf32>
    %918 = tpu.matmul %916, %917, %cst_293 {dimension_numbers = #tpu.dot_dimension_numbers<[1], [0], [0], [1], [0, 0, 1, 1], [], []>} : vector<8x8xbf16>, vector<8x8xbf16>, vector<8x8xf32> -> vector<8x8xf32>
    %919 = vector.extract_strided_slice %838 {offsets = [16, 0], sizes = [8, 32], strides = [1, 1]} : vector<32x32xbf16> to vector<8x32xbf16>
    %920 = arith.truncf %918 : vector<8x8xf32> to vector<8x8xbf16>
    %cst_294 = arith.constant dense<0.000000e+00> : vector<8x32xf32>
    %921 = tpu.matmul %920, %919, %cst_294 {dimension_numbers = #tpu.dot_dimension_numbers<[1], [0], [0], [1], [0, 0, 1, 1], [], []>} : vector<8x8xbf16>, vector<8x32xbf16>, vector<8x32xf32> -> vector<8x32xf32>
    %922 = arith.addf %897, %921 : vector<8x32xf32>
    %923 = vector.extract_strided_slice %842 {offsets = [0, 24], sizes = [8, 8], strides = [1, 1]} : vector<8x32xf32> to vector<8x8xf32>
    %924 = vector.extract_strided_slice %845 {offsets = [0, 24], sizes = [8, 8], strides = [1, 1]} : vector<8x32xf32> to vector<8x8xf32>
    %925 = arith.truncf %923 : vector<8x8xf32> to vector<8x8xbf16>
    %926 = arith.truncf %924 : vector<8x8xf32> to vector<8x8xbf16>
    %cst_295 = arith.constant dense<0.000000e+00> : vector<8x8xf32>
    %927 = tpu.matmul %925, %926, %cst_295 {dimension_numbers = #tpu.dot_dimension_numbers<[1], [1], [0], [0], [0, 0, 1, 0], [], []>} : vector<8x8xbf16>, vector<8x8xbf16>, vector<8x8xf32> -> vector<8x8xf32>
    %928 = vector.broadcast %5 : vector<1x8xf32> to vector<8x8xf32>
    %929 = arith.addf %927, %928 : vector<8x8xf32>
    %cst_296 = arith.constant dense<0xFF800000> : vector<8xf32>
    %930 = vector.multi_reduction <maximumf>, %929, %cst_296 [1] : vector<8x8xf32> to vector<8xf32>
    %931 = vector.shape_cast %930 : vector<8xf32> to vector<8x1xf32>
    %932 = vector.broadcast %931 : vector<8x1xf32> to vector<8x8xf32>
    %933 = arith.subf %929, %932 : vector<8x8xf32>
    %934 = math.exp %933 : vector<8x8xf32>
    %cst_297 = arith.constant dense<0.000000e+00> : vector<8xf32>
    %935 = vector.multi_reduction <add>, %934, %cst_297 [1] : vector<8x8xf32> to vector<8xf32>
    %936 = vector.shape_cast %935 : vector<8xf32> to vector<8x1xf32>
    %937 = tpu.reciprocal %936 {approx = true} : vector<8x1xf32> -> vector<8x1xf32>
    %938 = vector.broadcast %937 : vector<8x1xf32> to vector<8x8xf32>
    %939 = arith.mulf %934, %938 : vector<8x8xf32>
    %940 = vector.extract_strided_slice %846 {offsets = [0, 24], sizes = [8, 8], strides = [1, 1]} : vector<8x32xf32> to vector<8x8xf32>
    %941 = arith.truncf %939 : vector<8x8xf32> to vector<8x8xbf16>
    %942 = arith.truncf %940 : vector<8x8xf32> to vector<8x8xbf16>
    %cst_298 = arith.constant dense<0.000000e+00> : vector<8x8xf32>
    %943 = tpu.matmul %941, %942, %cst_298 {dimension_numbers = #tpu.dot_dimension_numbers<[1], [0], [0], [1], [0, 0, 1, 1], [], []>} : vector<8x8xbf16>, vector<8x8xbf16>, vector<8x8xf32> -> vector<8x8xf32>
    %944 = vector.extract_strided_slice %838 {offsets = [24, 0], sizes = [8, 32], strides = [1, 1]} : vector<32x32xbf16> to vector<8x32xbf16>
    %945 = arith.truncf %943 : vector<8x8xf32> to vector<8x8xbf16>
    %cst_299 = arith.constant dense<0.000000e+00> : vector<8x32xf32>
    %946 = tpu.matmul %945, %944, %cst_299 {dimension_numbers = #tpu.dot_dimension_numbers<[1], [0], [0], [1], [0, 0, 1, 1], [], []>} : vector<8x8xbf16>, vector<8x32xbf16>, vector<8x32xf32> -> vector<8x32xf32>
    %947 = arith.addf %922, %946 : vector<8x32xf32>
    %948 = arith.addf %832, %947 : vector<8x32xf32>
    %949 = vector.extract_strided_slice %697 {offsets = [1, 0], sizes = [1, 32], strides = [1, 1]} : vector<3x32xf32> to vector<1x32xf32>
    %950 = vector.extract_strided_slice %699 {offsets = [1, 0], sizes = [1, 32], strides = [1, 1]} : vector<3x32xf32> to vector<1x32xf32>
    %cst_300 = arith.constant dense<0.000000e+00> : vector<8xf32>
    %951 = vector.multi_reduction <add>, %948, %cst_300 [1] : vector<8x32xf32> to vector<8xf32>
    %952 = vector.shape_cast %951 : vector<8xf32> to vector<8x1xf32>
    %cst_301 = arith.constant 3.200000e+01 : f32
    %953 = vector.broadcast %cst_301 : f32 to vector<8x1xf32>
    %954 = arith.divf %952, %953 : vector<8x1xf32>
    %955 = arith.mulf %948, %948 : vector<8x32xf32>
    %cst_302 = arith.constant dense<0.000000e+00> : vector<8xf32>
    %956 = vector.multi_reduction <add>, %955, %cst_302 [1] : vector<8x32xf32> to vector<8xf32>
    %957 = vector.shape_cast %956 : vector<8xf32> to vector<8x1xf32>
    %cst_303 = arith.constant 3.200000e+01 : f32
    %958 = vector.broadcast %cst_303 : f32 to vector<8x1xf32>
    %959 = arith.divf %957, %958 : vector<8x1xf32>
    %960 = arith.mulf %954, %954 : vector<8x1xf32>
    %961 = arith.subf %959, %960 : vector<8x1xf32>
    %962 = vector.broadcast %954 : vector<8x1xf32> to vector<8x32xf32>
    %963 = arith.subf %948, %962 : vector<8x32xf32>
    %cst_304 = arith.constant 9.99999974E-6 : f32
    %964 = vector.broadcast %cst_304 : f32 to vector<8x1xf32>
    %965 = arith.addf %961, %964 : vector<8x1xf32>
    %966 = math.rsqrt %965 : vector<8x1xf32>
    %967 = vector.broadcast %966 : vector<8x1xf32> to vector<8x32xf32>
    %968 = arith.mulf %963, %967 : vector<8x32xf32>
    %969 = vector.broadcast %949 : vector<1x32xf32> to vector<8x32xf32>
    %970 = arith.mulf %968, %969 : vector<8x32xf32>
    %971 = vector.broadcast %950 : vector<1x32xf32> to vector<8x32xf32>
    %972 = arith.addf %970, %971 : vector<8x32xf32>
    %c1_305 = arith.constant 1 : index
    %c0_306 = arith.constant 0 : index
    %c0_307 = arith.constant 0 : index
    %973 = vector.load %arg18[%c1_305, %c0_306, %c0_307] : memref<2x32x64xbf16, #tpu.memory_space<vmem>>, vector<1x32x64xbf16>
    %974 = vector.shape_cast %973 : vector<1x32x64xbf16> to vector<32x64xbf16>
    %c1_308 = arith.constant 1 : index
    %c0_309 = arith.constant 0 : index
    %c0_310 = arith.constant 0 : index
    %975 = vector.load %arg19[%c1_308, %c0_309, %c0_310] : memref<2x1x64xf32, #tpu.memory_space<vmem>>, vector<1x1x64xf32>
    %976 = vector.shape_cast %975 : vector<1x1x64xf32> to vector<1x64xf32>
    %c1_311 = arith.constant 1 : index
    %c0_312 = arith.constant 0 : index
    %c0_313 = arith.constant 0 : index
    %977 = vector.load %arg20[%c1_311, %c0_312, %c0_313] : memref<2x64x32xbf16, #tpu.memory_space<vmem>>, vector<1x64x32xbf16>
    %978 = vector.shape_cast %977 : vector<1x64x32xbf16> to vector<64x32xbf16>
    %c1_314 = arith.constant 1 : index
    %c0_315 = arith.constant 0 : index
    %c0_316 = arith.constant 0 : index
    %979 = vector.load %arg21[%c1_314, %c0_315, %c0_316] : memref<2x1x32xf32, #tpu.memory_space<vmem>>, vector<1x1x32xf32>
    %980 = vector.shape_cast %979 : vector<1x1x32xf32> to vector<1x32xf32>
    %981 = arith.truncf %972 : vector<8x32xf32> to vector<8x32xbf16>
    %cst_317 = arith.constant dense<0.000000e+00> : vector<8x64xf32>
    %982 = tpu.matmul %981, %974, %cst_317 {dimension_numbers = #tpu.dot_dimension_numbers<[1], [0], [0], [1], [0, 0, 1, 1], [], []>} : vector<8x32xbf16>, vector<32x64xbf16>, vector<8x64xf32> -> vector<8x64xf32>
    %983 = vector.broadcast %976 : vector<1x64xf32> to vector<8x64xf32>
    %984 = arith.addf %982, %983 : vector<8x64xf32>
    %cst_318 = arith.constant 0.000000e+00 : f32
    %985 = vector.broadcast %cst_318 : f32 to vector<8x64xf32>
    %986 = arith.maximumf %984, %985 : vector<8x64xf32>
    %987 = arith.truncf %986 : vector<8x64xf32> to vector<8x64xbf16>
    %cst_319 = arith.constant dense<0.000000e+00> : vector<8x32xf32>
    %988 = tpu.matmul %987, %978, %cst_319 {dimension_numbers = #tpu.dot_dimension_numbers<[1], [0], [0], [1], [0, 0, 1, 1], [], []>} : vector<8x64xbf16>, vector<64x32xbf16>, vector<8x32xf32> -> vector<8x32xf32>
    %989 = vector.broadcast %980 : vector<1x32xf32> to vector<8x32xf32>
    %990 = arith.addf %988, %989 : vector<8x32xf32>
    %991 = arith.addf %972, %990 : vector<8x32xf32>
    %992 = vector.extract_strided_slice %697 {offsets = [2, 0], sizes = [1, 32], strides = [1, 1]} : vector<3x32xf32> to vector<1x32xf32>
    %993 = vector.extract_strided_slice %699 {offsets = [2, 0], sizes = [1, 32], strides = [1, 1]} : vector<3x32xf32> to vector<1x32xf32>
    %cst_320 = arith.constant dense<0.000000e+00> : vector<8xf32>
    %994 = vector.multi_reduction <add>, %991, %cst_320 [1] : vector<8x32xf32> to vector<8xf32>
    %995 = vector.shape_cast %994 : vector<8xf32> to vector<8x1xf32>
    %cst_321 = arith.constant 3.200000e+01 : f32
    %996 = vector.broadcast %cst_321 : f32 to vector<8x1xf32>
    %997 = arith.divf %995, %996 : vector<8x1xf32>
    %998 = arith.mulf %991, %991 : vector<8x32xf32>
    %cst_322 = arith.constant dense<0.000000e+00> : vector<8xf32>
    %999 = vector.multi_reduction <add>, %998, %cst_322 [1] : vector<8x32xf32> to vector<8xf32>
    %1000 = vector.shape_cast %999 : vector<8xf32> to vector<8x1xf32>
    %cst_323 = arith.constant 3.200000e+01 : f32
    %1001 = vector.broadcast %cst_323 : f32 to vector<8x1xf32>
    %1002 = arith.divf %1000, %1001 : vector<8x1xf32>
    %1003 = arith.mulf %997, %997 : vector<8x1xf32>
    %1004 = arith.subf %1002, %1003 : vector<8x1xf32>
    %1005 = vector.broadcast %997 : vector<8x1xf32> to vector<8x32xf32>
    %1006 = arith.subf %991, %1005 : vector<8x32xf32>
    %cst_324 = arith.constant 9.99999974E-6 : f32
    %1007 = vector.broadcast %cst_324 : f32 to vector<8x1xf32>
    %1008 = arith.addf %1004, %1007 : vector<8x1xf32>
    %1009 = math.rsqrt %1008 : vector<8x1xf32>
    %1010 = vector.broadcast %1009 : vector<8x1xf32> to vector<8x32xf32>
    %1011 = arith.mulf %1006, %1010 : vector<8x32xf32>
    %1012 = vector.broadcast %992 : vector<1x32xf32> to vector<8x32xf32>
    %1013 = arith.mulf %1011, %1012 : vector<8x32xf32>
    %1014 = vector.broadcast %993 : vector<1x32xf32> to vector<8x32xf32>
    %1015 = arith.addf %1013, %1014 : vector<8x32xf32>
    %c0_325 = arith.constant 0 : index
    %c0_326 = arith.constant 0 : index
    %1016 = vector.load %arg24[%c0_325, %c0_326] : memref<32x128xbf16, #tpu.memory_space<vmem>>, vector<32x128xbf16>
    %1017 = arith.truncf %1015 : vector<8x32xf32> to vector<8x32xbf16>
    %cst_327 = arith.constant dense<0.000000e+00> : vector<8x128xf32>
    %1018 = tpu.matmul %1017, %1016, %cst_327 {dimension_numbers = #tpu.dot_dimension_numbers<[1], [0], [0], [1], [0, 0, 1, 1], [], []>} : vector<8x32xbf16>, vector<32x128xbf16>, vector<8x128xf32> -> vector<8x128xf32>
    %c0_328 = arith.constant 0 : index
    %c0_329 = arith.constant 0 : index
    %1019 = vector.load %arg25[%c0_328, %c0_329] : memref<1x128xf32, #tpu.memory_space<vmem>>, vector<1x128xf32>
    %1020 = vector.broadcast %1019 : vector<1x128xf32> to vector<8x128xf32>
    %1021 = arith.addf %1018, %1020 : vector<8x128xf32>
    %c0_330 = arith.constant 0 : index
    %c0_331 = arith.constant 0 : index
    %c0_332 = arith.constant 0 : index
    %1022 = vector.load %arg26[%c0_330, %c0_331, %c0_332] : memref<1x8x128xf32, #tpu.memory_space<vmem>>, vector<1x8x128xf32>
    %1023 = vector.shape_cast %1022 : vector<1x8x128xf32> to vector<8x128xf32>
    %1024 = vector.shape_cast %1021 : vector<8x128xf32> to vector<1x8x128xf32>
    tpu.vector_store %arg26[%c0_330, %c0_331, %c0_332], %1024 {strides = array<i32>} : memref<1x8x128xf32, #tpu.memory_space<vmem>>, vector<1x8x128xf32>,
    return
  }
  func.func @transform_0(%arg0: i32) -> (i32, i32, i32) {
    %c0_i32 = arith.constant 0 : i32
    %c0_i32_0 = arith.constant 0 : i32
    %c0_i32_1 = arith.constant 0 : i32
    return %arg0, %c0_i32, %c0_i32_0 : i32, i32, i32
  }
  func.func @transform_1(%arg0: i32) -> (i32, i32, i32) {
    %c0_i32 = arith.constant 0 : i32
    %c0_i32_0 = arith.constant 0 : i32
    %c0_i32_1 = arith.constant 0 : i32
    return %arg0, %c0_i32, %c0_i32_0 : i32, i32, i32
  }
  func.func @transform_2(%arg0: i32) -> (i32, i32, i32) {
    %c0_i32 = arith.constant 0 : i32
    %c0_i32_0 = arith.constant 0 : i32
    %c0_i32_1 = arith.constant 0 : i32
    return %arg0, %c0_i32, %c0_i32_0 : i32, i32, i32
  }
  func.func @transform_3(%arg0: i32) -> (i32, i32, i32) {
    %c0_i32 = arith.constant 0 : i32
    %c0_i32_0 = arith.constant 0 : i32
    %c0_i32_1 = arith.constant 0 : i32
    return %arg0, %c0_i32, %c0_i32_0 : i32, i32, i32
  }
  func.func @transform_4(%arg0: i32) -> (i32, i32, i32) {
    %c0_i32 = arith.constant 0 : i32
    %c0_i32_0 = arith.constant 0 : i32
    %c0_i32_1 = arith.constant 0 : i32
    %c0_i32_2 = arith.constant 0 : i32
    return %c0_i32, %c0_i32_0, %c0_i32_1 : i32, i32, i32
  }
  func.func @transform_5(%arg0: i32) -> (i32, i32, i32) {
    %c0_i32 = arith.constant 0 : i32
    %c0_i32_0 = arith.constant 0 : i32
    %c0_i32_1 = arith.constant 0 : i32
    %c0_i32_2 = arith.constant 0 : i32
    return %c0_i32, %c0_i32_0, %c0_i32_1 : i32, i32, i32
  }
  func.func @transform_6(%arg0: i32) -> (i32, i32, i32) {
    %c0_i32 = arith.constant 0 : i32
    %c0_i32_0 = arith.constant 0 : i32
    %c0_i32_1 = arith.constant 0 : i32
    %c0_i32_2 = arith.constant 0 : i32
    return %c0_i32, %c0_i32_0, %c0_i32_1 : i32, i32, i32
  }
  func.func @transform_7(%arg0: i32) -> (i32, i32, i32) {
    %c0_i32 = arith.constant 0 : i32
    %c0_i32_0 = arith.constant 0 : i32
    %c0_i32_1 = arith.constant 0 : i32
    %c0_i32_2 = arith.constant 0 : i32
    return %c0_i32, %c0_i32_0, %c0_i32_1 : i32, i32, i32
  }
  func.func @transform_8(%arg0: i32) -> (i32, i32, i32) {
    %c0_i32 = arith.constant 0 : i32
    %c0_i32_0 = arith.constant 0 : i32
    %c0_i32_1 = arith.constant 0 : i32
    %c0_i32_2 = arith.constant 0 : i32
    return %c0_i32, %c0_i32_0, %c0_i32_1 : i32, i32, i32
  }
  func.func @transform_9(%arg0: i32) -> (i32, i32, i32) {
    %c0_i32 = arith.constant 0 : i32
    %c0_i32_0 = arith.constant 0 : i32
    %c0_i32_1 = arith.constant 0 : i32
    %c0_i32_2 = arith.constant 0 : i32
    return %c0_i32, %c0_i32_0, %c0_i32_1 : i32, i32, i32
  }
  func.func @transform_10(%arg0: i32) -> (i32, i32, i32) {
    %c0_i32 = arith.constant 0 : i32
    %c0_i32_0 = arith.constant 0 : i32
    %c0_i32_1 = arith.constant 0 : i32
    %c0_i32_2 = arith.constant 0 : i32
    return %c0_i32, %c0_i32_0, %c0_i32_1 : i32, i32, i32
  }
  func.func @transform_11(%arg0: i32) -> (i32, i32, i32) {
    %c0_i32 = arith.constant 0 : i32
    %c0_i32_0 = arith.constant 0 : i32
    %c0_i32_1 = arith.constant 0 : i32
    %c0_i32_2 = arith.constant 0 : i32
    return %c0_i32, %c0_i32_0, %c0_i32_1 : i32, i32, i32
  }
  func.func @transform_12(%arg0: i32) -> (i32, i32, i32) {
    %c0_i32 = arith.constant 0 : i32
    %c0_i32_0 = arith.constant 0 : i32
    %c0_i32_1 = arith.constant 0 : i32
    %c0_i32_2 = arith.constant 0 : i32
    return %c0_i32, %c0_i32_0, %c0_i32_1 : i32, i32, i32
  }
  func.func @transform_13(%arg0: i32) -> (i32, i32, i32) {
    %c0_i32 = arith.constant 0 : i32
    %c0_i32_0 = arith.constant 0 : i32
    %c0_i32_1 = arith.constant 0 : i32
    %c0_i32_2 = arith.constant 0 : i32
    return %c0_i32, %c0_i32_0, %c0_i32_1 : i32, i32, i32
  }
  func.func @transform_14(%arg0: i32) -> (i32, i32, i32) {
    %c0_i32 = arith.constant 0 : i32
    %c0_i32_0 = arith.constant 0 : i32
    %c0_i32_1 = arith.constant 0 : i32
    %c0_i32_2 = arith.constant 0 : i32
    return %c0_i32, %c0_i32_0, %c0_i32_1 : i32, i32, i32
  }
  func.func @transform_15(%arg0: i32) -> (i32, i32, i32) {
    %c0_i32 = arith.constant 0 : i32
    %c0_i32_0 = arith.constant 0 : i32
    %c0_i32_1 = arith.constant 0 : i32
    %c0_i32_2 = arith.constant 0 : i32
    return %c0_i32, %c0_i32_0, %c0_i32_1 : i32, i32, i32
  }
  func.func @transform_16(%arg0: i32) -> (i32, i32, i32) {
    %c0_i32 = arith.constant 0 : i32
    %c0_i32_0 = arith.constant 0 : i32
    %c0_i32_1 = arith.constant 0 : i32
    %c0_i32_2 = arith.constant 0 : i32
    return %c0_i32, %c0_i32_0, %c0_i32_1 : i32, i32, i32
  }
  func.func @transform_17(%arg0: i32) -> (i32, i32, i32) {
    %c0_i32 = arith.constant 0 : i32
    %c0_i32_0 = arith.constant 0 : i32
    %c0_i32_1 = arith.constant 0 : i32
    %c0_i32_2 = arith.constant 0 : i32
    return %c0_i32, %c0_i32_0, %c0_i32_1 : i32, i32, i32
  }
  func.func @transform_18(%arg0: i32) -> (i32, i32, i32) {
    %c0_i32 = arith.constant 0 : i32
    %c0_i32_0 = arith.constant 0 : i32
    %c0_i32_1 = arith.constant 0 : i32
    %c0_i32_2 = arith.constant 0 : i32
    return %c0_i32, %c0_i32_0, %c0_i32_1 : i32, i32, i32
  }
  func.func @transform_19(%arg0: i32) -> (i32, i32, i32) {
    %c0_i32 = arith.constant 0 : i32
    %c0_i32_0 = arith.constant 0 : i32
    %c0_i32_1 = arith.constant 0 : i32
    %c0_i32_2 = arith.constant 0 : i32
    return %c0_i32, %c0_i32_0, %c0_i32_1 : i32, i32, i32
  }
  func.func @transform_20(%arg0: i32) -> (i32, i32, i32) {
    %c0_i32 = arith.constant 0 : i32
    %c0_i32_0 = arith.constant 0 : i32
    %c0_i32_1 = arith.constant 0 : i32
    %c0_i32_2 = arith.constant 0 : i32
    return %c0_i32, %c0_i32_0, %c0_i32_1 : i32, i32, i32
  }
  func.func @transform_21(%arg0: i32) -> (i32, i32, i32) {
    %c0_i32 = arith.constant 0 : i32
    %c0_i32_0 = arith.constant 0 : i32
    %c0_i32_1 = arith.constant 0 : i32
    %c0_i32_2 = arith.constant 0 : i32
    return %c0_i32, %c0_i32_0, %c0_i32_1 : i32, i32, i32
  }
  func.func @transform_22(%arg0: i32) -> (i32, i32, i32) {
    %c0_i32 = arith.constant 0 : i32
    %c0_i32_0 = arith.constant 0 : i32
    %c0_i32_1 = arith.constant 0 : i32
    %c0_i32_2 = arith.constant 0 : i32
    return %c0_i32, %c0_i32_0, %c0_i32_1 : i32, i32, i32
  }
  func.func @transform_23(%arg0: i32) -> (i32, i32) {
    %c0_i32 = arith.constant 0 : i32
    %c0_i32_0 = arith.constant 0 : i32
    %c0_i32_1 = arith.constant 0 : i32
    return %c0_i32, %c0_i32_0 : i32, i32
  }
  func.func @transform_24(%arg0: i32) -> (i32, i32) {
    %c0_i32 = arith.constant 0 : i32
    %c0_i32_0 = arith.constant 0 : i32
    %c0_i32_1 = arith.constant 0 : i32
    return %c0_i32, %c0_i32_0 : i32, i32
  }
  func.func @transform_25(%arg0: i32) -> (i32, i32, i32) {
    %c0_i32 = arith.constant 0 : i32
    %c0_i32_0 = arith.constant 0 : i32
    %c0_i32_1 = arith.constant 0 : i32
    return %arg0, %c0_i32, %c0_i32_0 : i32, i32, i32
  }
}

</mosaic_0001>

<llo_original>
// kernel: translation_transformer_forward.1
$region0: #{translation_transformer_forward.1}
  #allocation0 [shape = 'u32[]', space=smem, size = 0x4, offset = 0x4, fixed_abs, tag = 'smem constant byte address 0x4 - core index']
  #allocation1 [shape = 'u32[144,128]{1,0:T(1,128)}', space=vmem, size = 0x12000, scoped, tag = 'internal scratch']
  %s0 = inlined_call_operand.vmem [shape: f32[2,8,32], index: 0, kind: input, shape index: {}]
  %s1 = inlined_call_operand.vmem [shape: f32[2,8,32], index: 1, kind: input, shape index: {}]
  %s2 = inlined_call_operand.vmem [shape: f32[2,1,8], index: 2, kind: input, shape index: {}]
  %s3 = inlined_call_operand.vmem [shape: f32[2,8,8], index: 3, kind: input, shape index: {}]
  %s4 = inlined_call_operand.vmem [shape: bf16[2,32,96], index: 4, kind: input, shape index: {}]
  %s5 = inlined_call_operand.vmem [shape: bf16[2,32,32], index: 5, kind: input, shape index: {}]
  %s6 = inlined_call_operand.vmem [shape: bf16[2,32,64], index: 6, kind: input, shape index: {}]
  %s7 = inlined_call_operand.vmem [shape: f32[2,1,64], index: 7, kind: input, shape index: {}]
  %s8 = inlined_call_operand.vmem [shape: bf16[2,64,32], index: 8, kind: input, shape index: {}]
  %s9 = inlined_call_operand.vmem [shape: f32[2,1,32], index: 9, kind: input, shape index: {}]
  %s10 = inlined_call_operand.vmem [shape: f32[2,2,32], index: 10, kind: input, shape index: {}]
  %s11 = inlined_call_operand.vmem [shape: f32[2,2,32], index: 11, kind: input, shape index: {}]
  %s12 = inlined_call_operand.vmem [shape: bf16[2,32,96], index: 12, kind: input, shape index: {}]
  %s13 = inlined_call_operand.vmem [shape: bf16[2,32,32], index: 13, kind: input, shape index: {}]
  %s14 = inlined_call_operand.vmem [shape: bf16[2,32,32], index: 14, kind: input, shape index: {}]
  %s15 = inlined_call_operand.vmem [shape: bf16[2,32,64], index: 15, kind: input, shape index: {}]
  %s16 = inlined_call_operand.vmem [shape: bf16[2,32,32], index: 16, kind: input, shape index: {}]
  %s17 = inlined_call_operand.vmem [shape: bf16[2,32,64], index: 17, kind: input, shape index: {}]
  %s18 = inlined_call_operand.vmem [shape: f32[2,1,64], index: 18, kind: input, shape index: {}]
  %s19 = inlined_call_operand.vmem [shape: bf16[2,64,32], index: 19, kind: input, shape index: {}]
  %s20 = inlined_call_operand.vmem [shape: f32[2,1,32], index: 20, kind: input, shape index: {}]
  %s21 = inlined_call_operand.vmem [shape: f32[2,3,32], index: 21, kind: input, shape index: {}]
  %s22 = inlined_call_operand.vmem [shape: f32[2,3,32], index: 22, kind: input, shape index: {}]
  %s23 = inlined_call_operand.vmem [shape: bf16[32,128], index: 23, kind: input, shape index: {}]
  %s24 = inlined_call_operand.vmem [shape: f32[1,128], index: 24, kind: input, shape index: {}]
  %s25 = inlined_call_operand.hbm [shape: f32[2,8,128], index: 25, kind: output, shape index: {}]
  %s26 = sld [smem:[#allocation0]]
  $region133: #{translation_transformer_forward.1} parent=0
    _
  %s28 = ssub.s32 1, %s26
  %s29 = scalar_select 0, %s28, %s26
  $region1: #{translation_transformer_forward.1} parent=0
    #allocation2 [shape = 'u8[8192]{0}', space=vmem, size = 0x2000, scoped, tag = 'output window, operand 0']
    #allocation3 [shape = 's32[2]{0}', space=sflag, size = 0x8, scoped, tag = 'scoped memory for translation_transformer_forward.1']
    %30 = vsyncpa [#allocation3], 0
    %s31 = scalar_lea.sflag [#allocation3], 1
    %32 = vsyncpa %s31, 0
    loop: start=0, step=1, limit=4
    $region2: #{translation_transformer_forward.1} parent=1 // loop_pre_header
      _
    $region3: #{translation_transformer_forward.1} parent=1 // loop_header
      %s34 = sphi 0, %s38
      %p35 = scmp.ge.s32.totalorder %s34, 4
      %s44 = sphi 0, %s46
      %s47 = sphi 0, %s44
      %s48 = sphi 0, %s47
      %s64 = sphi 0, %s48
      %s70 = sphi 0, %s72
      %s73 = sphi 0, %s70
      %s74 = sphi 0, %s73
      %s90 = sphi 0, %s74
      %s96 = sphi 0, %s98
      %s99 = sphi 0, %s96
      %s100 = sphi 0, %s99
      %s116 = sphi 0, %s100
      %s122 = sphi 0, %s124
      %s125 = sphi 0, %s122
      %s126 = sphi 0, %s125
      %s142 = sphi 0, %s126
      %s146 = sphi 0, %s146
      %s148 = sphi 0, %s146
      %s149 = sphi 0, %s148
      %s163 = sphi 0, %s149
      %s167 = sphi 0, %s167
      %s169 = sphi 0, %s167
      %s170 = sphi 0, %s169
      %s184 = sphi 0, %s170
      %s188 = sphi 0, %s188
      %s190 = sphi 0, %s188
      %s191 = sphi 0, %s190
      %s205 = sphi 0, %s191
      %s209 = sphi 0, %s209
      %s211 = sphi 0, %s209
      %s212 = sphi 0, %s211
      %s226 = sphi 0, %s212
      %s230 = sphi 0, %s230
      %s232 = sphi 0, %s230
      %s233 = sphi 0, %s232
      %s247 = sphi 0, %s233
      %s251 = sphi 0, %s251
      %s253 = sphi 0, %s251
      %s254 = sphi 0, %s253
      %s268 = sphi 0, %s254
      %s272 = sphi 0, %s272
      %s274 = sphi 0, %s272
      %s275 = sphi 0, %s274
      %s289 = sphi 0, %s275
      %s293 = sphi 0, %s293
      %s295 = sphi 0, %s293
      %s296 = sphi 0, %s295
      %s310 = sphi 0, %s296
      %s314 = sphi 0, %s314
      %s316 = sphi 0, %s314
      %s317 = sphi 0, %s316
      %s331 = sphi 0, %s317
      %s335 = sphi 0, %s335
      %s337 = sphi 0, %s335
      %s338 = sphi 0, %s337
      %s352 = sphi 0, %s338
      %s356 = sphi 0, %s356
      %s358 = sphi 0, %s356
      %s359 = sphi 0, %s358
      %s373 = sphi 0, %s359
      %s377 = sphi 0, %s377
      %s379 = sphi 0, %s377
      %s380 = sphi 0, %s379
      %s394 = sphi 0, %s380
      %s398 = sphi 0, %s398
      %s400 = sphi 0, %s398
      %s401 = sphi 0, %s400
      %s415 = sphi 0, %s401
      %s419 = sphi 0, %s419
      %s421 = sphi 0, %s419
      %s422 = sphi 0, %s421
      %s436 = sphi 0, %s422
      %s440 = sphi 0, %s440
      %s442 = sphi 0, %s440
      %s443 = sphi 0, %s442
      %s457 = sphi 0, %s443
      %s461 = sphi 0, %s461
      %s463 = sphi 0, %s461
      %s464 = sphi 0, %s463
      %s478 = sphi 0, %s464
      %s482 = sphi 0, %s482
      %s484 = sphi 0, %s482
      %s485 = sphi 0, %s484
      %s499 = sphi 0, %s485
      %s503 = sphi 0, %s503
      %s505 = sphi 0, %s503
      %s506 = sphi 0, %s505
      %s520 = sphi 0, %s506
      %s524 = sphi 0, %s524
      %s526 = sphi 0, %s524
      %s527 = sphi 0, %s526
      %s541 = sphi 0, %s527
      %s545 = sphi 0, %s545
      %s547 = sphi 0, %s545
      %s548 = sphi 0, %s547
      %s562 = sphi 0, %s548
      %s566 = sphi 0, %s566
      %s568 = sphi 0, %s566
      %s569 = sphi 0, %s568
      %s583 = sphi 0, %s569
      %s589 = sphi 0, %s591
      %s592 = sphi 0, %s589
      %s593 = sphi 0, %s592
      %s609 = sphi 0, %s593
    $region4: #{translation_transformer_forward.1} parent=1 // loop_header_branch
      %37 = sbr.rel (%p35) target = $region8
    $region5: #{translation_transformer_forward.1} parent=1 // loop_body
      %s39 = ssub.s32 %s34, 1
      %s40 = ssub.s32 %s34, 2
      %s41 = sadd.s32 %s34, 1
      %s42 = ssub.s32 %s34, %s41
      %p43 = scmp.eq.s32.totalorder %s42, 0
      %s45 = sadd.s32 %s44, 1
      %s46 = scalar_select %p43, %s44, %s45
      %p49 = pneg %p43
      %p50 = scmp.eq.s32.totalorder %s34, 1
      %p51 = por %p49, %p50
      %p52 = scmp.ne.s32.totalorder %s44, %s47
      %p53 = scmp.eq.s32.totalorder %s34, 0
      %p54 = por %p52, %p53
      %p55 = scmp.ne.s32.totalorder %s44, %s47
      %p56 = scmp.eq.s32.totalorder %s39, 1
      %p57 = por %p55, %p56
      %p58 = scmp.ne.s32.totalorder %s47, %s48
      %p59 = scmp.eq.s32.totalorder %s39, 0
      %p60 = por %p58, %p59
      %p61 = scmp.ne.s32.totalorder %s47, %s48
      %p62 = scmp.eq.s32.totalorder %s40, 1
      %p63 = por %p61, %p62
      %p65 = scmp.ne.s32.totalorder %s48, %s64
      %p66 = scmp.eq.s32.totalorder %s40, 0
      %p67 = por %p65, %p66
      %s68 = ssub.s32 %s34, %s41
      %p69 = scmp.eq.s32.totalorder %s68, 0
      %s71 = sadd.s32 %s70, 1
      %s72 = scalar_select %p69, %s70, %s71
      %p75 = pneg %p69
      %p76 = scmp.eq.s32.totalorder %s34, 1
      %p77 = por %p75, %p76
      %p78 = scmp.ne.s32.totalorder %s70, %s73
      %p79 = scmp.eq.s32.totalorder %s34, 0
      %p80 = por %p78, %p79
      %p81 = scmp.ne.s32.totalorder %s70, %s73
      %p82 = scmp.eq.s32.totalorder %s39, 1
      %p83 = por %p81, %p82
      %p84 = scmp.ne.s32.totalorder %s73, %s74
      %p85 = scmp.eq.s32.totalorder %s39, 0
      %p86 = por %p84, %p85
      %p87 = scmp.ne.s32.totalorder %s73, %s74
      %p88 = scmp.eq.s32.totalorder %s40, 1
      %p89 = por %p87, %p88
      %p91 = scmp.ne.s32.totalorder %s74, %s90
      %p92 = scmp.eq.s32.totalorder %s40, 0
      %p93 = por %p91, %p92
      %s94 = ssub.s32 %s34, %s41
      %p95 = scmp.eq.s32.totalorder %s94, 0
      %s97 = sadd.s32 %s96, 1
      %s98 = scalar_select %p95, %s96, %s97
      %p101 = pneg %p95
      %p102 = scmp.eq.s32.totalorder %s34, 1
      %p103 = por %p101, %p102
      %p104 = scmp.ne.s32.totalorder %s96, %s99
      %p105 = scmp.eq.s32.totalorder %s34, 0
      %p106 = por %p104, %p105
      %p107 = scmp.ne.s32.totalorder %s96, %s99
      %p108 = scmp.eq.s32.totalorder %s39, 1
      %p109 = por %p107, %p108
      %p110 = scmp.ne.s32.totalorder %s99, %s100
      %p111 = scmp.eq.s32.totalorder %s39, 0
      %p112 = por %p110, %p111
      %p113 = scmp.ne.s32.totalorder %s99, %s100
      %p114 = scmp.eq.s32.totalorder %s40, 1
      %p115 = por %p113, %p114
      %p117 = scmp.ne.s32.totalorder %s100, %s116
      %p118 = scmp.eq.s32.totalorder %s40, 0
      %p119 = por %p117, %p118
      %s120 = ssub.s32 %s34, %s41
      %p121 = scmp.eq.s32.totalorder %s120, 0
      %s123 = sadd.s32 %s122, 1
      %s124 = scalar_select %p121, %s122, %s123
      %p127 = pneg %p121
      %p128 = scmp.eq.s32.totalorder %s34, 1
      %p129 = por %p127, %p128
      %p130 = scmp.ne.s32.totalorder %s122, %s125
      %p131 = scmp.eq.s32.totalorder %s34, 0
      %p132 = por %p130, %p131
      %p133 = scmp.ne.s32.totalorder %s122, %s125
      %p134 = scmp.eq.s32.totalorder %s39, 1
      %p135 = por %p133, %p134
      %p136 = scmp.ne.s32.totalorder %s125, %s126
      %p137 = scmp.eq.s32.totalorder %s39, 0
      %p138 = por %p136, %p137
      %p139 = scmp.ne.s32.totalorder %s125, %s126
      %p140 = scmp.eq.s32.totalorder %s40, 1
      %p141 = por %p139, %p140
      %p143 = scmp.ne.s32.totalorder %s126, %s142
      %p144 = scmp.eq.s32.totalorder %s40, 0
      %p145 = por %p143, %p144
      %s147 = sadd.s32 %s146, 1
      %p150 = scmp.eq.s32.totalorder %s34, 1
      %p151 = scmp.ne.s32.totalorder %s146, %s148
      %p152 = scmp.eq.s32.totalorder %s34, 0
      %p153 = por %p151, %p152
      %p154 = scmp.ne.s32.totalorder %s146, %s148
      %p155 = scmp.eq.s32.totalorder %s39, 1
      %p156 = por %p154, %p155
      %p157 = scmp.ne.s32.totalorder %s148, %s149
      %p158 = scmp.eq.s32.totalorder %s39, 0
      %p159 = por %p157, %p158
      %p160 = scmp.ne.s32.totalorder %s148, %s149
      %p161 = scmp.eq.s32.totalorder %s40, 1
      %p162 = por %p160, %p161
      %p164 = scmp.ne.s32.totalorder %s149, %s163
      %p165 = scmp.eq.s32.totalorder %s40, 0
      %p166 = por %p164, %p165
      %s168 = sadd.s32 %s167, 1
      %p171 = scmp.eq.s32.totalorder %s34, 1
      %p172 = scmp.ne.s32.totalorder %s167, %s169
      %p173 = scmp.eq.s32.totalorder %s34, 0
      %p174 = por %p172, %p173
      %p175 = scmp.ne.s32.totalorder %s167, %s169
      %p176 = scmp.eq.s32.totalorder %s39, 1
      %p177 = por %p175, %p176
      %p178 = scmp.ne.s32.totalorder %s169, %s170
      %p179 = scmp.eq.s32.totalorder %s39, 0
      %p180 = por %p178, %p179
      %p181 = scmp.ne.s32.totalorder %s169, %s170
      %p182 = scmp.eq.s32.totalorder %s40, 1
      %p183 = por %p181, %p182
      %p185 = scmp.ne.s32.totalorder %s170, %s184
      %p186 = scmp.eq.s32.totalorder %s40, 0
      %p187 = por %p185, %p186
      %s189 = sadd.s32 %s188, 1
      %p192 = scmp.eq.s32.totalorder %s34, 1
      %p193 = scmp.ne.s32.totalorder %s188, %s190
      %p194 = scmp.eq.s32.totalorder %s34, 0
      %p195 = por %p193, %p194
      %p196 = scmp.ne.s32.totalorder %s188, %s190
      %p197 = scmp.eq.s32.totalorder %s39, 1
      %p198 = por %p196, %p197
      %p199 = scmp.ne.s32.totalorder %s190, %s191
      %p200 = scmp.eq.s32.totalorder %s39, 0
      %p201 = por %p199, %p200
      %p202 = scmp.ne.s32.totalorder %s190, %s191
      %p203 = scmp.eq.s32.totalorder %s40, 1
      %p204 = por %p202, %p203
      %p206 = scmp.ne.s32.totalorder %s191, %s205
      %p207 = scmp.eq.s32.totalorder %s40, 0
      %p208 = por %p206, %p207
      %s210 = sadd.s32 %s209, 1
      %p213 = scmp.eq.s32.totalorder %s34, 1
      %p214 = scmp.ne.s32.totalorder %s209, %s211
      %p215 = scmp.eq.s32.totalorder %s34, 0
      %p216 = por %p214, %p215
      %p217 = scmp.ne.s32.totalorder %s209, %s211
      %p218 = scmp.eq.s32.totalorder %s39, 1
      %p219 = por %p217, %p218
      %p220 = scmp.ne.s32.totalorder %s211, %s212
      %p221 = scmp.eq.s32.totalorder %s39, 0
      %p222 = por %p220, %p221
      %p223 = scmp.ne.s32.totalorder %s211, %s212
      %p224 = scmp.eq.s32.totalorder %s40, 1
      %p225 = por %p223, %p224
      %p227 = scmp.ne.s32.totalorder %s212, %s226
      %p228 = scmp.eq.s32.totalorder %s40, 0
      %p229 = por %p227, %p228
      %s231 = sadd.s32 %s230, 1
      %p234 = scmp.eq.s32.totalorder %s34, 1
      %p235 = scmp.ne.s32.totalorder %s230, %s232
      %p236 = scmp.eq.s32.totalorder %s34, 0
      %p237 = por %p235, %p236
      %p238 = scmp.ne.s32.totalorder %s230, %s232
      %p239 = scmp.eq.s32.totalorder %s39, 1
      %p240 = por %p238, %p239
      %p241 = scmp.ne.s32.totalorder %s232, %s233
      %p242 = scmp.eq.s32.totalorder %s39, 0
      %p243 = por %p241, %p242
      %p244 = scmp.ne.s32.totalorder %s232, %s233
      %p245 = scmp.eq.s32.totalorder %s40, 1
      %p246 = por %p244, %p245
      %p248 = scmp.ne.s32.totalorder %s233, %s247
      %p249 = scmp.eq.s32.totalorder %s40, 0
      %p250 = por %p248, %p249
      %s252 = sadd.s32 %s251, 1
      %p255 = scmp.eq.s32.totalorder %s34, 1
      %p256 = scmp.ne.s32.totalorder %s251, %s253
      %p257 = scmp.eq.s32.totalorder %s34, 0
      %p258 = por %p256, %p257
      %p259 = scmp.ne.s32.totalorder %s251, %s253
      %p260 = scmp.eq.s32.totalorder %s39, 1
      %p261 = por %p259, %p260
      %p262 = scmp.ne.s32.totalorder %s253, %s254
      %p263 = scmp.eq.s32.totalorder %s39, 0
      %p264 = por %p262, %p263
      %p265 = scmp.ne.s32.totalorder %s253, %s254
      %p266 = scmp.eq.s32.totalorder %s40, 1
      %p267 = por %p265, %p266
      %p269 = scmp.ne.s32.totalorder %s254, %s268
      %p270 = scmp.eq.s32.totalorder %s40, 0
      %p271 = por %p269, %p270
      %s273 = sadd.s32 %s272, 1
      %p276 = scmp.eq.s32.totalorder %s34, 1
      %p277 = scmp.ne.s32.totalorder %s272, %s274
      %p278 = scmp.eq.s32.totalorder %s34, 0
      %p279 = por %p277, %p278
      %p280 = scmp.ne.s32.totalorder %s272, %s274
      %p281 = scmp.eq.s32.totalorder %s39, 1
      %p282 = por %p280, %p281
      %p283 = scmp.ne.s32.totalorder %s274, %s275
      %p284 = scmp.eq.s32.totalorder %s39, 0
      %p285 = por %p283, %p284
      %p286 = scmp.ne.s32.totalorder %s274, %s275
      %p287 = scmp.eq.s32.totalorder %s40, 1
      %p288 = por %p286, %p287
      %p290 = scmp.ne.s32.totalorder %s275, %s289
      %p291 = scmp.eq.s32.totalorder %s40, 0
      %p292 = por %p290, %p291
      %s294 = sadd.s32 %s293, 1
      %p297 = scmp.eq.s32.totalorder %s34, 1
      %p298 = scmp.ne.s32.totalorder %s293, %s295
      %p299 = scmp.eq.s32.totalorder %s34, 0
      %p300 = por %p298, %p299
      %p301 = scmp.ne.s32.totalorder %s293, %s295
      %p302 = scmp.eq.s32.totalorder %s39, 1
      %p303 = por %p301, %p302
      %p304 = scmp.ne.s32.totalorder %s295, %s296
      %p305 = scmp.eq.s32.totalorder %s39, 0
      %p306 = por %p304, %p305
      %p307 = scmp.ne.s32.totalorder %s295, %s296
      %p308 = scmp.eq.s32.totalorder %s40, 1
      %p309 = por %p307, %p308
      %p311 = scmp.ne.s32.totalorder %s296, %s310
      %p312 = scmp.eq.s32.totalorder %s40, 0
      %p313 = por %p311, %p312
      %s315 = sadd.s32 %s314, 1
      %p318 = scmp.eq.s32.totalorder %s34, 1
      %p319 = scmp.ne.s32.totalorder %s314, %s316
      %p320 = scmp.eq.s32.totalorder %s34, 0
      %p321 = por %p319, %p320
      %p322 = scmp.ne.s32.totalorder %s314, %s316
      %p323 = scmp.eq.s32.totalorder %s39, 1
      %p324 = por %p322, %p323
      %p325 = scmp.ne.s32.totalorder %s316, %s317
      %p326 = scmp.eq.s32.totalorder %s39, 0
      %p327 = por %p325, %p326
      %p328 = scmp.ne.s32.totalorder %s316, %s317
      %p329 = scmp.eq.s32.totalorder %s40, 1
      %p330 = por %p328, %p329
      %p332 = scmp.ne.s32.totalorder %s317, %s331
      %p333 = scmp.eq.s32.totalorder %s40, 0
      %p334 = por %p332, %p333
      %s336 = sadd.s32 %s335, 1
      %p339 = scmp.eq.s32.totalorder %s34, 1
      %p340 = scmp.ne.s32.totalorder %s335, %s337
      %p341 = scmp.eq.s32.totalorder %s34, 0
      %p342 = por %p340, %p341
      %p343 = scmp.ne.s32.totalorder %s335, %s337
      %p344 = scmp.eq.s32.totalorder %s39, 1
      %p345 = por %p343, %p344
      %p346 = scmp.ne.s32.totalorder %s337, %s338
      %p347 = scmp.eq.s32.totalorder %s39, 0
      %p348 = por %p346, %p347
      %p349 = scmp.ne.s32.totalorder %s337, %s338
      %p350 = scmp.eq.s32.totalorder %s40, 1
      %p351 = por %p349, %p350
      %p353 = scmp.ne.s32.totalorder %s338, %s352
      %p354 = scmp.eq.s32.totalorder %s40, 0
      %p355 = por %p353, %p354
      %s357 = sadd.s32 %s356, 1
      %p360 = scmp.eq.s32.totalorder %s34, 1
      %p361 = scmp.ne.s32.totalorder %s356, %s358
      %p362 = scmp.eq.s32.totalorder %s34, 0
      %p363 = por %p361, %p362
      %p364 = scmp.ne.s32.totalorder %s356, %s358
      %p365 = scmp.eq.s32.totalorder %s39, 1
      %p366 = por %p364, %p365
      %p367 = scmp.ne.s32.totalorder %s358, %s359
      %p368 = scmp.eq.s32.totalorder %s39, 0
      %p369 = por %p367, %p368
      %p370 = scmp.ne.s32.totalorder %s358, %s359
      %p371 = scmp.eq.s32.totalorder %s40, 1
      %p372 = por %p370, %p371
      %p374 = scmp.ne.s32.totalorder %s359, %s373
      %p375 = scmp.eq.s32.totalorder %s40, 0
      %p376 = por %p374, %p375
      %s378 = sadd.s32 %s377, 1
      %p381 = scmp.eq.s32.totalorder %s34, 1
      %p382 = scmp.ne.s32.totalorder %s377, %s379
      %p383 = scmp.eq.s32.totalorder %s34, 0
      %p384 = por %p382, %p383
      %p385 = scmp.ne.s32.totalorder %s377, %s379
      %p386 = scmp.eq.s32.totalorder %s39, 1
      %p387 = por %p385, %p386
      %p388 = scmp.ne.s32.totalorder %s379, %s380
      %p389 = scmp.eq.s32.totalorder %s39, 0
      %p390 = por %p388, %p389
      %p391 = scmp.ne.s32.totalorder %s379, %s380
      %p392 = scmp.eq.s32.totalorder %s40, 1
      %p393 = por %p391, %p392
      %p395 = scmp.ne.s32.totalorder %s380, %s394
      %p396 = scmp.eq.s32.totalorder %s40, 0
      %p397 = por %p395, %p396
      %s399 = sadd.s32 %s398, 1
      %p402 = scmp.eq.s32.totalorder %s34, 1
      %p403 = scmp.ne.s32.totalorder %s398, %s400
      %p404 = scmp.eq.s32.totalorder %s34, 0
      %p405 = por %p403, %p404
      %p406 = scmp.ne.s32.totalorder %s398, %s400
      %p407 = scmp.eq.s32.totalorder %s39, 1
      %p408 = por %p406, %p407
      %p409 = scmp.ne.s32.totalorder %s400, %s401
      %p410 = scmp.eq.s32.totalorder %s39, 0
      %p411 = por %p409, %p410
      %p412 = scmp.ne.s32.totalorder %s400, %s401
      %p413 = scmp.eq.s32.totalorder %s40, 1
      %p414 = por %p412, %p413
      %p416 = scmp.ne.s32.totalorder %s401, %s415
      %p417 = scmp.eq.s32.totalorder %s40, 0
      %p418 = por %p416, %p417
      %s420 = sadd.s32 %s419, 1
      %p423 = scmp.eq.s32.totalorder %s34, 1
      %p424 = scmp.ne.s32.totalorder %s419, %s421
      %p425 = scmp.eq.s32.totalorder %s34, 0
      %p426 = por %p424, %p425
      %p427 = scmp.ne.s32.totalorder %s419, %s421
      %p428 = scmp.eq.s32.totalorder %s39, 1
      %p429 = por %p427, %p428
      %p430 = scmp.ne.s32.totalorder %s421, %s422
      %p431 = scmp.eq.s32.totalorder %s39, 0
      %p432 = por %p430, %p431
      %p433 = scmp.ne.s32.totalorder %s421, %s422
      %p434 = scmp.eq.s32.totalorder %s40, 1
      %p435 = por %p433, %p434
      %p437 = scmp.ne.s32.totalorder %s422, %s436
      %p438 = scmp.eq.s32.totalorder %s40, 0
      %p439 = por %p437, %p438
      %s441 = sadd.s32 %s440, 1
      %p444 = scmp.eq.s32.totalorder %s34, 1
      %p445 = scmp.ne.s32.totalorder %s440, %s442
      %p446 = scmp.eq.s32.totalorder %s34, 0
      %p447 = por %p445, %p446
      %p448 = scmp.ne.s32.totalorder %s440, %s442
      %p449 = scmp.eq.s32.totalorder %s39, 1
      %p450 = por %p448, %p449
      %p451 = scmp.ne.s32.totalorder %s442, %s443
      %p452 = scmp.eq.s32.totalorder %s39, 0
      %p453 = por %p451, %p452
      %p454 = scmp.ne.s32.totalorder %s442, %s443
      %p455 = scmp.eq.s32.totalorder %s40, 1
      %p456 = por %p454, %p455
      %p458 = scmp.ne.s32.totalorder %s443, %s457
      %p459 = scmp.eq.s32.totalorder %s40, 0
      %p460 = por %p458, %p459
      %s462 = sadd.s32 %s461, 1
      %p465 = scmp.eq.s32.totalorder %s34, 1
      %p466 = scmp.ne.s32.totalorder %s461, %s463
      %p467 = scmp.eq.s32.totalorder %s34, 0
      %p468 = por %p466, %p467
      %p469 = scmp.ne.s32.totalorder %s461, %s463
      %p470 = scmp.eq.s32.totalorder %s39, 1
      %p471 = por %p469, %p470
      %p472 = scmp.ne.s32.totalorder %s463, %s464
      %p473 = scmp.eq.s32.totalorder %s39, 0
      %p474 = por %p472, %p473
      %p475 = scmp.ne.s32.totalorder %s463, %s464
      %p476 = scmp.eq.s32.totalorder %s40, 1
      %p477 = por %p475, %p476
      %p479 = scmp.ne.s32.totalorder %s464, %s478
      %p480 = scmp.eq.s32.totalorder %s40, 0
      %p481 = por %p479, %p480
      %s483 = sadd.s32 %s482, 1
      %p486 = scmp.eq.s32.totalorder %s34, 1
      %p487 = scmp.ne.s32.totalorder %s482, %s484
      %p488 = scmp.eq.s32.totalorder %s34, 0
      %p489 = por %p487, %p488
      %p490 = scmp.ne.s32.totalorder %s482, %s484
      %p491 = scmp.eq.s32.totalorder %s39, 1
      %p492 = por %p490, %p491
      %p493 = scmp.ne.s32.totalorder %s484, %s485
      %p494 = scmp.eq.s32.totalorder %s39, 0
      %p495 = por %p493, %p494
      %p496 = scmp.ne.s32.totalorder %s484, %s485
      %p497 = scmp.eq.s32.totalorder %s40, 1
      %p498 = por %p496, %p497
      %p500 = scmp.ne.s32.totalorder %s485, %s499
      %p501 = scmp.eq.s32.totalorder %s40, 0
      %p502 = por %p500, %p501
      %s504 = sadd.s32 %s503, 1
      %p507 = scmp.eq.s32.totalorder %s34, 1
      %p508 = scmp.ne.s32.totalorder %s503, %s505
      %p509 = scmp.eq.s32.totalorder %s34, 0
      %p510 = por %p508, %p509
      %p511 = scmp.ne.s32.totalorder %s503, %s505
      %p512 = scmp.eq.s32.totalorder %s39, 1
      %p513 = por %p511, %p512
      %p514 = scmp.ne.s32.totalorder %s505, %s506
      %p515 = scmp.eq.s32.totalorder %s39, 0
      %p516 = por %p514, %p515
      %p517 = scmp.ne.s32.totalorder %s505, %s506
      %p518 = scmp.eq.s32.totalorder %s40, 1
      %p519 = por %p517, %p518
      %p521 = scmp.ne.s32.totalorder %s506, %s520
      %p522 = scmp.eq.s32.totalorder %s40, 0
      %p523 = por %p521, %p522
      %s525 = sadd.s32 %s524, 1
      %p528 = scmp.eq.s32.totalorder %s34, 1
      %p529 = scmp.ne.s32.totalorder %s524, %s526
      %p530 = scmp.eq.s32.totalorder %s34, 0
      %p531 = por %p529, %p530
      %p532 = scmp.ne.s32.totalorder %s524, %s526
      %p533 = scmp.eq.s32.totalorder %s39, 1
      %p534 = por %p532, %p533
      %p535 = scmp.ne.s32.totalorder %s526, %s527
      %p536 = scmp.eq.s32.totalorder %s39, 0
      %p537 = por %p535, %p536
      %p538 = scmp.ne.s32.totalorder %s526, %s527
      %p539 = scmp.eq.s32.totalorder %s40, 1
      %p540 = por %p538, %p539
      %p542 = scmp.ne.s32.totalorder %s527, %s541
      %p543 = scmp.eq.s32.totalorder %s40, 0
      %p544 = por %p542, %p543
      %s546 = sadd.s32 %s545, 1
      %p549 = scmp.eq.s32.totalorder %s34, 1
      %p550 = scmp.ne.s32.totalorder %s545, %s547
      %p551 = scmp.eq.s32.totalorder %s34, 0
      %p552 = por %p550, %p551
      %p553 = scmp.ne.s32.totalorder %s545, %s547
      %p554 = scmp.eq.s32.totalorder %s39, 1
      %p555 = por %p553, %p554
      %p556 = scmp.ne.s32.totalorder %s547, %s548
      %p557 = scmp.eq.s32.totalorder %s39, 0
      %p558 = por %p556, %p557
      %p559 = scmp.ne.s32.totalorder %s547, %s548
      %p560 = scmp.eq.s32.totalorder %s40, 1
      %p561 = por %p559, %p560
      %p563 = scmp.ne.s32.totalorder %s548, %s562
      %p564 = scmp.eq.s32.totalorder %s40, 0
      %p565 = por %p563, %p564
      %s567 = sadd.s32 %s566, 1
      %p570 = scmp.eq.s32.totalorder %s34, 1
      %p571 = scmp.ne.s32.totalorder %s566, %s568
      %p572 = scmp.eq.s32.totalorder %s34, 0
      %p573 = por %p571, %p572
      %p574 = scmp.ne.s32.totalorder %s566, %s568
      %p575 = scmp.eq.s32.totalorder %s39, 1
      %p576 = por %p574, %p575
      %p577 = scmp.ne.s32.totalorder %s568, %s569
      %p578 = scmp.eq.s32.totalorder %s39, 0
      %p579 = por %p577, %p578
      %p580 = scmp.ne.s32.totalorder %s568, %s569
      %p581 = scmp.eq.s32.totalorder %s40, 1
      %p582 = por %p580, %p581
      %p584 = scmp.ne.s32.totalorder %s569, %s583
      %p585 = scmp.eq.s32.totalorder %s40, 0
      %p586 = por %p584, %p585
      %s587 = ssub.s32 %s34, %s41
      %p588 = scmp.eq.s32.totalorder %s587, 0
      %s590 = sadd.s32 %s589, 1
      %s591 = scalar_select %p588, %s589, %s590
      %p594 = pneg %p588
      %p595 = scmp.eq.s32.totalorder %s34, 1
      %p596 = por %p594, %p595
      %p597 = scmp.ne.s32.totalorder %s589, %s592
      %p598 = scmp.eq.s32.totalorder %s34, 0
      %p599 = por %p597, %p598
      %p600 = scmp.ne.s32.totalorder %s589, %s592
      %p601 = scmp.eq.s32.totalorder %s39, 1
      %p602 = por %p600, %p601
      %p603 = scmp.ne.s32.totalorder %s592, %s593
      %p604 = scmp.eq.s32.totalorder %s39, 0
      %p605 = por %p603, %p604
      %p606 = scmp.ne.s32.totalorder %s592, %s593
      %p607 = scmp.eq.s32.totalorder %s40, 1
      %p608 = por %p606, %p607
      %p610 = scmp.ne.s32.totalorder %s593, %s609
      %p611 = scmp.eq.s32.totalorder %s40, 0
      %p612 = por %p610, %p611
      %p613 = scmp.le.s32.totalorder 1, %s34
      %p614 = scmp.lt.s32.totalorder %s34, 3
      %p615 = pnand %p613, %p614
      %p616 = pneg %p615
      // Predicated region
      $region9: #{translation_transformer_forward.1} parent=5 // pred_check
        _
      $region10: #{translation_transformer_forward.1} parent=5 // pred_check_branch
        %618 = sbr.rel (%p615) target = $region12
      $region11: #{translation_transformer_forward.1} parent=5 // pred_region
        %s619 = ssub.s32 %s34, 1
        // Predicated region
        $region13: #{translation_transformer_forward.1} parent=11 // pred_check
          %p620 = pneg %p159
        $region14: #{translation_transformer_forward.1} parent=11 // pred_check_branch
          %622 = sbr.rel (%p620) target = $region16
        $region15: #{translation_transformer_forward.1} parent=11 // pred_region
          _
        $region16: #{translation_transformer_forward.1} parent=11 // pred_fallthru
          _
        // Predicated region
        $region17: #{translation_transformer_forward.1} parent=11 // pred_check
          %p623 = pneg %p180
        $region18: #{translation_transformer_forward.1} parent=11 // pred_check_branch
          %625 = sbr.rel (%p623) target = $region20
        $region19: #{translation_transformer_forward.1} parent=11 // pred_region
          _
        $region20: #{translation_transformer_forward.1} parent=11 // pred_fallthru
          _
        // Predicated region
        $region21: #{translation_transformer_forward.1} parent=11 // pred_check
          %p626 = pneg %p201
        $region22: #{translation_transformer_forward.1} parent=11 // pred_check_branch
          %628 = sbr.rel (%p626) target = $region24
        $region23: #{translation_transformer_forward.1} parent=11 // pred_region
          _
        $region24: #{translation_transformer_forward.1} parent=11 // pred_fallthru
          _
        // Predicated region
        $region25: #{translation_transformer_forward.1} parent=11 // pred_check
          %p629 = pneg %p222
        $region26: #{translation_transformer_forward.1} parent=11 // pred_check_branch
          %631 = sbr.rel (%p629) target = $region28
        $region27: #{translation_transformer_forward.1} parent=11 // pred_region
          _
        $region28: #{translation_transformer_forward.1} parent=11 // pred_fallthru
          _
        // Predicated region
        $region29: #{translation_transformer_forward.1} parent=11 // pred_check
          %p632 = pneg %p243
        $region30: #{translation_transformer_forward.1} parent=11 // pred_check_branch
          %634 = sbr.rel (%p632) target = $region32
        $region31: #{translation_transformer_forward.1} parent=11 // pred_region
          _
        $region32: #{translation_transformer_forward.1} parent=11 // pred_fallthru
          _
        // Predicated region
        $region33: #{translation_transformer_forward.1} parent=11 // pred_check
          %p635 = pneg %p264
        $region34: #{translation_transformer_forward.1} parent=11 // pred_check_branch
          %637 = sbr.rel (%p635) target = $region36
        $region35: #{translation_transformer_forward.1} parent=11 // pred_region
          _
        $region36: #{translation_transformer_forward.1} parent=11 // pred_fallthru
          _
        // Predicated region
        $region37: #{translation_transformer_forward.1} parent=11 // pred_check
          %p638 = pneg %p285
        $region38: #{translation_transformer_forward.1} parent=11 // pred_check_branch
          %640 = sbr.rel (%p638) target = $region40
        $region39: #{translation_transformer_forward.1} parent=11 // pred_region
          _
        $region40: #{translation_transformer_forward.1} parent=11 // pred_fallthru
          _
        // Predicated region
        $region41: #{translation_transformer_forward.1} parent=11 // pred_check
          %p641 = pneg %p306
        $region42: #{translation_transformer_forward.1} parent=11 // pred_check_branch
          %643 = sbr.rel (%p641) target = $region44
        $region43: #{translation_transformer_forward.1} parent=11 // pred_region
          _
        $region44: #{translation_transformer_forward.1} parent=11 // pred_fallthru
          _
        // Predicated region
        $region45: #{translation_transformer_forward.1} parent=11 // pred_check
          %p644 = pneg %p327
        $region46: #{translation_transformer_forward.1} parent=11 // pred_check_branch
          %646 = sbr.rel (%p644) target = $region48
        $region47: #{translation_transformer_forward.1} parent=11 // pred_region
          _
        $region48: #{translation_transformer_forward.1} parent=11 // pred_fallthru
          _
        // Predicated region
        $region49: #{translation_transformer_forward.1} parent=11 // pred_check
          %p647 = pneg %p348
        $region50: #{translation_transformer_forward.1} parent=11 // pred_check_branch
          %649 = sbr.rel (%p647) target = $region52
        $region51: #{translation_transformer_forward.1} parent=11 // pred_region
          _
        $region52: #{translation_transformer_forward.1} parent=11 // pred_fallthru
          _
        // Predicated region
        $region53: #{translation_transformer_forward.1} parent=11 // pred_check
          %p650 = pneg %p369
        $region54: #{translation_transformer_forward.1} parent=11 // pred_check_branch
          %652 = sbr.rel (%p650) target = $region56
        $region55: #{translation_transformer_forward.1} parent=11 // pred_region
          _
        $region56: #{translation_transformer_forward.1} parent=11 // pred_fallthru
          _
        // Predicated region
        $region57: #{translation_transformer_forward.1} parent=11 // pred_check
          %p653 = pneg %p390
        $region58: #{translation_transformer_forward.1} parent=11 // pred_check_branch
          %655 = sbr.rel (%p653) target = $region60
        $region59: #{translation_transformer_forward.1} parent=11 // pred_region
          _
        $region60: #{translation_transformer_forward.1} parent=11 // pred_fallthru
          _
        // Predicated region
        $region61: #{translation_transformer_forward.1} parent=11 // pred_check
          %p656 = pneg %p411
        $region62: #{translation_transformer_forward.1} parent=11 // pred_check_branch
          %658 = sbr.rel (%p656) target = $region64
        $region63: #{translation_transformer_forward.1} parent=11 // pred_region
          _
        $region64: #{translation_transformer_forward.1} parent=11 // pred_fallthru
          _
        // Predicated region
        $region65: #{translation_transformer_forward.1} parent=11 // pred_check
          %p659 = pneg %p432
        $region66: #{translation_transformer_forward.1} parent=11 // pred_check_branch
          %661 = sbr.rel (%p659) target = $region68
        $region67: #{translation_transformer_forward.1} parent=11 // pred_region
          _
        $region68: #{translation_transformer_forward.1} parent=11 // pred_fallthru
          _
        // Predicated region
        $region69: #{translation_transformer_forward.1} parent=11 // pred_check
          %p662 = pneg %p453
        $region70: #{translation_transformer_forward.1} parent=11 // pred_check_branch
          %664 = sbr.rel (%p662) target = $region72
        $region71: #{translation_transformer_forward.1} parent=11 // pred_region
          _
        $region72: #{translation_transformer_forward.1} parent=11 // pred_fallthru
          _
        // Predicated region
        $region73: #{translation_transformer_forward.1} parent=11 // pred_check
          %p665 = pneg %p474
        $region74: #{translation_transformer_forward.1} parent=11 // pred_check_branch
          %667 = sbr.rel (%p665) target = $region76
        $region75: #{translation_transformer_forward.1} parent=11 // pred_region
          _
        $region76: #{translation_transformer_forward.1} parent=11 // pred_fallthru
          _
        // Predicated region
        $region77: #{translation_transformer_forward.1} parent=11 // pred_check
          %p668 = pneg %p495
        $region78: #{translation_transformer_forward.1} parent=11 // pred_check_branch
          %670 = sbr.rel (%p668) target = $region80
        $region79: #{translation_transformer_forward.1} parent=11 // pred_region
          _
        $region80: #{translation_transformer_forward.1} parent=11 // pred_fallthru
          _
        // Predicated region
        $region81: #{translation_transformer_forward.1} parent=11 // pred_check
          %p671 = pneg %p516
        $region82: #{translation_transformer_forward.1} parent=11 // pred_check_branch
          %673 = sbr.rel (%p671) target = $region84
        $region83: #{translation_transformer_forward.1} parent=11 // pred_region
          _
        $region84: #{translation_transformer_forward.1} parent=11 // pred_fallthru
          _
        // Predicated region
        $region85: #{translation_transformer_forward.1} parent=11 // pred_check
          %p674 = pneg %p537
        $region86: #{translation_transformer_forward.1} parent=11 // pred_check_branch
          %676 = sbr.rel (%p674) target = $region88
        $region87: #{translation_transformer_forward.1} parent=11 // pred_region
          _
        $region88: #{translation_transformer_forward.1} parent=11 // pred_fallthru
          _
        // Predicated region
        $region89: #{translation_transformer_forward.1} parent=11 // pred_check
          %p677 = pneg %p558
        $region90: #{translation_transformer_forward.1} parent=11 // pred_check_branch
          %679 = sbr.rel (%p677) target = $region92
        $region91: #{translation_transformer_forward.1} parent=11 // pred_region
          _
        $region92: #{translation_transformer_forward.1} parent=11 // pred_fallthru
          _
        // Predicated region
        $region93: #{translation_transformer_forward.1} parent=11 // pred_check
          %p680 = pneg %p579
        $region94: #{translation_transformer_forward.1} parent=11 // pred_check_branch
          %682 = sbr.rel (%p680) target = $region96
        $region95: #{translation_transformer_forward.1} parent=11 // pred_region
          _
        $region96: #{translation_transformer_forward.1} parent=11 // pred_fallthru
          _
      $region12: #{translation_transformer_forward.1} parent=5 // pred_fallthru
        _
      %p683 = scmp.lt.s32.totalorder %s34, 2
      // Predicated region
      $region97: #{translation_transformer_forward.1} parent=5 // pred_check
        %p684 = pneg %p683
      $region98: #{translation_transformer_forward.1} parent=5 // pred_check_branch
        %686 = sbr.rel (%p684) target = $region100
      $region99: #{translation_transformer_forward.1} parent=5 // pred_region
        // Predicated region
        $region101: #{translation_transformer_forward.1} parent=99 // pred_check
          %p687 = pneg %p54
        $region102: #{translation_transformer_forward.1} parent=99 // pred_check_branch
          %689 = sbr.rel (%p687) target = $region104
        $region103: #{translation_transformer_forward.1} parent=99 // pred_region
          %p690 = scmp.lt.s32.totalorder %s34, 1
          %s691 = scalar_select %p690, %s34, 1
          %s692 = smul.addr %s691, 8
          %s693 = scalar_lea.vmem %s0, %s692
        $region104: #{translation_transformer_forward.1} parent=99 // pred_fallthru
          _
        // Predicated region
        $region105: #{translation_transformer_forward.1} parent=99 // pred_check
          %p694 = pneg %p80
        $region106: #{translation_transformer_forward.1} parent=99 // pred_check_branch
          %696 = sbr.rel (%p694) target = $region108
        $region107: #{translation_transformer_forward.1} parent=99 // pred_region
          %p697 = scmp.lt.s32.totalorder %s34, 1
          %s698 = scalar_select %p697, %s34, 1
          %s699 = smul.addr %s698, 8
          %s700 = scalar_lea.vmem %s1, %s699
        $region108: #{translation_transformer_forward.1} parent=99 // pred_fallthru
          _
        // Predicated region
        $region109: #{translation_transformer_forward.1} parent=99 // pred_check
          %p701 = pneg %p106
        $region110: #{translation_transformer_forward.1} parent=99 // pred_check_branch
          %703 = sbr.rel (%p701) target = $region112
        $region111: #{translation_transformer_forward.1} parent=99 // pred_region
          %p704 = scmp.lt.s32.totalorder %s34, 1
          %s705 = scalar_select %p704, %s34, 1
          %s706 = scalar_lea.vmem %s2, %s705
        $region112: #{translation_transformer_forward.1} parent=99 // pred_fallthru
          _
        // Predicated region
        $region113: #{translation_transformer_forward.1} parent=99 // pred_check
          %p707 = pneg %p132
        $region114: #{translation_transformer_forward.1} parent=99 // pred_check_branch
          %709 = sbr.rel (%p707) target = $region116
        $region115: #{translation_transformer_forward.1} parent=99 // pred_region
          %p710 = scmp.lt.s32.totalorder %s34, 1
          %s711 = scalar_select %p710, %s34, 1
          %s712 = smul.addr %s711, 8
          %s713 = scalar_lea.vmem %s3, %s712
        $region116: #{translation_transformer_forward.1} parent=99 // pred_fallthru
          _
      $region100: #{translation_transformer_forward.1} parent=5 // pred_fallthru
        _
      %p714 = scmp.le.s32.totalorder 1, %s34
      %p715 = scmp.lt.s32.totalorder %s34, 3
      %p716 = pnand %p714, %p715
      %p717 = pneg %p716
      // Predicated region
      $region117: #{translation_transformer_forward.1} parent=5 // pred_check
        _
      $region118: #{translation_transformer_forward.1} parent=5 // pred_check_branch
        %719 = sbr.rel (%p716) target = $region120
      $region119: #{translation_transformer_forward.1} parent=5 // pred_region
        %s720 = ssub.s32 %s34, 1
        %p721 = scmp.lt.s32.totalorder %s39, 1
        %s722 = scalar_select %p721, %s39, 1
        %s723 = smul.addr %s722, 8
        %s724 = scalar_lea.vmem %s0, %s723
        %p725 = pneg %p60
        %p726 = pneg %p57
        %p727 = scmp.lt.s32.totalorder %s39, 1
        %s728 = scalar_select %p727, %s39, 1
        %s729 = smul.addr %s728, 8
        %s730 = scalar_lea.vmem %s1, %s729
        %p731 = pneg %p86
        %p732 = pneg %p83
        %p733 = scmp.lt.s32.totalorder %s39, 1
        %s734 = scalar_select %p733, %s39, 1
        %s735 = scalar_lea.vmem %s2, %s734
        %p736 = pneg %p112
        %p737 = pneg %p109
        %p738 = scmp.lt.s32.totalorder %s39, 1
        %s739 = scalar_select %p738, %s39, 1
        %s740 = smul.addr %s739, 8
        %s741 = scalar_lea.vmem %s3, %s740
        %p742 = pneg %p138
        %p743 = pneg %p135
        %p744 = pneg %p159
        %p745 = pneg %p156
        %p746 = pneg %p180
        %p747 = pneg %p177
        %p748 = pneg %p201
        %p749 = pneg %p198
        %p750 = pneg %p222
        %p751 = pneg %p219
        %p752 = pneg %p243
        %p753 = pneg %p240
        %p754 = pneg %p264
        %p755 = pneg %p261
        %p756 = pneg %p285
        %p757 = pneg %p282
        %p758 = pneg %p306
        %p759 = pneg %p303
        %p760 = pneg %p327
        %p761 = pneg %p324
        %p762 = pneg %p348
        %p763 = pneg %p345
        %p764 = pneg %p369
        %p765 = pneg %p366
        %p766 = pneg %p390
        %p767 = pneg %p387
        %p768 = pneg %p411
        %p769 = pneg %p408
        %p770 = pneg %p432
        %p771 = pneg %p429
        %p772 = pneg %p453
        %p773 = pneg %p450
        %p774 = pneg %p474
        %p775 = pneg %p471
        %p776 = pneg %p495
        %p777 = pneg %p492
        %p778 = pneg %p516
        %p779 = pneg %p513
        %p780 = pneg %p537
        %p781 = pneg %p534
        %p782 = pneg %p558
        %p783 = pneg %p555
        %p784 = pneg %p579
        %p785 = pneg %p576
        %p786 = pneg %p605
        %p787 = pneg %p602
        %s788 = sand.u32 %s592, 1
        %s789 = scalar_lea.sflag [#allocation3], %s788
        %s790 = sand.u32 %s592, 1
        %s791 = smul.addr %s790, 8
        %s792 = scalar_lea.vmem [#allocation2], %s791
        %p793 = scmp.lt.s32.totalorder %s39, 1
        %s794 = scalar_select %p793, %s39, 1
        %s795 = smul.addr %s794, 8
        %s796 = scalar_lea.vmem %s0, %s795
        %p797 = scmp.lt.s32.totalorder %s39, 1
        %s798 = scalar_select %p797, %s39, 1
        %s799 = smul.addr %s798, 8
        %s800 = scalar_lea.vmem %s1, %s799
        %p801 = scmp.lt.s32.totalorder %s39, 1
        %s802 = scalar_select %p801, %s39, 1
        %s803 = scalar_lea.vmem %s2, %s802
        %p804 = scmp.lt.s32.totalorder %s39, 1
        %s805 = scalar_select %p804, %s39, 1
        %s806 = smul.addr %s805, 8
        %s807 = scalar_lea.vmem %s3, %s806
        %v809 = vld [vmem:[%s796] sm:$0xff]
        %v810 = vld [vmem:[%s800] sm:$0xff]
        %v811 = vld [vmem:[%s803] sm:$0x1]
        %v812 = vld [vmem:[%s807] sm:$0xff]
        %v813 = vld [vmem:[%s10] sm:$0x3]
        %v814 = vld [vmem:[%s11] sm:$0x3]
        %v815 = vld [vmem:[%s4] sm:$0xf]
        %v816 = vld [vmem:[%s4 + $0x4] sm:$0xf]
        %v817 = vld [vmem:[%s4 + $0x8] sm:$0xf]
        %v818 = vld [vmem:[%s4 + $0xc] sm:$0xf]
        %v819 = vld [vmem:[%s5] sm:$0xf]
        %v820 = vld [vmem:[%s5 + $0x4] sm:$0xf]
        %v821 = vld [vmem:[%s5 + $0x8] sm:$0xf]
        %v822 = vld [vmem:[%s5 + $0xc] sm:$0xf]
        %v823 = vpack.c.bf16 %v809, %v809
        %v828 = vunpack.c.l.b16 %v815
        %v829 = vunpack.c.l.b16 %v816
        %v830 = vunpack.c.l.b16 %v817
        %v831 = vunpack.c.l.b16 %v818
        %v832 = vpack.c.b16 %v829, %v828
        %v833 = vpack.c.b16 %v831, %v830
        %vm836 = vcmask 261120
        %v838 = vsel %vm836, %v823, 0
        %840 = vmatprep.subr.bf16.mxu0 0
        %841 = vmatpush1.bf16.msra.mxu0 %v832
        %842 = vmatprep.subr.bf16.mxu0 0
        %843 = vmatpush1.bf16.msra.mxu0 %v833
        %844 = vmatprep.subr.bf16.mxu0 0
        %845 = vmatpush1.bf16.msra.mxu0 0
        %846 = vmatprep.subr.bf16.mxu0 0
        %847 = vmatpush1.bf16.msra.mxu0 0
        %848 = vmatprep.subr.bf16.mxu0 0
        %849 = vmatpush1.bf16.msra.mxu0 0
        %850 = vmatprep.subr.bf16.mxu0 0
        %851 = vmatpush1.bf16.msra.mxu0 0
        %852 = vmatprep.subr.bf16.mxu0 0
        %853 = vmatpush1.bf16.msra.mxu0 0
        %854 = vmatprep.subr.bf16.mxu0 0
        %855 = vmatpush1.bf16.msra.mxu0 0
        %856 = vmatprep.subr.bf16.mxu0 0
        %857 = vmatpush1.bf16.msra.mxu0 0
        %858 = vmatprep.subr.bf16.mxu0 0
        %859 = vmatpush1.bf16.msra.mxu0 0
        %860 = vmatprep.subr.bf16.mxu0 0
        %861 = vmatpush1.bf16.msra.mxu0 0
        %862 = vmatprep.subr.bf16.mxu0 0
        %863 = vmatpush1.bf16.msra.mxu0 0
        %864 = vmatprep.subr.bf16.mxu0 0
        %865 = vmatpush1.bf16.msra.mxu0 0
        %866 = vmatprep.subr.bf16.mxu0 0
        %867 = vmatpush1.bf16.msra.mxu0 0
        %868 = vmatprep.subr.bf16.mxu0 0
        %869 = vmatpush1.bf16.msra.mxu0 0
        %870 = vmatprep.subr.bf16.mxu0 0
        %871 = vmatpush1.bf16.msra.mxu0 0
        %872 = vmatprep.mubr.bf16.mxu0 0
        %873 = vmatmul.mubr.bf16.gmra.mrb[0].mxu0 %v838
        %v874 = vpop.f32.mrb[0].mxu0
        %v875 = vadd.f32 0.0, %v874
        %v876 = vpop.f32.mrb[0].mxu0
        %v877 = vpop.f32.mrb[0].mxu0
        %v878 = vpop.f32.mrb[0].mxu0
        %879 = vdwg.mxu0
        %v880 = vmul.f32 %v875, 0.35355338
        %v881 = vpack.c.bf16 %v880, %v880
        %v882 = vpack.c.bf16 %v875, %v875
        %v884 = vlaneseq
        %v885 = vshrl.u32 %v884, 7
        %v886 = vsub.s32 0, %v885
        %v887 = vrot.slane %v811, %v886
        %890 = vrot.lane.b32.xlu0 %v882, 96
        %v891 = vpop.permute.xlu0 %890
        %vm892 = vcmask 64512
        %v894 = vsel %vm892, %v881, 0
        %v897 = vsel %vm892, %v891, 0
        %899 = vmatprep.subr.bf16.mxu0 0
        %900 = vmatpush1.bf16.xpose.msra.mxu0 %v897
        %901 = vmatprep.subr.bf16.mxu0 0
        %902 = vmatpush1.bf16.xpose.msra.mxu0 0
        %903 = vmatprep.subr.bf16.mxu0 0
        %904 = vmatpush1.bf16.xpose.msra.mxu0 0
        %905 = vmatprep.subr.bf16.mxu0 0
        %906 = vmatpush1.bf16.xpose.msra.mxu0 0
        %907 = vmatprep.subr.bf16.mxu0 0
        %908 = vmatpush1.bf16.xpose.msra.mxu0 0
        %909 = vmatprep.subr.bf16.mxu0 0
        %910 = vmatpush1.bf16.xpose.msra.mxu0 0
        %911 = vmatprep.subr.bf16.mxu0 0
        %912 = vmatpush1.bf16.xpose.msra.mxu0 0
        %913 = vmatprep.subr.bf16.mxu0 0
        %914 = vmatpush1.bf16.xpose.msra.mxu0 0
        %915 = vmatprep.subr.bf16.mxu0 0
        %916 = vmatpush1.bf16.xpose.msra.mxu0 0
        %917 = vmatprep.subr.bf16.mxu0 0
        %918 = vmatpush1.bf16.xpose.msra.mxu0 0
        %919 = vmatprep.subr.bf16.mxu0 0
        %920 = vmatpush1.bf16.xpose.msra.mxu0 0
        %921 = vmatprep.subr.bf16.mxu0 0
        %922 = vmatpush1.bf16.xpose.msra.mxu0 0
        %923 = vmatprep.subr.bf16.mxu0 0
        %924 = vmatpush1.bf16.xpose.msra.mxu0 0
        %925 = vmatprep.subr.bf16.mxu0 0
        %926 = vmatpush1.bf16.xpose.msra.mxu0 0
        %927 = vmatprep.subr.bf16.mxu0 0
        %928 = vmatpush1.bf16.xpose.msra.mxu0 0
        %929 = vmatprep.subr.bf16.mxu0 0
        %930 = vmatpush1.bf16.xpose.msra.mxu0 0
        %931 = vmatprep.mubr.bf16.mxu0 0
        %932 = vmatmul.mubr.bf16.gmra.mrb[0].mxu0 %v894
        %v933 = vpop.f32.mrb[0].mxu0
        %v934 = vadd.f32 %v887, %v933
        %v935 = vpop.f32.mrb[0].mxu0
        %v936 = vpop.f32.mrb[0].mxu0
        %v937 = vpop.f32.mrb[0].mxu0
        %938 = vdwg.mxu0
        %v939 = vsel %vm892, %v934, -inf
        %940 = vmax.xlane.f32.xlu0 %v939
        %v941 = vpop.xlane.xlu0 %940
        %v942 = vsub.f32 %v934, %v941
        %v943 = vmul.f32 %v942, 1.442695
        %v944 = vpow.pop %v943
        %v945 = vsel %vm892, %v944, 0.0
        %946 = vadd.xlane.f32.xlu0 %v945
        %v947 = vpop.xlane.xlu0 %946
        %v948 = vrcp.pop %v947
        %v949 = vmul.f32 %v944, %v948
        %v950 = vpack.c.bf16 %v949, %v949
        %951 = vrot.lane.b32.xlu0 %v882, 64
        %v952 = vpop.permute.xlu0 %951
        %v954 = vsel %vm892, %v950, 0
        %vm956 = vcmask 1043456
        %v958 = vsel %vm956, %v952, 0
        %960 = vmatprep.subr.bf16.mxu0 0
        %961 = vmatpush1.bf16.msra.mxu0 %v958
        %962 = vmatprep.subr.bf16.mxu0 0
        %963 = vmatpush1.bf16.msra.mxu0 0
        %964 = vmatprep.subr.bf16.mxu0 0
        %965 = vmatpush1.bf16.msra.mxu0 0
        %966 = vmatprep.subr.bf16.mxu0 0
        %967 = vmatpush1.bf16.msra.mxu0 0
        %968 = vmatprep.subr.bf16.mxu0 0
        %969 = vmatpush1.bf16.msra.mxu0 0
        %970 = vmatprep.subr.bf16.mxu0 0
        %971 = vmatpush1.bf16.msra.mxu0 0
        %972 = vmatprep.subr.bf16.mxu0 0
        %973 = vmatpush1.bf16.msra.mxu0 0
        %974 = vmatprep.subr.bf16.mxu0 0
        %975 = vmatpush1.bf16.msra.mxu0 0
        %976 = vmatprep.subr.bf16.mxu0 0
        %977 = vmatpush1.bf16.msra.mxu0 0
        %978 = vmatprep.subr.bf16.mxu0 0
        %979 = vmatpush1.bf16.msra.mxu0 0
        %980 = vmatprep.subr.bf16.mxu0 0
        %981 = vmatpush1.bf16.msra.mxu0 0
        %982 = vmatprep.subr.bf16.mxu0 0
        %983 = vmatpush1.bf16.msra.mxu0 0
        %984 = vmatprep.subr.bf16.mxu0 0
        %985 = vmatpush1.bf16.msra.mxu0 0
        %986 = vmatprep.subr.bf16.mxu0 0
        %987 = vmatpush1.bf16.msra.mxu0 0
        %988 = vmatprep.subr.bf16.mxu0 0
        %989 = vmatpush1.bf16.msra.mxu0 0
        %990 = vmatprep.subr.bf16.mxu0 0
        %991 = vmatpush1.bf16.msra.mxu0 0
        %992 = vmatprep.mubr.bf16.mxu0 0
        %993 = vmatmul.mubr.bf16.gmra.mrb[0].mxu0 %v954
        %v994 = vpop.f32.mrb[0].mxu0
        %v995 = vadd.f32 0.0, %v994
        %v996 = vpop.f32.mrb[0].mxu0
        %v997 = vpop.f32.mrb[0].mxu0
        %v998 = vpop.f32.mrb[0].mxu0
        %999 = vdwg.mxu0
        %v1000 = vpack.c.bf16 %v995, %v995
        %1002 = vrot.lane.b32.xlu0 %v881, 120
        %v1003 = vpop.permute.xlu0 %1002
        %1004 = vrot.lane.b32.xlu0 %v882, 88
        %v1005 = vpop.permute.xlu0 %1004
        %v1007 = vsel %vm892, %v1003, 0
        %v1010 = vsel %vm892, %v1005, 0
        %1012 = vmatprep.subr.bf16.mxu0 0
        %1013 = vmatpush1.bf16.xpose.msra.mxu0 %v1010
        %1014 = vmatprep.subr.bf16.mxu0 0
        %1015 = vmatpush1.bf16.xpose.msra.mxu0 0
        %1016 = vmatprep.subr.bf16.mxu0 0
        %1017 = vmatpush1.bf16.xpose.msra.mxu0 0
        %1018 = vmatprep.subr.bf16.mxu0 0
        %1019 = vmatpush1.bf16.xpose.msra.mxu0 0
        %1020 = vmatprep.subr.bf16.mxu0 0
        %1021 = vmatpush1.bf16.xpose.msra.mxu0 0
        %1022 = vmatprep.subr.bf16.mxu0 0
        %1023 = vmatpush1.bf16.xpose.msra.mxu0 0
        %1024 = vmatprep.subr.bf16.mxu0 0
        %1025 = vmatpush1.bf16.xpose.msra.mxu0 0
        %1026 = vmatprep.subr.bf16.mxu0 0
        %1027 = vmatpush1.bf16.xpose.msra.mxu0 0
        %1028 = vmatprep.subr.bf16.mxu0 0
        %1029 = vmatpush1.bf16.xpose.msra.mxu0 0
        %1030 = vmatprep.subr.bf16.mxu0 0
        %1031 = vmatpush1.bf16.xpose.msra.mxu0 0
        %1032 = vmatprep.subr.bf16.mxu0 0
        %1033 = vmatpush1.bf16.xpose.msra.mxu0 0
        %1034 = vmatprep.subr.bf16.mxu0 0
        %1035 = vmatpush1.bf16.xpose.msra.mxu0 0
        %1036 = vmatprep.subr.bf16.mxu0 0
        %1037 = vmatpush1.bf16.xpose.msra.mxu0 0
        %1038 = vmatprep.subr.bf16.mxu0 0
        %1039 = vmatpush1.bf16.xpose.msra.mxu0 0
        %1040 = vmatprep.subr.bf16.mxu0 0
        %1041 = vmatpush1.bf16.xpose.msra.mxu0 0
        %1042 = vmatprep.subr.bf16.mxu0 0
        %1043 = vmatpush1.bf16.xpose.msra.mxu0 0
        %1044 = vmatprep.mubr.bf16.mxu0 0
        %1045 = vmatmul.mubr.bf16.gmra.mrb[0].mxu0 %v1007
        %v1046 = vpop.f32.mrb[0].mxu0
        %v1047 = vadd.f32 %v887, %v1046
        %v1048 = vpop.f32.mrb[0].mxu0
        %v1049 = vpop.f32.mrb[0].mxu0
        %v1050 = vpop.f32.mrb[0].mxu0
        %1051 = vdwg.mxu0
        %v1052 = vsel %vm892, %v1047, -inf
        %1053 = vmax.xlane.f32.xlu0 %v1052
        %v1054 = vpop.xlane.xlu0 %1053
        %v1055 = vsub.f32 %v1047, %v1054
        %v1056 = vmul.f32 %v1055, 1.442695
        %v1057 = vpow.pop %v1056
        %v1058 = vsel %vm892, %v1057, 0.0
        %1059 = vadd.xlane.f32.xlu0 %v1058
        %v1060 = vpop.xlane.xlu0 %1059
        %v1061 = vrcp.pop %v1060
        %v1062 = vmul.f32 %v1057, %v1061
        %v1063 = vpack.c.bf16 %v1062, %v1062
        %1064 = vrot.lane.b32.xlu0 %v882, 56
        %v1065 = vpop.permute.xlu0 %1064
        %v1067 = vsel %vm892, %v1063, 0
        %v1070 = vsel %vm956, %v1065, 0
        %1072 = vmatprep.subr.bf16.mxu0 0
        %1073 = vmatpush1.bf16.msra.mxu0 %v1070
        %1074 = vmatprep.subr.bf16.mxu0 0
        %1075 = vmatpush1.bf16.msra.mxu0 0
        %1076 = vmatprep.subr.bf16.mxu0 0
        %1077 = vmatpush1.bf16.msra.mxu0 0
        %1078 = vmatprep.subr.bf16.mxu0 0
        %1079 = vmatpush1.bf16.msra.mxu0 0
        %1080 = vmatprep.subr.bf16.mxu0 0
        %1081 = vmatpush1.bf16.msra.mxu0 0
        %1082 = vmatprep.subr.bf16.mxu0 0
        %1083 = vmatpush1.bf16.msra.mxu0 0
        %1084 = vmatprep.subr.bf16.mxu0 0
        %1085 = vmatpush1.bf16.msra.mxu0 0
        %1086 = vmatprep.subr.bf16.mxu0 0
        %1087 = vmatpush1.bf16.msra.mxu0 0
        %1088 = vmatprep.subr.bf16.mxu0 0
        %1089 = vmatpush1.bf16.msra.mxu0 0
        %1090 = vmatprep.subr.bf16.mxu0 0
        %1091 = vmatpush1.bf16.msra.mxu0 0
        %1092 = vmatprep.subr.bf16.mxu0 0
        %1093 = vmatpush1.bf16.msra.mxu0 0
        %1094 = vmatprep.subr.bf16.mxu0 0
        %1095 = vmatpush1.bf16.msra.mxu0 0
        %1096 = vmatprep.subr.bf16.mxu0 0
        %1097 = vmatpush1.bf16.msra.mxu0 0
        %1098 = vmatprep.subr.bf16.mxu0 0
        %1099 = vmatpush1.bf16.msra.mxu0 0
        %1100 = vmatprep.subr.bf16.mxu0 0
        %1101 = vmatpush1.bf16.msra.mxu0 0
        %1102 = vmatprep.subr.bf16.mxu0 0
        %1103 = vmatpush1.bf16.msra.mxu0 0
        %1104 = vmatprep.mubr.bf16.mxu0 0
        %1105 = vmatmul.mubr.bf16.gmra.mrb[0].mxu0 %v1067
        %v1106 = vpop.f32.mrb[0].mxu0
        %v1107 = vadd.f32 0.0, %v1106
        %v1108 = vpop.f32.mrb[0].mxu0
        %v1109 = vpop.f32.mrb[0].mxu0
        %v1110 = vpop.f32.mrb[0].mxu0
        %1111 = vdwg.mxu0
        %v1112 = vpack.c.bf16 %v1107, %v1107
        %v1114 = vsel %vm892, %v1112, 0
        %v1117 = vsel %vm956, %v820, 0
        %1119 = vmatprep.subr.bf16.mxu0 0
        %1120 = vmatpush1.bf16.msra.mxu0 %v1117
        %1121 = vmatprep.subr.bf16.mxu0 0
        %1122 = vmatpush1.bf16.msra.mxu0 0
        %1123 = vmatprep.subr.bf16.mxu0 0
        %1124 = vmatpush1.bf16.msra.mxu0 0
        %1125 = vmatprep.subr.bf16.mxu0 0
        %1126 = vmatpush1.bf16.msra.mxu0 0
        %1127 = vmatprep.subr.bf16.mxu0 0
        %1128 = vmatpush1.bf16.msra.mxu0 0
        %1129 = vmatprep.subr.bf16.mxu0 0
        %1130 = vmatpush1.bf16.msra.mxu0 0
        %1131 = vmatprep.subr.bf16.mxu0 0
        %1132 = vmatpush1.bf16.msra.mxu0 0
        %1133 = vmatprep.subr.bf16.mxu0 0
        %1134 = vmatpush1.bf16.msra.mxu0 0
        %1135 = vmatprep.subr.bf16.mxu0 0
        %1136 = vmatpush1.bf16.msra.mxu0 0
        %1137 = vmatprep.subr.bf16.mxu0 0
        %1138 = vmatpush1.bf16.msra.mxu0 0
        %1139 = vmatprep.subr.bf16.mxu0 0
        %1140 = vmatpush1.bf16.msra.mxu0 0
        %1141 = vmatprep.subr.bf16.mxu0 0
        %1142 = vmatpush1.bf16.msra.mxu0 0
        %1143 = vmatprep.subr.bf16.mxu0 0
        %1144 = vmatpush1.bf16.msra.mxu0 0
        %1145 = vmatprep.subr.bf16.mxu0 0
        %1146 = vmatpush1.bf16.msra.mxu0 0
        %1147 = vmatprep.subr.bf16.mxu0 0
        %1148 = vmatpush1.bf16.msra.mxu0 0
        %1149 = vmatprep.subr.bf16.mxu0 0
        %1150 = vmatpush1.bf16.msra.mxu0 0
        %1151 = vmatprep.mubr.bf16.mxu0 0
        %1152 = vmatmul.mubr.bf16.gmra.mrb[0].mxu0 %v1114
        %v1153 = vpop.f32.mrb[0].mxu0
        %v1154 = vadd.f32 0.0, %v1153
        %v1155 = vpop.f32.mrb[0].mxu0
        %v1156 = vpop.f32.mrb[0].mxu0
        %v1157 = vpop.f32.mrb[0].mxu0
        %1158 = vdwg.mxu0
        %v1160 = vsel %vm892, %v1000, 0
        %v1163 = vsel %vm956, %v819, 0
        %1165 = vmatprep.subr.bf16.mxu0 0
        %1166 = vmatpush1.bf16.msra.mxu0 %v1163
        %1167 = vmatprep.subr.bf16.mxu0 0
        %1168 = vmatpush1.bf16.msra.mxu0 0
        %1169 = vmatprep.subr.bf16.mxu0 0
        %1170 = vmatpush1.bf16.msra.mxu0 0
        %1171 = vmatprep.subr.bf16.mxu0 0
        %1172 = vmatpush1.bf16.msra.mxu0 0
        %1173 = vmatprep.subr.bf16.mxu0 0
        %1174 = vmatpush1.bf16.msra.mxu0 0
        %1175 = vmatprep.subr.bf16.mxu0 0
        %1176 = vmatpush1.bf16.msra.mxu0 0
        %1177 = vmatprep.subr.bf16.mxu0 0
        %1178 = vmatpush1.bf16.msra.mxu0 0
        %1179 = vmatprep.subr.bf16.mxu0 0
        %1180 = vmatpush1.bf16.msra.mxu0 0
        %1181 = vmatprep.subr.bf16.mxu0 0
        %1182 = vmatpush1.bf16.msra.mxu0 0
        %1183 = vmatprep.subr.bf16.mxu0 0
        %1184 = vmatpush1.bf16.msra.mxu0 0
        %1185 = vmatprep.subr.bf16.mxu0 0
        %1186 = vmatpush1.bf16.msra.mxu0 0
        %1187 = vmatprep.subr.bf16.mxu0 0
        %1188 = vmatpush1.bf16.msra.mxu0 0
        %1189 = vmatprep.subr.bf16.mxu0 0
        %1190 = vmatpush1.bf16.msra.mxu0 0
        %1191 = vmatprep.subr.bf16.mxu0 0
        %1192 = vmatpush1.bf16.msra.mxu0 0
        %1193 = vmatprep.subr.bf16.mxu0 0
        %1194 = vmatpush1.bf16.msra.mxu0 0
        %1195 = vmatprep.subr.bf16.mxu0 0
        %1196 = vmatpush1.bf16.msra.mxu0 0
        %1197 = vmatprep.mubr.bf16.mxu0 0
        %1198 = vmatmul.mubr.bf16.gmra.mrb[0].mxu0 %v1160
        %v1199 = vpop.f32.mrb[0].mxu0
        %v1200 = vadd.f32 %v1154, %v1199
        %v1201 = vpop.f32.mrb[0].mxu0
        %v1202 = vpop.f32.mrb[0].mxu0
        %v1203 = vpop.f32.mrb[0].mxu0
        %1204 = vdwg.mxu0
        %1205 = vrot.lane.b32.xlu0 %v881, 112
        %v1206 = vpop.permute.xlu0 %1205
        %1207 = vrot.lane.b32.xlu0 %v882, 80
        %v1208 = vpop.permute.xlu0 %1207
        %v1210 = vsel %vm892, %v1206, 0
        %v1213 = vsel %vm892, %v1208, 0
        %1215 = vmatprep.subr.bf16.mxu0 0
        %1216 = vmatpush1.bf16.xpose.msra.mxu0 %v1213
        %1217 = vmatprep.subr.bf16.mxu0 0
        %1218 = vmatpush1.bf16.xpose.msra.mxu0 0
        %1219 = vmatprep.subr.bf16.mxu0 0
        %1220 = vmatpush1.bf16.xpose.msra.mxu0 0
        %1221 = vmatprep.subr.bf16.mxu0 0
        %1222 = vmatpush1.bf16.xpose.msra.mxu0 0
        %1223 = vmatprep.subr.bf16.mxu0 0
        %1224 = vmatpush1.bf16.xpose.msra.mxu0 0
        %1225 = vmatprep.subr.bf16.mxu0 0
        %1226 = vmatpush1.bf16.xpose.msra.mxu0 0
        %1227 = vmatprep.subr.bf16.mxu0 0
        %1228 = vmatpush1.bf16.xpose.msra.mxu0 0
        %1229 = vmatprep.subr.bf16.mxu0 0
        %1230 = vmatpush1.bf16.xpose.msra.mxu0 0
        %1231 = vmatprep.subr.bf16.mxu0 0
        %1232 = vmatpush1.bf16.xpose.msra.mxu0 0
        %1233 = vmatprep.subr.bf16.mxu0 0
        %1234 = vmatpush1.bf16.xpose.msra.mxu0 0
        %1235 = vmatprep.subr.bf16.mxu0 0
        %1236 = vmatpush1.bf16.xpose.msra.mxu0 0
        %1237 = vmatprep.subr.bf16.mxu0 0
        %1238 = vmatpush1.bf16.xpose.msra.mxu0 0
        %1239 = vmatprep.subr.bf16.mxu0 0
        %1240 = vmatpush1.bf16.xpose.msra.mxu0 0
        %1241 = vmatprep.subr.bf16.mxu0 0
        %1242 = vmatpush1.bf16.xpose.msra.mxu0 0
        %1243 = vmatprep.subr.bf16.mxu0 0
        %1244 = vmatpush1.bf16.xpose.msra.mxu0 0
        %1245 = vmatprep.subr.bf16.mxu0 0
        %1246 = vmatpush1.bf16.xpose.msra.mxu0 0
        %1247 = vmatprep.mubr.bf16.mxu0 0
        %1248 = vmatmul.mubr.bf16.gmra.mrb[0].mxu0 %v1210
        %v1249 = vpop.f32.mrb[0].mxu0
        %v1250 = vadd.f32 %v887, %v1249
        %v1251 = vpop.f32.mrb[0].mxu0
        %v1252 = vpop.f32.mrb[0].mxu0
        %v1253 = vpop.f32.mrb[0].mxu0
        %1254 = vdwg.mxu0
        %v1255 = vsel %vm892, %v1250, -inf
        %1256 = vmax.xlane.f32.xlu0 %v1255
        %v1257 = vpop.xlane.xlu0 %1256
        %v1258 = vsub.f32 %v1250, %v1257
        %v1259 = vmul.f32 %v1258, 1.442695
        %v1260 = vpow.pop %v1259
        %v1261 = vsel %vm892, %v1260, 0.0
        %1262 = vadd.xlane.f32.xlu0 %v1261
        %v1263 = vpop.xlane.xlu0 %1262
        %v1264 = vrcp.pop %v1263
        %v1265 = vmul.f32 %v1260, %v1264
        %v1266 = vpack.c.bf16 %v1265, %v1265
        %1267 = vrot.lane.b32.xlu0 %v882, 48
        %v1268 = vpop.permute.xlu0 %1267
        %v1270 = vsel %vm892, %v1266, 0
        %v1273 = vsel %vm956, %v1268, 0
        %1275 = vmatprep.subr.bf16.mxu0 0
        %1276 = vmatpush1.bf16.msra.mxu0 %v1273
        %1277 = vmatprep.subr.bf16.mxu0 0
        %1278 = vmatpush1.bf16.msra.mxu0 0
        %1279 = vmatprep.subr.bf16.mxu0 0
        %1280 = vmatpush1.bf16.msra.mxu0 0
        %1281 = vmatprep.subr.bf16.mxu0 0
        %1282 = vmatpush1.bf16.msra.mxu0 0
        %1283 = vmatprep.subr.bf16.mxu0 0
        %1284 = vmatpush1.bf16.msra.mxu0 0
        %1285 = vmatprep.subr.bf16.mxu0 0
        %1286 = vmatpush1.bf16.msra.mxu0 0
        %1287 = vmatprep.subr.bf16.mxu0 0
        %1288 = vmatpush1.bf16.msra.mxu0 0
        %1289 = vmatprep.subr.bf16.mxu0 0
        %1290 = vmatpush1.bf16.msra.mxu0 0
        %1291 = vmatprep.subr.bf16.mxu0 0
        %1292 = vmatpush1.bf16.msra.mxu0 0
        %1293 = vmatprep.subr.bf16.mxu0 0
        %1294 = vmatpush1.bf16.msra.mxu0 0
        %1295 = vmatprep.subr.bf16.mxu0 0
        %1296 = vmatpush1.bf16.msra.mxu0 0
        %1297 = vmatprep.subr.bf16.mxu0 0
        %1298 = vmatpush1.bf16.msra.mxu0 0
        %1299 = vmatprep.subr.bf16.mxu0 0
        %1300 = vmatpush1.bf16.msra.mxu0 0
        %1301 = vmatprep.subr.bf16.mxu0 0
        %1302 = vmatpush1.bf16.msra.mxu0 0
        %1303 = vmatprep.subr.bf16.mxu0 0
        %1304 = vmatpush1.bf16.msra.mxu0 0
        %1305 = vmatprep.subr.bf16.mxu0 0
        %1306 = vmatpush1.bf16.msra.mxu0 0
        %1307 = vmatprep.mubr.bf16.mxu0 0
        %1308 = vmatmul.mubr.bf16.gmra.mrb[0].mxu0 %v1270
        %v1309 = vpop.f32.mrb[0].mxu0
        %v1310 = vadd.f32 0.0, %v1309
        %v1311 = vpop.f32.mrb[0].mxu0
        %v1312 = vpop.f32.mrb[0].mxu0
        %v1313 = vpop.f32.mrb[0].mxu0
        %1314 = vdwg.mxu0
        %v1315 = vpack.c.bf16 %v1310, %v1310
        %v1317 = vsel %vm892, %v1315, 0
        %v1320 = vsel %vm956, %v821, 0
        %1322 = vmatprep.subr.bf16.mxu0 0
        %1323 = vmatpush1.bf16.msra.mxu0 %v1320
        %1324 = vmatprep.subr.bf16.mxu0 0
        %1325 = vmatpush1.bf16.msra.mxu0 0
        %1326 = vmatprep.subr.bf16.mxu0 0
        %1327 = vmatpush1.bf16.msra.mxu0 0
        %1328 = vmatprep.subr.bf16.mxu0 0
        %1329 = vmatpush1.bf16.msra.mxu0 0
        %1330 = vmatprep.subr.bf16.mxu0 0
        %1331 = vmatpush1.bf16.msra.mxu0 0
        %1332 = vmatprep.subr.bf16.mxu0 0
        %1333 = vmatpush1.bf16.msra.mxu0 0
        %1334 = vmatprep.subr.bf16.mxu0 0
        %1335 = vmatpush1.bf16.msra.mxu0 0
        %1336 = vmatprep.subr.bf16.mxu0 0
        %1337 = vmatpush1.bf16.msra.mxu0 0
        %1338 = vmatprep.subr.bf16.mxu0 0
        %1339 = vmatpush1.bf16.msra.mxu0 0
        %1340 = vmatprep.subr.bf16.mxu0 0
        %1341 = vmatpush1.bf16.msra.mxu0 0
        %1342 = vmatprep.subr.bf16.mxu0 0
        %1343 = vmatpush1.bf16.msra.mxu0 0
        %1344 = vmatprep.subr.bf16.mxu0 0
        %1345 = vmatpush1.bf16.msra.mxu0 0
        %1346 = vmatprep.subr.bf16.mxu0 0
        %1347 = vmatpush1.bf16.msra.mxu0 0
        %1348 = vmatprep.subr.bf16.mxu0 0
        %1349 = vmatpush1.bf16.msra.mxu0 0
        %1350 = vmatprep.subr.bf16.mxu0 0
        %1351 = vmatpush1.bf16.msra.mxu0 0
        %1352 = vmatprep.subr.bf16.mxu0 0
        %1353 = vmatpush1.bf16.msra.mxu0 0
        %1354 = vmatprep.mubr.bf16.mxu0 0
        %1355 = vmatmul.mubr.bf16.gmra.mrb[0].mxu0 %v1317
        %v1356 = vpop.f32.mrb[0].mxu0
        %v1357 = vadd.f32 0.0, %v1356
        %v1358 = vpop.f32.mrb[0].mxu0
        %v1359 = vpop.f32.mrb[0].mxu0
        %v1360 = vpop.f32.mrb[0].mxu0
        %1361 = vdwg.mxu0
        %v1362 = vadd.f32 %v1200, %v1357
        %1363 = vrot.lane.b32.xlu0 %v881, 104
        %v1364 = vpop.permute.xlu0 %1363
        %1365 = vrot.lane.b32.xlu0 %v882, 72
        %v1366 = vpop.permute.xlu0 %1365
        %v1368 = vsel %vm892, %v1364, 0
        %v1371 = vsel %vm892, %v1366, 0
        %1373 = vmatprep.subr.bf16.mxu0 0
        %1374 = vmatpush1.bf16.xpose.msra.mxu0 %v1371
        %1375 = vmatprep.subr.bf16.mxu0 0
        %1376 = vmatpush1.bf16.xpose.msra.mxu0 0
        %1377 = vmatprep.subr.bf16.mxu0 0
        %1378 = vmatpush1.bf16.xpose.msra.mxu0 0
        %1379 = vmatprep.subr.bf16.mxu0 0
        %1380 = vmatpush1.bf16.xpose.msra.mxu0 0
        %1381 = vmatprep.subr.bf16.mxu0 0
        %1382 = vmatpush1.bf16.xpose.msra.mxu0 0
        %1383 = vmatprep.subr.bf16.mxu0 0
        %1384 = vmatpush1.bf16.xpose.msra.mxu0 0
        %1385 = vmatprep.subr.bf16.mxu0 0
        %1386 = vmatpush1.bf16.xpose.msra.mxu0 0
        %1387 = vmatprep.subr.bf16.mxu0 0
        %1388 = vmatpush1.bf16.xpose.msra.mxu0 0
        %1389 = vmatprep.subr.bf16.mxu0 0
        %1390 = vmatpush1.bf16.xpose.msra.mxu0 0
        %1391 = vmatprep.subr.bf16.mxu0 0
        %1392 = vmatpush1.bf16.xpose.msra.mxu0 0
        %1393 = vmatprep.subr.bf16.mxu0 0
        %1394 = vmatpush1.bf16.xpose.msra.mxu0 0
        %1395 = vmatprep.subr.bf16.mxu0 0
        %1396 = vmatpush1.bf16.xpose.msra.mxu0 0
        %1397 = vmatprep.subr.bf16.mxu0 0
        %1398 = vmatpush1.bf16.xpose.msra.mxu0 0
        %1399 = vmatprep.subr.bf16.mxu0 0
        %1400 = vmatpush1.bf16.xpose.msra.mxu0 0
        %1401 = vmatprep.subr.bf16.mxu0 0
        %1402 = vmatpush1.bf16.xpose.msra.mxu0 0
        %1403 = vmatprep.subr.bf16.mxu0 0
        %1404 = vmatpush1.bf16.xpose.msra.mxu0 0
        %1405 = vmatprep.mubr.bf16.mxu0 0
        %1406 = vmatmul.mubr.bf16.gmra.mrb[0].mxu0 %v1368
        %v1407 = vpop.f32.mrb[0].mxu0
        %v1408 = vadd.f32 %v887, %v1407
        %v1409 = vpop.f32.mrb[0].mxu0
        %v1410 = vpop.f32.mrb[0].mxu0
        %v1411 = vpop.f32.mrb[0].mxu0
        %1412 = vdwg.mxu0
        %v1413 = vsel %vm892, %v1408, -inf
        %1414 = vmax.xlane.f32.xlu0 %v1413
        %v1415 = vpop.xlane.xlu0 %1414
        %v1416 = vsub.f32 %v1408, %v1415
        %v1417 = vmul.f32 %v1416, 1.442695
        %v1418 = vpow.pop %v1417
        %v1419 = vsel %vm892, %v1418, 0.0
        %1420 = vadd.xlane.f32.xlu0 %v1419
        %v1421 = vpop.xlane.xlu0 %1420
        %v1422 = vrcp.pop %v1421
        %v1423 = vmul.f32 %v1418, %v1422
        %v1424 = vpack.c.bf16 %v1423, %v1423
        %1425 = vrot.lane.b32.xlu0 %v882, 40
        %v1426 = vpop.permute.xlu0 %1425
        %v1428 = vsel %vm892, %v1424, 0
        %v1431 = vsel %vm956, %v1426, 0
        %1433 = vmatprep.subr.bf16.mxu0 0
        %1434 = vmatpush1.bf16.msra.mxu0 %v1431
        %1435 = vmatprep.subr.bf16.mxu0 0
        %1436 = vmatpush1.bf16.msra.mxu0 0
        %1437 = vmatprep.subr.bf16.mxu0 0
        %1438 = vmatpush1.bf16.msra.mxu0 0
        %1439 = vmatprep.subr.bf16.mxu0 0
        %1440 = vmatpush1.bf16.msra.mxu0 0
        %1441 = vmatprep.subr.bf16.mxu0 0
        %1442 = vmatpush1.bf16.msra.mxu0 0
        %1443 = vmatprep.subr.bf16.mxu0 0
        %1444 = vmatpush1.bf16.msra.mxu0 0
        %1445 = vmatprep.subr.bf16.mxu0 0
        %1446 = vmatpush1.bf16.msra.mxu0 0
        %1447 = vmatprep.subr.bf16.mxu0 0
        %1448 = vmatpush1.bf16.msra.mxu0 0
        %1449 = vmatprep.subr.bf16.mxu0 0
        %1450 = vmatpush1.bf16.msra.mxu0 0
        %1451 = vmatprep.subr.bf16.mxu0 0
        %1452 = vmatpush1.bf16.msra.mxu0 0
        %1453 = vmatprep.subr.bf16.mxu0 0
        %1454 = vmatpush1.bf16.msra.mxu0 0
        %1455 = vmatprep.subr.bf16.mxu0 0
        %1456 = vmatpush1.bf16.msra.mxu0 0
        %1457 = vmatprep.subr.bf16.mxu0 0
        %1458 = vmatpush1.bf16.msra.mxu0 0
        %1459 = vmatprep.subr.bf16.mxu0 0
        %1460 = vmatpush1.bf16.msra.mxu0 0
        %1461 = vmatprep.subr.bf16.mxu0 0
        %1462 = vmatpush1.bf16.msra.mxu0 0
        %1463 = vmatprep.subr.bf16.mxu0 0
        %1464 = vmatpush1.bf16.msra.mxu0 0
        %1465 = vmatprep.mubr.bf16.mxu0 0
        %1466 = vmatmul.mubr.bf16.gmra.mrb[0].mxu0 %v1428
        %v1467 = vpop.f32.mrb[0].mxu0
        %v1468 = vadd.f32 0.0, %v1467
        %v1469 = vpop.f32.mrb[0].mxu0
        %v1470 = vpop.f32.mrb[0].mxu0
        %v1471 = vpop.f32.mrb[0].mxu0
        %1472 = vdwg.mxu0
        %v1473 = vpack.c.bf16 %v1468, %v1468
        %v1475 = vsel %vm892, %v1473, 0
        %v1478 = vsel %vm956, %v822, 0
        %1480 = vmatprep.subr.bf16.mxu0 0
        %1481 = vmatpush1.bf16.msra.mxu0 %v1478
        %1482 = vmatprep.subr.bf16.mxu0 0
        %1483 = vmatpush1.bf16.msra.mxu0 0
        %1484 = vmatprep.subr.bf16.mxu0 0
        %1485 = vmatpush1.bf16.msra.mxu0 0
        %1486 = vmatprep.subr.bf16.mxu0 0
        %1487 = vmatpush1.bf16.msra.mxu0 0
        %1488 = vmatprep.subr.bf16.mxu0 0
        %1489 = vmatpush1.bf16.msra.mxu0 0
        %1490 = vmatprep.subr.bf16.mxu0 0
        %1491 = vmatpush1.bf16.msra.mxu0 0
        %1492 = vmatprep.subr.bf16.mxu0 0
        %1493 = vmatpush1.bf16.msra.mxu0 0
        %1494 = vmatprep.subr.bf16.mxu0 0
        %1495 = vmatpush1.bf16.msra.mxu0 0
        %1496 = vmatprep.subr.bf16.mxu0 0
        %1497 = vmatpush1.bf16.msra.mxu0 0
        %1498 = vmatprep.subr.bf16.mxu0 0
        %1499 = vmatpush1.bf16.msra.mxu0 0
        %1500 = vmatprep.subr.bf16.mxu0 0
        %1501 = vmatpush1.bf16.msra.mxu0 0
        %1502 = vmatprep.subr.bf16.mxu0 0
        %1503 = vmatpush1.bf16.msra.mxu0 0
        %1504 = vmatprep.subr.bf16.mxu0 0
        %1505 = vmatpush1.bf16.msra.mxu0 0
        %1506 = vmatprep.subr.bf16.mxu0 0
        %1507 = vmatpush1.bf16.msra.mxu0 0
        %1508 = vmatprep.subr.bf16.mxu0 0
        %1509 = vmatpush1.bf16.msra.mxu0 0
        %1510 = vmatprep.subr.bf16.mxu0 0
        %1511 = vmatpush1.bf16.msra.mxu0 0
        %1512 = vmatprep.mubr.bf16.mxu0 0
        %1513 = vmatmul.mubr.bf16.gmra.mrb[0].mxu0 %v1475
        %v1514 = vpop.f32.mrb[0].mxu0
        %v1515 = vadd.f32 0.0, %v1514
        %v1516 = vpop.f32.mrb[0].mxu0
        %v1517 = vpop.f32.mrb[0].mxu0
        %v1518 = vpop.f32.mrb[0].mxu0
        %1519 = vdwg.mxu0
        %v1520 = vadd.f32 %v1362, %v1515
        %v1521 = vadd.f32 %v809, %v1520
        %v1522 = vsel %vm836, %v1521, 0.0
        %1523 = vadd.xlane.f32.xlu0 %v1522
        %v1524 = vpop.xlane.xlu0 %1523
        %v1525 = vrcp.pop 32.0
        %v1526 = vmul.f32 %v1524, %v1525
        %v1527 = vmul.f32 %v1521, %v1521
        %v1528 = vsel %vm836, %v1527, 0.0
        %1529 = vadd.xlane.f32.xlu0 %v1528
        %v1530 = vpop.xlane.xlu0 %1529
        %v1531 = vmul.f32 %v1530, %v1525
        %v1532 = vmul.f32 %v1526, %v1526
        %v1533 = vsub.f32 %v1531, %v1532
        %v1534 = vsub.f32 %v1521, %v1526
        %v1535 = vadd.f32 %v1533, 1e-05
        %v1536 = vrsqrt.pop %v1535
        %v1537 = vmul.f32 %v1534, %v1536
        %v1538 = vlaneseq
        %v1539 = vshrl.u32 %v1538, 7
        %v1540 = vsub.s32 0, %v1539
        %v1541 = vrot.slane %v813, %v1540
        %v1542 = vmul.f32 %v1537, %v1541
        %v1543 = vlaneseq
        %v1544 = vshrl.u32 %v1543, 7
        %v1545 = vsub.s32 0, %v1544
        %v1546 = vrot.slane %v814, %v1545
        %v1547 = vadd.f32 %v1542, %v1546
        %v1548 = vld [vmem:[%s6] sm:$0xf]
        %v1549 = vld [vmem:[%s6 + $0x4] sm:$0xf]
        %v1550 = vld [vmem:[%s6 + $0x8] sm:$0xf]
        %v1551 = vld [vmem:[%s6 + $0xc] sm:$0xf]
        %v1552 = vld [vmem:[%s7] sm:$0x1]
        %v1553 = vld [vmem:[%s8] sm:$0xf]
        %v1554 = vld [vmem:[%s8 + $0x4] sm:$0xf]
        %v1555 = vld [vmem:[%s8 + $0x8] sm:$0xf]
        %v1556 = vld [vmem:[%s8 + $0xc] sm:$0xf]
        %v1557 = vld [vmem:[%s8 + $0x10] sm:$0xf]
        %v1558 = vld [vmem:[%s8 + $0x14] sm:$0xf]
        %v1559 = vld [vmem:[%s8 + $0x18] sm:$0xf]
        %v1560 = vld [vmem:[%s8 + $0x1c] sm:$0xf]
        %v1561 = vld [vmem:[%s9] sm:$0x1]
        %v1562 = vpack.c.bf16 %v1547, %v1547
        %v1564 = vlaneseq
        %v1565 = vshrl.u32 %v1564, 7
        %v1566 = vsub.s32 0, %v1565
        %v1567 = vrot.slane %v1552, %v1566
        %v1573 = vunpack.c.l.b16 %v1548
        %v1574 = vunpack.c.l.b16 %v1549
        %v1575 = vunpack.c.l.b16 %v1550
        %v1576 = vunpack.c.l.b16 %v1551
        %v1577 = vpack.c.b16 %v1574, %v1573
        %v1578 = vpack.c.b16 %v1576, %v1575
        %v1582 = vsel %vm836, %v1562, 0
        %1584 = vmatprep.subr.bf16.mxu0 0
        %1585 = vmatpush1.bf16.msra.mxu0 %v1577
        %1586 = vmatprep.subr.bf16.mxu0 0
        %1587 = vmatpush1.bf16.msra.mxu0 %v1578
        %1588 = vmatprep.subr.bf16.mxu0 0
        %1589 = vmatpush1.bf16.msra.mxu0 0
        %1590 = vmatprep.subr.bf16.mxu0 0
        %1591 = vmatpush1.bf16.msra.mxu0 0
        %1592 = vmatprep.subr.bf16.mxu0 0
        %1593 = vmatpush1.bf16.msra.mxu0 0
        %1594 = vmatprep.subr.bf16.mxu0 0
        %1595 = vmatpush1.bf16.msra.mxu0 0
        %1596 = vmatprep.subr.bf16.mxu0 0
        %1597 = vmatpush1.bf16.msra.mxu0 0
        %1598 = vmatprep.subr.bf16.mxu0 0
        %1599 = vmatpush1.bf16.msra.mxu0 0
        %1600 = vmatprep.subr.bf16.mxu0 0
        %1601 = vmatpush1.bf16.msra.mxu0 0
        %1602 = vmatprep.subr.bf16.mxu0 0
        %1603 = vmatpush1.bf16.msra.mxu0 0
        %1604 = vmatprep.subr.bf16.mxu0 0
        %1605 = vmatpush1.bf16.msra.mxu0 0
        %1606 = vmatprep.subr.bf16.mxu0 0
        %1607 = vmatpush1.bf16.msra.mxu0 0
        %1608 = vmatprep.subr.bf16.mxu0 0
        %1609 = vmatpush1.bf16.msra.mxu0 0
        %1610 = vmatprep.subr.bf16.mxu0 0
        %1611 = vmatpush1.bf16.msra.mxu0 0
        %1612 = vmatprep.subr.bf16.mxu0 0
        %1613 = vmatpush1.bf16.msra.mxu0 0
        %1614 = vmatprep.subr.bf16.mxu0 0
        %1615 = vmatpush1.bf16.msra.mxu0 0
        %1616 = vmatprep.mubr.bf16.mxu0 0
        %1617 = vmatmul.mubr.bf16.gmra.mrb[0].mxu0 %v1582
        %v1618 = vpop.f32.mrb[0].mxu0
        %v1619 = vadd.f32 %v1567, %v1618
        %v1620 = vpop.f32.mrb[0].mxu0
        %v1621 = vpop.f32.mrb[0].mxu0
        %v1622 = vpop.f32.mrb[0].mxu0
        %1623 = vdwg.mxu0
        %v1624 = vmax.f32 %v1619, 0.0
        %v1625 = vpack.c.bf16 %v1624, %v1624
        %v1627 = vlaneseq
        %v1628 = vshrl.u32 %v1627, 7
        %v1629 = vsub.s32 0, %v1628
        %v1630 = vrot.slane %v1561, %v1629
        %v1640 = vunpack.c.l.b16 %v1553
        %v1641 = vunpack.c.l.b16 %v1554
        %v1642 = vunpack.c.l.b16 %v1555
        %v1643 = vunpack.c.l.b16 %v1556
        %v1644 = vunpack.c.l.b16 %v1557
        %v1645 = vunpack.c.l.b16 %v1558
        %v1646 = vunpack.c.l.b16 %v1559
        %v1647 = vunpack.c.l.b16 %v1560
        %v1648 = vpack.c.b16 %v1641, %v1640
        %v1649 = vpack.c.b16 %v1643, %v1642
        %v1650 = vpack.c.b16 %v1645, %v1644
        %v1651 = vpack.c.b16 %v1647, %v1646
        %vm1656 = vcmask 523264
        %v1658 = vsel %vm1656, %v1625, 0
        %1660 = vmatprep.subr.bf16.mxu0 0
        %1661 = vmatpush1.bf16.msra.mxu0 %v1648
        %1662 = vmatprep.subr.bf16.mxu0 0
        %1663 = vmatpush1.bf16.msra.mxu0 %v1649
        %1664 = vmatprep.subr.bf16.mxu0 0
        %1665 = vmatpush1.bf16.msra.mxu0 %v1650
        %1666 = vmatprep.subr.bf16.mxu0 0
        %1667 = vmatpush1.bf16.msra.mxu0 %v1651
        %1668 = vmatprep.subr.bf16.mxu0 0
        %1669 = vmatpush1.bf16.msra.mxu0 0
        %1670 = vmatprep.subr.bf16.mxu0 0
        %1671 = vmatpush1.bf16.msra.mxu0 0
        %1672 = vmatprep.subr.bf16.mxu0 0
        %1673 = vmatpush1.bf16.msra.mxu0 0
        %1674 = vmatprep.subr.bf16.mxu0 0
        %1675 = vmatpush1.bf16.msra.mxu0 0
        %1676 = vmatprep.subr.bf16.mxu0 0
        %1677 = vmatpush1.bf16.msra.mxu0 0
        %1678 = vmatprep.subr.bf16.mxu0 0
        %1679 = vmatpush1.bf16.msra.mxu0 0
        %1680 = vmatprep.subr.bf16.mxu0 0
        %1681 = vmatpush1.bf16.msra.mxu0 0
        %1682 = vmatprep.subr.bf16.mxu0 0
        %1683 = vmatpush1.bf16.msra.mxu0 0
        %1684 = vmatprep.subr.bf16.mxu0 0
        %1685 = vmatpush1.bf16.msra.mxu0 0
        %1686 = vmatprep.subr.bf16.mxu0 0
        %1687 = vmatpush1.bf16.msra.mxu0 0
        %1688 = vmatprep.subr.bf16.mxu0 0
        %1689 = vmatpush1.bf16.msra.mxu0 0
        %1690 = vmatprep.subr.bf16.mxu0 0
        %1691 = vmatpush1.bf16.msra.mxu0 0
        %1692 = vmatprep.mubr.bf16.mxu0 0
        %1693 = vmatmul.mubr.bf16.gmra.mrb[0].mxu0 %v1658
        %v1694 = vpop.f32.mrb[0].mxu0
        %v1695 = vadd.f32 %v1630, %v1694
        %v1696 = vpop.f32.mrb[0].mxu0
        %v1697 = vpop.f32.mrb[0].mxu0
        %v1698 = vpop.f32.mrb[0].mxu0
        %1699 = vdwg.mxu0
        %v1700 = vadd.f32 %v1547, %v1695
        %v1701 = vsel %vm836, %v1700, 0.0
        %1702 = vadd.xlane.f32.xlu0 %v1701
        %v1703 = vpop.xlane.xlu0 %1702
        %v1704 = vmul.f32 %v1703, %v1525
        %v1705 = vmul.f32 %v1700, %v1700
        %v1706 = vsel %vm836, %v1705, 0.0
        %1707 = vadd.xlane.f32.xlu0 %v1706
        %v1708 = vpop.xlane.xlu0 %1707
        %v1709 = vmul.f32 %v1708, %v1525
        %v1710 = vmul.f32 %v1704, %v1704
        %v1711 = vsub.f32 %v1709, %v1710
        %v1712 = vsub.f32 %v1700, %v1704
        %v1713 = vadd.f32 %v1711, 1e-05
        %v1714 = vrsqrt.pop %v1713
        %v1715 = vmul.f32 %v1712, %v1714
        %v1716 = vlaneseq
        %v1717 = vshrl.u32 %v1716, 7
        %v1718 = vsub.s32 1, %v1717
        %v1719 = vrot.slane %v813, %v1718
        %v1720 = vmul.f32 %v1715, %v1719
        %v1721 = vlaneseq
        %v1722 = vshrl.u32 %v1721, 7
        %v1723 = vsub.s32 1, %v1722
        %v1724 = vrot.slane %v814, %v1723
        %v1725 = vadd.f32 %v1720, %v1724
        %s1726 = scalar_lea.vmem %s10, 2
        %v1727 = vld [vmem:[%s1726] sm:$0x3]
        %s1728 = scalar_lea.vmem %s11, 2
        %v1729 = vld [vmem:[%s1728] sm:$0x3]
        %s1730 = scalar_lea.vmem %s4, 16
        %v1731 = vld [vmem:[%s1730] sm:$0xf]
        %v1732 = vld [vmem:[%s1730 + $0x4] sm:$0xf]
        %v1733 = vld [vmem:[%s1730 + $0x8] sm:$0xf]
        %v1734 = vld [vmem:[%s1730 + $0xc] sm:$0xf]
        %s1735 = scalar_lea.vmem %s5, 16
        %v1736 = vld [vmem:[%s1735] sm:$0xf]
        %v1737 = vld [vmem:[%s1735 + $0x4] sm:$0xf]
        %v1738 = vld [vmem:[%s1735 + $0x8] sm:$0xf]
        %v1739 = vld [vmem:[%s1735 + $0xc] sm:$0xf]
        %v1740 = vpack.c.bf16 %v1725, %v1725
        %v1745 = vunpack.c.l.b16 %v1731
        %v1746 = vunpack.c.l.b16 %v1732
        %v1747 = vunpack.c.l.b16 %v1733
        %v1748 = vunpack.c.l.b16 %v1734
        %v1749 = vpack.c.b16 %v1746, %v1745
        %v1750 = vpack.c.b16 %v1748, %v1747
        %v1754 = vsel %vm836, %v1740, 0
        %1756 = vmatprep.subr.bf16.mxu0 0
        %1757 = vmatpush1.bf16.msra.mxu0 %v1749
        %1758 = vmatprep.subr.bf16.mxu0 0
        %1759 = vmatpush1.bf16.msra.mxu0 %v1750
        %1760 = vmatprep.subr.bf16.mxu0 0
        %1761 = vmatpush1.bf16.msra.mxu0 0
        %1762 = vmatprep.subr.bf16.mxu0 0
        %1763 = vmatpush1.bf16.msra.mxu0 0
        %1764 = vmatprep.subr.bf16.mxu0 0
        %1765 = vmatpush1.bf16.msra.mxu0 0
        %1766 = vmatprep.subr.bf16.mxu0 0
        %1767 = vmatpush1.bf16.msra.mxu0 0
        %1768 = vmatprep.subr.bf16.mxu0 0
        %1769 = vmatpush1.bf16.msra.mxu0 0
        %1770 = vmatprep.subr.bf16.mxu0 0
        %1771 = vmatpush1.bf16.msra.mxu0 0
        %1772 = vmatprep.subr.bf16.mxu0 0
        %1773 = vmatpush1.bf16.msra.mxu0 0
        %1774 = vmatprep.subr.bf16.mxu0 0
        %1775 = vmatpush1.bf16.msra.mxu0 0
        %1776 = vmatprep.subr.bf16.mxu0 0
        %1777 = vmatpush1.bf16.msra.mxu0 0
        %1778 = vmatprep.subr.bf16.mxu0 0
        %1779 = vmatpush1.bf16.msra.mxu0 0
        %1780 = vmatprep.subr.bf16.mxu0 0
        %1781 = vmatpush1.bf16.msra.mxu0 0
        %1782 = vmatprep.subr.bf16.mxu0 0
        %1783 = vmatpush1.bf16.msra.mxu0 0
        %1784 = vmatprep.subr.bf16.mxu0 0
        %1785 = vmatpush1.bf16.msra.mxu0 0
        %1786 = vmatprep.subr.bf16.mxu0 0
        %1787 = vmatpush1.bf16.msra.mxu0 0
        %1788 = vmatprep.mubr.bf16.mxu0 0
        %1789 = vmatmul.mubr.bf16.gmra.mrb[0].mxu0 %v1754
        %v1790 = vpop.f32.mrb[0].mxu0
        %v1791 = vadd.f32 0.0, %v1790
        %v1792 = vpop.f32.mrb[0].mxu0
        %v1793 = vpop.f32.mrb[0].mxu0
        %v1794 = vpop.f32.mrb[0].mxu0
        %1795 = vdwg.mxu0
        %v1796 = vmul.f32 %v1791, 0.35355338
        %v1797 = vpack.c.bf16 %v1796, %v1796
        %v1798 = vpack.c.bf16 %v1791, %v1791
        %1800 = vrot.lane.b32.xlu0 %v1798, 96
        %v1801 = vpop.permute.xlu0 %1800
        %v1803 = vsel %vm892, %v1797, 0
        %v1806 = vsel %vm892, %v1801, 0
        %1808 = vmatprep.subr.bf16.mxu0 0
        %1809 = vmatpush1.bf16.xpose.msra.mxu0 %v1806
        %1810 = vmatprep.subr.bf16.mxu0 0
        %1811 = vmatpush1.bf16.xpose.msra.mxu0 0
        %1812 = vmatprep.subr.bf16.mxu0 0
        %1813 = vmatpush1.bf16.xpose.msra.mxu0 0
        %1814 = vmatprep.subr.bf16.mxu0 0
        %1815 = vmatpush1.bf16.xpose.msra.mxu0 0
        %1816 = vmatprep.subr.bf16.mxu0 0
        %1817 = vmatpush1.bf16.xpose.msra.mxu0 0
        %1818 = vmatprep.subr.bf16.mxu0 0
        %1819 = vmatpush1.bf16.xpose.msra.mxu0 0
        %1820 = vmatprep.subr.bf16.mxu0 0
        %1821 = vmatpush1.bf16.xpose.msra.mxu0 0
        %1822 = vmatprep.subr.bf16.mxu0 0
        %1823 = vmatpush1.bf16.xpose.msra.mxu0 0
        %1824 = vmatprep.subr.bf16.mxu0 0
        %1825 = vmatpush1.bf16.xpose.msra.mxu0 0
        %1826 = vmatprep.subr.bf16.mxu0 0
        %1827 = vmatpush1.bf16.xpose.msra.mxu0 0
        %1828 = vmatprep.subr.bf16.mxu0 0
        %1829 = vmatpush1.bf16.xpose.msra.mxu0 0
        %1830 = vmatprep.subr.bf16.mxu0 0
        %1831 = vmatpush1.bf16.xpose.msra.mxu0 0
        %1832 = vmatprep.subr.bf16.mxu0 0
        %1833 = vmatpush1.bf16.xpose.msra.mxu0 0
        %1834 = vmatprep.subr.bf16.mxu0 0
        %1835 = vmatpush1.bf16.xpose.msra.mxu0 0
        %1836 = vmatprep.subr.bf16.mxu0 0
        %1837 = vmatpush1.bf16.xpose.msra.mxu0 0
        %1838 = vmatprep.subr.bf16.mxu0 0
        %1839 = vmatpush1.bf16.xpose.msra.mxu0 0
        %1840 = vmatprep.mubr.bf16.mxu0 0
        %1841 = vmatmul.mubr.bf16.gmra.mrb[0].mxu0 %v1803
        %v1842 = vpop.f32.mrb[0].mxu0
        %v1843 = vadd.f32 %v887, %v1842
        %v1844 = vpop.f32.mrb[0].mxu0
        %v1845 = vpop.f32.mrb[0].mxu0
        %v1846 = vpop.f32.mrb[0].mxu0
        %1847 = vdwg.mxu0
        %v1848 = vsel %vm892, %v1843, -inf
        %1849 = vmax.xlane.f32.xlu0 %v1848
        %v1850 = vpop.xlane.xlu0 %1849
        %v1851 = vsub.f32 %v1843, %v1850
        %v1852 = vmul.f32 %v1851, 1.442695
        %v1853 = vpow.pop %v1852
        %v1854 = vsel %vm892, %v1853, 0.0
        %1855 = vadd.xlane.f32.xlu0 %v1854
        %v1856 = vpop.xlane.xlu0 %1855
        %v1857 = vrcp.pop %v1856
        %v1858 = vmul.f32 %v1853, %v1857
        %v1859 = vpack.c.bf16 %v1858, %v1858
        %1860 = vrot.lane.b32.xlu0 %v1798, 64
        %v1861 = vpop.permute.xlu0 %1860
        %v1863 = vsel %vm892, %v1859, 0
        %v1866 = vsel %vm956, %v1861, 0
        %1868 = vmatprep.subr.bf16.mxu0 0
        %1869 = vmatpush1.bf16.msra.mxu0 %v1866
        %1870 = vmatprep.subr.bf16.mxu0 0
        %1871 = vmatpush1.bf16.msra.mxu0 0
        %1872 = vmatprep.subr.bf16.mxu0 0
        %1873 = vmatpush1.bf16.msra.mxu0 0
        %1874 = vmatprep.subr.bf16.mxu0 0
        %1875 = vmatpush1.bf16.msra.mxu0 0
        %1876 = vmatprep.subr.bf16.mxu0 0
        %1877 = vmatpush1.bf16.msra.mxu0 0
        %1878 = vmatprep.subr.bf16.mxu0 0
        %1879 = vmatpush1.bf16.msra.mxu0 0
        %1880 = vmatprep.subr.bf16.mxu0 0
        %1881 = vmatpush1.bf16.msra.mxu0 0
        %1882 = vmatprep.subr.bf16.mxu0 0
        %1883 = vmatpush1.bf16.msra.mxu0 0
        %1884 = vmatprep.subr.bf16.mxu0 0
        %1885 = vmatpush1.bf16.msra.mxu0 0
        %1886 = vmatprep.subr.bf16.mxu0 0
        %1887 = vmatpush1.bf16.msra.mxu0 0
        %1888 = vmatprep.subr.bf16.mxu0 0
        %1889 = vmatpush1.bf16.msra.mxu0 0
        %1890 = vmatprep.subr.bf16.mxu0 0
        %1891 = vmatpush1.bf16.msra.mxu0 0
        %1892 = vmatprep.subr.bf16.mxu0 0
        %1893 = vmatpush1.bf16.msra.mxu0 0
        %1894 = vmatprep.subr.bf16.mxu0 0
        %1895 = vmatpush1.bf16.msra.mxu0 0
        %1896 = vmatprep.subr.bf16.mxu0 0
        %1897 = vmatpush1.bf16.msra.mxu0 0
        %1898 = vmatprep.subr.bf16.mxu0 0
        %1899 = vmatpush1.bf16.msra.mxu0 0
        %1900 = vmatprep.mubr.bf16.mxu0 0
        %1901 = vmatmul.mubr.bf16.gmra.mrb[0].mxu0 %v1863
        %v1902 = vpop.f32.mrb[0].mxu0
        %v1903 = vadd.f32 0.0, %v1902
        %v1904 = vpop.f32.mrb[0].mxu0
        %v1905 = vpop.f32.mrb[0].mxu0
        %v1906 = vpop.f32.mrb[0].mxu0
        %1907 = vdwg.mxu0
        %v1908 = vpack.c.bf16 %v1903, %v1903
        %1910 = vrot.lane.b32.xlu0 %v1797, 120
        %v1911 = vpop.permute.xlu0 %1910
        %1912 = vrot.lane.b32.xlu0 %v1798, 88
        %v1913 = vpop.permute.xlu0 %1912
        %v1915 = vsel %vm892, %v1911, 0
        %v1918 = vsel %vm892, %v1913, 0
        %1920 = vmatprep.subr.bf16.mxu0 0
        %1921 = vmatpush1.bf16.xpose.msra.mxu0 %v1918
        %1922 = vmatprep.subr.bf16.mxu0 0
        %1923 = vmatpush1.bf16.xpose.msra.mxu0 0
        %1924 = vmatprep.subr.bf16.mxu0 0
        %1925 = vmatpush1.bf16.xpose.msra.mxu0 0
        %1926 = vmatprep.subr.bf16.mxu0 0
        %1927 = vmatpush1.bf16.xpose.msra.mxu0 0
        %1928 = vmatprep.subr.bf16.mxu0 0
        %1929 = vmatpush1.bf16.xpose.msra.mxu0 0
        %1930 = vmatprep.subr.bf16.mxu0 0
        %1931 = vmatpush1.bf16.xpose.msra.mxu0 0
        %1932 = vmatprep.subr.bf16.mxu0 0
        %1933 = vmatpush1.bf16.xpose.msra.mxu0 0
        %1934 = vmatprep.subr.bf16.mxu0 0
        %1935 = vmatpush1.bf16.xpose.msra.mxu0 0
        %1936 = vmatprep.subr.bf16.mxu0 0
        %1937 = vmatpush1.bf16.xpose.msra.mxu0 0
        %1938 = vmatprep.subr.bf16.mxu0 0
        %1939 = vmatpush1.bf16.xpose.msra.mxu0 0
        %1940 = vmatprep.subr.bf16.mxu0 0
        %1941 = vmatpush1.bf16.xpose.msra.mxu0 0
        %1942 = vmatprep.subr.bf16.mxu0 0
        %1943 = vmatpush1.bf16.xpose.msra.mxu0 0
        %1944 = vmatprep.subr.bf16.mxu0 0
        %1945 = vmatpush1.bf16.xpose.msra.mxu0 0
        %1946 = vmatprep.subr.bf16.mxu0 0
        %1947 = vmatpush1.bf16.xpose.msra.mxu0 0
        %1948 = vmatprep.subr.bf16.mxu0 0
        %1949 = vmatpush1.bf16.xpose.msra.mxu0 0
        %1950 = vmatprep.subr.bf16.mxu0 0
        %1951 = vmatpush1.bf16.xpose.msra.mxu0 0
        %1952 = vmatprep.mubr.bf16.mxu0 0
        %1953 = vmatmul.mubr.bf16.gmra.mrb[0].mxu0 %v1915
        %v1954 = vpop.f32.mrb[0].mxu0
        %v1955 = vadd.f32 %v887, %v1954
        %v1956 = vpop.f32.mrb[0].mxu0
        %v1957 = vpop.f32.mrb[0].mxu0
        %v1958 = vpop.f32.mrb[0].mxu0
        %1959 = vdwg.mxu0
        %v1960 = vsel %vm892, %v1955, -inf
        %1961 = vmax.xlane.f32.xlu0 %v1960
        %v1962 = vpop.xlane.xlu0 %1961
        %v1963 = vsub.f32 %v1955, %v1962
        %v1964 = vmul.f32 %v1963, 1.442695
        %v1965 = vpow.pop %v1964
        %v1966 = vsel %vm892, %v1965, 0.0
        %1967 = vadd.xlane.f32.xlu0 %v1966
        %v1968 = vpop.xlane.xlu0 %1967
        %v1969 = vrcp.pop %v1968
        %v1970 = vmul.f32 %v1965, %v1969
        %v1971 = vpack.c.bf16 %v1970, %v1970
        %1972 = vrot.lane.b32.xlu0 %v1798, 56
        %v1973 = vpop.permute.xlu0 %1972
        %v1975 = vsel %vm892, %v1971, 0
        %v1978 = vsel %vm956, %v1973, 0
        %1980 = vmatprep.subr.bf16.mxu0 0
        %1981 = vmatpush1.bf16.msra.mxu0 %v1978
        %1982 = vmatprep.subr.bf16.mxu0 0
        %1983 = vmatpush1.bf16.msra.mxu0 0
        %1984 = vmatprep.subr.bf16.mxu0 0
        %1985 = vmatpush1.bf16.msra.mxu0 0
        %1986 = vmatprep.subr.bf16.mxu0 0
        %1987 = vmatpush1.bf16.msra.mxu0 0
        %1988 = vmatprep.subr.bf16.mxu0 0
        %1989 = vmatpush1.bf16.msra.mxu0 0
        %1990 = vmatprep.subr.bf16.mxu0 0
        %1991 = vmatpush1.bf16.msra.mxu0 0
        %1992 = vmatprep.subr.bf16.mxu0 0
        %1993 = vmatpush1.bf16.msra.mxu0 0
        %1994 = vmatprep.subr.bf16.mxu0 0
        %1995 = vmatpush1.bf16.msra.mxu0 0
        %1996 = vmatprep.subr.bf16.mxu0 0
        %1997 = vmatpush1.bf16.msra.mxu0 0
        %1998 = vmatprep.subr.bf16.mxu0 0
        %1999 = vmatpush1.bf16.msra.mxu0 0
        %2000 = vmatprep.subr.bf16.mxu0 0
        %2001 = vmatpush1.bf16.msra.mxu0 0
        %2002 = vmatprep.subr.bf16.mxu0 0
        %2003 = vmatpush1.bf16.msra.mxu0 0
        %2004 = vmatprep.subr.bf16.mxu0 0
        %2005 = vmatpush1.bf16.msra.mxu0 0
        %2006 = vmatprep.subr.bf16.mxu0 0
        %2007 = vmatpush1.bf16.msra.mxu0 0
        %2008 = vmatprep.subr.bf16.mxu0 0
        %2009 = vmatpush1.bf16.msra.mxu0 0
        %2010 = vmatprep.subr.bf16.mxu0 0
        %2011 = vmatpush1.bf16.msra.mxu0 0
        %2012 = vmatprep.mubr.bf16.mxu0 0
        %2013 = vmatmul.mubr.bf16.gmra.mrb[0].mxu0 %v1975
        %v2014 = vpop.f32.mrb[0].mxu0
        %v2015 = vadd.f32 0.0, %v2014
        %v2016 = vpop.f32.mrb[0].mxu0
        %v2017 = vpop.f32.mrb[0].mxu0
        %v2018 = vpop.f32.mrb[0].mxu0
        %2019 = vdwg.mxu0
        %v2020 = vpack.c.bf16 %v2015, %v2015
        %v2022 = vsel %vm892, %v2020, 0
        %v2025 = vsel %vm956, %v1737, 0
        %2027 = vmatprep.subr.bf16.mxu0 0
        %2028 = vmatpush1.bf16.msra.mxu0 %v2025
        %2029 = vmatprep.subr.bf16.mxu0 0
        %2030 = vmatpush1.bf16.msra.mxu0 0
        %2031 = vmatprep.subr.bf16.mxu0 0
        %2032 = vmatpush1.bf16.msra.mxu0 0
        %2033 = vmatprep.subr.bf16.mxu0 0
        %2034 = vmatpush1.bf16.msra.mxu0 0
        %2035 = vmatprep.subr.bf16.mxu0 0
        %2036 = vmatpush1.bf16.msra.mxu0 0
        %2037 = vmatprep.subr.bf16.mxu0 0
        %2038 = vmatpush1.bf16.msra.mxu0 0
        %2039 = vmatprep.subr.bf16.mxu0 0
        %2040 = vmatpush1.bf16.msra.mxu0 0
        %2041 = vmatprep.subr.bf16.mxu0 0
        %2042 = vmatpush1.bf16.msra.mxu0 0
        %2043 = vmatprep.subr.bf16.mxu0 0
        %2044 = vmatpush1.bf16.msra.mxu0 0
        %2045 = vmatprep.subr.bf16.mxu0 0
        %2046 = vmatpush1.bf16.msra.mxu0 0
        %2047 = vmatprep.subr.bf16.mxu0 0
        %2048 = vmatpush1.bf16.msra.mxu0 0
        %2049 = vmatprep.subr.bf16.mxu0 0
        %2050 = vmatpush1.bf16.msra.mxu0 0
        %2051 = vmatprep.subr.bf16.mxu0 0
        %2052 = vmatpush1.bf16.msra.mxu0 0
        %2053 = vmatprep.subr.bf16.mxu0 0
        %2054 = vmatpush1.bf16.msra.mxu0 0
        %2055 = vmatprep.subr.bf16.mxu0 0
        %2056 = vmatpush1.bf16.msra.mxu0 0
        %2057 = vmatprep.subr.bf16.mxu0 0
        %2058 = vmatpush1.bf16.msra.mxu0 0
        %2059 = vmatprep.mubr.bf16.mxu0 0
        %2060 = vmatmul.mubr.bf16.gmra.mrb[0].mxu0 %v2022
        %v2061 = vpop.f32.mrb[0].mxu0
        %v2062 = vadd.f32 0.0, %v2061
        %v2063 = vpop.f32.mrb[0].mxu0
        %v2064 = vpop.f32.mrb[0].mxu0
        %v2065 = vpop.f32.mrb[0].mxu0
        %2066 = vdwg.mxu0
        %v2068 = vsel %vm892, %v1908, 0
        %v2071 = vsel %vm956, %v1736, 0
        %2073 = vmatprep.subr.bf16.mxu0 0
        %2074 = vmatpush1.bf16.msra.mxu0 %v2071
        %2075 = vmatprep.subr.bf16.mxu0 0
        %2076 = vmatpush1.bf16.msra.mxu0 0
        %2077 = vmatprep.subr.bf16.mxu0 0
        %2078 = vmatpush1.bf16.msra.mxu0 0
        %2079 = vmatprep.subr.bf16.mxu0 0
        %2080 = vmatpush1.bf16.msra.mxu0 0
        %2081 = vmatprep.subr.bf16.mxu0 0
        %2082 = vmatpush1.bf16.msra.mxu0 0
        %2083 = vmatprep.subr.bf16.mxu0 0
        %2084 = vmatpush1.bf16.msra.mxu0 0
        %2085 = vmatprep.subr.bf16.mxu0 0
        %2086 = vmatpush1.bf16.msra.mxu0 0
        %2087 = vmatprep.subr.bf16.mxu0 0
        %2088 = vmatpush1.bf16.msra.mxu0 0
        %2089 = vmatprep.subr.bf16.mxu0 0
        %2090 = vmatpush1.bf16.msra.mxu0 0
        %2091 = vmatprep.subr.bf16.mxu0 0
        %2092 = vmatpush1.bf16.msra.mxu0 0
        %2093 = vmatprep.subr.bf16.mxu0 0
        %2094 = vmatpush1.bf16.msra.mxu0 0
        %2095 = vmatprep.subr.bf16.mxu0 0
        %2096 = vmatpush1.bf16.msra.mxu0 0
        %2097 = vmatprep.subr.bf16.mxu0 0
        %2098 = vmatpush1.bf16.msra.mxu0 0
        %2099 = vmatprep.subr.bf16.mxu0 0
        %2100 = vmatpush1.bf16.msra.mxu0 0
        %2101 = vmatprep.subr.bf16.mxu0 0
        %2102 = vmatpush1.bf16.msra.mxu0 0
        %2103 = vmatprep.subr.bf16.mxu0 0
        %2104 = vmatpush1.bf16.msra.mxu0 0
        %2105 = vmatprep.mubr.bf16.mxu0 0
        %2106 = vmatmul.mubr.bf16.gmra.mrb[0].mxu0 %v2068
        %v2107 = vpop.f32.mrb[0].mxu0
        %v2108 = vadd.f32 %v2062, %v2107
        %v2109 = vpop.f32.mrb[0].mxu0
        %v2110 = vpop.f32.mrb[0].mxu0
        %v2111 = vpop.f32.mrb[0].mxu0
        %2112 = vdwg.mxu0
        %2113 = vrot.lane.b32.xlu0 %v1797, 112
        %v2114 = vpop.permute.xlu0 %2113
        %2115 = vrot.lane.b32.xlu0 %v1798, 80
        %v2116 = vpop.permute.xlu0 %2115
        %v2118 = vsel %vm892, %v2114, 0
        %v2121 = vsel %vm892, %v2116, 0
        %2123 = vmatprep.subr.bf16.mxu0 0
        %2124 = vmatpush1.bf16.xpose.msra.mxu0 %v2121
        %2125 = vmatprep.subr.bf16.mxu0 0
        %2126 = vmatpush1.bf16.xpose.msra.mxu0 0
        %2127 = vmatprep.subr.bf16.mxu0 0
        %2128 = vmatpush1.bf16.xpose.msra.mxu0 0
        %2129 = vmatprep.subr.bf16.mxu0 0
        %2130 = vmatpush1.bf16.xpose.msra.mxu0 0
        %2131 = vmatprep.subr.bf16.mxu0 0
        %2132 = vmatpush1.bf16.xpose.msra.mxu0 0
        %2133 = vmatprep.subr.bf16.mxu0 0
        %2134 = vmatpush1.bf16.xpose.msra.mxu0 0
        %2135 = vmatprep.subr.bf16.mxu0 0
        %2136 = vmatpush1.bf16.xpose.msra.mxu0 0
        %2137 = vmatprep.subr.bf16.mxu0 0
        %2138 = vmatpush1.bf16.xpose.msra.mxu0 0
        %2139 = vmatprep.subr.bf16.mxu0 0
        %2140 = vmatpush1.bf16.xpose.msra.mxu0 0
        %2141 = vmatprep.subr.bf16.mxu0 0
        %2142 = vmatpush1.bf16.xpose.msra.mxu0 0
        %2143 = vmatprep.subr.bf16.mxu0 0
        %2144 = vmatpush1.bf16.xpose.msra.mxu0 0
        %2145 = vmatprep.subr.bf16.mxu0 0
        %2146 = vmatpush1.bf16.xpose.msra.mxu0 0
        %2147 = vmatprep.subr.bf16.mxu0 0
        %2148 = vmatpush1.bf16.xpose.msra.mxu0 0
        %2149 = vmatprep.subr.bf16.mxu0 0
        %2150 = vmatpush1.bf16.xpose.msra.mxu0 0
        %2151 = vmatprep.subr.bf16.mxu0 0
        %2152 = vmatpush1.bf16.xpose.msra.mxu0 0
        %2153 = vmatprep.subr.bf16.mxu0 0
        %2154 = vmatpush1.bf16.xpose.msra.mxu0 0
        %2155 = vmatprep.mubr.bf16.mxu0 0
        %2156 = vmatmul.mubr.bf16.gmra.mrb[0].mxu0 %v2118
        %v2157 = vpop.f32.mrb[0].mxu0
        %v2158 = vadd.f32 %v887, %v2157
        %v2159 = vpop.f32.mrb[0].mxu0
        %v2160 = vpop.f32.mrb[0].mxu0
        %v2161 = vpop.f32.mrb[0].mxu0
        %2162 = vdwg.mxu0
        %v2163 = vsel %vm892, %v2158, -inf
        %2164 = vmax.xlane.f32.xlu0 %v2163
        %v2165 = vpop.xlane.xlu0 %2164
        %v2166 = vsub.f32 %v2158, %v2165
        %v2167 = vmul.f32 %v2166, 1.442695
        %v2168 = vpow.pop %v2167
        %v2169 = vsel %vm892, %v2168, 0.0
        %2170 = vadd.xlane.f32.xlu0 %v2169
        %v2171 = vpop.xlane.xlu0 %2170
        %v2172 = vrcp.pop %v2171
        %v2173 = vmul.f32 %v2168, %v2172
        %v2174 = vpack.c.bf16 %v2173, %v2173
        %2175 = vrot.lane.b32.xlu0 %v1798, 48
        %v2176 = vpop.permute.xlu0 %2175
        %v2178 = vsel %vm892, %v2174, 0
        %v2181 = vsel %vm956, %v2176, 0
        %2183 = vmatprep.subr.bf16.mxu0 0
        %2184 = vmatpush1.bf16.msra.mxu0 %v2181
        %2185 = vmatprep.subr.bf16.mxu0 0
        %2186 = vmatpush1.bf16.msra.mxu0 0
        %2187 = vmatprep.subr.bf16.mxu0 0
        %2188 = vmatpush1.bf16.msra.mxu0 0
        %2189 = vmatprep.subr.bf16.mxu0 0
        %2190 = vmatpush1.bf16.msra.mxu0 0
        %2191 = vmatprep.subr.bf16.mxu0 0
        %2192 = vmatpush1.bf16.msra.mxu0 0
        %2193 = vmatprep.subr.bf16.mxu0 0
        %2194 = vmatpush1.bf16.msra.mxu0 0
        %2195 = vmatprep.subr.bf16.mxu0 0
        %2196 = vmatpush1.bf16.msra.mxu0 0
        %2197 = vmatprep.subr.bf16.mxu0 0
        %2198 = vmatpush1.bf16.msra.mxu0 0
        %2199 = vmatprep.subr.bf16.mxu0 0
        %2200 = vmatpush1.bf16.msra.mxu0 0
        %2201 = vmatprep.subr.bf16.mxu0 0
        %2202 = vmatpush1.bf16.msra.mxu0 0
        %2203 = vmatprep.subr.bf16.mxu0 0
        %2204 = vmatpush1.bf16.msra.mxu0 0
        %2205 = vmatprep.subr.bf16.mxu0 0
        %2206 = vmatpush1.bf16.msra.mxu0 0
        %2207 = vmatprep.subr.bf16.mxu0 0
        %2208 = vmatpush1.bf16.msra.mxu0 0
        %2209 = vmatprep.subr.bf16.mxu0 0
        %2210 = vmatpush1.bf16.msra.mxu0 0
        %2211 = vmatprep.subr.bf16.mxu0 0
        %2212 = vmatpush1.bf16.msra.mxu0 0
        %2213 = vmatprep.subr.bf16.mxu0 0
        %2214 = vmatpush1.bf16.msra.mxu0 0
        %2215 = vmatprep.mubr.bf16.mxu0 0
        %2216 = vmatmul.mubr.bf16.gmra.mrb[0].mxu0 %v2178
        %v2217 = vpop.f32.mrb[0].mxu0
        %v2218 = vadd.f32 0.0, %v2217
        %v2219 = vpop.f32.mrb[0].mxu0
        %v2220 = vpop.f32.mrb[0].mxu0
        %v2221 = vpop.f32.mrb[0].mxu0
        %2222 = vdwg.mxu0
        %v2223 = vpack.c.bf16 %v2218, %v2218
        %v2225 = vsel %vm892, %v2223, 0
        %v2228 = vsel %vm956, %v1738, 0
        %2230 = vmatprep.subr.bf16.mxu0 0
        %2231 = vmatpush1.bf16.msra.mxu0 %v2228
        %2232 = vmatprep.subr.bf16.mxu0 0
        %2233 = vmatpush1.bf16.msra.mxu0 0
        %2234 = vmatprep.subr.bf16.mxu0 0
        %2235 = vmatpush1.bf16.msra.mxu0 0
        %2236 = vmatprep.subr.bf16.mxu0 0
        %2237 = vmatpush1.bf16.msra.mxu0 0
        %2238 = vmatprep.subr.bf16.mxu0 0
        %2239 = vmatpush1.bf16.msra.mxu0 0
        %2240 = vmatprep.subr.bf16.mxu0 0
        %2241 = vmatpush1.bf16.msra.mxu0 0
        %2242 = vmatprep.subr.bf16.mxu0 0
        %2243 = vmatpush1.bf16.msra.mxu0 0
        %2244 = vmatprep.subr.bf16.mxu0 0
        %2245 = vmatpush1.bf16.msra.mxu0 0
        %2246 = vmatprep.subr.bf16.mxu0 0
        %2247 = vmatpush1.bf16.msra.mxu0 0
        %2248 = vmatprep.subr.bf16.mxu0 0
        %2249 = vmatpush1.bf16.msra.mxu0 0
        %2250 = vmatprep.subr.bf16.mxu0 0
        %2251 = vmatpush1.bf16.msra.mxu0 0
        %2252 = vmatprep.subr.bf16.mxu0 0
        %2253 = vmatpush1.bf16.msra.mxu0 0
        %2254 = vmatprep.subr.bf16.mxu0 0
        %2255 = vmatpush1.bf16.msra.mxu0 0
        %2256 = vmatprep.subr.bf16.mxu0 0
        %2257 = vmatpush1.bf16.msra.mxu0 0
        %2258 = vmatprep.subr.bf16.mxu0 0
        %2259 = vmatpush1.bf16.msra.mxu0 0
        %2260 = vmatprep.subr.bf16.mxu0 0
        %2261 = vmatpush1.bf16.msra.mxu0 0
        %2262 = vmatprep.mubr.bf16.mxu0 0
        %2263 = vmatmul.mubr.bf16.gmra.mrb[0].mxu0 %v2225
        %v2264 = vpop.f32.mrb[0].mxu0
        %v2265 = vadd.f32 0.0, %v2264
        %v2266 = vpop.f32.mrb[0].mxu0
        %v2267 = vpop.f32.mrb[0].mxu0
        %v2268 = vpop.f32.mrb[0].mxu0
        %2269 = vdwg.mxu0
        %v2270 = vadd.f32 %v2108, %v2265
        %2271 = vrot.lane.b32.xlu0 %v1797, 104
        %v2272 = vpop.permute.xlu0 %2271
        %2273 = vrot.lane.b32.xlu0 %v1798, 72
        %v2274 = vpop.permute.xlu0 %2273
        %v2276 = vsel %vm892, %v2272, 0
        %v2279 = vsel %vm892, %v2274, 0
        %2281 = vmatprep.subr.bf16.mxu0 0
        %2282 = vmatpush1.bf16.xpose.msra.mxu0 %v2279
        %2283 = vmatprep.subr.bf16.mxu0 0
        %2284 = vmatpush1.bf16.xpose.msra.mxu0 0
        %2285 = vmatprep.subr.bf16.mxu0 0
        %2286 = vmatpush1.bf16.xpose.msra.mxu0 0
        %2287 = vmatprep.subr.bf16.mxu0 0
        %2288 = vmatpush1.bf16.xpose.msra.mxu0 0
        %2289 = vmatprep.subr.bf16.mxu0 0
        %2290 = vmatpush1.bf16.xpose.msra.mxu0 0
        %2291 = vmatprep.subr.bf16.mxu0 0
        %2292 = vmatpush1.bf16.xpose.msra.mxu0 0
        %2293 = vmatprep.subr.bf16.mxu0 0
        %2294 = vmatpush1.bf16.xpose.msra.mxu0 0
        %2295 = vmatprep.subr.bf16.mxu0 0
        %2296 = vmatpush1.bf16.xpose.msra.mxu0 0
        %2297 = vmatprep.subr.bf16.mxu0 0
        %2298 = vmatpush1.bf16.xpose.msra.mxu0 0
        %2299 = vmatprep.subr.bf16.mxu0 0
        %2300 = vmatpush1.bf16.xpose.msra.mxu0 0
        %2301 = vmatprep.subr.bf16.mxu0 0
        %2302 = vmatpush1.bf16.xpose.msra.mxu0 0
        %2303 = vmatprep.subr.bf16.mxu0 0
        %2304 = vmatpush1.bf16.xpose.msra.mxu0 0
        %2305 = vmatprep.subr.bf16.mxu0 0
        %2306 = vmatpush1.bf16.xpose.msra.mxu0 0
        %2307 = vmatprep.subr.bf16.mxu0 0
        %2308 = vmatpush1.bf16.xpose.msra.mxu0 0
        %2309 = vmatprep.subr.bf16.mxu0 0
        %2310 = vmatpush1.bf16.xpose.msra.mxu0 0
        %2311 = vmatprep.subr.bf16.mxu0 0
        %2312 = vmatpush1.bf16.xpose.msra.mxu0 0
        %2313 = vmatprep.mubr.bf16.mxu0 0
        %2314 = vmatmul.mubr.bf16.gmra.mrb[0].mxu0 %v2276
        %v2315 = vpop.f32.mrb[0].mxu0
        %v2316 = vadd.f32 %v887, %v2315
        %v2317 = vpop.f32.mrb[0].mxu0
        %v2318 = vpop.f32.mrb[0].mxu0
        %v2319 = vpop.f32.mrb[0].mxu0
        %2320 = vdwg.mxu0
        %v2321 = vsel %vm892, %v2316, -inf
        %2322 = vmax.xlane.f32.xlu0 %v2321
        %v2323 = vpop.xlane.xlu0 %2322
        %v2324 = vsub.f32 %v2316, %v2323
        %v2325 = vmul.f32 %v2324, 1.442695
        %v2326 = vpow.pop %v2325
        %v2327 = vsel %vm892, %v2326, 0.0
        %2328 = vadd.xlane.f32.xlu0 %v2327
        %v2329 = vpop.xlane.xlu0 %2328
        %v2330 = vrcp.pop %v2329
        %v2331 = vmul.f32 %v2326, %v2330
        %v2332 = vpack.c.bf16 %v2331, %v2331
        %2333 = vrot.lane.b32.xlu0 %v1798, 40
        %v2334 = vpop.permute.xlu0 %2333
        %v2336 = vsel %vm892, %v2332, 0
        %v2339 = vsel %vm956, %v2334, 0
        %2341 = vmatprep.subr.bf16.mxu0 0
        %2342 = vmatpush1.bf16.msra.mxu0 %v2339
        %2343 = vmatprep.subr.bf16.mxu0 0
        %2344 = vmatpush1.bf16.msra.mxu0 0
        %2345 = vmatprep.subr.bf16.mxu0 0
        %2346 = vmatpush1.bf16.msra.mxu0 0
        %2347 = vmatprep.subr.bf16.mxu0 0
        %2348 = vmatpush1.bf16.msra.mxu0 0
        %2349 = vmatprep.subr.bf16.mxu0 0
        %2350 = vmatpush1.bf16.msra.mxu0 0
        %2351 = vmatprep.subr.bf16.mxu0 0
        %2352 = vmatpush1.bf16.msra.mxu0 0
        %2353 = vmatprep.subr.bf16.mxu0 0
        %2354 = vmatpush1.bf16.msra.mxu0 0
        %2355 = vmatprep.subr.bf16.mxu0 0
        %2356 = vmatpush1.bf16.msra.mxu0 0
        %2357 = vmatprep.subr.bf16.mxu0 0
        %2358 = vmatpush1.bf16.msra.mxu0 0
        %2359 = vmatprep.subr.bf16.mxu0 0
        %2360 = vmatpush1.bf16.msra.mxu0 0
        %2361 = vmatprep.subr.bf16.mxu0 0
        %2362 = vmatpush1.bf16.msra.mxu0 0
        %2363 = vmatprep.subr.bf16.mxu0 0
        %2364 = vmatpush1.bf16.msra.mxu0 0
        %2365 = vmatprep.subr.bf16.mxu0 0
        %2366 = vmatpush1.bf16.msra.mxu0 0
        %2367 = vmatprep.subr.bf16.mxu0 0
        %2368 = vmatpush1.bf16.msra.mxu0 0
        %2369 = vmatprep.subr.bf16.mxu0 0
        %2370 = vmatpush1.bf16.msra.mxu0 0
        %2371 = vmatprep.subr.bf16.mxu0 0
        %2372 = vmatpush1.bf16.msra.mxu0 0
        %2373 = vmatprep.mubr.bf16.mxu0 0
        %2374 = vmatmul.mubr.bf16.gmra.mrb[0].mxu0 %v2336
        %v2375 = vpop.f32.mrb[0].mxu0
        %v2376 = vadd.f32 0.0, %v2375
        %v2377 = vpop.f32.mrb[0].mxu0
        %v2378 = vpop.f32.mrb[0].mxu0
        %v2379 = vpop.f32.mrb[0].mxu0
        %2380 = vdwg.mxu0
        %v2381 = vpack.c.bf16 %v2376, %v2376
        %v2383 = vsel %vm892, %v2381, 0
        %v2386 = vsel %vm956, %v1739, 0
        %2388 = vmatprep.subr.bf16.mxu0 0
        %2389 = vmatpush1.bf16.msra.mxu0 %v2386
        %2390 = vmatprep.subr.bf16.mxu0 0
        %2391 = vmatpush1.bf16.msra.mxu0 0
        %2392 = vmatprep.subr.bf16.mxu0 0
        %2393 = vmatpush1.bf16.msra.mxu0 0
        %2394 = vmatprep.subr.bf16.mxu0 0
        %2395 = vmatpush1.bf16.msra.mxu0 0
        %2396 = vmatprep.subr.bf16.mxu0 0
        %2397 = vmatpush1.bf16.msra.mxu0 0
        %2398 = vmatprep.subr.bf16.mxu0 0
        %2399 = vmatpush1.bf16.msra.mxu0 0
        %2400 = vmatprep.subr.bf16.mxu0 0
        %2401 = vmatpush1.bf16.msra.mxu0 0
        %2402 = vmatprep.subr.bf16.mxu0 0
        %2403 = vmatpush1.bf16.msra.mxu0 0
        %2404 = vmatprep.subr.bf16.mxu0 0
        %2405 = vmatpush1.bf16.msra.mxu0 0
        %2406 = vmatprep.subr.bf16.mxu0 0
        %2407 = vmatpush1.bf16.msra.mxu0 0
        %2408 = vmatprep.subr.bf16.mxu0 0
        %2409 = vmatpush1.bf16.msra.mxu0 0
        %2410 = vmatprep.subr.bf16.mxu0 0
        %2411 = vmatpush1.bf16.msra.mxu0 0
        %2412 = vmatprep.subr.bf16.mxu0 0
        %2413 = vmatpush1.bf16.msra.mxu0 0
        %2414 = vmatprep.subr.bf16.mxu0 0
        %2415 = vmatpush1.bf16.msra.mxu0 0
        %2416 = vmatprep.subr.bf16.mxu0 0
        %2417 = vmatpush1.bf16.msra.mxu0 0
        %2418 = vmatprep.subr.bf16.mxu0 0
        %2419 = vmatpush1.bf16.msra.mxu0 0
        %2420 = vmatprep.mubr.bf16.mxu0 0
        %2421 = vmatmul.mubr.bf16.gmra.mrb[0].mxu0 %v2383
        %v2422 = vpop.f32.mrb[0].mxu0
        %v2423 = vadd.f32 0.0, %v2422
        %v2424 = vpop.f32.mrb[0].mxu0
        %v2425 = vpop.f32.mrb[0].mxu0
        %v2426 = vpop.f32.mrb[0].mxu0
        %2427 = vdwg.mxu0
        %v2428 = vadd.f32 %v2270, %v2423
        %v2429 = vadd.f32 %v1725, %v2428
        %v2430 = vsel %vm836, %v2429, 0.0
        %2431 = vadd.xlane.f32.xlu0 %v2430
        %v2432 = vpop.xlane.xlu0 %2431
        %v2433 = vmul.f32 %v2432, %v1525
        %v2434 = vmul.f32 %v2429, %v2429
        %v2435 = vsel %vm836, %v2434, 0.0
        %2436 = vadd.xlane.f32.xlu0 %v2435
        %v2437 = vpop.xlane.xlu0 %2436
        %v2438 = vmul.f32 %v2437, %v1525
        %v2439 = vmul.f32 %v2433, %v2433
        %v2440 = vsub.f32 %v2438, %v2439
        %v2441 = vsub.f32 %v2429, %v2433
        %v2442 = vadd.f32 %v2440, 1e-05
        %v2443 = vrsqrt.pop %v2442
        %v2444 = vmul.f32 %v2441, %v2443
        %v2445 = vlaneseq
        %v2446 = vshrl.u32 %v2445, 7
        %v2447 = vsub.s32 0, %v2446
        %v2448 = vrot.slane %v1727, %v2447
        %v2449 = vmul.f32 %v2444, %v2448
        %v2450 = vlaneseq
        %v2451 = vshrl.u32 %v2450, 7
        %v2452 = vsub.s32 0, %v2451
        %v2453 = vrot.slane %v1729, %v2452
        %v2454 = vadd.f32 %v2449, %v2453
        %s2455 = scalar_lea.vmem %s6, 16
        %v2456 = vld [vmem:[%s2455] sm:$0xf]
        %v2457 = vld [vmem:[%s2455 + $0x4] sm:$0xf]
        %v2458 = vld [vmem:[%s2455 + $0x8] sm:$0xf]
        %v2459 = vld [vmem:[%s2455 + $0xc] sm:$0xf]
        %s2460 = scalar_lea.vmem %s7, 1
        %v2461 = vld [vmem:[%s2460] sm:$0x1]
        %s2462 = scalar_lea.vmem %s8, 32
        %v2463 = vld [vmem:[%s2462] sm:$0xf]
        %v2464 = vld [vmem:[%s2462 + $0x4] sm:$0xf]
        %v2465 = vld [vmem:[%s2462 + $0x8] sm:$0xf]
        %v2466 = vld [vmem:[%s2462 + $0xc] sm:$0xf]
        %v2467 = vld [vmem:[%s2462 + $0x10] sm:$0xf]
        %v2468 = vld [vmem:[%s2462 + $0x14] sm:$0xf]
        %v2469 = vld [vmem:[%s2462 + $0x18] sm:$0xf]
        %v2470 = vld [vmem:[%s2462 + $0x1c] sm:$0xf]
        %s2471 = scalar_lea.vmem %s9, 1
        %v2472 = vld [vmem:[%s2471] sm:$0x1]
        %v2473 = vpack.c.bf16 %v2454, %v2454
        %v2475 = vlaneseq
        %v2476 = vshrl.u32 %v2475, 7
        %v2477 = vsub.s32 0, %v2476
        %v2478 = vrot.slane %v2461, %v2477
        %v2484 = vunpack.c.l.b16 %v2456
        %v2485 = vunpack.c.l.b16 %v2457
        %v2486 = vunpack.c.l.b16 %v2458
        %v2487 = vunpack.c.l.b16 %v2459
        %v2488 = vpack.c.b16 %v2485, %v2484
        %v2489 = vpack.c.b16 %v2487, %v2486
        %v2493 = vsel %vm836, %v2473, 0
        %2495 = vmatprep.subr.bf16.mxu0 0
        %2496 = vmatpush1.bf16.msra.mxu0 %v2488
        %2497 = vmatprep.subr.bf16.mxu0 0
        %2498 = vmatpush1.bf16.msra.mxu0 %v2489
        %2499 = vmatprep.subr.bf16.mxu0 0
        %2500 = vmatpush1.bf16.msra.mxu0 0
        %2501 = vmatprep.subr.bf16.mxu0 0
        %2502 = vmatpush1.bf16.msra.mxu0 0
        %2503 = vmatprep.subr.bf16.mxu0 0
        %2504 = vmatpush1.bf16.msra.mxu0 0
        %2505 = vmatprep.subr.bf16.mxu0 0
        %2506 = vmatpush1.bf16.msra.mxu0 0
        %2507 = vmatprep.subr.bf16.mxu0 0
        %2508 = vmatpush1.bf16.msra.mxu0 0
        %2509 = vmatprep.subr.bf16.mxu0 0
        %2510 = vmatpush1.bf16.msra.mxu0 0
        %2511 = vmatprep.subr.bf16.mxu0 0
        %2512 = vmatpush1.bf16.msra.mxu0 0
        %2513 = vmatprep.subr.bf16.mxu0 0
        %2514 = vmatpush1.bf16.msra.mxu0 0
        %2515 = vmatprep.subr.bf16.mxu0 0
        %2516 = vmatpush1.bf16.msra.mxu0 0
        %2517 = vmatprep.subr.bf16.mxu0 0
        %2518 = vmatpush1.bf16.msra.mxu0 0
        %2519 = vmatprep.subr.bf16.mxu0 0
        %2520 = vmatpush1.bf16.msra.mxu0 0
        %2521 = vmatprep.subr.bf16.mxu0 0
        %2522 = vmatpush1.bf16.msra.mxu0 0
        %2523 = vmatprep.subr.bf16.mxu0 0
        %2524 = vmatpush1.bf16.msra.mxu0 0
        %2525 = vmatprep.subr.bf16.mxu0 0
        %2526 = vmatpush1.bf16.msra.mxu0 0
        %2527 = vmatprep.mubr.bf16.mxu0 0
        %2528 = vmatmul.mubr.bf16.gmra.mrb[0].mxu0 %v2493
        %v2529 = vpop.f32.mrb[0].mxu0
        %v2530 = vadd.f32 %v2478, %v2529
        %v2531 = vpop.f32.mrb[0].mxu0
        %v2532 = vpop.f32.mrb[0].mxu0
        %v2533 = vpop.f32.mrb[0].mxu0
        %2534 = vdwg.mxu0
        %v2535 = vmax.f32 %v2530, 0.0
        %v2536 = vpack.c.bf16 %v2535, %v2535
        %v2538 = vlaneseq
        %v2539 = vshrl.u32 %v2538, 7
        %v2540 = vsub.s32 0, %v2539
        %v2541 = vrot.slane %v2472, %v2540
        %v2551 = vunpack.c.l.b16 %v2463
        %v2552 = vunpack.c.l.b16 %v2464
        %v2553 = vunpack.c.l.b16 %v2465
        %v2554 = vunpack.c.l.b16 %v2466
        %v2555 = vunpack.c.l.b16 %v2467
        %v2556 = vunpack.c.l.b16 %v2468
        %v2557 = vunpack.c.l.b16 %v2469
        %v2558 = vunpack.c.l.b16 %v2470
        %v2559 = vpack.c.b16 %v2552, %v2551
        %v2560 = vpack.c.b16 %v2554, %v2553
        %v2561 = vpack.c.b16 %v2556, %v2555
        %v2562 = vpack.c.b16 %v2558, %v2557
        %v2568 = vsel %vm1656, %v2536, 0
        %2570 = vmatprep.subr.bf16.mxu0 0
        %2571 = vmatpush1.bf16.msra.mxu0 %v2559
        %2572 = vmatprep.subr.bf16.mxu0 0
        %2573 = vmatpush1.bf16.msra.mxu0 %v2560
        %2574 = vmatprep.subr.bf16.mxu0 0
        %2575 = vmatpush1.bf16.msra.mxu0 %v2561
        %2576 = vmatprep.subr.bf16.mxu0 0
        %2577 = vmatpush1.bf16.msra.mxu0 %v2562
        %2578 = vmatprep.subr.bf16.mxu0 0
        %2579 = vmatpush1.bf16.msra.mxu0 0
        %2580 = vmatprep.subr.bf16.mxu0 0
        %2581 = vmatpush1.bf16.msra.mxu0 0
        %2582 = vmatprep.subr.bf16.mxu0 0
        %2583 = vmatpush1.bf16.msra.mxu0 0
        %2584 = vmatprep.subr.bf16.mxu0 0
        %2585 = vmatpush1.bf16.msra.mxu0 0
        %2586 = vmatprep.subr.bf16.mxu0 0
        %2587 = vmatpush1.bf16.msra.mxu0 0
        %2588 = vmatprep.subr.bf16.mxu0 0
        %2589 = vmatpush1.bf16.msra.mxu0 0
        %2590 = vmatprep.subr.bf16.mxu0 0
        %2591 = vmatpush1.bf16.msra.mxu0 0
        %2592 = vmatprep.subr.bf16.mxu0 0
        %2593 = vmatpush1.bf16.msra.mxu0 0
        %2594 = vmatprep.subr.bf16.mxu0 0
        %2595 = vmatpush1.bf16.msra.mxu0 0
        %2596 = vmatprep.subr.bf16.mxu0 0
        %2597 = vmatpush1.bf16.msra.mxu0 0
        %2598 = vmatprep.subr.bf16.mxu0 0
        %2599 = vmatpush1.bf16.msra.mxu0 0
        %2600 = vmatprep.subr.bf16.mxu0 0
        %2601 = vmatpush1.bf16.msra.mxu0 0
        %2602 = vmatprep.mubr.bf16.mxu0 0
        %2603 = vmatmul.mubr.bf16.gmra.mrb[0].mxu0 %v2568
        %v2604 = vpop.f32.mrb[0].mxu0
        %v2605 = vadd.f32 %v2541, %v2604
        %v2606 = vpop.f32.mrb[0].mxu0
        %v2607 = vpop.f32.mrb[0].mxu0
        %v2608 = vpop.f32.mrb[0].mxu0
        %2609 = vdwg.mxu0
        %v2610 = vadd.f32 %v2454, %v2605
        %v2611 = vsel %vm836, %v2610, 0.0
        %2612 = vadd.xlane.f32.xlu0 %v2611
        %v2613 = vpop.xlane.xlu0 %2612
        %v2614 = vmul.f32 %v2613, %v1525
        %v2615 = vmul.f32 %v2610, %v2610
        %v2616 = vsel %vm836, %v2615, 0.0
        %2617 = vadd.xlane.f32.xlu0 %v2616
        %v2618 = vpop.xlane.xlu0 %2617
        %v2619 = vmul.f32 %v2618, %v1525
        %v2620 = vmul.f32 %v2614, %v2614
        %v2621 = vsub.f32 %v2619, %v2620
        %v2622 = vsub.f32 %v2610, %v2614
        %v2623 = vadd.f32 %v2621, 1e-05
        %v2624 = vrsqrt.pop %v2623
        %v2625 = vmul.f32 %v2622, %v2624
        %v2626 = vlaneseq
        %v2627 = vshrl.u32 %v2626, 7
        %v2628 = vsub.s32 1, %v2627
        %v2629 = vrot.slane %v1727, %v2628
        %v2630 = vmul.f32 %v2625, %v2629
        %v2631 = vlaneseq
        %v2632 = vshrl.u32 %v2631, 7
        %v2633 = vsub.s32 1, %v2632
        %v2634 = vrot.slane %v1729, %v2633
        %v2635 = vadd.f32 %v2630, %v2634
        %v2636 = vld [vmem:[%s21] sm:$0x7]
        %v2637 = vld [vmem:[%s22] sm:$0x7]
        %v2638 = vld [vmem:[%s12] sm:$0xf]
        %v2639 = vld [vmem:[%s12 + $0x4] sm:$0xf]
        %v2640 = vld [vmem:[%s12 + $0x8] sm:$0xf]
        %v2641 = vld [vmem:[%s12 + $0xc] sm:$0xf]
        %v2642 = vld [vmem:[%s13] sm:$0xf]
        %v2643 = vld [vmem:[%s13 + $0x4] sm:$0xf]
        %v2644 = vld [vmem:[%s13 + $0x8] sm:$0xf]
        %v2645 = vld [vmem:[%s13 + $0xc] sm:$0xf]
        %v2646 = vpack.c.bf16 %v810, %v810
        %v2651 = vunpack.c.l.b16 %v2638
        %v2652 = vunpack.c.l.b16 %v2639
        %v2653 = vunpack.c.l.b16 %v2640
        %v2654 = vunpack.c.l.b16 %v2641
        %v2655 = vpack.c.b16 %v2652, %v2651
        %v2656 = vpack.c.b16 %v2654, %v2653
        %v2660 = vsel %vm836, %v2646, 0
        %2662 = vmatprep.subr.bf16.mxu0 0
        %2663 = vmatpush1.bf16.msra.mxu0 %v2655
        %2664 = vmatprep.subr.bf16.mxu0 0
        %2665 = vmatpush1.bf16.msra.mxu0 %v2656
        %2666 = vmatprep.subr.bf16.mxu0 0
        %2667 = vmatpush1.bf16.msra.mxu0 0
        %2668 = vmatprep.subr.bf16.mxu0 0
        %2669 = vmatpush1.bf16.msra.mxu0 0
        %2670 = vmatprep.subr.bf16.mxu0 0
        %2671 = vmatpush1.bf16.msra.mxu0 0
        %2672 = vmatprep.subr.bf16.mxu0 0
        %2673 = vmatpush1.bf16.msra.mxu0 0
        %2674 = vmatprep.subr.bf16.mxu0 0
        %2675 = vmatpush1.bf16.msra.mxu0 0
        %2676 = vmatprep.subr.bf16.mxu0 0
        %2677 = vmatpush1.bf16.msra.mxu0 0
        %2678 = vmatprep.subr.bf16.mxu0 0
        %2679 = vmatpush1.bf16.msra.mxu0 0
        %2680 = vmatprep.subr.bf16.mxu0 0
        %2681 = vmatpush1.bf16.msra.mxu0 0
        %2682 = vmatprep.subr.bf16.mxu0 0
        %2683 = vmatpush1.bf16.msra.mxu0 0
        %2684 = vmatprep.subr.bf16.mxu0 0
        %2685 = vmatpush1.bf16.msra.mxu0 0
        %2686 = vmatprep.subr.bf16.mxu0 0
        %2687 = vmatpush1.bf16.msra.mxu0 0
        %2688 = vmatprep.subr.bf16.mxu0 0
        %2689 = vmatpush1.bf16.msra.mxu0 0
        %2690 = vmatprep.subr.bf16.mxu0 0
        %2691 = vmatpush1.bf16.msra.mxu0 0
        %2692 = vmatprep.subr.bf16.mxu0 0
        %2693 = vmatpush1.bf16.msra.mxu0 0
        %2694 = vmatprep.mubr.bf16.mxu0 0
        %2695 = vmatmul.mubr.bf16.gmra.mrb[0].mxu0 %v2660
        %v2696 = vpop.f32.mrb[0].mxu0
        %v2697 = vadd.f32 0.0, %v2696
        %v2698 = vpop.f32.mrb[0].mxu0
        %v2699 = vpop.f32.mrb[0].mxu0
        %v2700 = vpop.f32.mrb[0].mxu0
        %2701 = vdwg.mxu0
        %v2702 = vmul.f32 %v2697, 0.35355338
        %v2703 = vpack.c.bf16 %v2702, %v2702
        %v2704 = vpack.c.bf16 %v2697, %v2697
        %2706 = vrot.lane.b32.xlu0 %v2704, 96
        %v2707 = vpop.permute.xlu0 %2706
        %v2709 = vsel %vm892, %v2703, 0
        %v2712 = vsel %vm892, %v2707, 0
        %2714 = vmatprep.subr.bf16.mxu0 0
        %2715 = vmatpush1.bf16.xpose.msra.mxu0 %v2712
        %2716 = vmatprep.subr.bf16.mxu0 0
        %2717 = vmatpush1.bf16.xpose.msra.mxu0 0
        %2718 = vmatprep.subr.bf16.mxu0 0
        %2719 = vmatpush1.bf16.xpose.msra.mxu0 0
        %2720 = vmatprep.subr.bf16.mxu0 0
        %2721 = vmatpush1.bf16.xpose.msra.mxu0 0
        %2722 = vmatprep.subr.bf16.mxu0 0
        %2723 = vmatpush1.bf16.xpose.msra.mxu0 0
        %2724 = vmatprep.subr.bf16.mxu0 0
        %2725 = vmatpush1.bf16.xpose.msra.mxu0 0
        %2726 = vmatprep.subr.bf16.mxu0 0
        %2727 = vmatpush1.bf16.xpose.msra.mxu0 0
        %2728 = vmatprep.subr.bf16.mxu0 0
        %2729 = vmatpush1.bf16.xpose.msra.mxu0 0
        %2730 = vmatprep.subr.bf16.mxu0 0
        %2731 = vmatpush1.bf16.xpose.msra.mxu0 0
        %2732 = vmatprep.subr.bf16.mxu0 0
        %2733 = vmatpush1.bf16.xpose.msra.mxu0 0
        %2734 = vmatprep.subr.bf16.mxu0 0
        %2735 = vmatpush1.bf16.xpose.msra.mxu0 0
        %2736 = vmatprep.subr.bf16.mxu0 0
        %2737 = vmatpush1.bf16.xpose.msra.mxu0 0
        %2738 = vmatprep.subr.bf16.mxu0 0
        %2739 = vmatpush1.bf16.xpose.msra.mxu0 0
        %2740 = vmatprep.subr.bf16.mxu0 0
        %2741 = vmatpush1.bf16.xpose.msra.mxu0 0
        %2742 = vmatprep.subr.bf16.mxu0 0
        %2743 = vmatpush1.bf16.xpose.msra.mxu0 0
        %2744 = vmatprep.subr.bf16.mxu0 0
        %2745 = vmatpush1.bf16.xpose.msra.mxu0 0
        %2746 = vmatprep.mubr.bf16.mxu0 0
        %2747 = vmatmul.mubr.bf16.gmra.mrb[0].mxu0 %v2709
        %v2748 = vpop.f32.mrb[0].mxu0
        %v2749 = vadd.f32 %v812, %v2748
        %v2750 = vpop.f32.mrb[0].mxu0
        %v2751 = vpop.f32.mrb[0].mxu0
        %v2752 = vpop.f32.mrb[0].mxu0
        %2753 = vdwg.mxu0
        %v2754 = vsel %vm892, %v2749, -inf
        %2755 = vmax.xlane.f32.xlu0 %v2754
        %v2756 = vpop.xlane.xlu0 %2755
        %v2757 = vsub.f32 %v2749, %v2756
        %v2758 = vmul.f32 %v2757, 1.442695
        %v2759 = vpow.pop %v2758
        %v2760 = vsel %vm892, %v2759, 0.0
        %2761 = vadd.xlane.f32.xlu0 %v2760
        %v2762 = vpop.xlane.xlu0 %2761
        %v2763 = vrcp.pop %v2762
        %v2764 = vmul.f32 %v2759, %v2763
        %v2765 = vpack.c.bf16 %v2764, %v2764
        %2766 = vrot.lane.b32.xlu0 %v2704, 64
        %v2767 = vpop.permute.xlu0 %2766
        %v2769 = vsel %vm892, %v2765, 0
        %v2772 = vsel %vm956, %v2767, 0
        %2774 = vmatprep.subr.bf16.mxu0 0
        %2775 = vmatpush1.bf16.msra.mxu0 %v2772
        %2776 = vmatprep.subr.bf16.mxu0 0
        %2777 = vmatpush1.bf16.msra.mxu0 0
        %2778 = vmatprep.subr.bf16.mxu0 0
        %2779 = vmatpush1.bf16.msra.mxu0 0
        %2780 = vmatprep.subr.bf16.mxu0 0
        %2781 = vmatpush1.bf16.msra.mxu0 0
        %2782 = vmatprep.subr.bf16.mxu0 0
        %2783 = vmatpush1.bf16.msra.mxu0 0
        %2784 = vmatprep.subr.bf16.mxu0 0
        %2785 = vmatpush1.bf16.msra.mxu0 0
        %2786 = vmatprep.subr.bf16.mxu0 0
        %2787 = vmatpush1.bf16.msra.mxu0 0
        %2788 = vmatprep.subr.bf16.mxu0 0
        %2789 = vmatpush1.bf16.msra.mxu0 0
        %2790 = vmatprep.subr.bf16.mxu0 0
        %2791 = vmatpush1.bf16.msra.mxu0 0
        %2792 = vmatprep.subr.bf16.mxu0 0
        %2793 = vmatpush1.bf16.msra.mxu0 0
        %2794 = vmatprep.subr.bf16.mxu0 0
        %2795 = vmatpush1.bf16.msra.mxu0 0
        %2796 = vmatprep.subr.bf16.mxu0 0
        %2797 = vmatpush1.bf16.msra.mxu0 0
        %2798 = vmatprep.subr.bf16.mxu0 0
        %2799 = vmatpush1.bf16.msra.mxu0 0
        %2800 = vmatprep.subr.bf16.mxu0 0
        %2801 = vmatpush1.bf16.msra.mxu0 0
        %2802 = vmatprep.subr.bf16.mxu0 0
        %2803 = vmatpush1.bf16.msra.mxu0 0
        %2804 = vmatprep.subr.bf16.mxu0 0
        %2805 = vmatpush1.bf16.msra.mxu0 0
        %2806 = vmatprep.mubr.bf16.mxu0 0
        %2807 = vmatmul.mubr.bf16.gmra.mrb[0].mxu0 %v2769
        %v2808 = vpop.f32.mrb[0].mxu0
        %v2809 = vadd.f32 0.0, %v2808
        %v2810 = vpop.f32.mrb[0].mxu0
        %v2811 = vpop.f32.mrb[0].mxu0
        %v2812 = vpop.f32.mrb[0].mxu0
        %2813 = vdwg.mxu0
        %v2814 = vpack.c.bf16 %v2809, %v2809
        %2816 = vrot.lane.b32.xlu0 %v2703, 120
        %v2817 = vpop.permute.xlu0 %2816
        %2818 = vrot.lane.b32.xlu0 %v2704, 88
        %v2819 = vpop.permute.xlu0 %2818
        %v2821 = vsel %vm892, %v2817, 0
        %v2824 = vsel %vm892, %v2819, 0
        %2826 = vmatprep.subr.bf16.mxu0 0
        %2827 = vmatpush1.bf16.xpose.msra.mxu0 %v2824
        %2828 = vmatprep.subr.bf16.mxu0 0
        %2829 = vmatpush1.bf16.xpose.msra.mxu0 0
        %2830 = vmatprep.subr.bf16.mxu0 0
        %2831 = vmatpush1.bf16.xpose.msra.mxu0 0
        %2832 = vmatprep.subr.bf16.mxu0 0
        %2833 = vmatpush1.bf16.xpose.msra.mxu0 0
        %2834 = vmatprep.subr.bf16.mxu0 0
        %2835 = vmatpush1.bf16.xpose.msra.mxu0 0
        %2836 = vmatprep.subr.bf16.mxu0 0
        %2837 = vmatpush1.bf16.xpose.msra.mxu0 0
        %2838 = vmatprep.subr.bf16.mxu0 0
        %2839 = vmatpush1.bf16.xpose.msra.mxu0 0
        %2840 = vmatprep.subr.bf16.mxu0 0
        %2841 = vmatpush1.bf16.xpose.msra.mxu0 0
        %2842 = vmatprep.subr.bf16.mxu0 0
        %2843 = vmatpush1.bf16.xpose.msra.mxu0 0
        %2844 = vmatprep.subr.bf16.mxu0 0
        %2845 = vmatpush1.bf16.xpose.msra.mxu0 0
        %2846 = vmatprep.subr.bf16.mxu0 0
        %2847 = vmatpush1.bf16.xpose.msra.mxu0 0
        %2848 = vmatprep.subr.bf16.mxu0 0
        %2849 = vmatpush1.bf16.xpose.msra.mxu0 0
        %2850 = vmatprep.subr.bf16.mxu0 0
        %2851 = vmatpush1.bf16.xpose.msra.mxu0 0
        %2852 = vmatprep.subr.bf16.mxu0 0
        %2853 = vmatpush1.bf16.xpose.msra.mxu0 0
        %2854 = vmatprep.subr.bf16.mxu0 0
        %2855 = vmatpush1.bf16.xpose.msra.mxu0 0
        %2856 = vmatprep.subr.bf16.mxu0 0
        %2857 = vmatpush1.bf16.xpose.msra.mxu0 0
        %2858 = vmatprep.mubr.bf16.mxu0 0
        %2859 = vmatmul.mubr.bf16.gmra.mrb[0].mxu0 %v2821
        %v2860 = vpop.f32.mrb[0].mxu0
        %v2861 = vadd.f32 %v812, %v2860
        %v2862 = vpop.f32.mrb[0].mxu0
        %v2863 = vpop.f32.mrb[0].mxu0
        %v2864 = vpop.f32.mrb[0].mxu0
        %2865 = vdwg.mxu0
        %v2866 = vsel %vm892, %v2861, -inf
        %2867 = vmax.xlane.f32.xlu0 %v2866
        %v2868 = vpop.xlane.xlu0 %2867
        %v2869 = vsub.f32 %v2861, %v2868
        %v2870 = vmul.f32 %v2869, 1.442695
        %v2871 = vpow.pop %v2870
        %v2872 = vsel %vm892, %v2871, 0.0
        %2873 = vadd.xlane.f32.xlu0 %v2872
        %v2874 = vpop.xlane.xlu0 %2873
        %v2875 = vrcp.pop %v2874
        %v2876 = vmul.f32 %v2871, %v2875
        %v2877 = vpack.c.bf16 %v2876, %v2876
        %2878 = vrot.lane.b32.xlu0 %v2704, 56
        %v2879 = vpop.permute.xlu0 %2878
        %v2881 = vsel %vm892, %v2877, 0
        %v2884 = vsel %vm956, %v2879, 0
        %2886 = vmatprep.subr.bf16.mxu0 0
        %2887 = vmatpush1.bf16.msra.mxu0 %v2884
        %2888 = vmatprep.subr.bf16.mxu0 0
        %2889 = vmatpush1.bf16.msra.mxu0 0
        %2890 = vmatprep.subr.bf16.mxu0 0
        %2891 = vmatpush1.bf16.msra.mxu0 0
        %2892 = vmatprep.subr.bf16.mxu0 0
        %2893 = vmatpush1.bf16.msra.mxu0 0
        %2894 = vmatprep.subr.bf16.mxu0 0
        %2895 = vmatpush1.bf16.msra.mxu0 0
        %2896 = vmatprep.subr.bf16.mxu0 0
        %2897 = vmatpush1.bf16.msra.mxu0 0
        %2898 = vmatprep.subr.bf16.mxu0 0
        %2899 = vmatpush1.bf16.msra.mxu0 0
        %2900 = vmatprep.subr.bf16.mxu0 0
        %2901 = vmatpush1.bf16.msra.mxu0 0
        %2902 = vmatprep.subr.bf16.mxu0 0
        %2903 = vmatpush1.bf16.msra.mxu0 0
        %2904 = vmatprep.subr.bf16.mxu0 0
        %2905 = vmatpush1.bf16.msra.mxu0 0
        %2906 = vmatprep.subr.bf16.mxu0 0
        %2907 = vmatpush1.bf16.msra.mxu0 0
        %2908 = vmatprep.subr.bf16.mxu0 0
        %2909 = vmatpush1.bf16.msra.mxu0 0
        %2910 = vmatprep.subr.bf16.mxu0 0
        %2911 = vmatpush1.bf16.msra.mxu0 0
        %2912 = vmatprep.subr.bf16.mxu0 0
        %2913 = vmatpush1.bf16.msra.mxu0 0
        %2914 = vmatprep.subr.bf16.mxu0 0
        %2915 = vmatpush1.bf16.msra.mxu0 0
        %2916 = vmatprep.subr.bf16.mxu0 0
        %2917 = vmatpush1.bf16.msra.mxu0 0
        %2918 = vmatprep.mubr.bf16.mxu0 0
        %2919 = vmatmul.mubr.bf16.gmra.mrb[0].mxu0 %v2881
        %v2920 = vpop.f32.mrb[0].mxu0
        %v2921 = vadd.f32 0.0, %v2920
        %v2922 = vpop.f32.mrb[0].mxu0
        %v2923 = vpop.f32.mrb[0].mxu0
        %v2924 = vpop.f32.mrb[0].mxu0
        %2925 = vdwg.mxu0
        %v2926 = vpack.c.bf16 %v2921, %v2921
        %v2928 = vsel %vm892, %v2926, 0
        %v2931 = vsel %vm956, %v2643, 0
        %2933 = vmatprep.subr.bf16.mxu0 0
        %2934 = vmatpush1.bf16.msra.mxu0 %v2931
        %2935 = vmatprep.subr.bf16.mxu0 0
        %2936 = vmatpush1.bf16.msra.mxu0 0
        %2937 = vmatprep.subr.bf16.mxu0 0
        %2938 = vmatpush1.bf16.msra.mxu0 0
        %2939 = vmatprep.subr.bf16.mxu0 0
        %2940 = vmatpush1.bf16.msra.mxu0 0
        %2941 = vmatprep.subr.bf16.mxu0 0
        %2942 = vmatpush1.bf16.msra.mxu0 0
        %2943 = vmatprep.subr.bf16.mxu0 0
        %2944 = vmatpush1.bf16.msra.mxu0 0
        %2945 = vmatprep.subr.bf16.mxu0 0
        %2946 = vmatpush1.bf16.msra.mxu0 0
        %2947 = vmatprep.subr.bf16.mxu0 0
        %2948 = vmatpush1.bf16.msra.mxu0 0
        %2949 = vmatprep.subr.bf16.mxu0 0
        %2950 = vmatpush1.bf16.msra.mxu0 0
        %2951 = vmatprep.subr.bf16.mxu0 0
        %2952 = vmatpush1.bf16.msra.mxu0 0
        %2953 = vmatprep.subr.bf16.mxu0 0
        %2954 = vmatpush1.bf16.msra.mxu0 0
        %2955 = vmatprep.subr.bf16.mxu0 0
        %2956 = vmatpush1.bf16.msra.mxu0 0
        %2957 = vmatprep.subr.bf16.mxu0 0
        %2958 = vmatpush1.bf16.msra.mxu0 0
        %2959 = vmatprep.subr.bf16.mxu0 0
        %2960 = vmatpush1.bf16.msra.mxu0 0
        %2961 = vmatprep.subr.bf16.mxu0 0
        %2962 = vmatpush1.bf16.msra.mxu0 0
        %2963 = vmatprep.subr.bf16.mxu0 0
        %2964 = vmatpush1.bf16.msra.mxu0 0
        %2965 = vmatprep.mubr.bf16.mxu0 0
        %2966 = vmatmul.mubr.bf16.gmra.mrb[0].mxu0 %v2928
        %v2967 = vpop.f32.mrb[0].mxu0
        %v2968 = vadd.f32 0.0, %v2967
        %v2969 = vpop.f32.mrb[0].mxu0
        %v2970 = vpop.f32.mrb[0].mxu0
        %v2971 = vpop.f32.mrb[0].mxu0
        %2972 = vdwg.mxu0
        %v2974 = vsel %vm892, %v2814, 0
        %v2977 = vsel %vm956, %v2642, 0
        %2979 = vmatprep.subr.bf16.mxu0 0
        %2980 = vmatpush1.bf16.msra.mxu0 %v2977
        %2981 = vmatprep.subr.bf16.mxu0 0
        %2982 = vmatpush1.bf16.msra.mxu0 0
        %2983 = vmatprep.subr.bf16.mxu0 0
        %2984 = vmatpush1.bf16.msra.mxu0 0
        %2985 = vmatprep.subr.bf16.mxu0 0
        %2986 = vmatpush1.bf16.msra.mxu0 0
        %2987 = vmatprep.subr.bf16.mxu0 0
        %2988 = vmatpush1.bf16.msra.mxu0 0
        %2989 = vmatprep.subr.bf16.mxu0 0
        %2990 = vmatpush1.bf16.msra.mxu0 0
        %2991 = vmatprep.subr.bf16.mxu0 0
        %2992 = vmatpush1.bf16.msra.mxu0 0
        %2993 = vmatprep.subr.bf16.mxu0 0
        %2994 = vmatpush1.bf16.msra.mxu0 0
        %2995 = vmatprep.subr.bf16.mxu0 0
        %2996 = vmatpush1.bf16.msra.mxu0 0
        %2997 = vmatprep.subr.bf16.mxu0 0
        %2998 = vmatpush1.bf16.msra.mxu0 0
        %2999 = vmatprep.subr.bf16.mxu0 0
        %3000 = vmatpush1.bf16.msra.mxu0 0
        %3001 = vmatprep.subr.bf16.mxu0 0
        %3002 = vmatpush1.bf16.msra.mxu0 0
        %3003 = vmatprep.subr.bf16.mxu0 0
        %3004 = vmatpush1.bf16.msra.mxu0 0
        %3005 = vmatprep.subr.bf16.mxu0 0
        %3006 = vmatpush1.bf16.msra.mxu0 0
        %3007 = vmatprep.subr.bf16.mxu0 0
        %3008 = vmatpush1.bf16.msra.mxu0 0
        %3009 = vmatprep.subr.bf16.mxu0 0
        %3010 = vmatpush1.bf16.msra.mxu0 0
        %3011 = vmatprep.mubr.bf16.mxu0 0
        %3012 = vmatmul.mubr.bf16.gmra.mrb[0].mxu0 %v2974
        %v3013 = vpop.f32.mrb[0].mxu0
        %v3014 = vadd.f32 %v2968, %v3013
        %v3015 = vpop.f32.mrb[0].mxu0
        %v3016 = vpop.f32.mrb[0].mxu0
        %v3017 = vpop.f32.mrb[0].mxu0
        %3018 = vdwg.mxu0
        %3019 = vrot.lane.b32.xlu0 %v2703, 112
        %v3020 = vpop.permute.xlu0 %3019
        %3021 = vrot.lane.b32.xlu0 %v2704, 80
        %v3022 = vpop.permute.xlu0 %3021
        %v3024 = vsel %vm892, %v3020, 0
        %v3027 = vsel %vm892, %v3022, 0
        %3029 = vmatprep.subr.bf16.mxu0 0
        %3030 = vmatpush1.bf16.xpose.msra.mxu0 %v3027
        %3031 = vmatprep.subr.bf16.mxu0 0
        %3032 = vmatpush1.bf16.xpose.msra.mxu0 0
        %3033 = vmatprep.subr.bf16.mxu0 0
        %3034 = vmatpush1.bf16.xpose.msra.mxu0 0
        %3035 = vmatprep.subr.bf16.mxu0 0
        %3036 = vmatpush1.bf16.xpose.msra.mxu0 0
        %3037 = vmatprep.subr.bf16.mxu0 0
        %3038 = vmatpush1.bf16.xpose.msra.mxu0 0
        %3039 = vmatprep.subr.bf16.mxu0 0
        %3040 = vmatpush1.bf16.xpose.msra.mxu0 0
        %3041 = vmatprep.subr.bf16.mxu0 0
        %3042 = vmatpush1.bf16.xpose.msra.mxu0 0
        %3043 = vmatprep.subr.bf16.mxu0 0
        %3044 = vmatpush1.bf16.xpose.msra.mxu0 0
        %3045 = vmatprep.subr.bf16.mxu0 0
        %3046 = vmatpush1.bf16.xpose.msra.mxu0 0
        %3047 = vmatprep.subr.bf16.mxu0 0
        %3048 = vmatpush1.bf16.xpose.msra.mxu0 0
        %3049 = vmatprep.subr.bf16.mxu0 0
        %3050 = vmatpush1.bf16.xpose.msra.mxu0 0
        %3051 = vmatprep.subr.bf16.mxu0 0
        %3052 = vmatpush1.bf16.xpose.msra.mxu0 0
        %3053 = vmatprep.subr.bf16.mxu0 0
        %3054 = vmatpush1.bf16.xpose.msra.mxu0 0
        %3055 = vmatprep.subr.bf16.mxu0 0
        %3056 = vmatpush1.bf16.xpose.msra.mxu0 0
        %3057 = vmatprep.subr.bf16.mxu0 0
        %3058 = vmatpush1.bf16.xpose.msra.mxu0 0
        %3059 = vmatprep.subr.bf16.mxu0 0
        %3060 = vmatpush1.bf16.xpose.msra.mxu0 0
        %3061 = vmatprep.mubr.bf16.mxu0 0
        %3062 = vmatmul.mubr.bf16.gmra.mrb[0].mxu0 %v3024
        %v3063 = vpop.f32.mrb[0].mxu0
        %v3064 = vadd.f32 %v812, %v3063
        %v3065 = vpop.f32.mrb[0].mxu0
        %v3066 = vpop.f32.mrb[0].mxu0
        %v3067 = vpop.f32.mrb[0].mxu0
        %3068 = vdwg.mxu0
        %v3069 = vsel %vm892, %v3064, -inf
        %3070 = vmax.xlane.f32.xlu0 %v3069
        %v3071 = vpop.xlane.xlu0 %3070
        %v3072 = vsub.f32 %v3064, %v3071
        %v3073 = vmul.f32 %v3072, 1.442695
        %v3074 = vpow.pop %v3073
        %v3075 = vsel %vm892, %v3074, 0.0
        %3076 = vadd.xlane.f32.xlu0 %v3075
        %v3077 = vpop.xlane.xlu0 %3076
        %v3078 = vrcp.pop %v3077
        %v3079 = vmul.f32 %v3074, %v3078
        %v3080 = vpack.c.bf16 %v3079, %v3079
        %3081 = vrot.lane.b32.xlu0 %v2704, 48
        %v3082 = vpop.permute.xlu0 %3081
        %v3084 = vsel %vm892, %v3080, 0
        %v3087 = vsel %vm956, %v3082, 0
        %3089 = vmatprep.subr.bf16.mxu0 0
        %3090 = vmatpush1.bf16.msra.mxu0 %v3087
        %3091 = vmatprep.subr.bf16.mxu0 0
        %3092 = vmatpush1.bf16.msra.mxu0 0
        %3093 = vmatprep.subr.bf16.mxu0 0
        %3094 = vmatpush1.bf16.msra.mxu0 0
        %3095 = vmatprep.subr.bf16.mxu0 0
        %3096 = vmatpush1.bf16.msra.mxu0 0
        %3097 = vmatprep.subr.bf16.mxu0 0
        %3098 = vmatpush1.bf16.msra.mxu0 0
        %3099 = vmatprep.subr.bf16.mxu0 0
        %3100 = vmatpush1.bf16.msra.mxu0 0
        %3101 = vmatprep.subr.bf16.mxu0 0
        %3102 = vmatpush1.bf16.msra.mxu0 0
        %3103 = vmatprep.subr.bf16.mxu0 0
        %3104 = vmatpush1.bf16.msra.mxu0 0
        %3105 = vmatprep.subr.bf16.mxu0 0
        %3106 = vmatpush1.bf16.msra.mxu0 0
        %3107 = vmatprep.subr.bf16.mxu0 0
        %3108 = vmatpush1.bf16.msra.mxu0 0
        %3109 = vmatprep.subr.bf16.mxu0 0
        %3110 = vmatpush1.bf16.msra.mxu0 0
        %3111 = vmatprep.subr.bf16.mxu0 0
        %3112 = vmatpush1.bf16.msra.mxu0 0
        %3113 = vmatprep.subr.bf16.mxu0 0
        %3114 = vmatpush1.bf16.msra.mxu0 0
        %3115 = vmatprep.subr.bf16.mxu0 0
        %3116 = vmatpush1.bf16.msra.mxu0 0
        %3117 = vmatprep.subr.bf16.mxu0 0
        %3118 = vmatpush1.bf16.msra.mxu0 0
        %3119 = vmatprep.subr.bf16.mxu0 0
        %3120 = vmatpush1.bf16.msra.mxu0 0
        %3121 = vmatprep.mubr.bf16.mxu0 0
        %3122 = vmatmul.mubr.bf16.gmra.mrb[0].mxu0 %v3084
        %v3123 = vpop.f32.mrb[0].mxu0
        %v3124 = vadd.f32 0.0, %v3123
        %v3125 = vpop.f32.mrb[0].mxu0
        %v3126 = vpop.f32.mrb[0].mxu0
        %v3127 = vpop.f32.mrb[0].mxu0
        %3128 = vdwg.mxu0
        %v3129 = vpack.c.bf16 %v3124, %v3124
        %v3131 = vsel %vm892, %v3129, 0
        %v3134 = vsel %vm956, %v2644, 0
        %3136 = vmatprep.subr.bf16.mxu0 0
        %3137 = vmatpush1.bf16.msra.mxu0 %v3134
        %3138 = vmatprep.subr.bf16.mxu0 0
        %3139 = vmatpush1.bf16.msra.mxu0 0
        %3140 = vmatprep.subr.bf16.mxu0 0
        %3141 = vmatpush1.bf16.msra.mxu0 0
        %3142 = vmatprep.subr.bf16.mxu0 0
        %3143 = vmatpush1.bf16.msra.mxu0 0
        %3144 = vmatprep.subr.bf16.mxu0 0
        %3145 = vmatpush1.bf16.msra.mxu0 0
        %3146 = vmatprep.subr.bf16.mxu0 0
        %3147 = vmatpush1.bf16.msra.mxu0 0
        %3148 = vmatprep.subr.bf16.mxu0 0
        %3149 = vmatpush1.bf16.msra.mxu0 0
        %3150 = vmatprep.subr.bf16.mxu0 0
        %3151 = vmatpush1.bf16.msra.mxu0 0
        %3152 = vmatprep.subr.bf16.mxu0 0
        %3153 = vmatpush1.bf16.msra.mxu0 0
        %3154 = vmatprep.subr.bf16.mxu0 0
        %3155 = vmatpush1.bf16.msra.mxu0 0
        %3156 = vmatprep.subr.bf16.mxu0 0
        %3157 = vmatpush1.bf16.msra.mxu0 0
        %3158 = vmatprep.subr.bf16.mxu0 0
        %3159 = vmatpush1.bf16.msra.mxu0 0
        %3160 = vmatprep.subr.bf16.mxu0 0
        %3161 = vmatpush1.bf16.msra.mxu0 0
        %3162 = vmatprep.subr.bf16.mxu0 0
        %3163 = vmatpush1.bf16.msra.mxu0 0
        %3164 = vmatprep.subr.bf16.mxu0 0
        %3165 = vmatpush1.bf16.msra.mxu0 0
        %3166 = vmatprep.subr.bf16.mxu0 0
        %3167 = vmatpush1.bf16.msra.mxu0 0
        %3168 = vmatprep.mubr.bf16.mxu0 0
        %3169 = vmatmul.mubr.bf16.gmra.mrb[0].mxu0 %v3131
        %v3170 = vpop.f32.mrb[0].mxu0
        %v3171 = vadd.f32 0.0, %v3170
        %v3172 = vpop.f32.mrb[0].mxu0
        %v3173 = vpop.f32.mrb[0].mxu0
        %v3174 = vpop.f32.mrb[0].mxu0
        %3175 = vdwg.mxu0
        %v3176 = vadd.f32 %v3014, %v3171
        %3177 = vrot.lane.b32.xlu0 %v2703, 104
        %v3178 = vpop.permute.xlu0 %3177
        %3179 = vrot.lane.b32.xlu0 %v2704, 72
        %v3180 = vpop.permute.xlu0 %3179
        %v3182 = vsel %vm892, %v3178, 0
        %v3185 = vsel %vm892, %v3180, 0
        %3187 = vmatprep.subr.bf16.mxu0 0
        %3188 = vmatpush1.bf16.xpose.msra.mxu0 %v3185
        %3189 = vmatprep.subr.bf16.mxu0 0
        %3190 = vmatpush1.bf16.xpose.msra.mxu0 0
        %3191 = vmatprep.subr.bf16.mxu0 0
        %3192 = vmatpush1.bf16.xpose.msra.mxu0 0
        %3193 = vmatprep.subr.bf16.mxu0 0
        %3194 = vmatpush1.bf16.xpose.msra.mxu0 0
        %3195 = vmatprep.subr.bf16.mxu0 0
        %3196 = vmatpush1.bf16.xpose.msra.mxu0 0
        %3197 = vmatprep.subr.bf16.mxu0 0
        %3198 = vmatpush1.bf16.xpose.msra.mxu0 0
        %3199 = vmatprep.subr.bf16.mxu0 0
        %3200 = vmatpush1.bf16.xpose.msra.mxu0 0
        %3201 = vmatprep.subr.bf16.mxu0 0
        %3202 = vmatpush1.bf16.xpose.msra.mxu0 0
        %3203 = vmatprep.subr.bf16.mxu0 0
        %3204 = vmatpush1.bf16.xpose.msra.mxu0 0
        %3205 = vmatprep.subr.bf16.mxu0 0
        %3206 = vmatpush1.bf16.xpose.msra.mxu0 0
        %3207 = vmatprep.subr.bf16.mxu0 0
        %3208 = vmatpush1.bf16.xpose.msra.mxu0 0
        %3209 = vmatprep.subr.bf16.mxu0 0
        %3210 = vmatpush1.bf16.xpose.msra.mxu0 0
        %3211 = vmatprep.subr.bf16.mxu0 0
        %3212 = vmatpush1.bf16.xpose.msra.mxu0 0
        %3213 = vmatprep.subr.bf16.mxu0 0
        %3214 = vmatpush1.bf16.xpose.msra.mxu0 0
        %3215 = vmatprep.subr.bf16.mxu0 0
        %3216 = vmatpush1.bf16.xpose.msra.mxu0 0
        %3217 = vmatprep.subr.bf16.mxu0 0
        %3218 = vmatpush1.bf16.xpose.msra.mxu0 0
        %3219 = vmatprep.mubr.bf16.mxu0 0
        %3220 = vmatmul.mubr.bf16.gmra.mrb[0].mxu0 %v3182
        %v3221 = vpop.f32.mrb[0].mxu0
        %v3222 = vadd.f32 %v812, %v3221
        %v3223 = vpop.f32.mrb[0].mxu0
        %v3224 = vpop.f32.mrb[0].mxu0
        %v3225 = vpop.f32.mrb[0].mxu0
        %3226 = vdwg.mxu0
        %v3227 = vsel %vm892, %v3222, -inf
        %3228 = vmax.xlane.f32.xlu0 %v3227
        %v3229 = vpop.xlane.xlu0 %3228
        %v3230 = vsub.f32 %v3222, %v3229
        %v3231 = vmul.f32 %v3230, 1.442695
        %v3232 = vpow.pop %v3231
        %v3233 = vsel %vm892, %v3232, 0.0
        %3234 = vadd.xlane.f32.xlu0 %v3233
        %v3235 = vpop.xlane.xlu0 %3234
        %v3236 = vrcp.pop %v3235
        %v3237 = vmul.f32 %v3232, %v3236
        %v3238 = vpack.c.bf16 %v3237, %v3237
        %3239 = vrot.lane.b32.xlu0 %v2704, 40
        %v3240 = vpop.permute.xlu0 %3239
        %v3242 = vsel %vm892, %v3238, 0
        %v3245 = vsel %vm956, %v3240, 0
        %3247 = vmatprep.subr.bf16.mxu0 0
        %3248 = vmatpush1.bf16.msra.mxu0 %v3245
        %3249 = vmatprep.subr.bf16.mxu0 0
        %3250 = vmatpush1.bf16.msra.mxu0 0
        %3251 = vmatprep.subr.bf16.mxu0 0
        %3252 = vmatpush1.bf16.msra.mxu0 0
        %3253 = vmatprep.subr.bf16.mxu0 0
        %3254 = vmatpush1.bf16.msra.mxu0 0
        %3255 = vmatprep.subr.bf16.mxu0 0
        %3256 = vmatpush1.bf16.msra.mxu0 0
        %3257 = vmatprep.subr.bf16.mxu0 0
        %3258 = vmatpush1.bf16.msra.mxu0 0
        %3259 = vmatprep.subr.bf16.mxu0 0
        %3260 = vmatpush1.bf16.msra.mxu0 0
        %3261 = vmatprep.subr.bf16.mxu0 0
        %3262 = vmatpush1.bf16.msra.mxu0 0
        %3263 = vmatprep.subr.bf16.mxu0 0
        %3264 = vmatpush1.bf16.msra.mxu0 0
        %3265 = vmatprep.subr.bf16.mxu0 0
        %3266 = vmatpush1.bf16.msra.mxu0 0
        %3267 = vmatprep.subr.bf16.mxu0 0
        %3268 = vmatpush1.bf16.msra.mxu0 0
        %3269 = vmatprep.subr.bf16.mxu0 0
        %3270 = vmatpush1.bf16.msra.mxu0 0
        %3271 = vmatprep.subr.bf16.mxu0 0
        %3272 = vmatpush1.bf16.msra.mxu0 0
        %3273 = vmatprep.subr.bf16.mxu0 0
        %3274 = vmatpush1.bf16.msra.mxu0 0
        %3275 = vmatprep.subr.bf16.mxu0 0
        %3276 = vmatpush1.bf16.msra.mxu0 0
        %3277 = vmatprep.subr.bf16.mxu0 0
        %3278 = vmatpush1.bf16.msra.mxu0 0
        %3279 = vmatprep.mubr.bf16.mxu0 0
        %3280 = vmatmul.mubr.bf16.gmra.mrb[0].mxu0 %v3242
        %v3281 = vpop.f32.mrb[0].mxu0
        %v3282 = vadd.f32 0.0, %v3281
        %v3283 = vpop.f32.mrb[0].mxu0
        %v3284 = vpop.f32.mrb[0].mxu0
        %v3285 = vpop.f32.mrb[0].mxu0
        %3286 = vdwg.mxu0
        %v3287 = vpack.c.bf16 %v3282, %v3282
        %v3289 = vsel %vm892, %v3287, 0
        %v3292 = vsel %vm956, %v2645, 0
        %3294 = vmatprep.subr.bf16.mxu0 0
        %3295 = vmatpush1.bf16.msra.mxu0 %v3292
        %3296 = vmatprep.subr.bf16.mxu0 0
        %3297 = vmatpush1.bf16.msra.mxu0 0
        %3298 = vmatprep.subr.bf16.mxu0 0
        %3299 = vmatpush1.bf16.msra.mxu0 0
        %3300 = vmatprep.subr.bf16.mxu0 0
        %3301 = vmatpush1.bf16.msra.mxu0 0
        %3302 = vmatprep.subr.bf16.mxu0 0
        %3303 = vmatpush1.bf16.msra.mxu0 0
        %3304 = vmatprep.subr.bf16.mxu0 0
        %3305 = vmatpush1.bf16.msra.mxu0 0
        %3306 = vmatprep.subr.bf16.mxu0 0
        %3307 = vmatpush1.bf16.msra.mxu0 0
        %3308 = vmatprep.subr.bf16.mxu0 0
        %3309 = vmatpush1.bf16.msra.mxu0 0
        %3310 = vmatprep.subr.bf16.mxu0 0
        %3311 = vmatpush1.bf16.msra.mxu0 0
        %3312 = vmatprep.subr.bf16.mxu0 0
        %3313 = vmatpush1.bf16.msra.mxu0 0
        %3314 = vmatprep.subr.bf16.mxu0 0
        %3315 = vmatpush1.bf16.msra.mxu0 0
        %3316 = vmatprep.subr.bf16.mxu0 0
        %3317 = vmatpush1.bf16.msra.mxu0 0
        %3318 = vmatprep.subr.bf16.mxu0 0
        %3319 = vmatpush1.bf16.msra.mxu0 0
        %3320 = vmatprep.subr.bf16.mxu0 0
        %3321 = vmatpush1.bf16.msra.mxu0 0
        %3322 = vmatprep.subr.bf16.mxu0 0
        %3323 = vmatpush1.bf16.msra.mxu0 0
        %3324 = vmatprep.subr.bf16.mxu0 0
        %3325 = vmatpush1.bf16.msra.mxu0 0
        %3326 = vmatprep.mubr.bf16.mxu0 0
        %3327 = vmatmul.mubr.bf16.gmra.mrb[0].mxu0 %v3289
        %v3328 = vpop.f32.mrb[0].mxu0
        %v3329 = vadd.f32 0.0, %v3328
        %v3330 = vpop.f32.mrb[0].mxu0
        %v3331 = vpop.f32.mrb[0].mxu0
        %v3332 = vpop.f32.mrb[0].mxu0
        %3333 = vdwg.mxu0
        %v3334 = vadd.f32 %v3176, %v3329
        %v3335 = vadd.f32 %v810, %v3334
        %v3336 = vsel %vm836, %v3335, 0.0
        %3337 = vadd.xlane.f32.xlu0 %v3336
        %v3338 = vpop.xlane.xlu0 %3337
        %v3339 = vmul.f32 %v3338, %v1525
        %v3340 = vmul.f32 %v3335, %v3335
        %v3341 = vsel %vm836, %v3340, 0.0
        %3342 = vadd.xlane.f32.xlu0 %v3341
        %v3343 = vpop.xlane.xlu0 %3342
        %v3344 = vmul.f32 %v3343, %v1525
        %v3345 = vmul.f32 %v3339, %v3339
        %v3346 = vsub.f32 %v3344, %v3345
        %v3347 = vsub.f32 %v3335, %v3339
        %v3348 = vadd.f32 %v3346, 1e-05
        %v3349 = vrsqrt.pop %v3348
        %v3350 = vmul.f32 %v3347, %v3349
        %v3351 = vlaneseq
        %v3352 = vshrl.u32 %v3351, 7
        %v3353 = vsub.s32 0, %v3352
        %v3354 = vrot.slane %v2636, %v3353
        %v3355 = vmul.f32 %v3350, %v3354
        %v3356 = vlaneseq
        %v3357 = vshrl.u32 %v3356, 7
        %v3358 = vsub.s32 0, %v3357
        %v3359 = vrot.slane %v2637, %v3358
        %v3360 = vadd.f32 %v3355, %v3359
        %v3361 = vld [vmem:[%s14] sm:$0xf]
        %v3362 = vld [vmem:[%s14 + $0x4] sm:$0xf]
        %v3363 = vld [vmem:[%s14 + $0x8] sm:$0xf]
        %v3364 = vld [vmem:[%s14 + $0xc] sm:$0xf]
        %v3365 = vld [vmem:[%s15] sm:$0xf]
        %v3366 = vld [vmem:[%s15 + $0x4] sm:$0xf]
        %v3367 = vld [vmem:[%s15 + $0x8] sm:$0xf]
        %v3368 = vld [vmem:[%s15 + $0xc] sm:$0xf]
        %v3369 = vld [vmem:[%s16] sm:$0xf]
        %v3370 = vld [vmem:[%s16 + $0x4] sm:$0xf]
        %v3371 = vld [vmem:[%s16 + $0x8] sm:$0xf]
        %v3372 = vld [vmem:[%s16 + $0xc] sm:$0xf]
        %v3373 = vpack.c.bf16 %v3360, %v3360
        %v3378 = vunpack.c.l.b16 %v3361
        %v3379 = vunpack.c.l.b16 %v3362
        %v3380 = vunpack.c.l.b16 %v3363
        %v3381 = vunpack.c.l.b16 %v3364
        %v3382 = vpack.c.b16 %v3379, %v3378
        %v3383 = vpack.c.b16 %v3381, %v3380
        %v3387 = vsel %vm836, %v3373, 0
        %3389 = vmatprep.subr.bf16.mxu0 0
        %3390 = vmatpush1.bf16.msra.mxu0 %v3382
        %3391 = vmatprep.subr.bf16.mxu0 0
        %3392 = vmatpush1.bf16.msra.mxu0 %v3383
        %3393 = vmatprep.subr.bf16.mxu0 0
        %3394 = vmatpush1.bf16.msra.mxu0 0
        %3395 = vmatprep.subr.bf16.mxu0 0
        %3396 = vmatpush1.bf16.msra.mxu0 0
        %3397 = vmatprep.subr.bf16.mxu0 0
        %3398 = vmatpush1.bf16.msra.mxu0 0
        %3399 = vmatprep.subr.bf16.mxu0 0
        %3400 = vmatpush1.bf16.msra.mxu0 0
        %3401 = vmatprep.subr.bf16.mxu0 0
        %3402 = vmatpush1.bf16.msra.mxu0 0
        %3403 = vmatprep.subr.bf16.mxu0 0
        %3404 = vmatpush1.bf16.msra.mxu0 0
        %3405 = vmatprep.subr.bf16.mxu0 0
        %3406 = vmatpush1.bf16.msra.mxu0 0
        %3407 = vmatprep.subr.bf16.mxu0 0
        %3408 = vmatpush1.bf16.msra.mxu0 0
        %3409 = vmatprep.subr.bf16.mxu0 0
        %3410 = vmatpush1.bf16.msra.mxu0 0
        %3411 = vmatprep.subr.bf16.mxu0 0
        %3412 = vmatpush1.bf16.msra.mxu0 0
        %3413 = vmatprep.subr.bf16.mxu0 0
        %3414 = vmatpush1.bf16.msra.mxu0 0
        %3415 = vmatprep.subr.bf16.mxu0 0
        %3416 = vmatpush1.bf16.msra.mxu0 0
        %3417 = vmatprep.subr.bf16.mxu0 0
        %3418 = vmatpush1.bf16.msra.mxu0 0
        %3419 = vmatprep.subr.bf16.mxu0 0
        %3420 = vmatpush1.bf16.msra.mxu0 0
        %3421 = vmatprep.mubr.bf16.mxu0 0
        %3422 = vmatmul.mubr.bf16.gmra.mrb[0].mxu0 %v3387
        %v3423 = vpop.f32.mrb[0].mxu0
        %v3424 = vadd.f32 0.0, %v3423
        %v3425 = vpop.f32.mrb[0].mxu0
        %v3426 = vpop.f32.mrb[0].mxu0
        %v3427 = vpop.f32.mrb[0].mxu0
        %3428 = vdwg.mxu0
        %v3429 = vmul.f32 %v3424, 0.35355338
        %v3430 = vpack.c.bf16 %v2635, %v2635
        %v3435 = vunpack.c.l.b16 %v3365
        %v3436 = vunpack.c.l.b16 %v3366
        %v3437 = vunpack.c.l.b16 %v3367
        %v3438 = vunpack.c.l.b16 %v3368
        %v3439 = vpack.c.b16 %v3436, %v3435
        %v3440 = vpack.c.b16 %v3438, %v3437
        %v3444 = vsel %vm836, %v3430, 0
        %3446 = vmatprep.subr.bf16.mxu0 0
        %3447 = vmatpush1.bf16.msra.mxu0 %v3439
        %3448 = vmatprep.subr.bf16.mxu0 0
        %3449 = vmatpush1.bf16.msra.mxu0 %v3440
        %3450 = vmatprep.subr.bf16.mxu0 0
        %3451 = vmatpush1.bf16.msra.mxu0 0
        %3452 = vmatprep.subr.bf16.mxu0 0
        %3453 = vmatpush1.bf16.msra.mxu0 0
        %3454 = vmatprep.subr.bf16.mxu0 0
        %3455 = vmatpush1.bf16.msra.mxu0 0
        %3456 = vmatprep.subr.bf16.mxu0 0
        %3457 = vmatpush1.bf16.msra.mxu0 0
        %3458 = vmatprep.subr.bf16.mxu0 0
        %3459 = vmatpush1.bf16.msra.mxu0 0
        %3460 = vmatprep.subr.bf16.mxu0 0
        %3461 = vmatpush1.bf16.msra.mxu0 0
        %3462 = vmatprep.subr.bf16.mxu0 0
        %3463 = vmatpush1.bf16.msra.mxu0 0
        %3464 = vmatprep.subr.bf16.mxu0 0
        %3465 = vmatpush1.bf16.msra.mxu0 0
        %3466 = vmatprep.subr.bf16.mxu0 0
        %3467 = vmatpush1.bf16.msra.mxu0 0
        %3468 = vmatprep.subr.bf16.mxu0 0
        %3469 = vmatpush1.bf16.msra.mxu0 0
        %3470 = vmatprep.subr.bf16.mxu0 0
        %3471 = vmatpush1.bf16.msra.mxu0 0
        %3472 = vmatprep.subr.bf16.mxu0 0
        %3473 = vmatpush1.bf16.msra.mxu0 0
        %3474 = vmatprep.subr.bf16.mxu0 0
        %3475 = vmatpush1.bf16.msra.mxu0 0
        %3476 = vmatprep.subr.bf16.mxu0 0
        %3477 = vmatpush1.bf16.msra.mxu0 0
        %3478 = vmatprep.mubr.bf16.mxu0 0
        %3479 = vmatmul.mubr.bf16.gmra.mrb[0].mxu0 %v3444
        %v3480 = vpop.f32.mrb[0].mxu0
        %v3481 = vadd.f32 0.0, %v3480
        %v3482 = vpop.f32.mrb[0].mxu0
        %v3483 = vpop.f32.mrb[0].mxu0
        %v3484 = vpop.f32.mrb[0].mxu0
        %3485 = vdwg.mxu0
        %v3486 = vpack.c.bf16 %v3429, %v3429
        %v3487 = vpack.c.bf16 %v3481, %v3481
        %v3489 = vsel %vm892, %v3486, 0
        %v3492 = vsel %vm892, %v3487, 0
        %3494 = vmatprep.subr.bf16.mxu0 0
        %3495 = vmatpush1.bf16.xpose.msra.mxu0 %v3492
        %3496 = vmatprep.subr.bf16.mxu0 0
        %3497 = vmatpush1.bf16.xpose.msra.mxu0 0
        %3498 = vmatprep.subr.bf16.mxu0 0
        %3499 = vmatpush1.bf16.xpose.msra.mxu0 0
        %3500 = vmatprep.subr.bf16.mxu0 0
        %3501 = vmatpush1.bf16.xpose.msra.mxu0 0
        %3502 = vmatprep.subr.bf16.mxu0 0
        %3503 = vmatpush1.bf16.xpose.msra.mxu0 0
        %3504 = vmatprep.subr.bf16.mxu0 0
        %3505 = vmatpush1.bf16.xpose.msra.mxu0 0
        %3506 = vmatprep.subr.bf16.mxu0 0
        %3507 = vmatpush1.bf16.xpose.msra.mxu0 0
        %3508 = vmatprep.subr.bf16.mxu0 0
        %3509 = vmatpush1.bf16.xpose.msra.mxu0 0
        %3510 = vmatprep.subr.bf16.mxu0 0
        %3511 = vmatpush1.bf16.xpose.msra.mxu0 0
        %3512 = vmatprep.subr.bf16.mxu0 0
        %3513 = vmatpush1.bf16.xpose.msra.mxu0 0
        %3514 = vmatprep.subr.bf16.mxu0 0
        %3515 = vmatpush1.bf16.xpose.msra.mxu0 0
        %3516 = vmatprep.subr.bf16.mxu0 0
        %3517 = vmatpush1.bf16.xpose.msra.mxu0 0
        %3518 = vmatprep.subr.bf16.mxu0 0
        %3519 = vmatpush1.bf16.xpose.msra.mxu0 0
        %3520 = vmatprep.subr.bf16.mxu0 0
        %3521 = vmatpush1.bf16.xpose.msra.mxu0 0
        %3522 = vmatprep.subr.bf16.mxu0 0
        %3523 = vmatpush1.bf16.xpose.msra.mxu0 0
        %3524 = vmatprep.subr.bf16.mxu0 0
        %3525 = vmatpush1.bf16.xpose.msra.mxu0 0
        %3526 = vmatprep.mubr.bf16.mxu0 0
        %3527 = vmatmul.mubr.bf16.gmra.mrb[0].mxu0 %v3489
        %v3528 = vpop.f32.mrb[0].mxu0
        %v3529 = vadd.f32 %v887, %v3528
        %v3530 = vpop.f32.mrb[0].mxu0
        %v3531 = vpop.f32.mrb[0].mxu0
        %v3532 = vpop.f32.mrb[0].mxu0
        %3533 = vdwg.mxu0
        %v3534 = vsel %vm892, %v3529, -inf
        %3535 = vmax.xlane.f32.xlu0 %v3534
        %v3536 = vpop.xlane.xlu0 %3535
        %v3537 = vsub.f32 %v3529, %v3536
        %v3538 = vmul.f32 %v3537, 1.442695
        %v3539 = vpow.pop %v3538
        %v3540 = vsel %vm892, %v3539, 0.0
        %3541 = vadd.xlane.f32.xlu0 %v3540
        %v3542 = vpop.xlane.xlu0 %3541
        %v3543 = vrcp.pop %v3542
        %v3544 = vmul.f32 %v3539, %v3543
        %v3545 = vpack.c.bf16 %v3544, %v3544
        %3547 = vrot.lane.b32.xlu0 %v3487, 96
        %v3548 = vpop.permute.xlu0 %3547
        %v3550 = vsel %vm892, %v3545, 0
        %v3553 = vsel %vm956, %v3548, 0
        %3555 = vmatprep.subr.bf16.mxu0 0
        %3556 = vmatpush1.bf16.msra.mxu0 %v3553
        %3557 = vmatprep.subr.bf16.mxu0 0
        %3558 = vmatpush1.bf16.msra.mxu0 0
        %3559 = vmatprep.subr.bf16.mxu0 0
        %3560 = vmatpush1.bf16.msra.mxu0 0
        %3561 = vmatprep.subr.bf16.mxu0 0
        %3562 = vmatpush1.bf16.msra.mxu0 0
        %3563 = vmatprep.subr.bf16.mxu0 0
        %3564 = vmatpush1.bf16.msra.mxu0 0
        %3565 = vmatprep.subr.bf16.mxu0 0
        %3566 = vmatpush1.bf16.msra.mxu0 0
        %3567 = vmatprep.subr.bf16.mxu0 0
        %3568 = vmatpush1.bf16.msra.mxu0 0
        %3569 = vmatprep.subr.bf16.mxu0 0
        %3570 = vmatpush1.bf16.msra.mxu0 0
        %3571 = vmatprep.subr.bf16.mxu0 0
        %3572 = vmatpush1.bf16.msra.mxu0 0
        %3573 = vmatprep.subr.bf16.mxu0 0
        %3574 = vmatpush1.bf16.msra.mxu0 0
        %3575 = vmatprep.subr.bf16.mxu0 0
        %3576 = vmatpush1.bf16.msra.mxu0 0
        %3577 = vmatprep.subr.bf16.mxu0 0
        %3578 = vmatpush1.bf16.msra.mxu0 0
        %3579 = vmatprep.subr.bf16.mxu0 0
        %3580 = vmatpush1.bf16.msra.mxu0 0
        %3581 = vmatprep.subr.bf16.mxu0 0
        %3582 = vmatpush1.bf16.msra.mxu0 0
        %3583 = vmatprep.subr.bf16.mxu0 0
        %3584 = vmatpush1.bf16.msra.mxu0 0
        %3585 = vmatprep.subr.bf16.mxu0 0
        %3586 = vmatpush1.bf16.msra.mxu0 0
        %3587 = vmatprep.mubr.bf16.mxu0 0
        %3588 = vmatmul.mubr.bf16.gmra.mrb[0].mxu0 %v3550
        %v3589 = vpop.f32.mrb[0].mxu0
        %v3590 = vadd.f32 0.0, %v3589
        %v3591 = vpop.f32.mrb[0].mxu0
        %v3592 = vpop.f32.mrb[0].mxu0
        %v3593 = vpop.f32.mrb[0].mxu0
        %3594 = vdwg.mxu0
        %v3595 = vpack.c.bf16 %v3590, %v3590
        %3597 = vrot.lane.b32.xlu0 %v3486, 120
        %v3598 = vpop.permute.xlu0 %3597
        %3599 = vrot.lane.b32.xlu0 %v3487, 120
        %v3600 = vpop.permute.xlu0 %3599
        %v3602 = vsel %vm892, %v3598, 0
        %v3605 = vsel %vm892, %v3600, 0
        %3607 = vmatprep.subr.bf16.mxu0 0
        %3608 = vmatpush1.bf16.xpose.msra.mxu0 %v3605
        %3609 = vmatprep.subr.bf16.mxu0 0
        %3610 = vmatpush1.bf16.xpose.msra.mxu0 0
        %3611 = vmatprep.subr.bf16.mxu0 0
        %3612 = vmatpush1.bf16.xpose.msra.mxu0 0
        %3613 = vmatprep.subr.bf16.mxu0 0
        %3614 = vmatpush1.bf16.xpose.msra.mxu0 0
        %3615 = vmatprep.subr.bf16.mxu0 0
        %3616 = vmatpush1.bf16.xpose.msra.mxu0 0
        %3617 = vmatprep.subr.bf16.mxu0 0
        %3618 = vmatpush1.bf16.xpose.msra.mxu0 0
        %3619 = vmatprep.subr.bf16.mxu0 0
        %3620 = vmatpush1.bf16.xpose.msra.mxu0 0
        %3621 = vmatprep.subr.bf16.mxu0 0
        %3622 = vmatpush1.bf16.xpose.msra.mxu0 0
        %3623 = vmatprep.subr.bf16.mxu0 0
        %3624 = vmatpush1.bf16.xpose.msra.mxu0 0
        %3625 = vmatprep.subr.bf16.mxu0 0
        %3626 = vmatpush1.bf16.xpose.msra.mxu0 0
        %3627 = vmatprep.subr.bf16.mxu0 0
        %3628 = vmatpush1.bf16.xpose.msra.mxu0 0
        %3629 = vmatprep.subr.bf16.mxu0 0
        %3630 = vmatpush1.bf16.xpose.msra.mxu0 0
        %3631 = vmatprep.subr.bf16.mxu0 0
        %3632 = vmatpush1.bf16.xpose.msra.mxu0 0
        %3633 = vmatprep.subr.bf16.mxu0 0
        %3634 = vmatpush1.bf16.xpose.msra.mxu0 0
        %3635 = vmatprep.subr.bf16.mxu0 0
        %3636 = vmatpush1.bf16.xpose.msra.mxu0 0
        %3637 = vmatprep.subr.bf16.mxu0 0
        %3638 = vmatpush1.bf16.xpose.msra.mxu0 0
        %3639 = vmatprep.mubr.bf16.mxu0 0
        %3640 = vmatmul.mubr.bf16.gmra.mrb[0].mxu0 %v3602
        %v3641 = vpop.f32.mrb[0].mxu0
        %v3642 = vadd.f32 %v887, %v3641
        %v3643 = vpop.f32.mrb[0].mxu0
        %v3644 = vpop.f32.mrb[0].mxu0
        %v3645 = vpop.f32.mrb[0].mxu0
        %3646 = vdwg.mxu0
        %v3647 = vsel %vm892, %v3642, -inf
        %3648 = vmax.xlane.f32.xlu0 %v3647
        %v3649 = vpop.xlane.xlu0 %3648
        %v3650 = vsub.f32 %v3642, %v3649
        %v3651 = vmul.f32 %v3650, 1.442695
        %v3652 = vpow.pop %v3651
        %v3653 = vsel %vm892, %v3652, 0.0
        %3654 = vadd.xlane.f32.xlu0 %v3653
        %v3655 = vpop.xlane.xlu0 %3654
        %v3656 = vrcp.pop %v3655
        %v3657 = vmul.f32 %v3652, %v3656
        %v3658 = vpack.c.bf16 %v3657, %v3657
        %3659 = vrot.lane.b32.xlu0 %v3487, 88
        %v3660 = vpop.permute.xlu0 %3659
        %v3662 = vsel %vm892, %v3658, 0
        %v3665 = vsel %vm956, %v3660, 0
        %3667 = vmatprep.subr.bf16.mxu0 0
        %3668 = vmatpush1.bf16.msra.mxu0 %v3665
        %3669 = vmatprep.subr.bf16.mxu0 0
        %3670 = vmatpush1.bf16.msra.mxu0 0
        %3671 = vmatprep.subr.bf16.mxu0 0
        %3672 = vmatpush1.bf16.msra.mxu0 0
        %3673 = vmatprep.subr.bf16.mxu0 0
        %3674 = vmatpush1.bf16.msra.mxu0 0
        %3675 = vmatprep.subr.bf16.mxu0 0
        %3676 = vmatpush1.bf16.msra.mxu0 0
        %3677 = vmatprep.subr.bf16.mxu0 0
        %3678 = vmatpush1.bf16.msra.mxu0 0
        %3679 = vmatprep.subr.bf16.mxu0 0
        %3680 = vmatpush1.bf16.msra.mxu0 0
        %3681 = vmatprep.subr.bf16.mxu0 0
        %3682 = vmatpush1.bf16.msra.mxu0 0
        %3683 = vmatprep.subr.bf16.mxu0 0
        %3684 = vmatpush1.bf16.msra.mxu0 0
        %3685 = vmatprep.subr.bf16.mxu0 0
        %3686 = vmatpush1.bf16.msra.mxu0 0
        %3687 = vmatprep.subr.bf16.mxu0 0
        %3688 = vmatpush1.bf16.msra.mxu0 0
        %3689 = vmatprep.subr.bf16.mxu0 0
        %3690 = vmatpush1.bf16.msra.mxu0 0
        %3691 = vmatprep.subr.bf16.mxu0 0
        %3692 = vmatpush1.bf16.msra.mxu0 0
        %3693 = vmatprep.subr.bf16.mxu0 0
        %3694 = vmatpush1.bf16.msra.mxu0 0
        %3695 = vmatprep.subr.bf16.mxu0 0
        %3696 = vmatpush1.bf16.msra.mxu0 0
        %3697 = vmatprep.subr.bf16.mxu0 0
        %3698 = vmatpush1.bf16.msra.mxu0 0
        %3699 = vmatprep.mubr.bf16.mxu0 0
        %3700 = vmatmul.mubr.bf16.gmra.mrb[0].mxu0 %v3662
        %v3701 = vpop.f32.mrb[0].mxu0
        %v3702 = vadd.f32 0.0, %v3701
        %v3703 = vpop.f32.mrb[0].mxu0
        %v3704 = vpop.f32.mrb[0].mxu0
        %v3705 = vpop.f32.mrb[0].mxu0
        %3706 = vdwg.mxu0
        %v3707 = vpack.c.bf16 %v3702, %v3702
        %v3709 = vsel %vm892, %v3707, 0
        %v3712 = vsel %vm956, %v3370, 0
        %3714 = vmatprep.subr.bf16.mxu0 0
        %3715 = vmatpush1.bf16.msra.mxu0 %v3712
        %3716 = vmatprep.subr.bf16.mxu0 0
        %3717 = vmatpush1.bf16.msra.mxu0 0
        %3718 = vmatprep.subr.bf16.mxu0 0
        %3719 = vmatpush1.bf16.msra.mxu0 0
        %3720 = vmatprep.subr.bf16.mxu0 0
        %3721 = vmatpush1.bf16.msra.mxu0 0
        %3722 = vmatprep.subr.bf16.mxu0 0
        %3723 = vmatpush1.bf16.msra.mxu0 0
        %3724 = vmatprep.subr.bf16.mxu0 0
        %3725 = vmatpush1.bf16.msra.mxu0 0
        %3726 = vmatprep.subr.bf16.mxu0 0
        %3727 = vmatpush1.bf16.msra.mxu0 0
        %3728 = vmatprep.subr.bf16.mxu0 0
        %3729 = vmatpush1.bf16.msra.mxu0 0
        %3730 = vmatprep.subr.bf16.mxu0 0
        %3731 = vmatpush1.bf16.msra.mxu0 0
        %3732 = vmatprep.subr.bf16.mxu0 0
        %3733 = vmatpush1.bf16.msra.mxu0 0
        %3734 = vmatprep.subr.bf16.mxu0 0
        %3735 = vmatpush1.bf16.msra.mxu0 0
        %3736 = vmatprep.subr.bf16.mxu0 0
        %3737 = vmatpush1.bf16.msra.mxu0 0
        %3738 = vmatprep.subr.bf16.mxu0 0
        %3739 = vmatpush1.bf16.msra.mxu0 0
        %3740 = vmatprep.subr.bf16.mxu0 0
        %3741 = vmatpush1.bf16.msra.mxu0 0
        %3742 = vmatprep.subr.bf16.mxu0 0
        %3743 = vmatpush1.bf16.msra.mxu0 0
        %3744 = vmatprep.subr.bf16.mxu0 0
        %3745 = vmatpush1.bf16.msra.mxu0 0
        %3746 = vmatprep.mubr.bf16.mxu0 0
        %3747 = vmatmul.mubr.bf16.gmra.mrb[0].mxu0 %v3709
        %v3748 = vpop.f32.mrb[0].mxu0
        %v3749 = vadd.f32 0.0, %v3748
        %v3750 = vpop.f32.mrb[0].mxu0
        %v3751 = vpop.f32.mrb[0].mxu0
        %v3752 = vpop.f32.mrb[0].mxu0
        %3753 = vdwg.mxu0
        %v3755 = vsel %vm892, %v3595, 0
        %v3758 = vsel %vm956, %v3369, 0
        %3760 = vmatprep.subr.bf16.mxu0 0
        %3761 = vmatpush1.bf16.msra.mxu0 %v3758
        %3762 = vmatprep.subr.bf16.mxu0 0
        %3763 = vmatpush1.bf16.msra.mxu0 0
        %3764 = vmatprep.subr.bf16.mxu0 0
        %3765 = vmatpush1.bf16.msra.mxu0 0
        %3766 = vmatprep.subr.bf16.mxu0 0
        %3767 = vmatpush1.bf16.msra.mxu0 0
        %3768 = vmatprep.subr.bf16.mxu0 0
        %3769 = vmatpush1.bf16.msra.mxu0 0
        %3770 = vmatprep.subr.bf16.mxu0 0
        %3771 = vmatpush1.bf16.msra.mxu0 0
        %3772 = vmatprep.subr.bf16.mxu0 0
        %3773 = vmatpush1.bf16.msra.mxu0 0
        %3774 = vmatprep.subr.bf16.mxu0 0
        %3775 = vmatpush1.bf16.msra.mxu0 0
        %3776 = vmatprep.subr.bf16.mxu0 0
        %3777 = vmatpush1.bf16.msra.mxu0 0
        %3778 = vmatprep.subr.bf16.mxu0 0
        %3779 = vmatpush1.bf16.msra.mxu0 0
        %3780 = vmatprep.subr.bf16.mxu0 0
        %3781 = vmatpush1.bf16.msra.mxu0 0
        %3782 = vmatprep.subr.bf16.mxu0 0
        %3783 = vmatpush1.bf16.msra.mxu0 0
        %3784 = vmatprep.subr.bf16.mxu0 0
        %3785 = vmatpush1.bf16.msra.mxu0 0
        %3786 = vmatprep.subr.bf16.mxu0 0
        %3787 = vmatpush1.bf16.msra.mxu0 0
        %3788 = vmatprep.subr.bf16.mxu0 0
        %3789 = vmatpush1.bf16.msra.mxu0 0
        %3790 = vmatprep.subr.bf16.mxu0 0
        %3791 = vmatpush1.bf16.msra.mxu0 0
        %3792 = vmatprep.mubr.bf16.mxu0 0
        %3793 = vmatmul.mubr.bf16.gmra.mrb[0].mxu0 %v3755
        %v3794 = vpop.f32.mrb[0].mxu0
        %v3795 = vadd.f32 %v3749, %v3794
        %v3796 = vpop.f32.mrb[0].mxu0
        %v3797 = vpop.f32.mrb[0].mxu0
        %v3798 = vpop.f32.mrb[0].mxu0
        %3799 = vdwg.mxu0
        %3800 = vrot.lane.b32.xlu0 %v3486, 112
        %v3801 = vpop.permute.xlu0 %3800
        %3802 = vrot.lane.b32.xlu0 %v3487, 112
        %v3803 = vpop.permute.xlu0 %3802
        %v3805 = vsel %vm892, %v3801, 0
        %v3808 = vsel %vm892, %v3803, 0
        %3810 = vmatprep.subr.bf16.mxu0 0
        %3811 = vmatpush1.bf16.xpose.msra.mxu0 %v3808
        %3812 = vmatprep.subr.bf16.mxu0 0
        %3813 = vmatpush1.bf16.xpose.msra.mxu0 0
        %3814 = vmatprep.subr.bf16.mxu0 0
        %3815 = vmatpush1.bf16.xpose.msra.mxu0 0
        %3816 = vmatprep.subr.bf16.mxu0 0
        %3817 = vmatpush1.bf16.xpose.msra.mxu0 0
        %3818 = vmatprep.subr.bf16.mxu0 0
        %3819 = vmatpush1.bf16.xpose.msra.mxu0 0
        %3820 = vmatprep.subr.bf16.mxu0 0
        %3821 = vmatpush1.bf16.xpose.msra.mxu0 0
        %3822 = vmatprep.subr.bf16.mxu0 0
        %3823 = vmatpush1.bf16.xpose.msra.mxu0 0
        %3824 = vmatprep.subr.bf16.mxu0 0
        %3825 = vmatpush1.bf16.xpose.msra.mxu0 0
        %3826 = vmatprep.subr.bf16.mxu0 0
        %3827 = vmatpush1.bf16.xpose.msra.mxu0 0
        %3828 = vmatprep.subr.bf16.mxu0 0
        %3829 = vmatpush1.bf16.xpose.msra.mxu0 0
        %3830 = vmatprep.subr.bf16.mxu0 0
        %3831 = vmatpush1.bf16.xpose.msra.mxu0 0
        %3832 = vmatprep.subr.bf16.mxu0 0
        %3833 = vmatpush1.bf16.xpose.msra.mxu0 0
        %3834 = vmatprep.subr.bf16.mxu0 0
        %3835 = vmatpush1.bf16.xpose.msra.mxu0 0
        %3836 = vmatprep.subr.bf16.mxu0 0
        %3837 = vmatpush1.bf16.xpose.msra.mxu0 0
        %3838 = vmatprep.subr.bf16.mxu0 0
        %3839 = vmatpush1.bf16.xpose.msra.mxu0 0
        %3840 = vmatprep.subr.bf16.mxu0 0
        %3841 = vmatpush1.bf16.xpose.msra.mxu0 0
        %3842 = vmatprep.mubr.bf16.mxu0 0
        %3843 = vmatmul.mubr.bf16.gmra.mrb[0].mxu0 %v3805
        %v3844 = vpop.f32.mrb[0].mxu0
        %v3845 = vadd.f32 %v887, %v3844
        %v3846 = vpop.f32.mrb[0].mxu0
        %v3847 = vpop.f32.mrb[0].mxu0
        %v3848 = vpop.f32.mrb[0].mxu0
        %3849 = vdwg.mxu0
        %v3850 = vsel %vm892, %v3845, -inf
        %3851 = vmax.xlane.f32.xlu0 %v3850
        %v3852 = vpop.xlane.xlu0 %3851
        %v3853 = vsub.f32 %v3845, %v3852
        %v3854 = vmul.f32 %v3853, 1.442695
        %v3855 = vpow.pop %v3854
        %v3856 = vsel %vm892, %v3855, 0.0
        %3857 = vadd.xlane.f32.xlu0 %v3856
        %v3858 = vpop.xlane.xlu0 %3857
        %v3859 = vrcp.pop %v3858
        %v3860 = vmul.f32 %v3855, %v3859
        %v3861 = vpack.c.bf16 %v3860, %v3860
        %3862 = vrot.lane.b32.xlu0 %v3487, 80
        %v3863 = vpop.permute.xlu0 %3862
        %v3865 = vsel %vm892, %v3861, 0
        %v3868 = vsel %vm956, %v3863, 0
        %3870 = vmatprep.subr.bf16.mxu0 0
        %3871 = vmatpush1.bf16.msra.mxu0 %v3868
        %3872 = vmatprep.subr.bf16.mxu0 0
        %3873 = vmatpush1.bf16.msra.mxu0 0
        %3874 = vmatprep.subr.bf16.mxu0 0
        %3875 = vmatpush1.bf16.msra.mxu0 0
        %3876 = vmatprep.subr.bf16.mxu0 0
        %3877 = vmatpush1.bf16.msra.mxu0 0
        %3878 = vmatprep.subr.bf16.mxu0 0
        %3879 = vmatpush1.bf16.msra.mxu0 0
        %3880 = vmatprep.subr.bf16.mxu0 0
        %3881 = vmatpush1.bf16.msra.mxu0 0
        %3882 = vmatprep.subr.bf16.mxu0 0
        %3883 = vmatpush1.bf16.msra.mxu0 0
        %3884 = vmatprep.subr.bf16.mxu0 0
        %3885 = vmatpush1.bf16.msra.mxu0 0
        %3886 = vmatprep.subr.bf16.mxu0 0
        %3887 = vmatpush1.bf16.msra.mxu0 0
        %3888 = vmatprep.subr.bf16.mxu0 0
        %3889 = vmatpush1.bf16.msra.mxu0 0
        %3890 = vmatprep.subr.bf16.mxu0 0
        %3891 = vmatpush1.bf16.msra.mxu0 0
        %3892 = vmatprep.subr.bf16.mxu0 0
        %3893 = vmatpush1.bf16.msra.mxu0 0
        %3894 = vmatprep.subr.bf16.mxu0 0
        %3895 = vmatpush1.bf16.msra.mxu0 0
        %3896 = vmatprep.subr.bf16.mxu0 0
        %3897 = vmatpush1.bf16.msra.mxu0 0
        %3898 = vmatprep.subr.bf16.mxu0 0
        %3899 = vmatpush1.bf16.msra.mxu0 0
        %3900 = vmatprep.subr.bf16.mxu0 0
        %3901 = vmatpush1.bf16.msra.mxu0 0
        %3902 = vmatprep.mubr.bf16.mxu0 0
        %3903 = vmatmul.mubr.bf16.gmra.mrb[0].mxu0 %v3865
        %v3904 = vpop.f32.mrb[0].mxu0
        %v3905 = vadd.f32 0.0, %v3904
        %v3906 = vpop.f32.mrb[0].mxu0
        %v3907 = vpop.f32.mrb[0].mxu0
        %v3908 = vpop.f32.mrb[0].mxu0
        %3909 = vdwg.mxu0
        %v3910 = vpack.c.bf16 %v3905, %v3905
        %v3912 = vsel %vm892, %v3910, 0
        %v3915 = vsel %vm956, %v3371, 0
        %3917 = vmatprep.subr.bf16.mxu0 0
        %3918 = vmatpush1.bf16.msra.mxu0 %v3915
        %3919 = vmatprep.subr.bf16.mxu0 0
        %3920 = vmatpush1.bf16.msra.mxu0 0
        %3921 = vmatprep.subr.bf16.mxu0 0
        %3922 = vmatpush1.bf16.msra.mxu0 0
        %3923 = vmatprep.subr.bf16.mxu0 0
        %3924 = vmatpush1.bf16.msra.mxu0 0
        %3925 = vmatprep.subr.bf16.mxu0 0
        %3926 = vmatpush1.bf16.msra.mxu0 0
        %3927 = vmatprep.subr.bf16.mxu0 0
        %3928 = vmatpush1.bf16.msra.mxu0 0
        %3929 = vmatprep.subr.bf16.mxu0 0
        %3930 = vmatpush1.bf16.msra.mxu0 0
        %3931 = vmatprep.subr.bf16.mxu0 0
        %3932 = vmatpush1.bf16.msra.mxu0 0
        %3933 = vmatprep.subr.bf16.mxu0 0
        %3934 = vmatpush1.bf16.msra.mxu0 0
        %3935 = vmatprep.subr.bf16.mxu0 0
        %3936 = vmatpush1.bf16.msra.mxu0 0
        %3937 = vmatprep.subr.bf16.mxu0 0
        %3938 = vmatpush1.bf16.msra.mxu0 0
        %3939 = vmatprep.subr.bf16.mxu0 0
        %3940 = vmatpush1.bf16.msra.mxu0 0
        %3941 = vmatprep.subr.bf16.mxu0 0
        %3942 = vmatpush1.bf16.msra.mxu0 0
        %3943 = vmatprep.subr.bf16.mxu0 0
        %3944 = vmatpush1.bf16.msra.mxu0 0
        %3945 = vmatprep.subr.bf16.mxu0 0
        %3946 = vmatpush1.bf16.msra.mxu0 0
        %3947 = vmatprep.subr.bf16.mxu0 0
        %3948 = vmatpush1.bf16.msra.mxu0 0
        %3949 = vmatprep.mubr.bf16.mxu0 0
        %3950 = vmatmul.mubr.bf16.gmra.mrb[0].mxu0 %v3912
        %v3951 = vpop.f32.mrb[0].mxu0
        %v3952 = vadd.f32 0.0, %v3951
        %v3953 = vpop.f32.mrb[0].mxu0
        %v3954 = vpop.f32.mrb[0].mxu0
        %v3955 = vpop.f32.mrb[0].mxu0
        %3956 = vdwg.mxu0
        %v3957 = vadd.f32 %v3795, %v3952
        %3958 = vrot.lane.b32.xlu0 %v3486, 104
        %v3959 = vpop.permute.xlu0 %3958
        %3960 = vrot.lane.b32.xlu0 %v3487, 104
        %v3961 = vpop.permute.xlu0 %3960
        %v3963 = vsel %vm892, %v3959, 0
        %v3966 = vsel %vm892, %v3961, 0
        %3968 = vmatprep.subr.bf16.mxu0 0
        %3969 = vmatpush1.bf16.xpose.msra.mxu0 %v3966
        %3970 = vmatprep.subr.bf16.mxu0 0
        %3971 = vmatpush1.bf16.xpose.msra.mxu0 0
        %3972 = vmatprep.subr.bf16.mxu0 0
        %3973 = vmatpush1.bf16.xpose.msra.mxu0 0
        %3974 = vmatprep.subr.bf16.mxu0 0
        %3975 = vmatpush1.bf16.xpose.msra.mxu0 0
        %3976 = vmatprep.subr.bf16.mxu0 0
        %3977 = vmatpush1.bf16.xpose.msra.mxu0 0
        %3978 = vmatprep.subr.bf16.mxu0 0
        %3979 = vmatpush1.bf16.xpose.msra.mxu0 0
        %3980 = vmatprep.subr.bf16.mxu0 0
        %3981 = vmatpush1.bf16.xpose.msra.mxu0 0
        %3982 = vmatprep.subr.bf16.mxu0 0
        %3983 = vmatpush1.bf16.xpose.msra.mxu0 0
        %3984 = vmatprep.subr.bf16.mxu0 0
        %3985 = vmatpush1.bf16.xpose.msra.mxu0 0
        %3986 = vmatprep.subr.bf16.mxu0 0
        %3987 = vmatpush1.bf16.xpose.msra.mxu0 0
        %3988 = vmatprep.subr.bf16.mxu0 0
        %3989 = vmatpush1.bf16.xpose.msra.mxu0 0
        %3990 = vmatprep.subr.bf16.mxu0 0
        %3991 = vmatpush1.bf16.xpose.msra.mxu0 0
        %3992 = vmatprep.subr.bf16.mxu0 0
        %3993 = vmatpush1.bf16.xpose.msra.mxu0 0
        %3994 = vmatprep.subr.bf16.mxu0 0
        %3995 = vmatpush1.bf16.xpose.msra.mxu0 0
        %3996 = vmatprep.subr.bf16.mxu0 0
        %3997 = vmatpush1.bf16.xpose.msra.mxu0 0
        %3998 = vmatprep.subr.bf16.mxu0 0
        %3999 = vmatpush1.bf16.xpose.msra.mxu0 0
        %4000 = vmatprep.mubr.bf16.mxu0 0
        %4001 = vmatmul.mubr.bf16.gmra.mrb[0].mxu0 %v3963
        %v4002 = vpop.f32.mrb[0].mxu0
        %v4003 = vadd.f32 %v887, %v4002
        %v4004 = vpop.f32.mrb[0].mxu0
        %v4005 = vpop.f32.mrb[0].mxu0
        %v4006 = vpop.f32.mrb[0].mxu0
        %4007 = vdwg.mxu0
        %v4008 = vsel %vm892, %v4003, -inf
        %4009 = vmax.xlane.f32.xlu0 %v4008
        %v4010 = vpop.xlane.xlu0 %4009
        %v4011 = vsub.f32 %v4003, %v4010
        %v4012 = vmul.f32 %v4011, 1.442695
        %v4013 = vpow.pop %v4012
        %v4014 = vsel %vm892, %v4013, 0.0
        %4015 = vadd.xlane.f32.xlu0 %v4014
        %v4016 = vpop.xlane.xlu0 %4015
        %v4017 = vrcp.pop %v4016
        %v4018 = vmul.f32 %v4013, %v4017
        %v4019 = vpack.c.bf16 %v4018, %v4018
        %4020 = vrot.lane.b32.xlu0 %v3487, 72
        %v4021 = vpop.permute.xlu0 %4020
        %v4023 = vsel %vm892, %v4019, 0
        %v4026 = vsel %vm956, %v4021, 0
        %4028 = vmatprep.subr.bf16.mxu0 0
        %4029 = vmatpush1.bf16.msra.mxu0 %v4026
        %4030 = vmatprep.subr.bf16.mxu0 0
        %4031 = vmatpush1.bf16.msra.mxu0 0
        %4032 = vmatprep.subr.bf16.mxu0 0
        %4033 = vmatpush1.bf16.msra.mxu0 0
        %4034 = vmatprep.subr.bf16.mxu0 0
        %4035 = vmatpush1.bf16.msra.mxu0 0
        %4036 = vmatprep.subr.bf16.mxu0 0
        %4037 = vmatpush1.bf16.msra.mxu0 0
        %4038 = vmatprep.subr.bf16.mxu0 0
        %4039 = vmatpush1.bf16.msra.mxu0 0
        %4040 = vmatprep.subr.bf16.mxu0 0
        %4041 = vmatpush1.bf16.msra.mxu0 0
        %4042 = vmatprep.subr.bf16.mxu0 0
        %4043 = vmatpush1.bf16.msra.mxu0 0
        %4044 = vmatprep.subr.bf16.mxu0 0
        %4045 = vmatpush1.bf16.msra.mxu0 0
        %4046 = vmatprep.subr.bf16.mxu0 0
        %4047 = vmatpush1.bf16.msra.mxu0 0
        %4048 = vmatprep.subr.bf16.mxu0 0
        %4049 = vmatpush1.bf16.msra.mxu0 0
        %4050 = vmatprep.subr.bf16.mxu0 0
        %4051 = vmatpush1.bf16.msra.mxu0 0
        %4052 = vmatprep.subr.bf16.mxu0 0
        %4053 = vmatpush1.bf16.msra.mxu0 0
        %4054 = vmatprep.subr.bf16.mxu0 0
        %4055 = vmatpush1.bf16.msra.mxu0 0
        %4056 = vmatprep.subr.bf16.mxu0 0
        %4057 = vmatpush1.bf16.msra.mxu0 0
        %4058 = vmatprep.subr.bf16.mxu0 0
        %4059 = vmatpush1.bf16.msra.mxu0 0
        %4060 = vmatprep.mubr.bf16.mxu0 0
        %4061 = vmatmul.mubr.bf16.gmra.mrb[0].mxu0 %v4023
        %v4062 = vpop.f32.mrb[0].mxu0
        %v4063 = vadd.f32 0.0, %v4062
        %v4064 = vpop.f32.mrb[0].mxu0
        %v4065 = vpop.f32.mrb[0].mxu0
        %v4066 = vpop.f32.mrb[0].mxu0
        %4067 = vdwg.mxu0
        %v4068 = vpack.c.bf16 %v4063, %v4063
        %v4070 = vsel %vm892, %v4068, 0
        %v4073 = vsel %vm956, %v3372, 0
        %4075 = vmatprep.subr.bf16.mxu0 0
        %4076 = vmatpush1.bf16.msra.mxu0 %v4073
        %4077 = vmatprep.subr.bf16.mxu0 0
        %4078 = vmatpush1.bf16.msra.mxu0 0
        %4079 = vmatprep.subr.bf16.mxu0 0
        %4080 = vmatpush1.bf16.msra.mxu0 0
        %4081 = vmatprep.subr.bf16.mxu0 0
        %4082 = vmatpush1.bf16.msra.mxu0 0
        %4083 = vmatprep.subr.bf16.mxu0 0
        %4084 = vmatpush1.bf16.msra.mxu0 0
        %4085 = vmatprep.subr.bf16.mxu0 0
        %4086 = vmatpush1.bf16.msra.mxu0 0
        %4087 = vmatprep.subr.bf16.mxu0 0
        %4088 = vmatpush1.bf16.msra.mxu0 0
        %4089 = vmatprep.subr.bf16.mxu0 0
        %4090 = vmatpush1.bf16.msra.mxu0 0
        %4091 = vmatprep.subr.bf16.mxu0 0
        %4092 = vmatpush1.bf16.msra.mxu0 0
        %4093 = vmatprep.subr.bf16.mxu0 0
        %4094 = vmatpush1.bf16.msra.mxu0 0
        %4095 = vmatprep.subr.bf16.mxu0 0
        %4096 = vmatpush1.bf16.msra.mxu0 0
        %4097 = vmatprep.subr.bf16.mxu0 0
        %4098 = vmatpush1.bf16.msra.mxu0 0
        %4099 = vmatprep.subr.bf16.mxu0 0
        %4100 = vmatpush1.bf16.msra.mxu0 0
        %4101 = vmatprep.subr.bf16.mxu0 0
        %4102 = vmatpush1.bf16.msra.mxu0 0
        %4103 = vmatprep.subr.bf16.mxu0 0
        %4104 = vmatpush1.bf16.msra.mxu0 0
        %4105 = vmatprep.subr.bf16.mxu0 0
        %4106 = vmatpush1.bf16.msra.mxu0 0
        %4107 = vmatprep.mubr.bf16.mxu0 0
        %4108 = vmatmul.mubr.bf16.gmra.mrb[0].mxu0 %v4070
        %v4109 = vpop.f32.mrb[0].mxu0
        %v4110 = vadd.f32 0.0, %v4109
        %v4111 = vpop.f32.mrb[0].mxu0
        %v4112 = vpop.f32.mrb[0].mxu0
        %v4113 = vpop.f32.mrb[0].mxu0
        %4114 = vdwg.mxu0
        %v4115 = vadd.f32 %v3957, %v4110
        %v4116 = vadd.f32 %v3360, %v4115
        %v4117 = vsel %vm836, %v4116, 0.0
        %4118 = vadd.xlane.f32.xlu0 %v4117
        %v4119 = vpop.xlane.xlu0 %4118
        %v4120 = vmul.f32 %v4119, %v1525
        %v4121 = vmul.f32 %v4116, %v4116
        %v4122 = vsel %vm836, %v4121, 0.0
        %4123 = vadd.xlane.f32.xlu0 %v4122
        %v4124 = vpop.xlane.xlu0 %4123
        %v4125 = vmul.f32 %v4124, %v1525
        %v4126 = vmul.f32 %v4120, %v4120
        %v4127 = vsub.f32 %v4125, %v4126
        %v4128 = vsub.f32 %v4116, %v4120
        %v4129 = vadd.f32 %v4127, 1e-05
        %v4130 = vrsqrt.pop %v4129
        %v4131 = vmul.f32 %v4128, %v4130
        %v4132 = vlaneseq
        %v4133 = vshrl.u32 %v4132, 7
        %v4134 = vsub.s32 1, %v4133
        %v4135 = vrot.slane %v2636, %v4134
        %v4136 = vmul.f32 %v4131, %v4135
        %v4137 = vlaneseq
        %v4138 = vshrl.u32 %v4137, 7
        %v4139 = vsub.s32 1, %v4138
        %v4140 = vrot.slane %v2637, %v4139
        %v4141 = vadd.f32 %v4136, %v4140
        %v4142 = vld [vmem:[%s17] sm:$0xf]
        %v4143 = vld [vmem:[%s17 + $0x4] sm:$0xf]
        %v4144 = vld [vmem:[%s17 + $0x8] sm:$0xf]
        %v4145 = vld [vmem:[%s17 + $0xc] sm:$0xf]
        %v4146 = vld [vmem:[%s18] sm:$0x1]
        %v4147 = vld [vmem:[%s19] sm:$0xf]
        %v4148 = vld [vmem:[%s19 + $0x4] sm:$0xf]
        %v4149 = vld [vmem:[%s19 + $0x8] sm:$0xf]
        %v4150 = vld [vmem:[%s19 + $0xc] sm:$0xf]
        %v4151 = vld [vmem:[%s19 + $0x10] sm:$0xf]
        %v4152 = vld [vmem:[%s19 + $0x14] sm:$0xf]
        %v4153 = vld [vmem:[%s19 + $0x18] sm:$0xf]
        %v4154 = vld [vmem:[%s19 + $0x1c] sm:$0xf]
        %v4155 = vld [vmem:[%s20] sm:$0x1]
        %v4156 = vpack.c.bf16 %v4141, %v4141
        %v4158 = vlaneseq
        %v4159 = vshrl.u32 %v4158, 7
        %v4160 = vsub.s32 0, %v4159
        %v4161 = vrot.slane %v4146, %v4160
        %v4167 = vunpack.c.l.b16 %v4142
        %v4168 = vunpack.c.l.b16 %v4143
        %v4169 = vunpack.c.l.b16 %v4144
        %v4170 = vunpack.c.l.b16 %v4145
        %v4171 = vpack.c.b16 %v4168, %v4167
        %v4172 = vpack.c.b16 %v4170, %v4169
        %v4176 = vsel %vm836, %v4156, 0
        %4178 = vmatprep.subr.bf16.mxu0 0
        %4179 = vmatpush1.bf16.msra.mxu0 %v4171
        %4180 = vmatprep.subr.bf16.mxu0 0
        %4181 = vmatpush1.bf16.msra.mxu0 %v4172
        %4182 = vmatprep.subr.bf16.mxu0 0
        %4183 = vmatpush1.bf16.msra.mxu0 0
        %4184 = vmatprep.subr.bf16.mxu0 0
        %4185 = vmatpush1.bf16.msra.mxu0 0
        %4186 = vmatprep.subr.bf16.mxu0 0
        %4187 = vmatpush1.bf16.msra.mxu0 0
        %4188 = vmatprep.subr.bf16.mxu0 0
        %4189 = vmatpush1.bf16.msra.mxu0 0
        %4190 = vmatprep.subr.bf16.mxu0 0
        %4191 = vmatpush1.bf16.msra.mxu0 0
        %4192 = vmatprep.subr.bf16.mxu0 0
        %4193 = vmatpush1.bf16.msra.mxu0 0
        %4194 = vmatprep.subr.bf16.mxu0 0
        %4195 = vmatpush1.bf16.msra.mxu0 0
        %4196 = vmatprep.subr.bf16.mxu0 0
        %4197 = vmatpush1.bf16.msra.mxu0 0
        %4198 = vmatprep.subr.bf16.mxu0 0
        %4199 = vmatpush1.bf16.msra.mxu0 0
        %4200 = vmatprep.subr.bf16.mxu0 0
        %4201 = vmatpush1.bf16.msra.mxu0 0
        %4202 = vmatprep.subr.bf16.mxu0 0
        %4203 = vmatpush1.bf16.msra.mxu0 0
        %4204 = vmatprep.subr.bf16.mxu0 0
        %4205 = vmatpush1.bf16.msra.mxu0 0
        %4206 = vmatprep.subr.bf16.mxu0 0
        %4207 = vmatpush1.bf16.msra.mxu0 0
        %4208 = vmatprep.subr.bf16.mxu0 0
        %4209 = vmatpush1.bf16.msra.mxu0 0
        %4210 = vmatprep.mubr.bf16.mxu0 0
        %4211 = vmatmul.mubr.bf16.gmra.mrb[0].mxu0 %v4176
        %v4212 = vpop.f32.mrb[0].mxu0
        %v4213 = vadd.f32 %v4161, %v4212
        %v4214 = vpop.f32.mrb[0].mxu0
        %v4215 = vpop.f32.mrb[0].mxu0
        %v4216 = vpop.f32.mrb[0].mxu0
        %4217 = vdwg.mxu0
        %v4218 = vmax.f32 %v4213, 0.0
        %v4219 = vpack.c.bf16 %v4218, %v4218
        %v4221 = vlaneseq
        %v4222 = vshrl.u32 %v4221, 7
        %v4223 = vsub.s32 0, %v4222
        %v4224 = vrot.slane %v4155, %v4223
        %v4234 = vunpack.c.l.b16 %v4147
        %v4235 = vunpack.c.l.b16 %v4148
        %v4236 = vunpack.c.l.b16 %v4149
        %v4237 = vunpack.c.l.b16 %v4150
        %v4238 = vunpack.c.l.b16 %v4151
        %v4239 = vunpack.c.l.b16 %v4152
        %v4240 = vunpack.c.l.b16 %v4153
        %v4241 = vunpack.c.l.b16 %v4154
        %v4242 = vpack.c.b16 %v4235, %v4234
        %v4243 = vpack.c.b16 %v4237, %v4236
        %v4244 = vpack.c.b16 %v4239, %v4238
        %v4245 = vpack.c.b16 %v4241, %v4240
        %v4251 = vsel %vm1656, %v4219, 0
        %4253 = vmatprep.subr.bf16.mxu0 0
        %4254 = vmatpush1.bf16.msra.mxu0 %v4242
        %4255 = vmatprep.subr.bf16.mxu0 0
        %4256 = vmatpush1.bf16.msra.mxu0 %v4243
        %4257 = vmatprep.subr.bf16.mxu0 0
        %4258 = vmatpush1.bf16.msra.mxu0 %v4244
        %4259 = vmatprep.subr.bf16.mxu0 0
        %4260 = vmatpush1.bf16.msra.mxu0 %v4245
        %4261 = vmatprep.subr.bf16.mxu0 0
        %4262 = vmatpush1.bf16.msra.mxu0 0
        %4263 = vmatprep.subr.bf16.mxu0 0
        %4264 = vmatpush1.bf16.msra.mxu0 0
        %4265 = vmatprep.subr.bf16.mxu0 0
        %4266 = vmatpush1.bf16.msra.mxu0 0
        %4267 = vmatprep.subr.bf16.mxu0 0
        %4268 = vmatpush1.bf16.msra.mxu0 0
        %4269 = vmatprep.subr.bf16.mxu0 0
        %4270 = vmatpush1.bf16.msra.mxu0 0
        %4271 = vmatprep.subr.bf16.mxu0 0
        %4272 = vmatpush1.bf16.msra.mxu0 0
        %4273 = vmatprep.subr.bf16.mxu0 0
        %4274 = vmatpush1.bf16.msra.mxu0 0
        %4275 = vmatprep.subr.bf16.mxu0 0
        %4276 = vmatpush1.bf16.msra.mxu0 0
        %4277 = vmatprep.subr.bf16.mxu0 0
        %4278 = vmatpush1.bf16.msra.mxu0 0
        %4279 = vmatprep.subr.bf16.mxu0 0
        %4280 = vmatpush1.bf16.msra.mxu0 0
        %4281 = vmatprep.subr.bf16.mxu0 0
        %4282 = vmatpush1.bf16.msra.mxu0 0
        %4283 = vmatprep.subr.bf16.mxu0 0
        %4284 = vmatpush1.bf16.msra.mxu0 0
        %4285 = vmatprep.mubr.bf16.mxu0 0
        %4286 = vmatmul.mubr.bf16.gmra.mrb[0].mxu0 %v4251
        %v4287 = vpop.f32.mrb[0].mxu0
        %v4288 = vadd.f32 %v4224, %v4287
        %v4289 = vpop.f32.mrb[0].mxu0
        %v4290 = vpop.f32.mrb[0].mxu0
        %v4291 = vpop.f32.mrb[0].mxu0
        %4292 = vdwg.mxu0
        %v4293 = vadd.f32 %v4141, %v4288
        %v4294 = vsel %vm836, %v4293, 0.0
        %4295 = vadd.xlane.f32.xlu0 %v4294
        %v4296 = vpop.xlane.xlu0 %4295
        %v4297 = vmul.f32 %v4296, %v1525
        %v4298 = vmul.f32 %v4293, %v4293
        %v4299 = vsel %vm836, %v4298, 0.0
        %4300 = vadd.xlane.f32.xlu0 %v4299
        %v4301 = vpop.xlane.xlu0 %4300
        %v4302 = vmul.f32 %v4301, %v1525
        %v4303 = vmul.f32 %v4297, %v4297
        %v4304 = vsub.f32 %v4302, %v4303
        %v4305 = vsub.f32 %v4293, %v4297
        %v4306 = vadd.f32 %v4304, 1e-05
        %v4307 = vrsqrt.pop %v4306
        %v4308 = vmul.f32 %v4305, %v4307
        %v4309 = vlaneseq
        %v4310 = vshrl.u32 %v4309, 7
        %v4311 = vsub.s32 2, %v4310
        %v4312 = vrot.slane %v2636, %v4311
        %v4313 = vmul.f32 %v4308, %v4312
        %v4314 = vlaneseq
        %v4315 = vshrl.u32 %v4314, 7
        %v4316 = vsub.s32 2, %v4315
        %v4317 = vrot.slane %v2637, %v4316
        %v4318 = vadd.f32 %v4313, %v4317
        %s4319 = scalar_lea.vmem %s21, 4
        %v4320 = vld [vmem:[%s4319] sm:$0x7]
        %s4321 = scalar_lea.vmem %s22, 4
        %v4322 = vld [vmem:[%s4321] sm:$0x7]
        %s4323 = scalar_lea.vmem %s12, 16
        %v4324 = vld [vmem:[%s4323] sm:$0xf]
        %v4325 = vld [vmem:[%s4323 + $0x4] sm:$0xf]
        %v4326 = vld [vmem:[%s4323 + $0x8] sm:$0xf]
        %v4327 = vld [vmem:[%s4323 + $0xc] sm:$0xf]
        %s4328 = scalar_lea.vmem %s13, 16
        %v4329 = vld [vmem:[%s4328] sm:$0xf]
        %v4330 = vld [vmem:[%s4328 + $0x4] sm:$0xf]
        %v4331 = vld [vmem:[%s4328 + $0x8] sm:$0xf]
        %v4332 = vld [vmem:[%s4328 + $0xc] sm:$0xf]
        %v4333 = vpack.c.bf16 %v4318, %v4318
        %v4338 = vunpack.c.l.b16 %v4324
        %v4339 = vunpack.c.l.b16 %v4325
        %v4340 = vunpack.c.l.b16 %v4326
        %v4341 = vunpack.c.l.b16 %v4327
        %v4342 = vpack.c.b16 %v4339, %v4338
        %v4343 = vpack.c.b16 %v4341, %v4340
        %v4347 = vsel %vm836, %v4333, 0
        %4349 = vmatprep.subr.bf16.mxu0 0
        %4350 = vmatpush1.bf16.msra.mxu0 %v4342
        %4351 = vmatprep.subr.bf16.mxu0 0
        %4352 = vmatpush1.bf16.msra.mxu0 %v4343
        %4353 = vmatprep.subr.bf16.mxu0 0
        %4354 = vmatpush1.bf16.msra.mxu0 0
        %4355 = vmatprep.subr.bf16.mxu0 0
        %4356 = vmatpush1.bf16.msra.mxu0 0
        %4357 = vmatprep.subr.bf16.mxu0 0
        %4358 = vmatpush1.bf16.msra.mxu0 0
        %4359 = vmatprep.subr.bf16.mxu0 0
        %4360 = vmatpush1.bf16.msra.mxu0 0
        %4361 = vmatprep.subr.bf16.mxu0 0
        %4362 = vmatpush1.bf16.msra.mxu0 0
        %4363 = vmatprep.subr.bf16.mxu0 0
        %4364 = vmatpush1.bf16.msra.mxu0 0
        %4365 = vmatprep.subr.bf16.mxu0 0
        %4366 = vmatpush1.bf16.msra.mxu0 0
        %4367 = vmatprep.subr.bf16.mxu0 0
        %4368 = vmatpush1.bf16.msra.mxu0 0
        %4369 = vmatprep.subr.bf16.mxu0 0
        %4370 = vmatpush1.bf16.msra.mxu0 0
        %4371 = vmatprep.subr.bf16.mxu0 0
        %4372 = vmatpush1.bf16.msra.mxu0 0
        %4373 = vmatprep.subr.bf16.mxu0 0
        %4374 = vmatpush1.bf16.msra.mxu0 0
        %4375 = vmatprep.subr.bf16.mxu0 0
        %4376 = vmatpush1.bf16.msra.mxu0 0
        %4377 = vmatprep.subr.bf16.mxu0 0
        %4378 = vmatpush1.bf16.msra.mxu0 0
        %4379 = vmatprep.subr.bf16.mxu0 0
        %4380 = vmatpush1.bf16.msra.mxu0 0
        %4381 = vmatprep.mubr.bf16.mxu0 0
        %4382 = vmatmul.mubr.bf16.gmra.mrb[0].mxu0 %v4347
        %v4383 = vpop.f32.mrb[0].mxu0
        %v4384 = vadd.f32 0.0, %v4383
        %v4385 = vpop.f32.mrb[0].mxu0
        %v4386 = vpop.f32.mrb[0].mxu0
        %v4387 = vpop.f32.mrb[0].mxu0
        %4388 = vdwg.mxu0
        %v4389 = vmul.f32 %v4384, 0.35355338
        %v4390 = vpack.c.bf16 %v4389, %v4389
        %v4391 = vpack.c.bf16 %v4384, %v4384
        %4393 = vrot.lane.b32.xlu0 %v4391, 96
        %v4394 = vpop.permute.xlu0 %4393
        %v4396 = vsel %vm892, %v4390, 0
        %v4399 = vsel %vm892, %v4394, 0
        %4401 = vmatprep.subr.bf16.mxu0 0
        %4402 = vmatpush1.bf16.xpose.msra.mxu0 %v4399
        %4403 = vmatprep.subr.bf16.mxu0 0
        %4404 = vmatpush1.bf16.xpose.msra.mxu0 0
        %4405 = vmatprep.subr.bf16.mxu0 0
        %4406 = vmatpush1.bf16.xpose.msra.mxu0 0
        %4407 = vmatprep.subr.bf16.mxu0 0
        %4408 = vmatpush1.bf16.xpose.msra.mxu0 0
        %4409 = vmatprep.subr.bf16.mxu0 0
        %4410 = vmatpush1.bf16.xpose.msra.mxu0 0
        %4411 = vmatprep.subr.bf16.mxu0 0
        %4412 = vmatpush1.bf16.xpose.msra.mxu0 0
        %4413 = vmatprep.subr.bf16.mxu0 0
        %4414 = vmatpush1.bf16.xpose.msra.mxu0 0
        %4415 = vmatprep.subr.bf16.mxu0 0
        %4416 = vmatpush1.bf16.xpose.msra.mxu0 0
        %4417 = vmatprep.subr.bf16.mxu0 0
        %4418 = vmatpush1.bf16.xpose.msra.mxu0 0
        %4419 = vmatprep.subr.bf16.mxu0 0
        %4420 = vmatpush1.bf16.xpose.msra.mxu0 0
        %4421 = vmatprep.subr.bf16.mxu0 0
        %4422 = vmatpush1.bf16.xpose.msra.mxu0 0
        %4423 = vmatprep.subr.bf16.mxu0 0
        %4424 = vmatpush1.bf16.xpose.msra.mxu0 0
        %4425 = vmatprep.subr.bf16.mxu0 0
        %4426 = vmatpush1.bf16.xpose.msra.mxu0 0
        %4427 = vmatprep.subr.bf16.mxu0 0
        %4428 = vmatpush1.bf16.xpose.msra.mxu0 0
        %4429 = vmatprep.subr.bf16.mxu0 0
        %4430 = vmatpush1.bf16.xpose.msra.mxu0 0
        %4431 = vmatprep.subr.bf16.mxu0 0
        %4432 = vmatpush1.bf16.xpose.msra.mxu0 0
        %4433 = vmatprep.mubr.bf16.mxu0 0
        %4434 = vmatmul.mubr.bf16.gmra.mrb[0].mxu0 %v4396
        %v4435 = vpop.f32.mrb[0].mxu0
        %v4436 = vadd.f32 %v812, %v4435
        %v4437 = vpop.f32.mrb[0].mxu0
        %v4438 = vpop.f32.mrb[0].mxu0
        %v4439 = vpop.f32.mrb[0].mxu0
        %4440 = vdwg.mxu0
        %v4441 = vsel %vm892, %v4436, -inf
        %4442 = vmax.xlane.f32.xlu0 %v4441
        %v4443 = vpop.xlane.xlu0 %4442
        %v4444 = vsub.f32 %v4436, %v4443
        %v4445 = vmul.f32 %v4444, 1.442695
        %v4446 = vpow.pop %v4445
        %v4447 = vsel %vm892, %v4446, 0.0
        %4448 = vadd.xlane.f32.xlu0 %v4447
        %v4449 = vpop.xlane.xlu0 %4448
        %v4450 = vrcp.pop %v4449
        %v4451 = vmul.f32 %v4446, %v4450
        %v4452 = vpack.c.bf16 %v4451, %v4451
        %4453 = vrot.lane.b32.xlu0 %v4391, 64
        %v4454 = vpop.permute.xlu0 %4453
        %v4456 = vsel %vm892, %v4452, 0
        %v4459 = vsel %vm956, %v4454, 0
        %4461 = vmatprep.subr.bf16.mxu0 0
        %4462 = vmatpush1.bf16.msra.mxu0 %v4459
        %4463 = vmatprep.subr.bf16.mxu0 0
        %4464 = vmatpush1.bf16.msra.mxu0 0
        %4465 = vmatprep.subr.bf16.mxu0 0
        %4466 = vmatpush1.bf16.msra.mxu0 0
        %4467 = vmatprep.subr.bf16.mxu0 0
        %4468 = vmatpush1.bf16.msra.mxu0 0
        %4469 = vmatprep.subr.bf16.mxu0 0
        %4470 = vmatpush1.bf16.msra.mxu0 0
        %4471 = vmatprep.subr.bf16.mxu0 0
        %4472 = vmatpush1.bf16.msra.mxu0 0
        %4473 = vmatprep.subr.bf16.mxu0 0
        %4474 = vmatpush1.bf16.msra.mxu0 0
        %4475 = vmatprep.subr.bf16.mxu0 0
        %4476 = vmatpush1.bf16.msra.mxu0 0
        %4477 = vmatprep.subr.bf16.mxu0 0
        %4478 = vmatpush1.bf16.msra.mxu0 0
        %4479 = vmatprep.subr.bf16.mxu0 0
        %4480 = vmatpush1.bf16.msra.mxu0 0
        %4481 = vmatprep.subr.bf16.mxu0 0
        %4482 = vmatpush1.bf16.msra.mxu0 0
        %4483 = vmatprep.subr.bf16.mxu0 0
        %4484 = vmatpush1.bf16.msra.mxu0 0
        %4485 = vmatprep.subr.bf16.mxu0 0
        %4486 = vmatpush1.bf16.msra.mxu0 0
        %4487 = vmatprep.subr.bf16.mxu0 0
        %4488 = vmatpush1.bf16.msra.mxu0 0
        %4489 = vmatprep.subr.bf16.mxu0 0
        %4490 = vmatpush1.bf16.msra.mxu0 0
        %4491 = vmatprep.subr.bf16.mxu0 0
        %4492 = vmatpush1.bf16.msra.mxu0 0
        %4493 = vmatprep.mubr.bf16.mxu0 0
        %4494 = vmatmul.mubr.bf16.gmra.mrb[0].mxu0 %v4456
        %v4495 = vpop.f32.mrb[0].mxu0
        %v4496 = vadd.f32 0.0, %v4495
        %v4497 = vpop.f32.mrb[0].mxu0
        %v4498 = vpop.f32.mrb[0].mxu0
        %v4499 = vpop.f32.mrb[0].mxu0
        %4500 = vdwg.mxu0
        %v4501 = vpack.c.bf16 %v4496, %v4496
        %4503 = vrot.lane.b32.xlu0 %v4390, 120
        %v4504 = vpop.permute.xlu0 %4503
        %4505 = vrot.lane.b32.xlu0 %v4391, 88
        %v4506 = vpop.permute.xlu0 %4505
        %v4508 = vsel %vm892, %v4504, 0
        %v4511 = vsel %vm892, %v4506, 0
        %4513 = vmatprep.subr.bf16.mxu0 0
        %4514 = vmatpush1.bf16.xpose.msra.mxu0 %v4511
        %4515 = vmatprep.subr.bf16.mxu0 0
        %4516 = vmatpush1.bf16.xpose.msra.mxu0 0
        %4517 = vmatprep.subr.bf16.mxu0 0
        %4518 = vmatpush1.bf16.xpose.msra.mxu0 0
        %4519 = vmatprep.subr.bf16.mxu0 0
        %4520 = vmatpush1.bf16.xpose.msra.mxu0 0
        %4521 = vmatprep.subr.bf16.mxu0 0
        %4522 = vmatpush1.bf16.xpose.msra.mxu0 0
        %4523 = vmatprep.subr.bf16.mxu0 0
        %4524 = vmatpush1.bf16.xpose.msra.mxu0 0
        %4525 = vmatprep.subr.bf16.mxu0 0
        %4526 = vmatpush1.bf16.xpose.msra.mxu0 0
        %4527 = vmatprep.subr.bf16.mxu0 0
        %4528 = vmatpush1.bf16.xpose.msra.mxu0 0
        %4529 = vmatprep.subr.bf16.mxu0 0
        %4530 = vmatpush1.bf16.xpose.msra.mxu0 0
        %4531 = vmatprep.subr.bf16.mxu0 0
        %4532 = vmatpush1.bf16.xpose.msra.mxu0 0
        %4533 = vmatprep.subr.bf16.mxu0 0
        %4534 = vmatpush1.bf16.xpose.msra.mxu0 0
        %4535 = vmatprep.subr.bf16.mxu0 0
        %4536 = vmatpush1.bf16.xpose.msra.mxu0 0
        %4537 = vmatprep.subr.bf16.mxu0 0
        %4538 = vmatpush1.bf16.xpose.msra.mxu0 0
        %4539 = vmatprep.subr.bf16.mxu0 0
        %4540 = vmatpush1.bf16.xpose.msra.mxu0 0
        %4541 = vmatprep.subr.bf16.mxu0 0
        %4542 = vmatpush1.bf16.xpose.msra.mxu0 0
        %4543 = vmatprep.subr.bf16.mxu0 0
        %4544 = vmatpush1.bf16.xpose.msra.mxu0 0
        %4545 = vmatprep.mubr.bf16.mxu0 0
        %4546 = vmatmul.mubr.bf16.gmra.mrb[0].mxu0 %v4508
        %v4547 = vpop.f32.mrb[0].mxu0
        %v4548 = vadd.f32 %v812, %v4547
        %v4549 = vpop.f32.mrb[0].mxu0
        %v4550 = vpop.f32.mrb[0].mxu0
        %v4551 = vpop.f32.mrb[0].mxu0
        %4552 = vdwg.mxu0
        %v4553 = vsel %vm892, %v4548, -inf
        %4554 = vmax.xlane.f32.xlu0 %v4553
        %v4555 = vpop.xlane.xlu0 %4554
        %v4556 = vsub.f32 %v4548, %v4555
        %v4557 = vmul.f32 %v4556, 1.442695
        %v4558 = vpow.pop %v4557
        %v4559 = vsel %vm892, %v4558, 0.0
        %4560 = vadd.xlane.f32.xlu0 %v4559
        %v4561 = vpop.xlane.xlu0 %4560
        %v4562 = vrcp.pop %v4561
        %v4563 = vmul.f32 %v4558, %v4562
        %v4564 = vpack.c.bf16 %v4563, %v4563
        %4565 = vrot.lane.b32.xlu0 %v4391, 56
        %v4566 = vpop.permute.xlu0 %4565
        %v4568 = vsel %vm892, %v4564, 0
        %v4571 = vsel %vm956, %v4566, 0
        %4573 = vmatprep.subr.bf16.mxu0 0
        %4574 = vmatpush1.bf16.msra.mxu0 %v4571
        %4575 = vmatprep.subr.bf16.mxu0 0
        %4576 = vmatpush1.bf16.msra.mxu0 0
        %4577 = vmatprep.subr.bf16.mxu0 0
        %4578 = vmatpush1.bf16.msra.mxu0 0
        %4579 = vmatprep.subr.bf16.mxu0 0
        %4580 = vmatpush1.bf16.msra.mxu0 0
        %4581 = vmatprep.subr.bf16.mxu0 0
        %4582 = vmatpush1.bf16.msra.mxu0 0
        %4583 = vmatprep.subr.bf16.mxu0 0
        %4584 = vmatpush1.bf16.msra.mxu0 0
        %4585 = vmatprep.subr.bf16.mxu0 0
        %4586 = vmatpush1.bf16.msra.mxu0 0
        %4587 = vmatprep.subr.bf16.mxu0 0
        %4588 = vmatpush1.bf16.msra.mxu0 0
        %4589 = vmatprep.subr.bf16.mxu0 0
        %4590 = vmatpush1.bf16.msra.mxu0 0
        %4591 = vmatprep.subr.bf16.mxu0 0
        %4592 = vmatpush1.bf16.msra.mxu0 0
        %4593 = vmatprep.subr.bf16.mxu0 0
        %4594 = vmatpush1.bf16.msra.mxu0 0
        %4595 = vmatprep.subr.bf16.mxu0 0
        %4596 = vmatpush1.bf16.msra.mxu0 0
        %4597 = vmatprep.subr.bf16.mxu0 0
        %4598 = vmatpush1.bf16.msra.mxu0 0
        %4599 = vmatprep.subr.bf16.mxu0 0
        %4600 = vmatpush1.bf16.msra.mxu0 0
        %4601 = vmatprep.subr.bf16.mxu0 0
        %4602 = vmatpush1.bf16.msra.mxu0 0
        %4603 = vmatprep.subr.bf16.mxu0 0
        %4604 = vmatpush1.bf16.msra.mxu0 0
        %4605 = vmatprep.mubr.bf16.mxu0 0
        %4606 = vmatmul.mubr.bf16.gmra.mrb[0].mxu0 %v4568
        %v4607 = vpop.f32.mrb[0].mxu0
        %v4608 = vadd.f32 0.0, %v4607
        %v4609 = vpop.f32.mrb[0].mxu0
        %v4610 = vpop.f32.mrb[0].mxu0
        %v4611 = vpop.f32.mrb[0].mxu0
        %4612 = vdwg.mxu0
        %v4613 = vpack.c.bf16 %v4608, %v4608
        %v4615 = vsel %vm892, %v4613, 0
        %v4618 = vsel %vm956, %v4330, 0
        %4620 = vmatprep.subr.bf16.mxu0 0
        %4621 = vmatpush1.bf16.msra.mxu0 %v4618
        %4622 = vmatprep.subr.bf16.mxu0 0
        %4623 = vmatpush1.bf16.msra.mxu0 0
        %4624 = vmatprep.subr.bf16.mxu0 0
        %4625 = vmatpush1.bf16.msra.mxu0 0
        %4626 = vmatprep.subr.bf16.mxu0 0
        %4627 = vmatpush1.bf16.msra.mxu0 0
        %4628 = vmatprep.subr.bf16.mxu0 0
        %4629 = vmatpush1.bf16.msra.mxu0 0
        %4630 = vmatprep.subr.bf16.mxu0 0
        %4631 = vmatpush1.bf16.msra.mxu0 0
        %4632 = vmatprep.subr.bf16.mxu0 0
        %4633 = vmatpush1.bf16.msra.mxu0 0
        %4634 = vmatprep.subr.bf16.mxu0 0
        %4635 = vmatpush1.bf16.msra.mxu0 0
        %4636 = vmatprep.subr.bf16.mxu0 0
        %4637 = vmatpush1.bf16.msra.mxu0 0
        %4638 = vmatprep.subr.bf16.mxu0 0
        %4639 = vmatpush1.bf16.msra.mxu0 0
        %4640 = vmatprep.subr.bf16.mxu0 0
        %4641 = vmatpush1.bf16.msra.mxu0 0
        %4642 = vmatprep.subr.bf16.mxu0 0
        %4643 = vmatpush1.bf16.msra.mxu0 0
        %4644 = vmatprep.subr.bf16.mxu0 0
        %4645 = vmatpush1.bf16.msra.mxu0 0
        %4646 = vmatprep.subr.bf16.mxu0 0
        %4647 = vmatpush1.bf16.msra.mxu0 0
        %4648 = vmatprep.subr.bf16.mxu0 0
        %4649 = vmatpush1.bf16.msra.mxu0 0
        %4650 = vmatprep.subr.bf16.mxu0 0
        %4651 = vmatpush1.bf16.msra.mxu0 0
        %4652 = vmatprep.mubr.bf16.mxu0 0
        %4653 = vmatmul.mubr.bf16.gmra.mrb[0].mxu0 %v4615
        %v4654 = vpop.f32.mrb[0].mxu0
        %v4655 = vadd.f32 0.0, %v4654
        %v4656 = vpop.f32.mrb[0].mxu0
        %v4657 = vpop.f32.mrb[0].mxu0
        %v4658 = vpop.f32.mrb[0].mxu0
        %4659 = vdwg.mxu0
        %v4661 = vsel %vm892, %v4501, 0
        %v4664 = vsel %vm956, %v4329, 0
        %4666 = vmatprep.subr.bf16.mxu0 0
        %4667 = vmatpush1.bf16.msra.mxu0 %v4664
        %4668 = vmatprep.subr.bf16.mxu0 0
        %4669 = vmatpush1.bf16.msra.mxu0 0
        %4670 = vmatprep.subr.bf16.mxu0 0
        %4671 = vmatpush1.bf16.msra.mxu0 0
        %4672 = vmatprep.subr.bf16.mxu0 0
        %4673 = vmatpush1.bf16.msra.mxu0 0
        %4674 = vmatprep.subr.bf16.mxu0 0
        %4675 = vmatpush1.bf16.msra.mxu0 0
        %4676 = vmatprep.subr.bf16.mxu0 0
        %4677 = vmatpush1.bf16.msra.mxu0 0
        %4678 = vmatprep.subr.bf16.mxu0 0
        %4679 = vmatpush1.bf16.msra.mxu0 0
        %4680 = vmatprep.subr.bf16.mxu0 0
        %4681 = vmatpush1.bf16.msra.mxu0 0
        %4682 = vmatprep.subr.bf16.mxu0 0
        %4683 = vmatpush1.bf16.msra.mxu0 0
        %4684 = vmatprep.subr.bf16.mxu0 0
        %4685 = vmatpush1.bf16.msra.mxu0 0
        %4686 = vmatprep.subr.bf16.mxu0 0
        %4687 = vmatpush1.bf16.msra.mxu0 0
        %4688 = vmatprep.subr.bf16.mxu0 0
        %4689 = vmatpush1.bf16.msra.mxu0 0
        %4690 = vmatprep.subr.bf16.mxu0 0
        %4691 = vmatpush1.bf16.msra.mxu0 0
        %4692 = vmatprep.subr.bf16.mxu0 0
        %4693 = vmatpush1.bf16.msra.mxu0 0
        %4694 = vmatprep.subr.bf16.mxu0 0
        %4695 = vmatpush1.bf16.msra.mxu0 0
        %4696 = vmatprep.subr.bf16.mxu0 0
        %4697 = vmatpush1.bf16.msra.mxu0 0
        %4698 = vmatprep.mubr.bf16.mxu0 0
        %4699 = vmatmul.mubr.bf16.gmra.mrb[0].mxu0 %v4661
        %v4700 = vpop.f32.mrb[0].mxu0
        %v4701 = vadd.f32 %v4655, %v4700
        %v4702 = vpop.f32.mrb[0].mxu0
        %v4703 = vpop.f32.mrb[0].mxu0
        %v4704 = vpop.f32.mrb[0].mxu0
        %4705 = vdwg.mxu0
        %4706 = vrot.lane.b32.xlu0 %v4390, 112
        %v4707 = vpop.permute.xlu0 %4706
        %4708 = vrot.lane.b32.xlu0 %v4391, 80
        %v4709 = vpop.permute.xlu0 %4708
        %v4711 = vsel %vm892, %v4707, 0
        %v4714 = vsel %vm892, %v4709, 0
        %4716 = vmatprep.subr.bf16.mxu0 0
        %4717 = vmatpush1.bf16.xpose.msra.mxu0 %v4714
        %4718 = vmatprep.subr.bf16.mxu0 0
        %4719 = vmatpush1.bf16.xpose.msra.mxu0 0
        %4720 = vmatprep.subr.bf16.mxu0 0
        %4721 = vmatpush1.bf16.xpose.msra.mxu0 0
        %4722 = vmatprep.subr.bf16.mxu0 0
        %4723 = vmatpush1.bf16.xpose.msra.mxu0 0
        %4724 = vmatprep.subr.bf16.mxu0 0
        %4725 = vmatpush1.bf16.xpose.msra.mxu0 0
        %4726 = vmatprep.subr.bf16.mxu0 0
        %4727 = vmatpush1.bf16.xpose.msra.mxu0 0
        %4728 = vmatprep.subr.bf16.mxu0 0
        %4729 = vmatpush1.bf16.xpose.msra.mxu0 0
        %4730 = vmatprep.subr.bf16.mxu0 0
        %4731 = vmatpush1.bf16.xpose.msra.mxu0 0
        %4732 = vmatprep.subr.bf16.mxu0 0
        %4733 = vmatpush1.bf16.xpose.msra.mxu0 0
        %4734 = vmatprep.subr.bf16.mxu0 0
        %4735 = vmatpush1.bf16.xpose.msra.mxu0 0
        %4736 = vmatprep.subr.bf16.mxu0 0
        %4737 = vmatpush1.bf16.xpose.msra.mxu0 0
        %4738 = vmatprep.subr.bf16.mxu0 0
        %4739 = vmatpush1.bf16.xpose.msra.mxu0 0
        %4740 = vmatprep.subr.bf16.mxu0 0
        %4741 = vmatpush1.bf16.xpose.msra.mxu0 0
        %4742 = vmatprep.subr.bf16.mxu0 0
        %4743 = vmatpush1.bf16.xpose.msra.mxu0 0
        %4744 = vmatprep.subr.bf16.mxu0 0
        %4745 = vmatpush1.bf16.xpose.msra.mxu0 0
        %4746 = vmatprep.subr.bf16.mxu0 0
        %4747 = vmatpush1.bf16.xpose.msra.mxu0 0
        %4748 = vmatprep.mubr.bf16.mxu0 0
        %4749 = vmatmul.mubr.bf16.gmra.mrb[0].mxu0 %v4711
        %v4750 = vpop.f32.mrb[0].mxu0
        %v4751 = vadd.f32 %v812, %v4750
        %v4752 = vpop.f32.mrb[0].mxu0
        %v4753 = vpop.f32.mrb[0].mxu0
        %v4754 = vpop.f32.mrb[0].mxu0
        %4755 = vdwg.mxu0
        %v4756 = vsel %vm892, %v4751, -inf
        %4757 = vmax.xlane.f32.xlu0 %v4756
        %v4758 = vpop.xlane.xlu0 %4757
        %v4759 = vsub.f32 %v4751, %v4758
        %v4760 = vmul.f32 %v4759, 1.442695
        %v4761 = vpow.pop %v4760
        %v4762 = vsel %vm892, %v4761, 0.0
        %4763 = vadd.xlane.f32.xlu0 %v4762
        %v4764 = vpop.xlane.xlu0 %4763
        %v4765 = vrcp.pop %v4764
        %v4766 = vmul.f32 %v4761, %v4765
        %v4767 = vpack.c.bf16 %v4766, %v4766
        %4768 = vrot.lane.b32.xlu0 %v4391, 48
        %v4769 = vpop.permute.xlu0 %4768
        %v4771 = vsel %vm892, %v4767, 0
        %v4774 = vsel %vm956, %v4769, 0
        %4776 = vmatprep.subr.bf16.mxu0 0
        %4777 = vmatpush1.bf16.msra.mxu0 %v4774
        %4778 = vmatprep.subr.bf16.mxu0 0
        %4779 = vmatpush1.bf16.msra.mxu0 0
        %4780 = vmatprep.subr.bf16.mxu0 0
        %4781 = vmatpush1.bf16.msra.mxu0 0
        %4782 = vmatprep.subr.bf16.mxu0 0
        %4783 = vmatpush1.bf16.msra.mxu0 0
        %4784 = vmatprep.subr.bf16.mxu0 0
        %4785 = vmatpush1.bf16.msra.mxu0 0
        %4786 = vmatprep.subr.bf16.mxu0 0
        %4787 = vmatpush1.bf16.msra.mxu0 0
        %4788 = vmatprep.subr.bf16.mxu0 0
        %4789 = vmatpush1.bf16.msra.mxu0 0
        %4790 = vmatprep.subr.bf16.mxu0 0
        %4791 = vmatpush1.bf16.msra.mxu0 0
        %4792 = vmatprep.subr.bf16.mxu0 0
        %4793 = vmatpush1.bf16.msra.mxu0 0
        %4794 = vmatprep.subr.bf16.mxu0 0
        %4795 = vmatpush1.bf16.msra.mxu0 0
        %4796 = vmatprep.subr.bf16.mxu0 0
        %4797 = vmatpush1.bf16.msra.mxu0 0
        %4798 = vmatprep.subr.bf16.mxu0 0
        %4799 = vmatpush1.bf16.msra.mxu0 0
        %4800 = vmatprep.subr.bf16.mxu0 0
        %4801 = vmatpush1.bf16.msra.mxu0 0
        %4802 = vmatprep.subr.bf16.mxu0 0
        %4803 = vmatpush1.bf16.msra.mxu0 0
        %4804 = vmatprep.subr.bf16.mxu0 0
        %4805 = vmatpush1.bf16.msra.mxu0 0
        %4806 = vmatprep.subr.bf16.mxu0 0
        %4807 = vmatpush1.bf16.msra.mxu0 0
        %4808 = vmatprep.mubr.bf16.mxu0 0
        %4809 = vmatmul.mubr.bf16.gmra.mrb[0].mxu0 %v4771
        %v4810 = vpop.f32.mrb[0].mxu0
        %v4811 = vadd.f32 0.0, %v4810
        %v4812 = vpop.f32.mrb[0].mxu0
        %v4813 = vpop.f32.mrb[0].mxu0
        %v4814 = vpop.f32.mrb[0].mxu0
        %4815 = vdwg.mxu0
        %v4816 = vpack.c.bf16 %v4811, %v4811
        %v4818 = vsel %vm892, %v4816, 0
        %v4821 = vsel %vm956, %v4331, 0
        %4823 = vmatprep.subr.bf16.mxu0 0
        %4824 = vmatpush1.bf16.msra.mxu0 %v4821
        %4825 = vmatprep.subr.bf16.mxu0 0
        %4826 = vmatpush1.bf16.msra.mxu0 0
        %4827 = vmatprep.subr.bf16.mxu0 0
        %4828 = vmatpush1.bf16.msra.mxu0 0
        %4829 = vmatprep.subr.bf16.mxu0 0
        %4830 = vmatpush1.bf16.msra.mxu0 0
        %4831 = vmatprep.subr.bf16.mxu0 0
        %4832 = vmatpush1.bf16.msra.mxu0 0
        %4833 = vmatprep.subr.bf16.mxu0 0
        %4834 = vmatpush1.bf16.msra.mxu0 0
        %4835 = vmatprep.subr.bf16.mxu0 0
        %4836 = vmatpush1.bf16.msra.mxu0 0
        %4837 = vmatprep.subr.bf16.mxu0 0
        %4838 = vmatpush1.bf16.msra.mxu0 0
        %4839 = vmatprep.subr.bf16.mxu0 0
        %4840 = vmatpush1.bf16.msra.mxu0 0
        %4841 = vmatprep.subr.bf16.mxu0 0
        %4842 = vmatpush1.bf16.msra.mxu0 0
        %4843 = vmatprep.subr.bf16.mxu0 0
        %4844 = vmatpush1.bf16.msra.mxu0 0
        %4845 = vmatprep.subr.bf16.mxu0 0
        %4846 = vmatpush1.bf16.msra.mxu0 0
        %4847 = vmatprep.subr.bf16.mxu0 0
        %4848 = vmatpush1.bf16.msra.mxu0 0
        %4849 = vmatprep.subr.bf16.mxu0 0
        %4850 = vmatpush1.bf16.msra.mxu0 0
        %4851 = vmatprep.subr.bf16.mxu0 0
        %4852 = vmatpush1.bf16.msra.mxu0 0
        %4853 = vmatprep.subr.bf16.mxu0 0
        %4854 = vmatpush1.bf16.msra.mxu0 0
        %4855 = vmatprep.mubr.bf16.mxu0 0
        %4856 = vmatmul.mubr.bf16.gmra.mrb[0].mxu0 %v4818
        %v4857 = vpop.f32.mrb[0].mxu0
        %v4858 = vadd.f32 0.0, %v4857
        %v4859 = vpop.f32.mrb[0].mxu0
        %v4860 = vpop.f32.mrb[0].mxu0
        %v4861 = vpop.f32.mrb[0].mxu0
        %4862 = vdwg.mxu0
        %v4863 = vadd.f32 %v4701, %v4858
        %4864 = vrot.lane.b32.xlu0 %v4390, 104
        %v4865 = vpop.permute.xlu0 %4864
        %4866 = vrot.lane.b32.xlu0 %v4391, 72
        %v4867 = vpop.permute.xlu0 %4866
        %v4869 = vsel %vm892, %v4865, 0
        %v4872 = vsel %vm892, %v4867, 0
        %4874 = vmatprep.subr.bf16.mxu0 0
        %4875 = vmatpush1.bf16.xpose.msra.mxu0 %v4872
        %4876 = vmatprep.subr.bf16.mxu0 0
        %4877 = vmatpush1.bf16.xpose.msra.mxu0 0
        %4878 = vmatprep.subr.bf16.mxu0 0
        %4879 = vmatpush1.bf16.xpose.msra.mxu0 0
        %4880 = vmatprep.subr.bf16.mxu0 0
        %4881 = vmatpush1.bf16.xpose.msra.mxu0 0
        %4882 = vmatprep.subr.bf16.mxu0 0
        %4883 = vmatpush1.bf16.xpose.msra.mxu0 0
        %4884 = vmatprep.subr.bf16.mxu0 0
        %4885 = vmatpush1.bf16.xpose.msra.mxu0 0
        %4886 = vmatprep.subr.bf16.mxu0 0
        %4887 = vmatpush1.bf16.xpose.msra.mxu0 0
        %4888 = vmatprep.subr.bf16.mxu0 0
        %4889 = vmatpush1.bf16.xpose.msra.mxu0 0
        %4890 = vmatprep.subr.bf16.mxu0 0
        %4891 = vmatpush1.bf16.xpose.msra.mxu0 0
        %4892 = vmatprep.subr.bf16.mxu0 0
        %4893 = vmatpush1.bf16.xpose.msra.mxu0 0
        %4894 = vmatprep.subr.bf16.mxu0 0
        %4895 = vmatpush1.bf16.xpose.msra.mxu0 0
        %4896 = vmatprep.subr.bf16.mxu0 0
        %4897 = vmatpush1.bf16.xpose.msra.mxu0 0
        %4898 = vmatprep.subr.bf16.mxu0 0
        %4899 = vmatpush1.bf16.xpose.msra.mxu0 0
        %4900 = vmatprep.subr.bf16.mxu0 0
        %4901 = vmatpush1.bf16.xpose.msra.mxu0 0
        %4902 = vmatprep.subr.bf16.mxu0 0
        %4903 = vmatpush1.bf16.xpose.msra.mxu0 0
        %4904 = vmatprep.subr.bf16.mxu0 0
        %4905 = vmatpush1.bf16.xpose.msra.mxu0 0
        %4906 = vmatprep.mubr.bf16.mxu0 0
        %4907 = vmatmul.mubr.bf16.gmra.mrb[0].mxu0 %v4869
        %v4908 = vpop.f32.mrb[0].mxu0
        %v4909 = vadd.f32 %v812, %v4908
        %v4910 = vpop.f32.mrb[0].mxu0
        %v4911 = vpop.f32.mrb[0].mxu0
        %v4912 = vpop.f32.mrb[0].mxu0
        %4913 = vdwg.mxu0
        %v4914 = vsel %vm892, %v4909, -inf
        %4915 = vmax.xlane.f32.xlu0 %v4914
        %v4916 = vpop.xlane.xlu0 %4915
        %v4917 = vsub.f32 %v4909, %v4916
        %v4918 = vmul.f32 %v4917, 1.442695
        %v4919 = vpow.pop %v4918
        %v4920 = vsel %vm892, %v4919, 0.0
        %4921 = vadd.xlane.f32.xlu0 %v4920
        %v4922 = vpop.xlane.xlu0 %4921
        %v4923 = vrcp.pop %v4922
        %v4924 = vmul.f32 %v4919, %v4923
        %v4925 = vpack.c.bf16 %v4924, %v4924
        %4926 = vrot.lane.b32.xlu0 %v4391, 40
        %v4927 = vpop.permute.xlu0 %4926
        %v4929 = vsel %vm892, %v4925, 0
        %v4932 = vsel %vm956, %v4927, 0
        %4934 = vmatprep.subr.bf16.mxu0 0
        %4935 = vmatpush1.bf16.msra.mxu0 %v4932
        %4936 = vmatprep.subr.bf16.mxu0 0
        %4937 = vmatpush1.bf16.msra.mxu0 0
        %4938 = vmatprep.subr.bf16.mxu0 0
        %4939 = vmatpush1.bf16.msra.mxu0 0
        %4940 = vmatprep.subr.bf16.mxu0 0
        %4941 = vmatpush1.bf16.msra.mxu0 0
        %4942 = vmatprep.subr.bf16.mxu0 0
        %4943 = vmatpush1.bf16.msra.mxu0 0
        %4944 = vmatprep.subr.bf16.mxu0 0
        %4945 = vmatpush1.bf16.msra.mxu0 0
        %4946 = vmatprep.subr.bf16.mxu0 0
        %4947 = vmatpush1.bf16.msra.mxu0 0
        %4948 = vmatprep.subr.bf16.mxu0 0
        %4949 = vmatpush1.bf16.msra.mxu0 0
        %4950 = vmatprep.subr.bf16.mxu0 0
        %4951 = vmatpush1.bf16.msra.mxu0 0
        %4952 = vmatprep.subr.bf16.mxu0 0
        %4953 = vmatpush1.bf16.msra.mxu0 0
        %4954 = vmatprep.subr.bf16.mxu0 0
        %4955 = vmatpush1.bf16.msra.mxu0 0
        %4956 = vmatprep.subr.bf16.mxu0 0
        %4957 = vmatpush1.bf16.msra.mxu0 0
        %4958 = vmatprep.subr.bf16.mxu0 0
        %4959 = vmatpush1.bf16.msra.mxu0 0
        %4960 = vmatprep.subr.bf16.mxu0 0
        %4961 = vmatpush1.bf16.msra.mxu0 0
        %4962 = vmatprep.subr.bf16.mxu0 0
        %4963 = vmatpush1.bf16.msra.mxu0 0
        %4964 = vmatprep.subr.bf16.mxu0 0
        %4965 = vmatpush1.bf16.msra.mxu0 0
        %4966 = vmatprep.mubr.bf16.mxu0 0
        %4967 = vmatmul.mubr.bf16.gmra.mrb[0].mxu0 %v4929
        %v4968 = vpop.f32.mrb[0].mxu0
        %v4969 = vadd.f32 0.0, %v4968
        %v4970 = vpop.f32.mrb[0].mxu0
        %v4971 = vpop.f32.mrb[0].mxu0
        %v4972 = vpop.f32.mrb[0].mxu0
        %4973 = vdwg.mxu0
        %v4974 = vpack.c.bf16 %v4969, %v4969
        %v4976 = vsel %vm892, %v4974, 0
        %v4979 = vsel %vm956, %v4332, 0
        %4981 = vmatprep.subr.bf16.mxu0 0
        %4982 = vmatpush1.bf16.msra.mxu0 %v4979
        %4983 = vmatprep.subr.bf16.mxu0 0
        %4984 = vmatpush1.bf16.msra.mxu0 0
        %4985 = vmatprep.subr.bf16.mxu0 0
        %4986 = vmatpush1.bf16.msra.mxu0 0
        %4987 = vmatprep.subr.bf16.mxu0 0
        %4988 = vmatpush1.bf16.msra.mxu0 0
        %4989 = vmatprep.subr.bf16.mxu0 0
        %4990 = vmatpush1.bf16.msra.mxu0 0
        %4991 = vmatprep.subr.bf16.mxu0 0
        %4992 = vmatpush1.bf16.msra.mxu0 0
        %4993 = vmatprep.subr.bf16.mxu0 0
        %4994 = vmatpush1.bf16.msra.mxu0 0
        %4995 = vmatprep.subr.bf16.mxu0 0
        %4996 = vmatpush1.bf16.msra.mxu0 0
        %4997 = vmatprep.subr.bf16.mxu0 0
        %4998 = vmatpush1.bf16.msra.mxu0 0
        %4999 = vmatprep.subr.bf16.mxu0 0
        %5000 = vmatpush1.bf16.msra.mxu0 0
        %5001 = vmatprep.subr.bf16.mxu0 0
        %5002 = vmatpush1.bf16.msra.mxu0 0
        %5003 = vmatprep.subr.bf16.mxu0 0
        %5004 = vmatpush1.bf16.msra.mxu0 0
        %5005 = vmatprep.subr.bf16.mxu0 0
        %5006 = vmatpush1.bf16.msra.mxu0 0
        %5007 = vmatprep.subr.bf16.mxu0 0
        %5008 = vmatpush1.bf16.msra.mxu0 0
        %5009 = vmatprep.subr.bf16.mxu0 0
        %5010 = vmatpush1.bf16.msra.mxu0 0
        %5011 = vmatprep.subr.bf16.mxu0 0
        %5012 = vmatpush1.bf16.msra.mxu0 0
        %5013 = vmatprep.mubr.bf16.mxu0 0
        %5014 = vmatmul.mubr.bf16.gmra.mrb[0].mxu0 %v4976
        %v5015 = vpop.f32.mrb[0].mxu0
        %v5016 = vadd.f32 0.0, %v5015
        %v5017 = vpop.f32.mrb[0].mxu0
        %v5018 = vpop.f32.mrb[0].mxu0
        %v5019 = vpop.f32.mrb[0].mxu0
        %5020 = vdwg.mxu0
        %v5021 = vadd.f32 %v4863, %v5016
        %v5022 = vadd.f32 %v4318, %v5021
        %v5023 = vsel %vm836, %v5022, 0.0
        %5024 = vadd.xlane.f32.xlu0 %v5023
        %v5025 = vpop.xlane.xlu0 %5024
        %v5026 = vmul.f32 %v5025, %v1525
        %v5027 = vmul.f32 %v5022, %v5022
        %v5028 = vsel %vm836, %v5027, 0.0
        %5029 = vadd.xlane.f32.xlu0 %v5028
        %v5030 = vpop.xlane.xlu0 %5029
        %v5031 = vmul.f32 %v5030, %v1525
        %v5032 = vmul.f32 %v5026, %v5026
        %v5033 = vsub.f32 %v5031, %v5032
        %v5034 = vsub.f32 %v5022, %v5026
        %v5035 = vadd.f32 %v5033, 1e-05
        %v5036 = vrsqrt.pop %v5035
        %v5037 = vmul.f32 %v5034, %v5036
        %v5038 = vlaneseq
        %v5039 = vshrl.u32 %v5038, 7
        %v5040 = vsub.s32 0, %v5039
        %v5041 = vrot.slane %v4320, %v5040
        %v5042 = vmul.f32 %v5037, %v5041
        %v5043 = vlaneseq
        %v5044 = vshrl.u32 %v5043, 7
        %v5045 = vsub.s32 0, %v5044
        %v5046 = vrot.slane %v4322, %v5045
        %v5047 = vadd.f32 %v5042, %v5046
        %s5048 = scalar_lea.vmem %s14, 16
        %v5049 = vld [vmem:[%s5048] sm:$0xf]
        %v5050 = vld [vmem:[%s5048 + $0x4] sm:$0xf]
        %v5051 = vld [vmem:[%s5048 + $0x8] sm:$0xf]
        %v5052 = vld [vmem:[%s5048 + $0xc] sm:$0xf]
        %s5053 = scalar_lea.vmem %s15, 16
        %v5054 = vld [vmem:[%s5053] sm:$0xf]
        %v5055 = vld [vmem:[%s5053 + $0x4] sm:$0xf]
        %v5056 = vld [vmem:[%s5053 + $0x8] sm:$0xf]
        %v5057 = vld [vmem:[%s5053 + $0xc] sm:$0xf]
        %s5058 = scalar_lea.vmem %s16, 16
        %v5059 = vld [vmem:[%s5058] sm:$0xf]
        %v5060 = vld [vmem:[%s5058 + $0x4] sm:$0xf]
        %v5061 = vld [vmem:[%s5058 + $0x8] sm:$0xf]
        %v5062 = vld [vmem:[%s5058 + $0xc] sm:$0xf]
        %v5063 = vpack.c.bf16 %v5047, %v5047
        %v5068 = vunpack.c.l.b16 %v5049
        %v5069 = vunpack.c.l.b16 %v5050
        %v5070 = vunpack.c.l.b16 %v5051
        %v5071 = vunpack.c.l.b16 %v5052
        %v5072 = vpack.c.b16 %v5069, %v5068
        %v5073 = vpack.c.b16 %v5071, %v5070
        %v5077 = vsel %vm836, %v5063, 0
        %5079 = vmatprep.subr.bf16.mxu0 0
        %5080 = vmatpush1.bf16.msra.mxu0 %v5072
        %5081 = vmatprep.subr.bf16.mxu0 0
        %5082 = vmatpush1.bf16.msra.mxu0 %v5073
        %5083 = vmatprep.subr.bf16.mxu0 0
        %5084 = vmatpush1.bf16.msra.mxu0 0
        %5085 = vmatprep.subr.bf16.mxu0 0
        %5086 = vmatpush1.bf16.msra.mxu0 0
        %5087 = vmatprep.subr.bf16.mxu0 0
        %5088 = vmatpush1.bf16.msra.mxu0 0
        %5089 = vmatprep.subr.bf16.mxu0 0
        %5090 = vmatpush1.bf16.msra.mxu0 0
        %5091 = vmatprep.subr.bf16.mxu0 0
        %5092 = vmatpush1.bf16.msra.mxu0 0
        %5093 = vmatprep.subr.bf16.mxu0 0
        %5094 = vmatpush1.bf16.msra.mxu0 0
        %5095 = vmatprep.subr.bf16.mxu0 0
        %5096 = vmatpush1.bf16.msra.mxu0 0
        %5097 = vmatprep.subr.bf16.mxu0 0
        %5098 = vmatpush1.bf16.msra.mxu0 0
        %5099 = vmatprep.subr.bf16.mxu0 0
        %5100 = vmatpush1.bf16.msra.mxu0 0
        %5101 = vmatprep.subr.bf16.mxu0 0
        %5102 = vmatpush1.bf16.msra.mxu0 0
        %5103 = vmatprep.subr.bf16.mxu0 0
        %5104 = vmatpush1.bf16.msra.mxu0 0
        %5105 = vmatprep.subr.bf16.mxu0 0
        %5106 = vmatpush1.bf16.msra.mxu0 0
        %5107 = vmatprep.subr.bf16.mxu0 0
        %5108 = vmatpush1.bf16.msra.mxu0 0
        %5109 = vmatprep.subr.bf16.mxu0 0
        %5110 = vmatpush1.bf16.msra.mxu0 0
        %5111 = vmatprep.mubr.bf16.mxu0 0
        %5112 = vmatmul.mubr.bf16.gmra.mrb[0].mxu0 %v5077
        %v5113 = vpop.f32.mrb[0].mxu0
        %v5114 = vadd.f32 0.0, %v5113
        %v5115 = vpop.f32.mrb[0].mxu0
        %v5116 = vpop.f32.mrb[0].mxu0
        %v5117 = vpop.f32.mrb[0].mxu0
        %5118 = vdwg.mxu0
        %v5119 = vmul.f32 %v5114, 0.35355338
        %v5124 = vunpack.c.l.b16 %v5054
        %v5125 = vunpack.c.l.b16 %v5055
        %v5126 = vunpack.c.l.b16 %v5056
        %v5127 = vunpack.c.l.b16 %v5057
        %v5128 = vpack.c.b16 %v5125, %v5124
        %v5129 = vpack.c.b16 %v5127, %v5126
        %5132 = vmatprep.subr.bf16.mxu0 0
        %5133 = vmatpush1.bf16.msra.mxu0 %v5128
        %5134 = vmatprep.subr.bf16.mxu0 0
        %5135 = vmatpush1.bf16.msra.mxu0 %v5129
        %5136 = vmatprep.subr.bf16.mxu0 0
        %5137 = vmatpush1.bf16.msra.mxu0 0
        %5138 = vmatprep.subr.bf16.mxu0 0
        %5139 = vmatpush1.bf16.msra.mxu0 0
        %5140 = vmatprep.subr.bf16.mxu0 0
        %5141 = vmatpush1.bf16.msra.mxu0 0
        %5142 = vmatprep.subr.bf16.mxu0 0
        %5143 = vmatpush1.bf16.msra.mxu0 0
        %5144 = vmatprep.subr.bf16.mxu0 0
        %5145 = vmatpush1.bf16.msra.mxu0 0
        %5146 = vmatprep.subr.bf16.mxu0 0
        %5147 = vmatpush1.bf16.msra.mxu0 0
        %5148 = vmatprep.subr.bf16.mxu0 0
        %5149 = vmatpush1.bf16.msra.mxu0 0
        %5150 = vmatprep.subr.bf16.mxu0 0
        %5151 = vmatpush1.bf16.msra.mxu0 0
        %5152 = vmatprep.subr.bf16.mxu0 0
        %5153 = vmatpush1.bf16.msra.mxu0 0
        %5154 = vmatprep.subr.bf16.mxu0 0
        %5155 = vmatpush1.bf16.msra.mxu0 0
        %5156 = vmatprep.subr.bf16.mxu0 0
        %5157 = vmatpush1.bf16.msra.mxu0 0
        %5158 = vmatprep.subr.bf16.mxu0 0
        %5159 = vmatpush1.bf16.msra.mxu0 0
        %5160 = vmatprep.subr.bf16.mxu0 0
        %5161 = vmatpush1.bf16.msra.mxu0 0
        %5162 = vmatprep.subr.bf16.mxu0 0
        %5163 = vmatpush1.bf16.msra.mxu0 0
        %5164 = vmatprep.mubr.bf16.mxu0 0
        %5165 = vmatmul.mubr.bf16.gmra.mrb[0].mxu0 %v3444
        %v5166 = vpop.f32.mrb[0].mxu0
        %v5167 = vadd.f32 0.0, %v5166
        %v5168 = vpop.f32.mrb[0].mxu0
        %v5169 = vpop.f32.mrb[0].mxu0
        %v5170 = vpop.f32.mrb[0].mxu0
        %5171 = vdwg.mxu0
        %v5172 = vpack.c.bf16 %v5119, %v5119
        %v5173 = vpack.c.bf16 %v5167, %v5167
        %v5175 = vsel %vm892, %v5172, 0
        %v5178 = vsel %vm892, %v5173, 0
        %5180 = vmatprep.subr.bf16.mxu0 0
        %5181 = vmatpush1.bf16.xpose.msra.mxu0 %v5178
        %5182 = vmatprep.subr.bf16.mxu0 0
        %5183 = vmatpush1.bf16.xpose.msra.mxu0 0
        %5184 = vmatprep.subr.bf16.mxu0 0
        %5185 = vmatpush1.bf16.xpose.msra.mxu0 0
        %5186 = vmatprep.subr.bf16.mxu0 0
        %5187 = vmatpush1.bf16.xpose.msra.mxu0 0
        %5188 = vmatprep.subr.bf16.mxu0 0
        %5189 = vmatpush1.bf16.xpose.msra.mxu0 0
        %5190 = vmatprep.subr.bf16.mxu0 0
        %5191 = vmatpush1.bf16.xpose.msra.mxu0 0
        %5192 = vmatprep.subr.bf16.mxu0 0
        %5193 = vmatpush1.bf16.xpose.msra.mxu0 0
        %5194 = vmatprep.subr.bf16.mxu0 0
        %5195 = vmatpush1.bf16.xpose.msra.mxu0 0
        %5196 = vmatprep.subr.bf16.mxu0 0
        %5197 = vmatpush1.bf16.xpose.msra.mxu0 0
        %5198 = vmatprep.subr.bf16.mxu0 0
        %5199 = vmatpush1.bf16.xpose.msra.mxu0 0
        %5200 = vmatprep.subr.bf16.mxu0 0
        %5201 = vmatpush1.bf16.xpose.msra.mxu0 0
        %5202 = vmatprep.subr.bf16.mxu0 0
        %5203 = vmatpush1.bf16.xpose.msra.mxu0 0
        %5204 = vmatprep.subr.bf16.mxu0 0
        %5205 = vmatpush1.bf16.xpose.msra.mxu0 0
        %5206 = vmatprep.subr.bf16.mxu0 0
        %5207 = vmatpush1.bf16.xpose.msra.mxu0 0
        %5208 = vmatprep.subr.bf16.mxu0 0
        %5209 = vmatpush1.bf16.xpose.msra.mxu0 0
        %5210 = vmatprep.subr.bf16.mxu0 0
        %5211 = vmatpush1.bf16.xpose.msra.mxu0 0
        %5212 = vmatprep.mubr.bf16.mxu0 0
        %5213 = vmatmul.mubr.bf16.gmra.mrb[0].mxu0 %v5175
        %v5214 = vpop.f32.mrb[0].mxu0
        %v5215 = vadd.f32 %v887, %v5214
        %v5216 = vpop.f32.mrb[0].mxu0
        %v5217 = vpop.f32.mrb[0].mxu0
        %v5218 = vpop.f32.mrb[0].mxu0
        %5219 = vdwg.mxu0
        %v5220 = vsel %vm892, %v5215, -inf
        %5221 = vmax.xlane.f32.xlu0 %v5220
        %v5222 = vpop.xlane.xlu0 %5221
        %v5223 = vsub.f32 %v5215, %v5222
        %v5224 = vmul.f32 %v5223, 1.442695
        %v5225 = vpow.pop %v5224
        %v5226 = vsel %vm892, %v5225, 0.0
        %5227 = vadd.xlane.f32.xlu0 %v5226
        %v5228 = vpop.xlane.xlu0 %5227
        %v5229 = vrcp.pop %v5228
        %v5230 = vmul.f32 %v5225, %v5229
        %v5231 = vpack.c.bf16 %v5230, %v5230
        %5233 = vrot.lane.b32.xlu0 %v5173, 96
        %v5234 = vpop.permute.xlu0 %5233
        %v5236 = vsel %vm892, %v5231, 0
        %v5239 = vsel %vm956, %v5234, 0
        %5241 = vmatprep.subr.bf16.mxu0 0
        %5242 = vmatpush1.bf16.msra.mxu0 %v5239
        %5243 = vmatprep.subr.bf16.mxu0 0
        %5244 = vmatpush1.bf16.msra.mxu0 0
        %5245 = vmatprep.subr.bf16.mxu0 0
        %5246 = vmatpush1.bf16.msra.mxu0 0
        %5247 = vmatprep.subr.bf16.mxu0 0
        %5248 = vmatpush1.bf16.msra.mxu0 0
        %5249 = vmatprep.subr.bf16.mxu0 0
        %5250 = vmatpush1.bf16.msra.mxu0 0
        %5251 = vmatprep.subr.bf16.mxu0 0
        %5252 = vmatpush1.bf16.msra.mxu0 0
        %5253 = vmatprep.subr.bf16.mxu0 0
        %5254 = vmatpush1.bf16.msra.mxu0 0
        %5255 = vmatprep.subr.bf16.mxu0 0
        %5256 = vmatpush1.bf16.msra.mxu0 0
        %5257 = vmatprep.subr.bf16.mxu0 0
        %5258 = vmatpush1.bf16.msra.mxu0 0
        %5259 = vmatprep.subr.bf16.mxu0 0
        %5260 = vmatpush1.bf16.msra.mxu0 0
        %5261 = vmatprep.subr.bf16.mxu0 0
        %5262 = vmatpush1.bf16.msra.mxu0 0
        %5263 = vmatprep.subr.bf16.mxu0 0
        %5264 = vmatpush1.bf16.msra.mxu0 0
        %5265 = vmatprep.subr.bf16.mxu0 0
        %5266 = vmatpush1.bf16.msra.mxu0 0
        %5267 = vmatprep.subr.bf16.mxu0 0
        %5268 = vmatpush1.bf16.msra.mxu0 0
        %5269 = vmatprep.subr.bf16.mxu0 0
        %5270 = vmatpush1.bf16.msra.mxu0 0
        %5271 = vmatprep.subr.bf16.mxu0 0
        %5272 = vmatpush1.bf16.msra.mxu0 0
        %5273 = vmatprep.mubr.bf16.mxu0 0
        %5274 = vmatmul.mubr.bf16.gmra.mrb[0].mxu0 %v5236
        %v5275 = vpop.f32.mrb[0].mxu0
        %v5276 = vadd.f32 0.0, %v5275
        %v5277 = vpop.f32.mrb[0].mxu0
        %v5278 = vpop.f32.mrb[0].mxu0
        %v5279 = vpop.f32.mrb[0].mxu0
        %5280 = vdwg.mxu0
        %v5281 = vpack.c.bf16 %v5276, %v5276
        %5283 = vrot.lane.b32.xlu0 %v5172, 120
        %v5284 = vpop.permute.xlu0 %5283
        %5285 = vrot.lane.b32.xlu0 %v5173, 120
        %v5286 = vpop.permute.xlu0 %5285
        %v5288 = vsel %vm892, %v5284, 0
        %v5291 = vsel %vm892, %v5286, 0
        %5293 = vmatprep.subr.bf16.mxu0 0
        %5294 = vmatpush1.bf16.xpose.msra.mxu0 %v5291
        %5295 = vmatprep.subr.bf16.mxu0 0
        %5296 = vmatpush1.bf16.xpose.msra.mxu0 0
        %5297 = vmatprep.subr.bf16.mxu0 0
        %5298 = vmatpush1.bf16.xpose.msra.mxu0 0
        %5299 = vmatprep.subr.bf16.mxu0 0
        %5300 = vmatpush1.bf16.xpose.msra.mxu0 0
        %5301 = vmatprep.subr.bf16.mxu0 0
        %5302 = vmatpush1.bf16.xpose.msra.mxu0 0
        %5303 = vmatprep.subr.bf16.mxu0 0
        %5304 = vmatpush1.bf16.xpose.msra.mxu0 0
        %5305 = vmatprep.subr.bf16.mxu0 0
        %5306 = vmatpush1.bf16.xpose.msra.mxu0 0
        %5307 = vmatprep.subr.bf16.mxu0 0
        %5308 = vmatpush1.bf16.xpose.msra.mxu0 0
        %5309 = vmatprep.subr.bf16.mxu0 0
        %5310 = vmatpush1.bf16.xpose.msra.mxu0 0
        %5311 = vmatprep.subr.bf16.mxu0 0
        %5312 = vmatpush1.bf16.xpose.msra.mxu0 0
        %5313 = vmatprep.subr.bf16.mxu0 0
        %5314 = vmatpush1.bf16.xpose.msra.mxu0 0
        %5315 = vmatprep.subr.bf16.mxu0 0
        %5316 = vmatpush1.bf16.xpose.msra.mxu0 0
        %5317 = vmatprep.subr.bf16.mxu0 0
        %5318 = vmatpush1.bf16.xpose.msra.mxu0 0
        %5319 = vmatprep.subr.bf16.mxu0 0
        %5320 = vmatpush1.bf16.xpose.msra.mxu0 0
        %5321 = vmatprep.subr.bf16.mxu0 0
        %5322 = vmatpush1.bf16.xpose.msra.mxu0 0
        %5323 = vmatprep.subr.bf16.mxu0 0
        %5324 = vmatpush1.bf16.xpose.msra.mxu0 0
        %5325 = vmatprep.mubr.bf16.mxu0 0
        %5326 = vmatmul.mubr.bf16.gmra.mrb[0].mxu0 %v5288
        %v5327 = vpop.f32.mrb[0].mxu0
        %v5328 = vadd.f32 %v887, %v5327
        %v5329 = vpop.f32.mrb[0].mxu0
        %v5330 = vpop.f32.mrb[0].mxu0
        %v5331 = vpop.f32.mrb[0].mxu0
        %5332 = vdwg.mxu0
        %v5333 = vsel %vm892, %v5328, -inf
        %5334 = vmax.xlane.f32.xlu0 %v5333
        %v5335 = vpop.xlane.xlu0 %5334
        %v5336 = vsub.f32 %v5328, %v5335
        %v5337 = vmul.f32 %v5336, 1.442695
        %v5338 = vpow.pop %v5337
        %v5339 = vsel %vm892, %v5338, 0.0
        %5340 = vadd.xlane.f32.xlu0 %v5339
        %v5341 = vpop.xlane.xlu0 %5340
        %v5342 = vrcp.pop %v5341
        %v5343 = vmul.f32 %v5338, %v5342
        %v5344 = vpack.c.bf16 %v5343, %v5343
        %5345 = vrot.lane.b32.xlu0 %v5173, 88
        %v5346 = vpop.permute.xlu0 %5345
        %v5348 = vsel %vm892, %v5344, 0
        %v5351 = vsel %vm956, %v5346, 0
        %5353 = vmatprep.subr.bf16.mxu0 0
        %5354 = vmatpush1.bf16.msra.mxu0 %v5351
        %5355 = vmatprep.subr.bf16.mxu0 0
        %5356 = vmatpush1.bf16.msra.mxu0 0
        %5357 = vmatprep.subr.bf16.mxu0 0
        %5358 = vmatpush1.bf16.msra.mxu0 0
        %5359 = vmatprep.subr.bf16.mxu0 0
        %5360 = vmatpush1.bf16.msra.mxu0 0
        %5361 = vmatprep.subr.bf16.mxu0 0
        %5362 = vmatpush1.bf16.msra.mxu0 0
        %5363 = vmatprep.subr.bf16.mxu0 0
        %5364 = vmatpush1.bf16.msra.mxu0 0
        %5365 = vmatprep.subr.bf16.mxu0 0
        %5366 = vmatpush1.bf16.msra.mxu0 0
        %5367 = vmatprep.subr.bf16.mxu0 0
        %5368 = vmatpush1.bf16.msra.mxu0 0
        %5369 = vmatprep.subr.bf16.mxu0 0
        %5370 = vmatpush1.bf16.msra.mxu0 0
        %5371 = vmatprep.subr.bf16.mxu0 0
        %5372 = vmatpush1.bf16.msra.mxu0 0
        %5373 = vmatprep.subr.bf16.mxu0 0
        %5374 = vmatpush1.bf16.msra.mxu0 0
        %5375 = vmatprep.subr.bf16.mxu0 0
        %5376 = vmatpush1.bf16.msra.mxu0 0
        %5377 = vmatprep.subr.bf16.mxu0 0
        %5378 = vmatpush1.bf16.msra.mxu0 0
        %5379 = vmatprep.subr.bf16.mxu0 0
        %5380 = vmatpush1.bf16.msra.mxu0 0
        %5381 = vmatprep.subr.bf16.mxu0 0
        %5382 = vmatpush1.bf16.msra.mxu0 0
        %5383 = vmatprep.subr.bf16.mxu0 0
        %5384 = vmatpush1.bf16.msra.mxu0 0
        %5385 = vmatprep.mubr.bf16.mxu0 0
        %5386 = vmatmul.mubr.bf16.gmra.mrb[0].mxu0 %v5348
        %v5387 = vpop.f32.mrb[0].mxu0
        %v5388 = vadd.f32 0.0, %v5387
        %v5389 = vpop.f32.mrb[0].mxu0
        %v5390 = vpop.f32.mrb[0].mxu0
        %v5391 = vpop.f32.mrb[0].mxu0
        %5392 = vdwg.mxu0
        %v5393 = vpack.c.bf16 %v5388, %v5388
        %v5395 = vsel %vm892, %v5393, 0
        %v5398 = vsel %vm956, %v5060, 0
        %5400 = vmatprep.subr.bf16.mxu0 0
        %5401 = vmatpush1.bf16.msra.mxu0 %v5398
        %5402 = vmatprep.subr.bf16.mxu0 0
        %5403 = vmatpush1.bf16.msra.mxu0 0
        %5404 = vmatprep.subr.bf16.mxu0 0
        %5405 = vmatpush1.bf16.msra.mxu0 0
        %5406 = vmatprep.subr.bf16.mxu0 0
        %5407 = vmatpush1.bf16.msra.mxu0 0
        %5408 = vmatprep.subr.bf16.mxu0 0
        %5409 = vmatpush1.bf16.msra.mxu0 0
        %5410 = vmatprep.subr.bf16.mxu0 0
        %5411 = vmatpush1.bf16.msra.mxu0 0
        %5412 = vmatprep.subr.bf16.mxu0 0
        %5413 = vmatpush1.bf16.msra.mxu0 0
        %5414 = vmatprep.subr.bf16.mxu0 0
        %5415 = vmatpush1.bf16.msra.mxu0 0
        %5416 = vmatprep.subr.bf16.mxu0 0
        %5417 = vmatpush1.bf16.msra.mxu0 0
        %5418 = vmatprep.subr.bf16.mxu0 0
        %5419 = vmatpush1.bf16.msra.mxu0 0
        %5420 = vmatprep.subr.bf16.mxu0 0
        %5421 = vmatpush1.bf16.msra.mxu0 0
        %5422 = vmatprep.subr.bf16.mxu0 0
        %5423 = vmatpush1.bf16.msra.mxu0 0
        %5424 = vmatprep.subr.bf16.mxu0 0
        %5425 = vmatpush1.bf16.msra.mxu0 0
        %5426 = vmatprep.subr.bf16.mxu0 0
        %5427 = vmatpush1.bf16.msra.mxu0 0
        %5428 = vmatprep.subr.bf16.mxu0 0
        %5429 = vmatpush1.bf16.msra.mxu0 0
        %5430 = vmatprep.subr.bf16.mxu0 0
        %5431 = vmatpush1.bf16.msra.mxu0 0
        %5432 = vmatprep.mubr.bf16.mxu0 0
        %5433 = vmatmul.mubr.bf16.gmra.mrb[0].mxu0 %v5395
        %v5434 = vpop.f32.mrb[0].mxu0
        %v5435 = vadd.f32 0.0, %v5434
        %v5436 = vpop.f32.mrb[0].mxu0
        %v5437 = vpop.f32.mrb[0].mxu0
        %v5438 = vpop.f32.mrb[0].mxu0
        %5439 = vdwg.mxu0
        %v5441 = vsel %vm892, %v5281, 0
        %v5444 = vsel %vm956, %v5059, 0
        %5446 = vmatprep.subr.bf16.mxu0 0
        %5447 = vmatpush1.bf16.msra.mxu0 %v5444
        %5448 = vmatprep.subr.bf16.mxu0 0
        %5449 = vmatpush1.bf16.msra.mxu0 0
        %5450 = vmatprep.subr.bf16.mxu0 0
        %5451 = vmatpush1.bf16.msra.mxu0 0
        %5452 = vmatprep.subr.bf16.mxu0 0
        %5453 = vmatpush1.bf16.msra.mxu0 0
        %5454 = vmatprep.subr.bf16.mxu0 0
        %5455 = vmatpush1.bf16.msra.mxu0 0
        %5456 = vmatprep.subr.bf16.mxu0 0
        %5457 = vmatpush1.bf16.msra.mxu0 0
        %5458 = vmatprep.subr.bf16.mxu0 0
        %5459 = vmatpush1.bf16.msra.mxu0 0
        %5460 = vmatprep.subr.bf16.mxu0 0
        %5461 = vmatpush1.bf16.msra.mxu0 0
        %5462 = vmatprep.subr.bf16.mxu0 0
        %5463 = vmatpush1.bf16.msra.mxu0 0
        %5464 = vmatprep.subr.bf16.mxu0 0
        %5465 = vmatpush1.bf16.msra.mxu0 0
        %5466 = vmatprep.subr.bf16.mxu0 0
        %5467 = vmatpush1.bf16.msra.mxu0 0
        %5468 = vmatprep.subr.bf16.mxu0 0
        %5469 = vmatpush1.bf16.msra.mxu0 0
        %5470 = vmatprep.subr.bf16.mxu0 0
        %5471 = vmatpush1.bf16.msra.mxu0 0
        %5472 = vmatprep.subr.bf16.mxu0 0
        %5473 = vmatpush1.bf16.msra.mxu0 0
        %5474 = vmatprep.subr.bf16.mxu0 0
        %5475 = vmatpush1.bf16.msra.mxu0 0
        %5476 = vmatprep.subr.bf16.mxu0 0
        %5477 = vmatpush1.bf16.msra.mxu0 0
        %5478 = vmatprep.mubr.bf16.mxu0 0
        %5479 = vmatmul.mubr.bf16.gmra.mrb[0].mxu0 %v5441
        %v5480 = vpop.f32.mrb[0].mxu0
        %v5481 = vadd.f32 %v5435, %v5480
        %v5482 = vpop.f32.mrb[0].mxu0
        %v5483 = vpop.f32.mrb[0].mxu0
        %v5484 = vpop.f32.mrb[0].mxu0
        %5485 = vdwg.mxu0
        %5486 = vrot.lane.b32.xlu0 %v5172, 112
        %v5487 = vpop.permute.xlu0 %5486
        %5488 = vrot.lane.b32.xlu0 %v5173, 112
        %v5489 = vpop.permute.xlu0 %5488
        %v5491 = vsel %vm892, %v5487, 0
        %v5494 = vsel %vm892, %v5489, 0
        %5496 = vmatprep.subr.bf16.mxu0 0
        %5497 = vmatpush1.bf16.xpose.msra.mxu0 %v5494
        %5498 = vmatprep.subr.bf16.mxu0 0
        %5499 = vmatpush1.bf16.xpose.msra.mxu0 0
        %5500 = vmatprep.subr.bf16.mxu0 0
        %5501 = vmatpush1.bf16.xpose.msra.mxu0 0
        %5502 = vmatprep.subr.bf16.mxu0 0
        %5503 = vmatpush1.bf16.xpose.msra.mxu0 0
        %5504 = vmatprep.subr.bf16.mxu0 0
        %5505 = vmatpush1.bf16.xpose.msra.mxu0 0
        %5506 = vmatprep.subr.bf16.mxu0 0
        %5507 = vmatpush1.bf16.xpose.msra.mxu0 0
        %5508 = vmatprep.subr.bf16.mxu0 0
        %5509 = vmatpush1.bf16.xpose.msra.mxu0 0
        %5510 = vmatprep.subr.bf16.mxu0 0
        %5511 = vmatpush1.bf16.xpose.msra.mxu0 0
        %5512 = vmatprep.subr.bf16.mxu0 0
        %5513 = vmatpush1.bf16.xpose.msra.mxu0 0
        %5514 = vmatprep.subr.bf16.mxu0 0
        %5515 = vmatpush1.bf16.xpose.msra.mxu0 0
        %5516 = vmatprep.subr.bf16.mxu0 0
        %5517 = vmatpush1.bf16.xpose.msra.mxu0 0
        %5518 = vmatprep.subr.bf16.mxu0 0
        %5519 = vmatpush1.bf16.xpose.msra.mxu0 0
        %5520 = vmatprep.subr.bf16.mxu0 0
        %5521 = vmatpush1.bf16.xpose.msra.mxu0 0
        %5522 = vmatprep.subr.bf16.mxu0 0
        %5523 = vmatpush1.bf16.xpose.msra.mxu0 0
        %5524 = vmatprep.subr.bf16.mxu0 0
        %5525 = vmatpush1.bf16.xpose.msra.mxu0 0
        %5526 = vmatprep.subr.bf16.mxu0 0
        %5527 = vmatpush1.bf16.xpose.msra.mxu0 0
        %5528 = vmatprep.mubr.bf16.mxu0 0
        %5529 = vmatmul.mubr.bf16.gmra.mrb[0].mxu0 %v5491
        %v5530 = vpop.f32.mrb[0].mxu0
        %v5531 = vadd.f32 %v887, %v5530
        %v5532 = vpop.f32.mrb[0].mxu0
        %v5533 = vpop.f32.mrb[0].mxu0
        %v5534 = vpop.f32.mrb[0].mxu0
        %5535 = vdwg.mxu0
        %v5536 = vsel %vm892, %v5531, -inf
        %5537 = vmax.xlane.f32.xlu0 %v5536
        %v5538 = vpop.xlane.xlu0 %5537
        %v5539 = vsub.f32 %v5531, %v5538
        %v5540 = vmul.f32 %v5539, 1.442695
        %v5541 = vpow.pop %v5540
        %v5542 = vsel %vm892, %v5541, 0.0
        %5543 = vadd.xlane.f32.xlu0 %v5542
        %v5544 = vpop.xlane.xlu0 %5543
        %v5545 = vrcp.pop %v5544
        %v5546 = vmul.f32 %v5541, %v5545
        %v5547 = vpack.c.bf16 %v5546, %v5546
        %5548 = vrot.lane.b32.xlu0 %v5173, 80
        %v5549 = vpop.permute.xlu0 %5548
        %v5551 = vsel %vm892, %v5547, 0
        %v5554 = vsel %vm956, %v5549, 0
        %5556 = vmatprep.subr.bf16.mxu0 0
        %5557 = vmatpush1.bf16.msra.mxu0 %v5554
        %5558 = vmatprep.subr.bf16.mxu0 0
        %5559 = vmatpush1.bf16.msra.mxu0 0
        %5560 = vmatprep.subr.bf16.mxu0 0
        %5561 = vmatpush1.bf16.msra.mxu0 0
        %5562 = vmatprep.subr.bf16.mxu0 0
        %5563 = vmatpush1.bf16.msra.mxu0 0
        %5564 = vmatprep.subr.bf16.mxu0 0
        %5565 = vmatpush1.bf16.msra.mxu0 0
        %5566 = vmatprep.subr.bf16.mxu0 0
        %5567 = vmatpush1.bf16.msra.mxu0 0
        %5568 = vmatprep.subr.bf16.mxu0 0
        %5569 = vmatpush1.bf16.msra.mxu0 0
        %5570 = vmatprep.subr.bf16.mxu0 0
        %5571 = vmatpush1.bf16.msra.mxu0 0
        %5572 = vmatprep.subr.bf16.mxu0 0
        %5573 = vmatpush1.bf16.msra.mxu0 0
        %5574 = vmatprep.subr.bf16.mxu0 0
        %5575 = vmatpush1.bf16.msra.mxu0 0
        %5576 = vmatprep.subr.bf16.mxu0 0
        %5577 = vmatpush1.bf16.msra.mxu0 0
        %5578 = vmatprep.subr.bf16.mxu0 0
        %5579 = vmatpush1.bf16.msra.mxu0 0
        %5580 = vmatprep.subr.bf16.mxu0 0
        %5581 = vmatpush1.bf16.msra.mxu0 0
        %5582 = vmatprep.subr.bf16.mxu0 0
        %5583 = vmatpush1.bf16.msra.mxu0 0
        %5584 = vmatprep.subr.bf16.mxu0 0
        %5585 = vmatpush1.bf16.msra.mxu0 0
        %5586 = vmatprep.subr.bf16.mxu0 0
        %5587 = vmatpush1.bf16.msra.mxu0 0
        %5588 = vmatprep.mubr.bf16.mxu0 0
        %5589 = vmatmul.mubr.bf16.gmra.mrb[0].mxu0 %v5551
        %v5590 = vpop.f32.mrb[0].mxu0
        %v5591 = vadd.f32 0.0, %v5590
        %v5592 = vpop.f32.mrb[0].mxu0
        %v5593 = vpop.f32.mrb[0].mxu0
        %v5594 = vpop.f32.mrb[0].mxu0
        %5595 = vdwg.mxu0
        %v5596 = vpack.c.bf16 %v5591, %v5591
        %v5598 = vsel %vm892, %v5596, 0
        %v5601 = vsel %vm956, %v5061, 0
        %5603 = vmatprep.subr.bf16.mxu0 0
        %5604 = vmatpush1.bf16.msra.mxu0 %v5601
        %5605 = vmatprep.subr.bf16.mxu0 0
        %5606 = vmatpush1.bf16.msra.mxu0 0
        %5607 = vmatprep.subr.bf16.mxu0 0
        %5608 = vmatpush1.bf16.msra.mxu0 0
        %5609 = vmatprep.subr.bf16.mxu0 0
        %5610 = vmatpush1.bf16.msra.mxu0 0
        %5611 = vmatprep.subr.bf16.mxu0 0
        %5612 = vmatpush1.bf16.msra.mxu0 0
        %5613 = vmatprep.subr.bf16.mxu0 0
        %5614 = vmatpush1.bf16.msra.mxu0 0
        %5615 = vmatprep.subr.bf16.mxu0 0
        %5616 = vmatpush1.bf16.msra.mxu0 0
        %5617 = vmatprep.subr.bf16.mxu0 0
        %5618 = vmatpush1.bf16.msra.mxu0 0
        %5619 = vmatprep.subr.bf16.mxu0 0
        %5620 = vmatpush1.bf16.msra.mxu0 0
        %5621 = vmatprep.subr.bf16.mxu0 0
        %5622 = vmatpush1.bf16.msra.mxu0 0
        %5623 = vmatprep.subr.bf16.mxu0 0
        %5624 = vmatpush1.bf16.msra.mxu0 0
        %5625 = vmatprep.subr.bf16.mxu0 0
        %5626 = vmatpush1.bf16.msra.mxu0 0
        %5627 = vmatprep.subr.bf16.mxu0 0
        %5628 = vmatpush1.bf16.msra.mxu0 0
        %5629 = vmatprep.subr.bf16.mxu0 0
        %5630 = vmatpush1.bf16.msra.mxu0 0
        %5631 = vmatprep.subr.bf16.mxu0 0
        %5632 = vmatpush1.bf16.msra.mxu0 0
        %5633 = vmatprep.subr.bf16.mxu0 0
        %5634 = vmatpush1.bf16.msra.mxu0 0
        %5635 = vmatprep.mubr.bf16.mxu0 0
        %5636 = vmatmul.mubr.bf16.gmra.mrb[0].mxu0 %v5598
        %v5637 = vpop.f32.mrb[0].mxu0
        %v5638 = vadd.f32 0.0, %v5637
        %v5639 = vpop.f32.mrb[0].mxu0
        %v5640 = vpop.f32.mrb[0].mxu0
        %v5641 = vpop.f32.mrb[0].mxu0
        %5642 = vdwg.mxu0
        %v5643 = vadd.f32 %v5481, %v5638
        %5644 = vrot.lane.b32.xlu0 %v5172, 104
        %v5645 = vpop.permute.xlu0 %5644
        %5646 = vrot.lane.b32.xlu0 %v5173, 104
        %v5647 = vpop.permute.xlu0 %5646
        %v5649 = vsel %vm892, %v5645, 0
        %v5652 = vsel %vm892, %v5647, 0
        %5654 = vmatprep.subr.bf16.mxu0 0
        %5655 = vmatpush1.bf16.xpose.msra.mxu0 %v5652
        %5656 = vmatprep.subr.bf16.mxu0 0
        %5657 = vmatpush1.bf16.xpose.msra.mxu0 0
        %5658 = vmatprep.subr.bf16.mxu0 0
        %5659 = vmatpush1.bf16.xpose.msra.mxu0 0
        %5660 = vmatprep.subr.bf16.mxu0 0
        %5661 = vmatpush1.bf16.xpose.msra.mxu0 0
        %5662 = vmatprep.subr.bf16.mxu0 0
        %5663 = vmatpush1.bf16.xpose.msra.mxu0 0
        %5664 = vmatprep.subr.bf16.mxu0 0
        %5665 = vmatpush1.bf16.xpose.msra.mxu0 0
        %5666 = vmatprep.subr.bf16.mxu0 0
        %5667 = vmatpush1.bf16.xpose.msra.mxu0 0
        %5668 = vmatprep.subr.bf16.mxu0 0
        %5669 = vmatpush1.bf16.xpose.msra.mxu0 0
        %5670 = vmatprep.subr.bf16.mxu0 0
        %5671 = vmatpush1.bf16.xpose.msra.mxu0 0
        %5672 = vmatprep.subr.bf16.mxu0 0
        %5673 = vmatpush1.bf16.xpose.msra.mxu0 0
        %5674 = vmatprep.subr.bf16.mxu0 0
        %5675 = vmatpush1.bf16.xpose.msra.mxu0 0
        %5676 = vmatprep.subr.bf16.mxu0 0
        %5677 = vmatpush1.bf16.xpose.msra.mxu0 0
        %5678 = vmatprep.subr.bf16.mxu0 0
        %5679 = vmatpush1.bf16.xpose.msra.mxu0 0
        %5680 = vmatprep.subr.bf16.mxu0 0
        %5681 = vmatpush1.bf16.xpose.msra.mxu0 0
        %5682 = vmatprep.subr.bf16.mxu0 0
        %5683 = vmatpush1.bf16.xpose.msra.mxu0 0
        %5684 = vmatprep.subr.bf16.mxu0 0
        %5685 = vmatpush1.bf16.xpose.msra.mxu0 0
        %5686 = vmatprep.mubr.bf16.mxu0 0
        %5687 = vmatmul.mubr.bf16.gmra.mrb[0].mxu0 %v5649
        %v5688 = vpop.f32.mrb[0].mxu0
        %v5689 = vadd.f32 %v887, %v5688
        %v5690 = vpop.f32.mrb[0].mxu0
        %v5691 = vpop.f32.mrb[0].mxu0
        %v5692 = vpop.f32.mrb[0].mxu0
        %5693 = vdwg.mxu0
        %v5694 = vsel %vm892, %v5689, -inf
        %5695 = vmax.xlane.f32.xlu0 %v5694
        %v5696 = vpop.xlane.xlu0 %5695
        %v5697 = vsub.f32 %v5689, %v5696
        %v5698 = vmul.f32 %v5697, 1.442695
        %v5699 = vpow.pop %v5698
        %v5700 = vsel %vm892, %v5699, 0.0
        %5701 = vadd.xlane.f32.xlu0 %v5700
        %v5702 = vpop.xlane.xlu0 %5701
        %v5703 = vrcp.pop %v5702
        %v5704 = vmul.f32 %v5699, %v5703
        %v5705 = vpack.c.bf16 %v5704, %v5704
        %5706 = vrot.lane.b32.xlu0 %v5173, 72
        %v5707 = vpop.permute.xlu0 %5706
        %v5709 = vsel %vm892, %v5705, 0
        %v5712 = vsel %vm956, %v5707, 0
        %5714 = vmatprep.subr.bf16.mxu0 0
        %5715 = vmatpush1.bf16.msra.mxu0 %v5712
        %5716 = vmatprep.subr.bf16.mxu0 0
        %5717 = vmatpush1.bf16.msra.mxu0 0
        %5718 = vmatprep.subr.bf16.mxu0 0
        %5719 = vmatpush1.bf16.msra.mxu0 0
        %5720 = vmatprep.subr.bf16.mxu0 0
        %5721 = vmatpush1.bf16.msra.mxu0 0
        %5722 = vmatprep.subr.bf16.mxu0 0
        %5723 = vmatpush1.bf16.msra.mxu0 0
        %5724 = vmatprep.subr.bf16.mxu0 0
        %5725 = vmatpush1.bf16.msra.mxu0 0
        %5726 = vmatprep.subr.bf16.mxu0 0
        %5727 = vmatpush1.bf16.msra.mxu0 0
        %5728 = vmatprep.subr.bf16.mxu0 0
        %5729 = vmatpush1.bf16.msra.mxu0 0
        %5730 = vmatprep.subr.bf16.mxu0 0
        %5731 = vmatpush1.bf16.msra.mxu0 0
        %5732 = vmatprep.subr.bf16.mxu0 0
        %5733 = vmatpush1.bf16.msra.mxu0 0
        %5734 = vmatprep.subr.bf16.mxu0 0
        %5735 = vmatpush1.bf16.msra.mxu0 0
        %5736 = vmatprep.subr.bf16.mxu0 0
        %5737 = vmatpush1.bf16.msra.mxu0 0
        %5738 = vmatprep.subr.bf16.mxu0 0
        %5739 = vmatpush1.bf16.msra.mxu0 0
        %5740 = vmatprep.subr.bf16.mxu0 0
        %5741 = vmatpush1.bf16.msra.mxu0 0
        %5742 = vmatprep.subr.bf16.mxu0 0
        %5743 = vmatpush1.bf16.msra.mxu0 0
        %5744 = vmatprep.subr.bf16.mxu0 0
        %5745 = vmatpush1.bf16.msra.mxu0 0
        %5746 = vmatprep.mubr.bf16.mxu0 0
        %5747 = vmatmul.mubr.bf16.gmra.mrb[0].mxu0 %v5709
        %v5748 = vpop.f32.mrb[0].mxu0
        %v5749 = vadd.f32 0.0, %v5748
        %v5750 = vpop.f32.mrb[0].mxu0
        %v5751 = vpop.f32.mrb[0].mxu0
        %v5752 = vpop.f32.mrb[0].mxu0
        %5753 = vdwg.mxu0
        %v5754 = vpack.c.bf16 %v5749, %v5749
        %v5756 = vsel %vm892, %v5754, 0
        %v5759 = vsel %vm956, %v5062, 0
        %5761 = vmatprep.subr.bf16.mxu0 0
        %5762 = vmatpush1.bf16.msra.mxu0 %v5759
        %5763 = vmatprep.subr.bf16.mxu0 0
        %5764 = vmatpush1.bf16.msra.mxu0 0
        %5765 = vmatprep.subr.bf16.mxu0 0
        %5766 = vmatpush1.bf16.msra.mxu0 0
        %5767 = vmatprep.subr.bf16.mxu0 0
        %5768 = vmatpush1.bf16.msra.mxu0 0
        %5769 = vmatprep.subr.bf16.mxu0 0
        %5770 = vmatpush1.bf16.msra.mxu0 0
        %5771 = vmatprep.subr.bf16.mxu0 0
        %5772 = vmatpush1.bf16.msra.mxu0 0
        %5773 = vmatprep.subr.bf16.mxu0 0
        %5774 = vmatpush1.bf16.msra.mxu0 0
        %5775 = vmatprep.subr.bf16.mxu0 0
        %5776 = vmatpush1.bf16.msra.mxu0 0
        %5777 = vmatprep.subr.bf16.mxu0 0
        %5778 = vmatpush1.bf16.msra.mxu0 0
        %5779 = vmatprep.subr.bf16.mxu0 0
        %5780 = vmatpush1.bf16.msra.mxu0 0
        %5781 = vmatprep.subr.bf16.mxu0 0
        %5782 = vmatpush1.bf16.msra.mxu0 0
        %5783 = vmatprep.subr.bf16.mxu0 0
        %5784 = vmatpush1.bf16.msra.mxu0 0
        %5785 = vmatprep.subr.bf16.mxu0 0
        %5786 = vmatpush1.bf16.msra.mxu0 0
        %5787 = vmatprep.subr.bf16.mxu0 0
        %5788 = vmatpush1.bf16.msra.mxu0 0
        %5789 = vmatprep.subr.bf16.mxu0 0
        %5790 = vmatpush1.bf16.msra.mxu0 0
        %5791 = vmatprep.subr.bf16.mxu0 0
        %5792 = vmatpush1.bf16.msra.mxu0 0
        %5793 = vmatprep.mubr.bf16.mxu0 0
        %5794 = vmatmul.mubr.bf16.gmra.mrb[0].mxu0 %v5756
        %v5795 = vpop.f32.mrb[0].mxu0
        %v5796 = vadd.f32 0.0, %v5795
        %v5797 = vpop.f32.mrb[0].mxu0
        %v5798 = vpop.f32.mrb[0].mxu0
        %v5799 = vpop.f32.mrb[0].mxu0
        %5800 = vdwg.mxu0
        %v5801 = vadd.f32 %v5643, %v5796
        %v5802 = vadd.f32 %v5047, %v5801
        %v5803 = vsel %vm836, %v5802, 0.0
        %5804 = vadd.xlane.f32.xlu0 %v5803
        %v5805 = vpop.xlane.xlu0 %5804
        %v5806 = vmul.f32 %v5805, %v1525
        %v5807 = vmul.f32 %v5802, %v5802
        %v5808 = vsel %vm836, %v5807, 0.0
        %5809 = vadd.xlane.f32.xlu0 %v5808
        %v5810 = vpop.xlane.xlu0 %5809
        %v5811 = vmul.f32 %v5810, %v1525
        %v5812 = vmul.f32 %v5806, %v5806
        %v5813 = vsub.f32 %v5811, %v5812
        %v5814 = vsub.f32 %v5802, %v5806
        %v5815 = vadd.f32 %v5813, 1e-05
        %v5816 = vrsqrt.pop %v5815
        %v5817 = vmul.f32 %v5814, %v5816
        %v5818 = vlaneseq
        %v5819 = vshrl.u32 %v5818, 7
        %v5820 = vsub.s32 1, %v5819
        %v5821 = vrot.slane %v4320, %v5820
        %v5822 = vmul.f32 %v5817, %v5821
        %v5823 = vlaneseq
        %v5824 = vshrl.u32 %v5823, 7
        %v5825 = vsub.s32 1, %v5824
        %v5826 = vrot.slane %v4322, %v5825
        %v5827 = vadd.f32 %v5822, %v5826
        %s5828 = scalar_lea.vmem %s17, 16
        %v5829 = vld [vmem:[%s5828] sm:$0xf]
        %v5830 = vld [vmem:[%s5828 + $0x4] sm:$0xf]
        %v5831 = vld [vmem:[%s5828 + $0x8] sm:$0xf]
        %v5832 = vld [vmem:[%s5828 + $0xc] sm:$0xf]
        %s5833 = scalar_lea.vmem %s18, 1
        %v5834 = vld [vmem:[%s5833] sm:$0x1]
        %s5835 = scalar_lea.vmem %s19, 32
        %v5836 = vld [vmem:[%s5835] sm:$0xf]
        %v5837 = vld [vmem:[%s5835 + $0x4] sm:$0xf]
        %v5838 = vld [vmem:[%s5835 + $0x8] sm:$0xf]
        %v5839 = vld [vmem:[%s5835 + $0xc] sm:$0xf]
        %v5840 = vld [vmem:[%s5835 + $0x10] sm:$0xf]
        %v5841 = vld [vmem:[%s5835 + $0x14] sm:$0xf]
        %v5842 = vld [vmem:[%s5835 + $0x18] sm:$0xf]
        %v5843 = vld [vmem:[%s5835 + $0x1c] sm:$0xf]
        %s5844 = scalar_lea.vmem %s20, 1
        %v5845 = vld [vmem:[%s5844] sm:$0x1]
        %v5846 = vpack.c.bf16 %v5827, %v5827
        %v5848 = vlaneseq
        %v5849 = vshrl.u32 %v5848, 7
        %v5850 = vsub.s32 0, %v5849
        %v5851 = vrot.slane %v5834, %v5850
        %v5857 = vunpack.c.l.b16 %v5829
        %v5858 = vunpack.c.l.b16 %v5830
        %v5859 = vunpack.c.l.b16 %v5831
        %v5860 = vunpack.c.l.b16 %v5832
        %v5861 = vpack.c.b16 %v5858, %v5857
        %v5862 = vpack.c.b16 %v5860, %v5859
        %v5866 = vsel %vm836, %v5846, 0
        %5868 = vmatprep.subr.bf16.mxu0 0
        %5869 = vmatpush1.bf16.msra.mxu0 %v5861
        %5870 = vmatprep.subr.bf16.mxu0 0
        %5871 = vmatpush1.bf16.msra.mxu0 %v5862
        %5872 = vmatprep.subr.bf16.mxu0 0
        %5873 = vmatpush1.bf16.msra.mxu0 0
        %5874 = vmatprep.subr.bf16.mxu0 0
        %5875 = vmatpush1.bf16.msra.mxu0 0
        %5876 = vmatprep.subr.bf16.mxu0 0
        %5877 = vmatpush1.bf16.msra.mxu0 0
        %5878 = vmatprep.subr.bf16.mxu0 0
        %5879 = vmatpush1.bf16.msra.mxu0 0
        %5880 = vmatprep.subr.bf16.mxu0 0
        %5881 = vmatpush1.bf16.msra.mxu0 0
        %5882 = vmatprep.subr.bf16.mxu0 0
        %5883 = vmatpush1.bf16.msra.mxu0 0
        %5884 = vmatprep.subr.bf16.mxu0 0
        %5885 = vmatpush1.bf16.msra.mxu0 0
        %5886 = vmatprep.subr.bf16.mxu0 0
        %5887 = vmatpush1.bf16.msra.mxu0 0
        %5888 = vmatprep.subr.bf16.mxu0 0
        %5889 = vmatpush1.bf16.msra.mxu0 0
        %5890 = vmatprep.subr.bf16.mxu0 0
        %5891 = vmatpush1.bf16.msra.mxu0 0
        %5892 = vmatprep.subr.bf16.mxu0 0
        %5893 = vmatpush1.bf16.msra.mxu0 0
        %5894 = vmatprep.subr.bf16.mxu0 0
        %5895 = vmatpush1.bf16.msra.mxu0 0
        %5896 = vmatprep.subr.bf16.mxu0 0
        %5897 = vmatpush1.bf16.msra.mxu0 0
        %5898 = vmatprep.subr.bf16.mxu0 0
        %5899 = vmatpush1.bf16.msra.mxu0 0
        %5900 = vmatprep.mubr.bf16.mxu0 0
        %5901 = vmatmul.mubr.bf16.gmra.mrb[0].mxu0 %v5866
        %v5902 = vpop.f32.mrb[0].mxu0
        %v5903 = vadd.f32 %v5851, %v5902
        %v5904 = vpop.f32.mrb[0].mxu0
        %v5905 = vpop.f32.mrb[0].mxu0
        %v5906 = vpop.f32.mrb[0].mxu0
        %5907 = vdwg.mxu0
        %v5908 = vmax.f32 %v5903, 0.0
        %v5909 = vpack.c.bf16 %v5908, %v5908
        %v5911 = vlaneseq
        %v5912 = vshrl.u32 %v5911, 7
        %v5913 = vsub.s32 0, %v5912
        %v5914 = vrot.slane %v5845, %v5913
        %v5924 = vunpack.c.l.b16 %v5836
        %v5925 = vunpack.c.l.b16 %v5837
        %v5926 = vunpack.c.l.b16 %v5838
        %v5927 = vunpack.c.l.b16 %v5839
        %v5928 = vunpack.c.l.b16 %v5840
        %v5929 = vunpack.c.l.b16 %v5841
        %v5930 = vunpack.c.l.b16 %v5842
        %v5931 = vunpack.c.l.b16 %v5843
        %v5932 = vpack.c.b16 %v5925, %v5924
        %v5933 = vpack.c.b16 %v5927, %v5926
        %v5934 = vpack.c.b16 %v5929, %v5928
        %v5935 = vpack.c.b16 %v5931, %v5930
        %v5941 = vsel %vm1656, %v5909, 0
        %5943 = vmatprep.subr.bf16.mxu0 0
        %5944 = vmatpush1.bf16.msra.mxu0 %v5932
        %5945 = vmatprep.subr.bf16.mxu0 0
        %5946 = vmatpush1.bf16.msra.mxu0 %v5933
        %5947 = vmatprep.subr.bf16.mxu0 0
        %5948 = vmatpush1.bf16.msra.mxu0 %v5934
        %5949 = vmatprep.subr.bf16.mxu0 0
        %5950 = vmatpush1.bf16.msra.mxu0 %v5935
        %5951 = vmatprep.subr.bf16.mxu0 0
        %5952 = vmatpush1.bf16.msra.mxu0 0
        %5953 = vmatprep.subr.bf16.mxu0 0
        %5954 = vmatpush1.bf16.msra.mxu0 0
        %5955 = vmatprep.subr.bf16.mxu0 0
        %5956 = vmatpush1.bf16.msra.mxu0 0
        %5957 = vmatprep.subr.bf16.mxu0 0
        %5958 = vmatpush1.bf16.msra.mxu0 0
        %5959 = vmatprep.subr.bf16.mxu0 0
        %5960 = vmatpush1.bf16.msra.mxu0 0
        %5961 = vmatprep.subr.bf16.mxu0 0
        %5962 = vmatpush1.bf16.msra.mxu0 0
        %5963 = vmatprep.subr.bf16.mxu0 0
        %5964 = vmatpush1.bf16.msra.mxu0 0
        %5965 = vmatprep.subr.bf16.mxu0 0
        %5966 = vmatpush1.bf16.msra.mxu0 0
        %5967 = vmatprep.subr.bf16.mxu0 0
        %5968 = vmatpush1.bf16.msra.mxu0 0
        %5969 = vmatprep.subr.bf16.mxu0 0
        %5970 = vmatpush1.bf16.msra.mxu0 0
        %5971 = vmatprep.subr.bf16.mxu0 0
        %5972 = vmatpush1.bf16.msra.mxu0 0
        %5973 = vmatprep.subr.bf16.mxu0 0
        %5974 = vmatpush1.bf16.msra.mxu0 0
        %5975 = vmatprep.mubr.bf16.mxu0 0
        %5976 = vmatmul.mubr.bf16.gmra.mrb[0].mxu0 %v5941
        %v5977 = vpop.f32.mrb[0].mxu0
        %v5978 = vadd.f32 %v5914, %v5977
        %v5979 = vpop.f32.mrb[0].mxu0
        %v5980 = vpop.f32.mrb[0].mxu0
        %v5981 = vpop.f32.mrb[0].mxu0
        %5982 = vdwg.mxu0
        %v5983 = vadd.f32 %v5827, %v5978
        %v5984 = vsel %vm836, %v5983, 0.0
        %5985 = vadd.xlane.f32.xlu0 %v5984
        %v5986 = vpop.xlane.xlu0 %5985
        %v5987 = vmul.f32 %v5986, %v1525
        %v5988 = vmul.f32 %v5983, %v5983
        %v5989 = vsel %vm836, %v5988, 0.0
        %5990 = vadd.xlane.f32.xlu0 %v5989
        %v5991 = vpop.xlane.xlu0 %5990
        %v5992 = vmul.f32 %v5991, %v1525
        %v5993 = vmul.f32 %v5987, %v5987
        %v5994 = vsub.f32 %v5992, %v5993
        %v5995 = vsub.f32 %v5983, %v5987
        %v5996 = vadd.f32 %v5994, 1e-05
        %v5997 = vrsqrt.pop %v5996
        %v5998 = vmul.f32 %v5995, %v5997
        %v5999 = vlaneseq
        %v6000 = vshrl.u32 %v5999, 7
        %v6001 = vsub.s32 2, %v6000
        %v6002 = vrot.slane %v4320, %v6001
        %v6003 = vmul.f32 %v5998, %v6002
        %v6004 = vlaneseq
        %v6005 = vshrl.u32 %v6004, 7
        %v6006 = vsub.s32 2, %v6005
        %v6007 = vrot.slane %v4322, %v6006
        %v6008 = vadd.f32 %v6003, %v6007
        %v6009 = vld [vmem:[%s23] sm:$0xf]
        %v6010 = vld [vmem:[%s23 + $0x4] sm:$0xf]
        %v6011 = vld [vmem:[%s23 + $0x8] sm:$0xf]
        %v6012 = vld [vmem:[%s23 + $0xc] sm:$0xf]
        %v6013 = vpack.c.bf16 %v6008, %v6008
        %v6014 = vld [vmem:[%s24] sm:$0x1]
        %v6016 = vlaneseq
        %v6017 = vshrl.u32 %v6016, 7
        %v6018 = vsub.s32 0, %v6017
        %v6019 = vrot.slane %v6014, %v6018
        %v6025 = vunpack.c.l.b16 %v6009
        %v6026 = vunpack.c.l.b16 %v6010
        %v6027 = vunpack.c.l.b16 %v6011
        %v6028 = vunpack.c.l.b16 %v6012
        %v6029 = vpack.c.b16 %v6026, %v6025
        %v6030 = vpack.c.b16 %v6028, %v6027
        %v6034 = vsel %vm836, %v6013, 0
        %6036 = vmatprep.subr.bf16.mxu0 0
        %6037 = vmatpush1.bf16.msra.mxu0 %v6029
        %6038 = vmatprep.subr.bf16.mxu0 0
        %6039 = vmatpush1.bf16.msra.mxu0 %v6030
        %6040 = vmatprep.subr.bf16.mxu0 0
        %6041 = vmatpush1.bf16.msra.mxu0 0
        %6042 = vmatprep.subr.bf16.mxu0 0
        %6043 = vmatpush1.bf16.msra.mxu0 0
        %6044 = vmatprep.subr.bf16.mxu0 0
        %6045 = vmatpush1.bf16.msra.mxu0 0
        %6046 = vmatprep.subr.bf16.mxu0 0
        %6047 = vmatpush1.bf16.msra.mxu0 0
        %6048 = vmatprep.subr.bf16.mxu0 0
        %6049 = vmatpush1.bf16.msra.mxu0 0
        %6050 = vmatprep.subr.bf16.mxu0 0
        %6051 = vmatpush1.bf16.msra.mxu0 0
        %6052 = vmatprep.subr.bf16.mxu0 0
        %6053 = vmatpush1.bf16.msra.mxu0 0
        %6054 = vmatprep.subr.bf16.mxu0 0
        %6055 = vmatpush1.bf16.msra.mxu0 0
        %6056 = vmatprep.subr.bf16.mxu0 0
        %6057 = vmatpush1.bf16.msra.mxu0 0
        %6058 = vmatprep.subr.bf16.mxu0 0
        %6059 = vmatpush1.bf16.msra.mxu0 0
        %6060 = vmatprep.subr.bf16.mxu0 0
        %6061 = vmatpush1.bf16.msra.mxu0 0
        %6062 = vmatprep.subr.bf16.mxu0 0
        %6063 = vmatpush1.bf16.msra.mxu0 0
        %6064 = vmatprep.subr.bf16.mxu0 0
        %6065 = vmatpush1.bf16.msra.mxu0 0
        %6066 = vmatprep.subr.bf16.mxu0 0
        %6067 = vmatpush1.bf16.msra.mxu0 0
        %6068 = vmatprep.mubr.bf16.mxu0 0
        %6069 = vmatmul.mubr.bf16.gmra.mrb[0].mxu0 %v6034
        %v6070 = vpop.f32.mrb[0].mxu0
        %v6071 = vadd.f32 %v6019, %v6070
        %v6072 = vpop.f32.mrb[0].mxu0
        %v6073 = vpop.f32.mrb[0].mxu0
        %v6074 = vpop.f32.mrb[0].mxu0
        %6075 = vdwg.mxu0
        %6076 = vst [vmem:[%s792] sm:$0xff] %v6071
        %s6077 = sand.u32 %s592, 1
        %s6078 = scalar_lea.sflag [#allocation3], %s6077
        %s6079 = sand.u32 %s592, 1
        %s6080 = smul.addr %s6079, 8
        %s6081 = scalar_lea.vmem [#allocation2], %s6080
        // Predicated region
        $region121: #{translation_transformer_forward.1} parent=119 // pred_check
          %p6082 = pneg %p602
        $region122: #{translation_transformer_forward.1} parent=119 // pred_check_branch
          %6084 = sbr.rel (%p6082) target = $region124
        $region123: #{translation_transformer_forward.1} parent=119 // pred_region
          %s6086 = ssub.s32 128, 128
          %6087 = vsyncadd %s6078, %s6086
          %s6088 = smul.addr %s39, 128
          %s6089 = scalar_lea.hbm %s25, %s6088
          %s6091 = sshll.u32 %s6081, 4
          %s6092 = int_to_ptr.vmem [resolvable:$true] %s6091
          %6094 = dma.vmem_to_hbm [thread:$0]  %s6092, 128, %s6089, %s6078
        $region124: #{translation_transformer_forward.1} parent=119 // pred_fallthru
          _
      $region120: #{translation_transformer_forward.1} parent=5 // pred_fallthru
        _
      %p6095 = scmp.le.s32.totalorder 2, %s34
      // Predicated region
      $region125: #{translation_transformer_forward.1} parent=5 // pred_check
        %p6096 = pneg %p6095
      $region126: #{translation_transformer_forward.1} parent=5 // pred_check_branch
        %6098 = sbr.rel (%p6096) target = $region128
      $region127: #{translation_transformer_forward.1} parent=5 // pred_region
        %s6099 = ssub.s32 %s34, 2
        // Predicated region
        $region129: #{translation_transformer_forward.1} parent=127 // pred_check
          %p6100 = pneg %p608
        $region130: #{translation_transformer_forward.1} parent=127 // pred_check_branch
          %6102 = sbr.rel (%p6100) target = $region132
        $region131: #{translation_transformer_forward.1} parent=127 // pred_region
          %s6103 = sand.u32 %s593, 1
          %s6104 = scalar_lea.sflag [#allocation3], %s6103
          %s6105 = sand.u32 %s593, 1
          %s6106 = smul.addr %s6105, 8
          %s6107 = scalar_lea.vmem [#allocation2], %s6106
          %6108 = dma.done %s6104, 128
        $region132: #{translation_transformer_forward.1} parent=127 // pred_fallthru
          _
      $region128: #{translation_transformer_forward.1} parent=5 // pred_fallthru
        _
    $region6: #{translation_transformer_forward.1} parent=1 // loop_footer
      %s38 = sadd.s32 1, %s34
    $region7: #{translation_transformer_forward.1} parent=1 // loop_footer_branch
      %33 = sbr.rel target = $region3
    $region8: #{translation_transformer_forward.1} parent=1 // loop_exit
      _
    %6109 = vsyncpa [#allocation3], 1
    %s6110 = scalar_lea.sflag [#allocation3], 1
    %6111 = vsyncpa %s6110, 1

</llo_original>
